<compile_context>
chip_gen: v6e
topology: v6e:2x2x1
jax: 0.10.0
libtpu: 0.0.40
codegen_flags: <defaults>
</compile_context>

<pallas_src>
import functools

import jax
import jax.numpy as jnp
from jax.experimental import pallas as pl
from jax.experimental.pallas import tpu as pltpu

N_HIDDEN = 32  # n_hidden global from the original script

# (param_name, table_name, in_features) in the exact concatenation order of
# the original forward: finger = cat(ecfp4, fcfp4, pubchem, maccs, rdk)
#                       seq    = cat(ksctriad, cksaap, tpc, paac, ctd)
FINGER_BRANCHES = (
    ("ECFP4", "ecfp4", 1024),
    ("FCFP4", "fcfp4", 1024),
    ("Pubchem", "pubchem", 881),
    ("MACCS", "maccs", 166),
    ("RDK", "rdk", 2048),
)
SEQ_BRANCHES = (
    ("KSCTriad", "KSCTriad", 343 * 4),
    ("CKSAAP", "CKSAAP", 1600),
    ("TPC", "TPC", 8000),
    ("PAAC", "PAAC", 22),
    ("CTD", "CTD", 273),
)
BRANCH_IN_FEATURES = {n: k for (n, _, k) in FINGER_BRANCHES + SEQ_BRANCHES}


def _round_up(x, m):
    return ((x + m - 1) // m) * m


def _pick_tile(n, cap):
    """Row tile: multiple of 8, <= cap, and (when n allows) giving a grid of
    length >= 2 so the 'parallel' axis can split across v7x's two cores."""
    return max(8, min(cap, _round_up(pl.cdiv(n, 2), 8)))


# ---------------------------------------------------------------------------
# Phase 1: per-group projection kernel  (all table rows, TM rows per step)
# ---------------------------------------------------------------------------
def _projection_kernel(*refs, n_branches):
    # refs = [t0, w0, b0, t1, w1, b1, ..., out_ref]
    out_ref = refs[-1]
    H = N_HIDDEN
    for i in range(n_branches):
        t_ref, w_ref, b_ref = refs[3 * i: 3 * i + 3]
        y = jnp.dot(t_ref[...], w_ref[...],
                    preferred_element_type=jnp.float32)      # (TM, 32) f32
        y = jnp.maximum(y + b_ref[...], 0.0)
        # Column-slice store into the (TM, 160) VMEM block; the HBM writeback
        # of the block is a single lane-dense (TM, 160) DMA per grid step.
        out_ref[:, i * H:(i + 1) * H] = y.astype(out_ref.dtype)


def _project_group(tables, weights_biases):
    """ReLU(table_i @ W_i + b_i) for ALL rows, concatenated -> (n_rows, 160)."""
    n_rows = tables[0].shape[0]
    n_br = len(tables)
    tile_rows = _pick_tile(n_rows, 128)
    grid = (pl.cdiv(n_rows, tile_rows),)

    in_arrays, in_specs = [], []
    for tbl, (w, b) in zip(tables, weights_biases):
        K = tbl.shape[1]
        in_arrays += [tbl.astype(jnp.bfloat16), w, b]   # bf16 tables in HBM
        in_specs += [
            pl.BlockSpec((tile_rows, K), lambda i: (i, 0)),
            pl.BlockSpec(w.shape, lambda i: (0, 0)),    # resident weights
            pl.BlockSpec(b.shape, lambda i: (0, 0)),    # resident bias
        ]

    out_dim = n_br * N_HIDDEN
    return pl.pallas_call(
        functools.partial(_projection_kernel, n_branches=n_br),
        out_shape=jax.ShapeDtypeStruct((n_rows, out_dim), jnp.float32),
        grid_spec=pltpu.PrefetchScalarGridSpec(
            num_scalar_prefetch=0,
            grid=grid,
            in_specs=in_specs,
            out_specs=pl.BlockSpec((tile_rows, out_dim), lambda i: (i, 0)),
        ),
        compiler_params=pltpu.CompilerParams(
            dimension_semantics=("parallel",),
            vmem_limit_bytes=32 * 1024 * 1024,   # headroom on v5e's 16 MiB default
        ),
    )(*in_arrays)


# ---------------------------------------------------------------------------
# Phase 2: batched row gather of the 160-wide projected rows
# ---------------------------------------------------------------------------
def _gather_kernel(xdr_ref, xp_ref, proj_dr_hbm, proj_pr_hbm,
                   finger_ref, seq_ref, fbuf, sbuf, sems, *, tile_b):
    base = pl.program_id(0) * tile_b
    copies = []
    for r in range(tile_b):                      # static unroll, TB rows/step
        d = xdr_ref[base + r]
        p = xp_ref[base + r]
        copies.append(pltpu.make_async_copy(
            proj_dr_hbm.at[d], fbuf.at[r], sems.at[0]))
        copies.append(pltpu.make_async_copy(
            proj_pr_hbm.at[p], sbuf.at[r], sems.at[1]))
    for c in copies:
        c.start()
    for c in copies:                             # all copies per sem are 640 B
        c.wait()
    # One dense (TB, 160) store per output -> lane-dense writeback.
    finger_ref[...] = fbuf[...]
    seq_ref[...] = sbuf[...]


def _gather_rows(proj_drug, proj_prot, x_dr, x_p):
    B = x_dr.shape[0]
    tile_b = _pick_tile(B, 64)
    n_steps = pl.cdiv(B, tile_b)
    pad = n_steps * tile_b - B
    x_dr_p = jnp.pad(x_dr, (0, pad))             # padded indices -> valid row 0
    x_p_p = jnp.pad(x_p, (0, pad))
    d_f = proj_drug.shape[1]
    d_s = proj_prot.shape[1]

    return pl.pallas_call(
        functools.partial(_gather_kernel, tile_b=tile_b),
        out_shape=(jax.ShapeDtypeStruct((B, d_f), jnp.float32),
                   jax.ShapeDtypeStruct((B, d_s), jnp.float32)),
        grid_spec=pltpu.PrefetchScalarGridSpec(
            num_scalar_prefetch=2,
            grid=(n_steps,),
            in_specs=[pl.BlockSpec(memory_space=pl.ANY),   # proj tables stay in HBM
                      pl.BlockSpec(memory_space=pl.ANY)],
            out_specs=[pl.BlockSpec((tile_b, d_f), lambda i, xdr, xp: (i, 0)),
                       pl.BlockSpec((tile_b, d_s), lambda i, xdr, xp: (i, 0))],
            scratch_shapes=[pltpu.VMEM((tile_b, d_f), jnp.float32),
                            pltpu.VMEM((tile_b, d_s), jnp.float32),
                            pltpu.SemaphoreType.DMA((2,))],
        ),
        compiler_params=pltpu.CompilerParams(
            dimension_semantics=("parallel",)),
    )(x_dr_p, x_p_p, proj_drug, proj_prot)


# ---------------------------------------------------------------------------
# Forward
# ---------------------------------------------------------------------------
def embedding_forward(params, Drug_feature, Protein_feature, x_dr, x_p):
    """Returns (finger, seq), each (B, 5 * N_HIDDEN) float32."""
    drug_tables = [Drug_feature[t] for (_, t, _) in FINGER_BRANCHES]
    prot_tables = [Protein_feature[t] for (_, t, _) in SEQ_BRANCHES]
    drug_wb = [params[n] for (n, _, _) in FINGER_BRANCHES]
    prot_wb = [params[n] for (n, _, _) in SEQ_BRANCHES]

    proj_drug = _project_group(drug_tables, drug_wb)   # (n_drugs, 160) f32
    proj_prot = _project_group(prot_tables, prot_wb)   # (n_prots, 160) f32

    finger, seq = _gather_rows(proj_drug, proj_prot,
                               x_dr.astype(jnp.int32), x_p.astype(jnp.int32))
    return finger, seq


# ---------------------------------------------------------------------------
# Parameters (weights pre-transposed [K, H]; bf16 weights, f32 bias)
# ---------------------------------------------------------------------------
def init_params(key, n_hidden=N_HIDDEN):
    params = {}
    for name, in_f in BRANCH_IN_FEATURES.items():
        key, kw, kb = jax.random.split(key, 3)
        scale = 1.0 / jnp.sqrt(jnp.float32(in_f))
        w = jax.random.uniform(kw, (in_f, n_hidden), jnp.float32, -scale, scale)
        b = jax.random.uniform(kb, (1, n_hidden), jnp.float32, -scale, scale)
        params[name] = (w.astype(jnp.bfloat16), b)
    return params


# ---------------------------------------------------------------------------
# Pure-JAX reference (same bf16-weight math) for correctness checking
# ---------------------------------------------------------------------------
def embedding_forward_ref(params, Drug_feature, Protein_feature, x_dr, x_p):
    def branch(name, x):
        w, b = params[name]
        y = jnp.dot(x.astype(w.dtype), w, preferred_element_type=jnp.float32)
        return jnp.maximum(y + b, 0.0)

    f = jnp.concatenate(
        (branch("ECFP4", Drug_feature["ecfp4"][x_dr]),
         branch("FCFP4", Drug_feature["fcfp4"][x_dr]),
         branch("Pubchem", Drug_feature["pubchem"][x_dr]),
         branch("MACCS", Drug_feature["maccs"][x_dr]),
         branch("RDK", Drug_feature["rdk"][x_dr])), axis=1)
    s = jnp.concatenate(
        (branch("KSCTriad", Protein_feature["KSCTriad"][x_p]),
         branch("CKSAAP", Protein_feature["CKSAAP"][x_p]),
         branch("TPC", Protein_feature["TPC"][x_p]),
         branch("PAAC", Protein_feature["PAAC"][x_p]),
         branch("CTD", Protein_feature["CTD"][x_p])), axis=1)
    return f, s


if __name__ == "__main__":
    key = jax.random.PRNGKey(0)
    key, pkey = jax.random.split(key)
    params = init_params(pkey)

    n_drugs, n_prots, batch = 6, 5, 4

    # Feature tables stored bf16 in HBM (fingerprint / composition features
    # are exactly representable); both kernel and reference see identical data.
    def table(k, n, d):
        return jax.random.normal(k, (n, d), jnp.float32).astype(jnp.bfloat16)

    keys = jax.random.split(key, 12)
    Drug_feature = {
        "ecfp4": table(keys[0], n_drugs, 1024),
        "fcfp4": table(keys[1], n_drugs, 1024),
        "maccs": table(keys[2], n_drugs, 166),
        "pubchem": table(keys[3], n_drugs, 881),
        "rdk": table(keys[4], n_drugs, 2048),
    }
    Protein_feature = {
        "KSCTriad": table(keys[5], n_prots, 343 * 4),
        "CKSAAP": table(keys[6], n_prots, 1600),
        "PAAC": table(keys[7], n_prots, 22),
        "TPC": table(keys[8], n_prots, 8000),
        "CTD": table(keys[9], n_prots, 273),
    }
    x_dr = jax.random.randint(keys[10], (batch,), 0, n_drugs)
    x_p = jax.random.randint(keys[11], (batch,), 0, n_prots)

    forward = jax.jit(embedding_forward)
    finger, seq = forward(params, Drug_feature, Protein_feature, x_dr, x_p)
    finger = jax.block_until_ready(finger)
    seq = jax.block_until_ready(seq)

    finger_ref, seq_ref = embedding_forward_ref(
        params, Drug_feature, Protein_feature, x_dr, x_p)

    assert finger.shape == (batch, len(FINGER_BRANCHES) * N_HIDDEN)
    assert seq.shape == (batch, len(SEQ_BRANCHES) * N_HIDDEN)
    assert jnp.allclose(finger, finger_ref, atol=1e-3, rtol=1e-3)
    assert jnp.allclose(seq, seq_ref, atol=1e-3, rtol=1e-3)

    print("KERNEL_OK")
</pallas_src>

<mosaic_0001>
module attributes {stable_mosaic.version = 11 : i64} {
  func.func @_projection_kernel(%arg0: i32, %arg1: memref<8x1372xbf16, #tpu.memory_space<vmem>>, %arg2: memref<1372x32xbf16, #tpu.memory_space<vmem>>, %arg3: memref<1x32xf32, #tpu.memory_space<vmem>>, %arg4: memref<8x1600xbf16, #tpu.memory_space<vmem>>, %arg5: memref<1600x32xbf16, #tpu.memory_space<vmem>>, %arg6: memref<1x32xf32, #tpu.memory_space<vmem>>, %arg7: memref<8x8000xbf16, #tpu.memory_space<vmem>>, %arg8: memref<8000x32xbf16, #tpu.memory_space<vmem>>, %arg9: memref<1x32xf32, #tpu.memory_space<vmem>>, %arg10: memref<8x22xbf16, #tpu.memory_space<vmem>>, %arg11: memref<22x32xbf16, #tpu.memory_space<vmem>>, %arg12: memref<1x32xf32, #tpu.memory_space<vmem>>, %arg13: memref<8x273xbf16, #tpu.memory_space<vmem>>, %arg14: memref<273x32xbf16, #tpu.memory_space<vmem>>, %arg15: memref<1x32xf32, #tpu.memory_space<vmem>>, %arg16: memref<8x160xf32, #tpu.memory_space<vmem>>) attributes {dimension_semantics = [#tpu.dimension_semantics<parallel>], iteration_bounds = array<i64: 1>, scalar_prefetch = 0 : i64, scratch_operands = 0 : i64, tpu.core_type = #tpu.core_type<tc>, window_params = [{transform_indices = @transform_0, window_bounds = array<i64: 8, 1372>}, {pipeline_mode = #tpu.pipeline_mode<synchronous>, transform_indices = @transform_1, window_bounds = array<i64: 1372, 32>}, {pipeline_mode = #tpu.pipeline_mode<synchronous>, transform_indices = @transform_2, window_bounds = array<i64: 1, 32>}, {transform_indices = @transform_3, window_bounds = array<i64: 8, 1600>}, {pipeline_mode = #tpu.pipeline_mode<synchronous>, transform_indices = @transform_4, window_bounds = array<i64: 1600, 32>}, {pipeline_mode = #tpu.pipeline_mode<synchronous>, transform_indices = @transform_5, window_bounds = array<i64: 1, 32>}, {transform_indices = @transform_6, window_bounds = array<i64: 8, 8000>}, {pipeline_mode = #tpu.pipeline_mode<synchronous>, transform_indices = @transform_7, window_bounds = array<i64: 8000, 32>}, {pipeline_mode = #tpu.pipeline_mode<synchronous>, transform_indices = @transform_8, window_bounds = array<i64: 1, 32>}, {transform_indices = @transform_9, window_bounds = array<i64: 8, 22>}, {pipeline_mode = #tpu.pipeline_mode<synchronous>, transform_indices = @transform_10, window_bounds = array<i64: 22, 32>}, {pipeline_mode = #tpu.pipeline_mode<synchronous>, transform_indices = @transform_11, window_bounds = array<i64: 1, 32>}, {transform_indices = @transform_12, window_bounds = array<i64: 8, 273>}, {pipeline_mode = #tpu.pipeline_mode<synchronous>, transform_indices = @transform_13, window_bounds = array<i64: 273, 32>}, {pipeline_mode = #tpu.pipeline_mode<synchronous>, transform_indices = @transform_14, window_bounds = array<i64: 1, 32>}, {transform_indices = @transform_15, window_bounds = array<i64: 8, 160>}]} {
    %c0 = arith.constant 0 : index
    %c0_0 = arith.constant 0 : index
    %0 = vector.load %arg1[%c0, %c0_0] : memref<8x1372xbf16, #tpu.memory_space<vmem>>, vector<8x1372xbf16>
    %c0_1 = arith.constant 0 : index
    %c0_2 = arith.constant 0 : index
    %1 = vector.load %arg2[%c0_1, %c0_2] : memref<1372x32xbf16, #tpu.memory_space<vmem>>, vector<1372x32xbf16>
    %cst = arith.constant dense<0.000000e+00> : vector<8x32xf32>
    %2 = tpu.matmul %0, %1, %cst {dimension_numbers = #tpu.dot_dimension_numbers<[1], [0], [0], [1], [0, 0, 1, 1], [], []>} : vector<8x1372xbf16>, vector<1372x32xbf16>, vector<8x32xf32> -> vector<8x32xf32>
    %c0_3 = arith.constant 0 : index
    %c0_4 = arith.constant 0 : index
    %3 = vector.load %arg3[%c0_3, %c0_4] : memref<1x32xf32, #tpu.memory_space<vmem>>, vector<1x32xf32>
    %4 = vector.broadcast %3 : vector<1x32xf32> to vector<8x32xf32>
    %5 = arith.addf %2, %4 : vector<8x32xf32>
    %cst_5 = arith.constant 0.000000e+00 : f32
    %6 = vector.broadcast %cst_5 : f32 to vector<8x32xf32>
    %7 = arith.maximumf %5, %6 : vector<8x32xf32>
    %c0_6 = arith.constant 0 : index
    %c0_7 = arith.constant 0 : index
    %8 = vector.load %arg16[%c0_6, %c0_7] : memref<8x160xf32, #tpu.memory_space<vmem>>, vector<8x32xf32>
    tpu.vector_store %arg16[%c0_6, %c0_7], %7 {strides = array<i32>} : memref<8x160xf32, #tpu.memory_space<vmem>>, vector<8x32xf32>,
    %c0_8 = arith.constant 0 : index
    %c0_9 = arith.constant 0 : index
    %9 = vector.load %arg4[%c0_8, %c0_9] : memref<8x1600xbf16, #tpu.memory_space<vmem>>, vector<8x1600xbf16>
    %c0_10 = arith.constant 0 : index
    %c0_11 = arith.constant 0 : index
    %10 = vector.load %arg5[%c0_10, %c0_11] : memref<1600x32xbf16, #tpu.memory_space<vmem>>, vector<1600x32xbf16>
    %cst_12 = arith.constant dense<0.000000e+00> : vector<8x32xf32>
    %11 = tpu.matmul %9, %10, %cst_12 {dimension_numbers = #tpu.dot_dimension_numbers<[1], [0], [0], [1], [0, 0, 1, 1], [], []>} : vector<8x1600xbf16>, vector<1600x32xbf16>, vector<8x32xf32> -> vector<8x32xf32>
    %c0_13 = arith.constant 0 : index
    %c0_14 = arith.constant 0 : index
    %12 = vector.load %arg6[%c0_13, %c0_14] : memref<1x32xf32, #tpu.memory_space<vmem>>, vector<1x32xf32>
    %13 = vector.broadcast %12 : vector<1x32xf32> to vector<8x32xf32>
    %14 = arith.addf %11, %13 : vector<8x32xf32>
    %cst_15 = arith.constant 0.000000e+00 : f32
    %15 = vector.broadcast %cst_15 : f32 to vector<8x32xf32>
    %16 = arith.maximumf %14, %15 : vector<8x32xf32>
    %c0_16 = arith.constant 0 : index
    %c32 = arith.constant 32 : index
    %17 = vector.load %arg16[%c0_16, %c32] : memref<8x160xf32, #tpu.memory_space<vmem>>, vector<8x32xf32>
    tpu.vector_store %arg16[%c0_16, %c32], %16 {strides = array<i32>} : memref<8x160xf32, #tpu.memory_space<vmem>>, vector<8x32xf32>,
    %c0_17 = arith.constant 0 : index
    %c0_18 = arith.constant 0 : index
    %18 = vector.load %arg7[%c0_17, %c0_18] : memref<8x8000xbf16, #tpu.memory_space<vmem>>, vector<8x8000xbf16>
    %c0_19 = arith.constant 0 : index
    %c0_20 = arith.constant 0 : index
    %19 = vector.load %arg8[%c0_19, %c0_20] : memref<8000x32xbf16, #tpu.memory_space<vmem>>, vector<8000x32xbf16>
    %cst_21 = arith.constant dense<0.000000e+00> : vector<8x32xf32>
    %20 = tpu.matmul %18, %19, %cst_21 {dimension_numbers = #tpu.dot_dimension_numbers<[1], [0], [0], [1], [0, 0, 1, 1], [], []>} : vector<8x8000xbf16>, vector<8000x32xbf16>, vector<8x32xf32> -> vector<8x32xf32>
    %c0_22 = arith.constant 0 : index
    %c0_23 = arith.constant 0 : index
    %21 = vector.load %arg9[%c0_22, %c0_23] : memref<1x32xf32, #tpu.memory_space<vmem>>, vector<1x32xf32>
    %22 = vector.broadcast %21 : vector<1x32xf32> to vector<8x32xf32>
    %23 = arith.addf %20, %22 : vector<8x32xf32>
    %cst_24 = arith.constant 0.000000e+00 : f32
    %24 = vector.broadcast %cst_24 : f32 to vector<8x32xf32>
    %25 = arith.maximumf %23, %24 : vector<8x32xf32>
    %c0_25 = arith.constant 0 : index
    %c64 = arith.constant 64 : index
    %26 = vector.load %arg16[%c0_25, %c64] : memref<8x160xf32, #tpu.memory_space<vmem>>, vector<8x32xf32>
    tpu.vector_store %arg16[%c0_25, %c64], %25 {strides = array<i32>} : memref<8x160xf32, #tpu.memory_space<vmem>>, vector<8x32xf32>,
    %c0_26 = arith.constant 0 : index
    %c0_27 = arith.constant 0 : index
    %27 = vector.load %arg10[%c0_26, %c0_27] : memref<8x22xbf16, #tpu.memory_space<vmem>>, vector<8x22xbf16>
    %c0_28 = arith.constant 0 : index
    %c0_29 = arith.constant 0 : index
    %28 = vector.load %arg11[%c0_28, %c0_29] : memref<22x32xbf16, #tpu.memory_space<vmem>>, vector<22x32xbf16>
    %cst_30 = arith.constant dense<0.000000e+00> : vector<8x32xf32>
    %29 = tpu.matmul %27, %28, %cst_30 {dimension_numbers = #tpu.dot_dimension_numbers<[1], [0], [0], [1], [0, 0, 1, 1], [], []>} : vector<8x22xbf16>, vector<22x32xbf16>, vector<8x32xf32> -> vector<8x32xf32>
    %c0_31 = arith.constant 0 : index
    %c0_32 = arith.constant 0 : index
    %30 = vector.load %arg12[%c0_31, %c0_32] : memref<1x32xf32, #tpu.memory_space<vmem>>, vector<1x32xf32>
    %31 = vector.broadcast %30 : vector<1x32xf32> to vector<8x32xf32>
    %32 = arith.addf %29, %31 : vector<8x32xf32>
    %cst_33 = arith.constant 0.000000e+00 : f32
    %33 = vector.broadcast %cst_33 : f32 to vector<8x32xf32>
    %34 = arith.maximumf %32, %33 : vector<8x32xf32>
    %c0_34 = arith.constant 0 : index
    %c96 = arith.constant 96 : index
    %35 = vector.load %arg16[%c0_34, %c96] : memref<8x160xf32, #tpu.memory_space<vmem>>, vector<8x32xf32>
    tpu.vector_store %arg16[%c0_34, %c96], %34 {strides = array<i32>} : memref<8x160xf32, #tpu.memory_space<vmem>>, vector<8x32xf32>,
    %c0_35 = arith.constant 0 : index
    %c0_36 = arith.constant 0 : index
    %36 = vector.load %arg13[%c0_35, %c0_36] : memref<8x273xbf16, #tpu.memory_space<vmem>>, vector<8x273xbf16>
    %c0_37 = arith.constant 0 : index
    %c0_38 = arith.constant 0 : index
    %37 = vector.load %arg14[%c0_37, %c0_38] : memref<273x32xbf16, #tpu.memory_space<vmem>>, vector<273x32xbf16>
    %cst_39 = arith.constant dense<0.000000e+00> : vector<8x32xf32>
    %38 = tpu.matmul %36, %37, %cst_39 {dimension_numbers = #tpu.dot_dimension_numbers<[1], [0], [0], [1], [0, 0, 1, 1], [], []>} : vector<8x273xbf16>, vector<273x32xbf16>, vector<8x32xf32> -> vector<8x32xf32>
    %c0_40 = arith.constant 0 : index
    %c0_41 = arith.constant 0 : index
    %39 = vector.load %arg15[%c0_40, %c0_41] : memref<1x32xf32, #tpu.memory_space<vmem>>, vector<1x32xf32>
    %40 = vector.broadcast %39 : vector<1x32xf32> to vector<8x32xf32>
    %41 = arith.addf %38, %40 : vector<8x32xf32>
    %cst_42 = arith.constant 0.000000e+00 : f32
    %42 = vector.broadcast %cst_42 : f32 to vector<8x32xf32>
    %43 = arith.maximumf %41, %42 : vector<8x32xf32>
    %c0_43 = arith.constant 0 : index
    %c128 = arith.constant 128 : index
    %44 = vector.load %arg16[%c0_43, %c128] : memref<8x160xf32, #tpu.memory_space<vmem>>, vector<8x32xf32>
    tpu.vector_store %arg16[%c0_43, %c128], %43 {strides = array<i32>} : memref<8x160xf32, #tpu.memory_space<vmem>>, vector<8x32xf32>,
    return
  }
  func.func @transform_0(%arg0: i32) -> (i32, i32) {
    %c0_i32 = arith.constant 0 : i32
    %c0_i32_0 = arith.constant 0 : i32
    return %arg0, %c0_i32 : i32, i32
  }
  func.func @transform_1(%arg0: i32) -> (i32, i32) {
    %c0_i32 = arith.constant 0 : i32
    %c0_i32_0 = arith.constant 0 : i32
    %c0_i32_1 = arith.constant 0 : i32
    return %c0_i32, %c0_i32_0 : i32, i32
  }
  func.func @transform_2(%arg0: i32) -> (i32, i32) {
    %c0_i32 = arith.constant 0 : i32
    %c0_i32_0 = arith.constant 0 : i32
    %c0_i32_1 = arith.constant 0 : i32
    return %c0_i32, %c0_i32_0 : i32, i32
  }
  func.func @transform_3(%arg0: i32) -> (i32, i32) {
    %c0_i32 = arith.constant 0 : i32
    %c0_i32_0 = arith.constant 0 : i32
    return %arg0, %c0_i32 : i32, i32
  }
  func.func @transform_4(%arg0: i32) -> (i32, i32) {
    %c0_i32 = arith.constant 0 : i32
    %c0_i32_0 = arith.constant 0 : i32
    %c0_i32_1 = arith.constant 0 : i32
    return %c0_i32, %c0_i32_0 : i32, i32
  }
  func.func @transform_5(%arg0: i32) -> (i32, i32) {
    %c0_i32 = arith.constant 0 : i32
    %c0_i32_0 = arith.constant 0 : i32
    %c0_i32_1 = arith.constant 0 : i32
    return %c0_i32, %c0_i32_0 : i32, i32
  }
  func.func @transform_6(%arg0: i32) -> (i32, i32) {
    %c0_i32 = arith.constant 0 : i32
    %c0_i32_0 = arith.constant 0 : i32
    return %arg0, %c0_i32 : i32, i32
  }
  func.func @transform_7(%arg0: i32) -> (i32, i32) {
    %c0_i32 = arith.constant 0 : i32
    %c0_i32_0 = arith.constant 0 : i32
    %c0_i32_1 = arith.constant 0 : i32
    return %c0_i32, %c0_i32_0 : i32, i32
  }
  func.func @transform_8(%arg0: i32) -> (i32, i32) {
    %c0_i32 = arith.constant 0 : i32
    %c0_i32_0 = arith.constant 0 : i32
    %c0_i32_1 = arith.constant 0 : i32
    return %c0_i32, %c0_i32_0 : i32, i32
  }
  func.func @transform_9(%arg0: i32) -> (i32, i32) {
    %c0_i32 = arith.constant 0 : i32
    %c0_i32_0 = arith.constant 0 : i32
    return %arg0, %c0_i32 : i32, i32
  }
  func.func @transform_10(%arg0: i32) -> (i32, i32) {
    %c0_i32 = arith.constant 0 : i32
    %c0_i32_0 = arith.constant 0 : i32
    %c0_i32_1 = arith.constant 0 : i32
    return %c0_i32, %c0_i32_0 : i32, i32
  }
  func.func @transform_11(%arg0: i32) -> (i32, i32) {
    %c0_i32 = arith.constant 0 : i32
    %c0_i32_0 = arith.constant 0 : i32
    %c0_i32_1 = arith.constant 0 : i32
    return %c0_i32, %c0_i32_0 : i32, i32
  }
  func.func @transform_12(%arg0: i32) -> (i32, i32) {
    %c0_i32 = arith.constant 0 : i32
    %c0_i32_0 = arith.constant 0 : i32
    return %arg0, %c0_i32 : i32, i32
  }
  func.func @transform_13(%arg0: i32) -> (i32, i32) {
    %c0_i32 = arith.constant 0 : i32
    %c0_i32_0 = arith.constant 0 : i32
    %c0_i32_1 = arith.constant 0 : i32
    return %c0_i32, %c0_i32_0 : i32, i32
  }
  func.func @transform_14(%arg0: i32) -> (i32, i32) {
    %c0_i32 = arith.constant 0 : i32
    %c0_i32_0 = arith.constant 0 : i32
    %c0_i32_1 = arith.constant 0 : i32
    return %c0_i32, %c0_i32_0 : i32, i32
  }
  func.func @transform_15(%arg0: i32) -> (i32, i32) {
    %c0_i32 = arith.constant 0 : i32
    %c0_i32_0 = arith.constant 0 : i32
    return %arg0, %c0_i32 : i32, i32
  }
}

module attributes {stable_mosaic.version = 11 : i64} {
  func.func @_projection_kernel(%arg0: i32, %arg1: memref<8x1024xbf16, #tpu.memory_space<vmem>>, %arg2: memref<1024x32xbf16, #tpu.memory_space<vmem>>, %arg3: memref<1x32xf32, #tpu.memory_space<vmem>>, %arg4: memref<8x1024xbf16, #tpu.memory_space<vmem>>, %arg5: memref<1024x32xbf16, #tpu.memory_space<vmem>>, %arg6: memref<1x32xf32, #tpu.memory_space<vmem>>, %arg7: memref<8x881xbf16, #tpu.memory_space<vmem>>, %arg8: memref<881x32xbf16, #tpu.memory_space<vmem>>, %arg9: memref<1x32xf32, #tpu.memory_space<vmem>>, %arg10: memref<8x166xbf16, #tpu.memory_space<vmem>>, %arg11: memref<166x32xbf16, #tpu.memory_space<vmem>>, %arg12: memref<1x32xf32, #tpu.memory_space<vmem>>, %arg13: memref<8x2048xbf16, #tpu.memory_space<vmem>>, %arg14: memref<2048x32xbf16, #tpu.memory_space<vmem>>, %arg15: memref<1x32xf32, #tpu.memory_space<vmem>>, %arg16: memref<8x160xf32, #tpu.memory_space<vmem>>) attributes {dimension_semantics = [#tpu.dimension_semantics<parallel>], iteration_bounds = array<i64: 1>, scalar_prefetch = 0 : i64, scratch_operands = 0 : i64, tpu.core_type = #tpu.core_type<tc>, window_params = [{transform_indices = @transform_0, window_bounds = array<i64: 8, 1024>}, {pipeline_mode = #tpu.pipeline_mode<synchronous>, transform_indices = @transform_1, window_bounds = array<i64: 1024, 32>}, {pipeline_mode = #tpu.pipeline_mode<synchronous>, transform_indices = @transform_2, window_bounds = array<i64: 1, 32>}, {transform_indices = @transform_3, window_bounds = array<i64: 8, 1024>}, {pipeline_mode = #tpu.pipeline_mode<synchronous>, transform_indices = @transform_4, window_bounds = array<i64: 1024, 32>}, {pipeline_mode = #tpu.pipeline_mode<synchronous>, transform_indices = @transform_5, window_bounds = array<i64: 1, 32>}, {transform_indices = @transform_6, window_bounds = array<i64: 8, 881>}, {pipeline_mode = #tpu.pipeline_mode<synchronous>, transform_indices = @transform_7, window_bounds = array<i64: 881, 32>}, {pipeline_mode = #tpu.pipeline_mode<synchronous>, transform_indices = @transform_8, window_bounds = array<i64: 1, 32>}, {transform_indices = @transform_9, window_bounds = array<i64: 8, 166>}, {pipeline_mode = #tpu.pipeline_mode<synchronous>, transform_indices = @transform_10, window_bounds = array<i64: 166, 32>}, {pipeline_mode = #tpu.pipeline_mode<synchronous>, transform_indices = @transform_11, window_bounds = array<i64: 1, 32>}, {transform_indices = @transform_12, window_bounds = array<i64: 8, 2048>}, {pipeline_mode = #tpu.pipeline_mode<synchronous>, transform_indices = @transform_13, window_bounds = array<i64: 2048, 32>}, {pipeline_mode = #tpu.pipeline_mode<synchronous>, transform_indices = @transform_14, window_bounds = array<i64: 1, 32>}, {transform_indices = @transform_15, window_bounds = array<i64: 8, 160>}]} {
    %c0 = arith.constant 0 : index
    %c0_0 = arith.constant 0 : index
    %0 = vector.load %arg1[%c0, %c0_0] : memref<8x1024xbf16, #tpu.memory_space<vmem>>, vector<8x1024xbf16>
    %c0_1 = arith.constant 0 : index
    %c0_2 = arith.constant 0 : index
    %1 = vector.load %arg2[%c0_1, %c0_2] : memref<1024x32xbf16, #tpu.memory_space<vmem>>, vector<1024x32xbf16>
    %cst = arith.constant dense<0.000000e+00> : vector<8x32xf32>
    %2 = tpu.matmul %0, %1, %cst {dimension_numbers = #tpu.dot_dimension_numbers<[1], [0], [0], [1], [0, 0, 1, 1], [], []>} : vector<8x1024xbf16>, vector<1024x32xbf16>, vector<8x32xf32> -> vector<8x32xf32>
    %c0_3 = arith.constant 0 : index
    %c0_4 = arith.constant 0 : index
    %3 = vector.load %arg3[%c0_3, %c0_4] : memref<1x32xf32, #tpu.memory_space<vmem>>, vector<1x32xf32>
    %4 = vector.broadcast %3 : vector<1x32xf32> to vector<8x32xf32>
    %5 = arith.addf %2, %4 : vector<8x32xf32>
    %cst_5 = arith.constant 0.000000e+00 : f32
    %6 = vector.broadcast %cst_5 : f32 to vector<8x32xf32>
    %7 = arith.maximumf %5, %6 : vector<8x32xf32>
    %c0_6 = arith.constant 0 : index
    %c0_7 = arith.constant 0 : index
    %8 = vector.load %arg16[%c0_6, %c0_7] : memref<8x160xf32, #tpu.memory_space<vmem>>, vector<8x32xf32>
    tpu.vector_store %arg16[%c0_6, %c0_7], %7 {strides = array<i32>} : memref<8x160xf32, #tpu.memory_space<vmem>>, vector<8x32xf32>,
    %c0_8 = arith.constant 0 : index
    %c0_9 = arith.constant 0 : index
    %9 = vector.load %arg4[%c0_8, %c0_9] : memref<8x1024xbf16, #tpu.memory_space<vmem>>, vector<8x1024xbf16>
    %c0_10 = arith.constant 0 : index
    %c0_11 = arith.constant 0 : index
    %10 = vector.load %arg5[%c0_10, %c0_11] : memref<1024x32xbf16, #tpu.memory_space<vmem>>, vector<1024x32xbf16>
    %cst_12 = arith.constant dense<0.000000e+00> : vector<8x32xf32>
    %11 = tpu.matmul %9, %10, %cst_12 {dimension_numbers = #tpu.dot_dimension_numbers<[1], [0], [0], [1], [0, 0, 1, 1], [], []>} : vector<8x1024xbf16>, vector<1024x32xbf16>, vector<8x32xf32> -> vector<8x32xf32>
    %c0_13 = arith.constant 0 : index
    %c0_14 = arith.constant 0 : index
    %12 = vector.load %arg6[%c0_13, %c0_14] : memref<1x32xf32, #tpu.memory_space<vmem>>, vector<1x32xf32>
    %13 = vector.broadcast %12 : vector<1x32xf32> to vector<8x32xf32>
    %14 = arith.addf %11, %13 : vector<8x32xf32>
    %cst_15 = arith.constant 0.000000e+00 : f32
    %15 = vector.broadcast %cst_15 : f32 to vector<8x32xf32>
    %16 = arith.maximumf %14, %15 : vector<8x32xf32>
    %c0_16 = arith.constant 0 : index
    %c32 = arith.constant 32 : index
    %17 = vector.load %arg16[%c0_16, %c32] : memref<8x160xf32, #tpu.memory_space<vmem>>, vector<8x32xf32>
    tpu.vector_store %arg16[%c0_16, %c32], %16 {strides = array<i32>} : memref<8x160xf32, #tpu.memory_space<vmem>>, vector<8x32xf32>,
    %c0_17 = arith.constant 0 : index
    %c0_18 = arith.constant 0 : index
    %18 = vector.load %arg7[%c0_17, %c0_18] : memref<8x881xbf16, #tpu.memory_space<vmem>>, vector<8x881xbf16>
    %c0_19 = arith.constant 0 : index
    %c0_20 = arith.constant 0 : index
    %19 = vector.load %arg8[%c0_19, %c0_20] : memref<881x32xbf16, #tpu.memory_space<vmem>>, vector<881x32xbf16>
    %cst_21 = arith.constant dense<0.000000e+00> : vector<8x32xf32>
    %20 = tpu.matmul %18, %19, %cst_21 {dimension_numbers = #tpu.dot_dimension_numbers<[1], [0], [0], [1], [0, 0, 1, 1], [], []>} : vector<8x881xbf16>, vector<881x32xbf16>, vector<8x32xf32> -> vector<8x32xf32>
    %c0_22 = arith.constant 0 : index
    %c0_23 = arith.constant 0 : index
    %21 = vector.load %arg9[%c0_22, %c0_23] : memref<1x32xf32, #tpu.memory_space<vmem>>, vector<1x32xf32>
    %22 = vector.broadcast %21 : vector<1x32xf32> to vector<8x32xf32>
    %23 = arith.addf %20, %22 : vector<8x32xf32>
    %cst_24 = arith.constant 0.000000e+00 : f32
    %24 = vector.broadcast %cst_24 : f32 to vector<8x32xf32>
    %25 = arith.maximumf %23, %24 : vector<8x32xf32>
    %c0_25 = arith.constant 0 : index
    %c64 = arith.constant 64 : index
    %26 = vector.load %arg16[%c0_25, %c64] : memref<8x160xf32, #tpu.memory_space<vmem>>, vector<8x32xf32>
    tpu.vector_store %arg16[%c0_25, %c64], %25 {strides = array<i32>} : memref<8x160xf32, #tpu.memory_space<vmem>>, vector<8x32xf32>,
    %c0_26 = arith.constant 0 : index
    %c0_27 = arith.constant 0 : index
    %27 = vector.load %arg10[%c0_26, %c0_27] : memref<8x166xbf16, #tpu.memory_space<vmem>>, vector<8x166xbf16>
    %c0_28 = arith.constant 0 : index
    %c0_29 = arith.constant 0 : index
    %28 = vector.load %arg11[%c0_28, %c0_29] : memref<166x32xbf16, #tpu.memory_space<vmem>>, vector<166x32xbf16>
    %cst_30 = arith.constant dense<0.000000e+00> : vector<8x32xf32>
    %29 = tpu.matmul %27, %28, %cst_30 {dimension_numbers = #tpu.dot_dimension_numbers<[1], [0], [0], [1], [0, 0, 1, 1], [], []>} : vector<8x166xbf16>, vector<166x32xbf16>, vector<8x32xf32> -> vector<8x32xf32>
    %c0_31 = arith.constant 0 : index
    %c0_32 = arith.constant 0 : index
    %30 = vector.load %arg12[%c0_31, %c0_32] : memref<1x32xf32, #tpu.memory_space<vmem>>, vector<1x32xf32>
    %31 = vector.broadcast %30 : vector<1x32xf32> to vector<8x32xf32>
    %32 = arith.addf %29, %31 : vector<8x32xf32>
    %cst_33 = arith.constant 0.000000e+00 : f32
    %33 = vector.broadcast %cst_33 : f32 to vector<8x32xf32>
    %34 = arith.maximumf %32, %33 : vector<8x32xf32>
    %c0_34 = arith.constant 0 : index
    %c96 = arith.constant 96 : index
    %35 = vector.load %arg16[%c0_34, %c96] : memref<8x160xf32, #tpu.memory_space<vmem>>, vector<8x32xf32>
    tpu.vector_store %arg16[%c0_34, %c96], %34 {strides = array<i32>} : memref<8x160xf32, #tpu.memory_space<vmem>>, vector<8x32xf32>,
    %c0_35 = arith.constant 0 : index
    %c0_36 = arith.constant 0 : index
    %36 = vector.load %arg13[%c0_35, %c0_36] : memref<8x2048xbf16, #tpu.memory_space<vmem>>, vector<8x2048xbf16>
    %c0_37 = arith.constant 0 : index
    %c0_38 = arith.constant 0 : index
    %37 = vector.load %arg14[%c0_37, %c0_38] : memref<2048x32xbf16, #tpu.memory_space<vmem>>, vector<2048x32xbf16>
    %cst_39 = arith.constant dense<0.000000e+00> : vector<8x32xf32>
    %38 = tpu.matmul %36, %37, %cst_39 {dimension_numbers = #tpu.dot_dimension_numbers<[1], [0], [0], [1], [0, 0, 1, 1], [], []>} : vector<8x2048xbf16>, vector<2048x32xbf16>, vector<8x32xf32> -> vector<8x32xf32>
    %c0_40 = arith.constant 0 : index
    %c0_41 = arith.constant 0 : index
    %39 = vector.load %arg15[%c0_40, %c0_41] : memref<1x32xf32, #tpu.memory_space<vmem>>, vector<1x32xf32>
    %40 = vector.broadcast %39 : vector<1x32xf32> to vector<8x32xf32>
    %41 = arith.addf %38, %40 : vector<8x32xf32>
    %cst_42 = arith.constant 0.000000e+00 : f32
    %42 = vector.broadcast %cst_42 : f32 to vector<8x32xf32>
    %43 = arith.maximumf %41, %42 : vector<8x32xf32>
    %c0_43 = arith.constant 0 : index
    %c128 = arith.constant 128 : index
    %44 = vector.load %arg16[%c0_43, %c128] : memref<8x160xf32, #tpu.memory_space<vmem>>, vector<8x32xf32>
    tpu.vector_store %arg16[%c0_43, %c128], %43 {strides = array<i32>} : memref<8x160xf32, #tpu.memory_space<vmem>>, vector<8x32xf32>,
    return
  }
  func.func @transform_0(%arg0: i32) -> (i32, i32) {
    %c0_i32 = arith.constant 0 : i32
    %c0_i32_0 = arith.constant 0 : i32
    return %arg0, %c0_i32 : i32, i32
  }
  func.func @transform_1(%arg0: i32) -> (i32, i32) {
    %c0_i32 = arith.constant 0 : i32
    %c0_i32_0 = arith.constant 0 : i32
    %c0_i32_1 = arith.constant 0 : i32
    return %c0_i32, %c0_i32_0 : i32, i32
  }
  func.func @transform_2(%arg0: i32) -> (i32, i32) {
    %c0_i32 = arith.constant 0 : i32
    %c0_i32_0 = arith.constant 0 : i32
    %c0_i32_1 = arith.constant 0 : i32
    return %c0_i32, %c0_i32_0 : i32, i32
  }
  func.func @transform_3(%arg0: i32) -> (i32, i32) {
    %c0_i32 = arith.constant 0 : i32
    %c0_i32_0 = arith.constant 0 : i32
    return %arg0, %c0_i32 : i32, i32
  }
  func.func @transform_4(%arg0: i32) -> (i32, i32) {
    %c0_i32 = arith.constant 0 : i32
    %c0_i32_0 = arith.constant 0 : i32
    %c0_i32_1 = arith.constant 0 : i32
    return %c0_i32, %c0_i32_0 : i32, i32
  }
  func.func @transform_5(%arg0: i32) -> (i32, i32) {
    %c0_i32 = arith.constant 0 : i32
    %c0_i32_0 = arith.constant 0 : i32
    %c0_i32_1 = arith.constant 0 : i32
    return %c0_i32, %c0_i32_0 : i32, i32
  }
  func.func @transform_6(%arg0: i32) -> (i32, i32) {
    %c0_i32 = arith.constant 0 : i32
    %c0_i32_0 = arith.constant 0 : i32
    return %arg0, %c0_i32 : i32, i32
  }
  func.func @transform_7(%arg0: i32) -> (i32, i32) {
    %c0_i32 = arith.constant 0 : i32
    %c0_i32_0 = arith.constant 0 : i32
    %c0_i32_1 = arith.constant 0 : i32
    return %c0_i32, %c0_i32_0 : i32, i32
  }
  func.func @transform_8(%arg0: i32) -> (i32, i32) {
    %c0_i32 = arith.constant 0 : i32
    %c0_i32_0 = arith.constant 0 : i32
    %c0_i32_1 = arith.constant 0 : i32
    return %c0_i32, %c0_i32_0 : i32, i32
  }
  func.func @transform_9(%arg0: i32) -> (i32, i32) {
    %c0_i32 = arith.constant 0 : i32
    %c0_i32_0 = arith.constant 0 : i32
    return %arg0, %c0_i32 : i32, i32
  }
  func.func @transform_10(%arg0: i32) -> (i32, i32) {
    %c0_i32 = arith.constant 0 : i32
    %c0_i32_0 = arith.constant 0 : i32
    %c0_i32_1 = arith.constant 0 : i32
    return %c0_i32, %c0_i32_0 : i32, i32
  }
  func.func @transform_11(%arg0: i32) -> (i32, i32) {
    %c0_i32 = arith.constant 0 : i32
    %c0_i32_0 = arith.constant 0 : i32
    %c0_i32_1 = arith.constant 0 : i32
    return %c0_i32, %c0_i32_0 : i32, i32
  }
  func.func @transform_12(%arg0: i32) -> (i32, i32) {
    %c0_i32 = arith.constant 0 : i32
    %c0_i32_0 = arith.constant 0 : i32
    return %arg0, %c0_i32 : i32, i32
  }
  func.func @transform_13(%arg0: i32) -> (i32, i32) {
    %c0_i32 = arith.constant 0 : i32
    %c0_i32_0 = arith.constant 0 : i32
    %c0_i32_1 = arith.constant 0 : i32
    return %c0_i32, %c0_i32_0 : i32, i32
  }
  func.func @transform_14(%arg0: i32) -> (i32, i32) {
    %c0_i32 = arith.constant 0 : i32
    %c0_i32_0 = arith.constant 0 : i32
    %c0_i32_1 = arith.constant 0 : i32
    return %c0_i32, %c0_i32_0 : i32, i32
  }
  func.func @transform_15(%arg0: i32) -> (i32, i32) {
    %c0_i32 = arith.constant 0 : i32
    %c0_i32_0 = arith.constant 0 : i32
    return %arg0, %c0_i32 : i32, i32
  }
}

module attributes {stable_mosaic.version = 11 : i64} {
  func.func @_gather_kernel(%arg0: i32, %arg1: memref<8xi32, #tpu.memory_space<smem>>, %arg2: memref<8xi32, #tpu.memory_space<smem>>, %arg3: memref<6x160xf32, #tpu.memory_space<any>>, %arg4: memref<5x160xf32, #tpu.memory_space<any>>, %arg5: memref<8x160xf32, #tpu.memory_space<vmem>>, %arg6: memref<8x160xf32, #tpu.memory_space<vmem>>, %arg7: memref<8x160xf32, #tpu.memory_space<vmem>>, %arg8: memref<8x160xf32, #tpu.memory_space<vmem>>, %arg9: memref<2x!tpu.dma_semaphore, #tpu.memory_space<semaphore_mem>>) attributes {dimension_semantics = [#tpu.dimension_semantics<parallel>], iteration_bounds = array<i64: 1>, scalar_prefetch = 2 : i64, scratch_operands = 3 : i64, tpu.core_type = #tpu.core_type<tc>, window_params = [{}, {}, {transform_indices = @transform_2, window_bounds = array<i64: 8, 160>}, {transform_indices = @transform_3, window_bounds = array<i64: 8, 160>}]} {
    %c8_i32 = arith.constant 8 : i32
    %0 = arith.muli %arg0, %c8_i32 : i32
    %c0_i32 = arith.constant 0 : i32
    %1 = arith.addi %0, %c0_i32 : i32
    %2 = arith.index_cast %1 : i32 to index
    %3 = memref.load %arg1[%2] : memref<8xi32, #tpu.memory_space<smem>>
    %c0_i32_0 = arith.constant 0 : i32
    %4 = arith.addi %0, %c0_i32_0 : i32
    %5 = arith.index_cast %4 : i32 to index
    %6 = memref.load %arg2[%5] : memref<8xi32, #tpu.memory_space<smem>>
    %c1_i32 = arith.constant 1 : i32
    %7 = arith.addi %0, %c1_i32 : i32
    %8 = arith.index_cast %7 : i32 to index
    %9 = memref.load %arg1[%8] : memref<8xi32, #tpu.memory_space<smem>>
    %c1_i32_1 = arith.constant 1 : i32
    %10 = arith.addi %0, %c1_i32_1 : i32
    %11 = arith.index_cast %10 : i32 to index
    %12 = memref.load %arg2[%11] : memref<8xi32, #tpu.memory_space<smem>>
    %c2_i32 = arith.constant 2 : i32
    %13 = arith.addi %0, %c2_i32 : i32
    %14 = arith.index_cast %13 : i32 to index
    %15 = memref.load %arg1[%14] : memref<8xi32, #tpu.memory_space<smem>>
    %c2_i32_2 = arith.constant 2 : i32
    %16 = arith.addi %0, %c2_i32_2 : i32
    %17 = arith.index_cast %16 : i32 to index
    %18 = memref.load %arg2[%17] : memref<8xi32, #tpu.memory_space<smem>>
    %c3_i32 = arith.constant 3 : i32
    %19 = arith.addi %0, %c3_i32 : i32
    %20 = arith.index_cast %19 : i32 to index
    %21 = memref.load %arg1[%20] : memref<8xi32, #tpu.memory_space<smem>>
    %c3_i32_3 = arith.constant 3 : i32
    %22 = arith.addi %0, %c3_i32_3 : i32
    %23 = arith.index_cast %22 : i32 to index
    %24 = memref.load %arg2[%23] : memref<8xi32, #tpu.memory_space<smem>>
    %c4_i32 = arith.constant 4 : i32
    %25 = arith.addi %0, %c4_i32 : i32
    %26 = arith.index_cast %25 : i32 to index
    %27 = memref.load %arg1[%26] : memref<8xi32, #tpu.memory_space<smem>>
    %c4_i32_4 = arith.constant 4 : i32
    %28 = arith.addi %0, %c4_i32_4 : i32
    %29 = arith.index_cast %28 : i32 to index
    %30 = memref.load %arg2[%29] : memref<8xi32, #tpu.memory_space<smem>>
    %c5_i32 = arith.constant 5 : i32
    %31 = arith.addi %0, %c5_i32 : i32
    %32 = arith.index_cast %31 : i32 to index
    %33 = memref.load %arg1[%32] : memref<8xi32, #tpu.memory_space<smem>>
    %c5_i32_5 = arith.constant 5 : i32
    %34 = arith.addi %0, %c5_i32_5 : i32
    %35 = arith.index_cast %34 : i32 to index
    %36 = memref.load %arg2[%35] : memref<8xi32, #tpu.memory_space<smem>>
    %c6_i32 = arith.constant 6 : i32
    %37 = arith.addi %0, %c6_i32 : i32
    %38 = arith.index_cast %37 : i32 to index
    %39 = memref.load %arg1[%38] : memref<8xi32, #tpu.memory_space<smem>>
    %c6_i32_6 = arith.constant 6 : i32
    %40 = arith.addi %0, %c6_i32_6 : i32
    %41 = arith.index_cast %40 : i32 to index
    %42 = memref.load %arg2[%41] : memref<8xi32, #tpu.memory_space<smem>>
    %c7_i32 = arith.constant 7 : i32
    %43 = arith.addi %0, %c7_i32 : i32
    %44 = arith.index_cast %43 : i32 to index
    %45 = memref.load %arg1[%44] : memref<8xi32, #tpu.memory_space<smem>>
    %c7_i32_7 = arith.constant 7 : i32
    %46 = arith.addi %0, %c7_i32_7 : i32
    %47 = arith.index_cast %46 : i32 to index
    %48 = memref.load %arg2[%47] : memref<8xi32, #tpu.memory_space<smem>>
    %c0_i32_8 = arith.constant 0 : i32
    %c0_i32_9 = arith.constant 0 : i32
    %c0_i32_10 = arith.constant 0 : i32
    %49 = tpu.memref_slice %arg3[%3, %c0_i32_10] : memref<6x160xf32, #tpu.memory_space<any>> -> memref<1x160xf32, #tpu.memory_space<any>>
    %50 = tpu.memref_squeeze %49 : memref<1x160xf32, #tpu.memory_space<any>> -> memref<160xf32, #tpu.memory_space<any>>
    %c0_i32_11 = arith.constant 0 : i32
    %51 = tpu.memref_slice %arg7[%c0_i32_8, %c0_i32_11] : memref<8x160xf32, #tpu.memory_space<vmem>> -> memref<1x160xf32, #tpu.memory_space<vmem>>
    %52 = tpu.memref_squeeze %51 : memref<1x160xf32, #tpu.memory_space<vmem>> -> memref<160xf32, #tpu.memory_space<vmem>>
    %53 = tpu.memref_slice %arg9[%c0_i32_9] : memref<2x!tpu.dma_semaphore, #tpu.memory_space<semaphore_mem>> -> memref<1x!tpu.dma_semaphore, #tpu.memory_space<semaphore_mem>>
    %54 = tpu.memref_squeeze %53 : memref<1x!tpu.dma_semaphore, #tpu.memory_space<semaphore_mem>> -> memref<!tpu.dma_semaphore, #tpu.memory_space<semaphore_mem>>
    tpu.enqueue_dma source(%50 : memref<160xf32, #tpu.memory_space<any>>) target(%52 : memref<160xf32, #tpu.memory_space<vmem>>) target_semaphore(%54 : memref<!tpu.dma_semaphore, #tpu.memory_space<semaphore_mem>>)
    %c0_i32_12 = arith.constant 0 : i32
    %c1_i32_13 = arith.constant 1 : i32
    %c0_i32_14 = arith.constant 0 : i32
    %55 = tpu.memref_slice %arg4[%6, %c0_i32_14] : memref<5x160xf32, #tpu.memory_space<any>> -> memref<1x160xf32, #tpu.memory_space<any>>
    %56 = tpu.memref_squeeze %55 : memref<1x160xf32, #tpu.memory_space<any>> -> memref<160xf32, #tpu.memory_space<any>>
    %c0_i32_15 = arith.constant 0 : i32
    %57 = tpu.memref_slice %arg8[%c0_i32_12, %c0_i32_15] : memref<8x160xf32, #tpu.memory_space<vmem>> -> memref<1x160xf32, #tpu.memory_space<vmem>>
    %58 = tpu.memref_squeeze %57 : memref<1x160xf32, #tpu.memory_space<vmem>> -> memref<160xf32, #tpu.memory_space<vmem>>
    %59 = tpu.memref_slice %arg9[%c1_i32_13] : memref<2x!tpu.dma_semaphore, #tpu.memory_space<semaphore_mem>> -> memref<1x!tpu.dma_semaphore, #tpu.memory_space<semaphore_mem>>
    %60 = tpu.memref_squeeze %59 : memref<1x!tpu.dma_semaphore, #tpu.memory_space<semaphore_mem>> -> memref<!tpu.dma_semaphore, #tpu.memory_space<semaphore_mem>>
    tpu.enqueue_dma source(%56 : memref<160xf32, #tpu.memory_space<any>>) target(%58 : memref<160xf32, #tpu.memory_space<vmem>>) target_semaphore(%60 : memref<!tpu.dma_semaphore, #tpu.memory_space<semaphore_mem>>)
    %c1_i32_16 = arith.constant 1 : i32
    %c0_i32_17 = arith.constant 0 : i32
    %c0_i32_18 = arith.constant 0 : i32
    %61 = tpu.memref_slice %arg3[%9, %c0_i32_18] : memref<6x160xf32, #tpu.memory_space<any>> -> memref<1x160xf32, #tpu.memory_space<any>>
    %62 = tpu.memref_squeeze %61 : memref<1x160xf32, #tpu.memory_space<any>> -> memref<160xf32, #tpu.memory_space<any>>
    %c0_i32_19 = arith.constant 0 : i32
    %63 = tpu.memref_slice %arg7[%c1_i32_16, %c0_i32_19] : memref<8x160xf32, #tpu.memory_space<vmem>> -> memref<1x160xf32, #tpu.memory_space<vmem>>
    %64 = tpu.memref_squeeze %63 : memref<1x160xf32, #tpu.memory_space<vmem>> -> memref<160xf32, #tpu.memory_space<vmem>>
    %65 = tpu.memref_slice %arg9[%c0_i32_17] : memref<2x!tpu.dma_semaphore, #tpu.memory_space<semaphore_mem>> -> memref<1x!tpu.dma_semaphore, #tpu.memory_space<semaphore_mem>>
    %66 = tpu.memref_squeeze %65 : memref<1x!tpu.dma_semaphore, #tpu.memory_space<semaphore_mem>> -> memref<!tpu.dma_semaphore, #tpu.memory_space<semaphore_mem>>
    tpu.enqueue_dma source(%62 : memref<160xf32, #tpu.memory_space<any>>) target(%64 : memref<160xf32, #tpu.memory_space<vmem>>) target_semaphore(%66 : memref<!tpu.dma_semaphore, #tpu.memory_space<semaphore_mem>>)
    %c1_i32_20 = arith.constant 1 : i32
    %c1_i32_21 = arith.constant 1 : i32
    %c0_i32_22 = arith.constant 0 : i32
    %67 = tpu.memref_slice %arg4[%12, %c0_i32_22] : memref<5x160xf32, #tpu.memory_space<any>> -> memref<1x160xf32, #tpu.memory_space<any>>
    %68 = tpu.memref_squeeze %67 : memref<1x160xf32, #tpu.memory_space<any>> -> memref<160xf32, #tpu.memory_space<any>>
    %c0_i32_23 = arith.constant 0 : i32
    %69 = tpu.memref_slice %arg8[%c1_i32_20, %c0_i32_23] : memref<8x160xf32, #tpu.memory_space<vmem>> -> memref<1x160xf32, #tpu.memory_space<vmem>>
    %70 = tpu.memref_squeeze %69 : memref<1x160xf32, #tpu.memory_space<vmem>> -> memref<160xf32, #tpu.memory_space<vmem>>
    %71 = tpu.memref_slice %arg9[%c1_i32_21] : memref<2x!tpu.dma_semaphore, #tpu.memory_space<semaphore_mem>> -> memref<1x!tpu.dma_semaphore, #tpu.memory_space<semaphore_mem>>
    %72 = tpu.memref_squeeze %71 : memref<1x!tpu.dma_semaphore, #tpu.memory_space<semaphore_mem>> -> memref<!tpu.dma_semaphore, #tpu.memory_space<semaphore_mem>>
    tpu.enqueue_dma source(%68 : memref<160xf32, #tpu.memory_space<any>>) target(%70 : memref<160xf32, #tpu.memory_space<vmem>>) target_semaphore(%72 : memref<!tpu.dma_semaphore, #tpu.memory_space<semaphore_mem>>)
    %c2_i32_24 = arith.constant 2 : i32
    %c0_i32_25 = arith.constant 0 : i32
    %c0_i32_26 = arith.constant 0 : i32
    %73 = tpu.memref_slice %arg3[%15, %c0_i32_26] : memref<6x160xf32, #tpu.memory_space<any>> -> memref<1x160xf32, #tpu.memory_space<any>>
    %74 = tpu.memref_squeeze %73 : memref<1x160xf32, #tpu.memory_space<any>> -> memref<160xf32, #tpu.memory_space<any>>
    %c0_i32_27 = arith.constant 0 : i32
    %75 = tpu.memref_slice %arg7[%c2_i32_24, %c0_i32_27] : memref<8x160xf32, #tpu.memory_space<vmem>> -> memref<1x160xf32, #tpu.memory_space<vmem>>
    %76 = tpu.memref_squeeze %75 : memref<1x160xf32, #tpu.memory_space<vmem>> -> memref<160xf32, #tpu.memory_space<vmem>>
    %77 = tpu.memref_slice %arg9[%c0_i32_25] : memref<2x!tpu.dma_semaphore, #tpu.memory_space<semaphore_mem>> -> memref<1x!tpu.dma_semaphore, #tpu.memory_space<semaphore_mem>>
    %78 = tpu.memref_squeeze %77 : memref<1x!tpu.dma_semaphore, #tpu.memory_space<semaphore_mem>> -> memref<!tpu.dma_semaphore, #tpu.memory_space<semaphore_mem>>
    tpu.enqueue_dma source(%74 : memref<160xf32, #tpu.memory_space<any>>) target(%76 : memref<160xf32, #tpu.memory_space<vmem>>) target_semaphore(%78 : memref<!tpu.dma_semaphore, #tpu.memory_space<semaphore_mem>>)
    %c2_i32_28 = arith.constant 2 : i32
    %c1_i32_29 = arith.constant 1 : i32
    %c0_i32_30 = arith.constant 0 : i32
    %79 = tpu.memref_slice %arg4[%18, %c0_i32_30] : memref<5x160xf32, #tpu.memory_space<any>> -> memref<1x160xf32, #tpu.memory_space<any>>
    %80 = tpu.memref_squeeze %79 : memref<1x160xf32, #tpu.memory_space<any>> -> memref<160xf32, #tpu.memory_space<any>>
    %c0_i32_31 = arith.constant 0 : i32
    %81 = tpu.memref_slice %arg8[%c2_i32_28, %c0_i32_31] : memref<8x160xf32, #tpu.memory_space<vmem>> -> memref<1x160xf32, #tpu.memory_space<vmem>>
    %82 = tpu.memref_squeeze %81 : memref<1x160xf32, #tpu.memory_space<vmem>> -> memref<160xf32, #tpu.memory_space<vmem>>
    %83 = tpu.memref_slice %arg9[%c1_i32_29] : memref<2x!tpu.dma_semaphore, #tpu.memory_space<semaphore_mem>> -> memref<1x!tpu.dma_semaphore, #tpu.memory_space<semaphore_mem>>
    %84 = tpu.memref_squeeze %83 : memref<1x!tpu.dma_semaphore, #tpu.memory_space<semaphore_mem>> -> memref<!tpu.dma_semaphore, #tpu.memory_space<semaphore_mem>>
    tpu.enqueue_dma source(%80 : memref<160xf32, #tpu.memory_space<any>>) target(%82 : memref<160xf32, #tpu.memory_space<vmem>>) target_semaphore(%84 : memref<!tpu.dma_semaphore, #tpu.memory_space<semaphore_mem>>)
    %c3_i32_32 = arith.constant 3 : i32
    %c0_i32_33 = arith.constant 0 : i32
    %c0_i32_34 = arith.constant 0 : i32
    %85 = tpu.memref_slice %arg3[%21, %c0_i32_34] : memref<6x160xf32, #tpu.memory_space<any>> -> memref<1x160xf32, #tpu.memory_space<any>>
    %86 = tpu.memref_squeeze %85 : memref<1x160xf32, #tpu.memory_space<any>> -> memref<160xf32, #tpu.memory_space<any>>
    %c0_i32_35 = arith.constant 0 : i32
    %87 = tpu.memref_slice %arg7[%c3_i32_32, %c0_i32_35] : memref<8x160xf32, #tpu.memory_space<vmem>> -> memref<1x160xf32, #tpu.memory_space<vmem>>
    %88 = tpu.memref_squeeze %87 : memref<1x160xf32, #tpu.memory_space<vmem>> -> memref<160xf32, #tpu.memory_space<vmem>>
    %89 = tpu.memref_slice %arg9[%c0_i32_33] : memref<2x!tpu.dma_semaphore, #tpu.memory_space<semaphore_mem>> -> memref<1x!tpu.dma_semaphore, #tpu.memory_space<semaphore_mem>>
    %90 = tpu.memref_squeeze %89 : memref<1x!tpu.dma_semaphore, #tpu.memory_space<semaphore_mem>> -> memref<!tpu.dma_semaphore, #tpu.memory_space<semaphore_mem>>
    tpu.enqueue_dma source(%86 : memref<160xf32, #tpu.memory_space<any>>) target(%88 : memref<160xf32, #tpu.memory_space<vmem>>) target_semaphore(%90 : memref<!tpu.dma_semaphore, #tpu.memory_space<semaphore_mem>>)
    %c3_i32_36 = arith.constant 3 : i32
    %c1_i32_37 = arith.constant 1 : i32
    %c0_i32_38 = arith.constant 0 : i32
    %91 = tpu.memref_slice %arg4[%24, %c0_i32_38] : memref<5x160xf32, #tpu.memory_space<any>> -> memref<1x160xf32, #tpu.memory_space<any>>
    %92 = tpu.memref_squeeze %91 : memref<1x160xf32, #tpu.memory_space<any>> -> memref<160xf32, #tpu.memory_space<any>>
    %c0_i32_39 = arith.constant 0 : i32
    %93 = tpu.memref_slice %arg8[%c3_i32_36, %c0_i32_39] : memref<8x160xf32, #tpu.memory_space<vmem>> -> memref<1x160xf32, #tpu.memory_space<vmem>>
    %94 = tpu.memref_squeeze %93 : memref<1x160xf32, #tpu.memory_space<vmem>> -> memref<160xf32, #tpu.memory_space<vmem>>
    %95 = tpu.memref_slice %arg9[%c1_i32_37] : memref<2x!tpu.dma_semaphore, #tpu.memory_space<semaphore_mem>> -> memref<1x!tpu.dma_semaphore, #tpu.memory_space<semaphore_mem>>
    %96 = tpu.memref_squeeze %95 : memref<1x!tpu.dma_semaphore, #tpu.memory_space<semaphore_mem>> -> memref<!tpu.dma_semaphore, #tpu.memory_space<semaphore_mem>>
    tpu.enqueue_dma source(%92 : memref<160xf32, #tpu.memory_space<any>>) target(%94 : memref<160xf32, #tpu.memory_space<vmem>>) target_semaphore(%96 : memref<!tpu.dma_semaphore, #tpu.memory_space<semaphore_mem>>)
    %c4_i32_40 = arith.constant 4 : i32
    %c0_i32_41 = arith.constant 0 : i32
    %c0_i32_42 = arith.constant 0 : i32
    %97 = tpu.memref_slice %arg3[%27, %c0_i32_42] : memref<6x160xf32, #tpu.memory_space<any>> -> memref<1x160xf32, #tpu.memory_space<any>>
    %98 = tpu.memref_squeeze %97 : memref<1x160xf32, #tpu.memory_space<any>> -> memref<160xf32, #tpu.memory_space<any>>
    %c0_i32_43 = arith.constant 0 : i32
    %99 = tpu.memref_slice %arg7[%c4_i32_40, %c0_i32_43] : memref<8x160xf32, #tpu.memory_space<vmem>> -> memref<1x160xf32, #tpu.memory_space<vmem>>
    %100 = tpu.memref_squeeze %99 : memref<1x160xf32, #tpu.memory_space<vmem>> -> memref<160xf32, #tpu.memory_space<vmem>>
    %101 = tpu.memref_slice %arg9[%c0_i32_41] : memref<2x!tpu.dma_semaphore, #tpu.memory_space<semaphore_mem>> -> memref<1x!tpu.dma_semaphore, #tpu.memory_space<semaphore_mem>>
    %102 = tpu.memref_squeeze %101 : memref<1x!tpu.dma_semaphore, #tpu.memory_space<semaphore_mem>> -> memref<!tpu.dma_semaphore, #tpu.memory_space<semaphore_mem>>
    tpu.enqueue_dma source(%98 : memref<160xf32, #tpu.memory_space<any>>) target(%100 : memref<160xf32, #tpu.memory_space<vmem>>) target_semaphore(%102 : memref<!tpu.dma_semaphore, #tpu.memory_space<semaphore_mem>>)
    %c4_i32_44 = arith.constant 4 : i32
    %c1_i32_45 = arith.constant 1 : i32
    %c0_i32_46 = arith.constant 0 : i32
    %103 = tpu.memref_slice %arg4[%30, %c0_i32_46] : memref<5x160xf32, #tpu.memory_space<any>> -> memref<1x160xf32, #tpu.memory_space<any>>
    %104 = tpu.memref_squeeze %103 : memref<1x160xf32, #tpu.memory_space<any>> -> memref<160xf32, #tpu.memory_space<any>>
    %c0_i32_47 = arith.constant 0 : i32
    %105 = tpu.memref_slice %arg8[%c4_i32_44, %c0_i32_47] : memref<8x160xf32, #tpu.memory_space<vmem>> -> memref<1x160xf32, #tpu.memory_space<vmem>>
    %106 = tpu.memref_squeeze %105 : memref<1x160xf32, #tpu.memory_space<vmem>> -> memref<160xf32, #tpu.memory_space<vmem>>
    %107 = tpu.memref_slice %arg9[%c1_i32_45] : memref<2x!tpu.dma_semaphore, #tpu.memory_space<semaphore_mem>> -> memref<1x!tpu.dma_semaphore, #tpu.memory_space<semaphore_mem>>
    %108 = tpu.memref_squeeze %107 : memref<1x!tpu.dma_semaphore, #tpu.memory_space<semaphore_mem>> -> memref<!tpu.dma_semaphore, #tpu.memory_space<semaphore_mem>>
    tpu.enqueue_dma source(%104 : memref<160xf32, #tpu.memory_space<any>>) target(%106 : memref<160xf32, #tpu.memory_space<vmem>>) target_semaphore(%108 : memref<!tpu.dma_semaphore, #tpu.memory_space<semaphore_mem>>)
    %c5_i32_48 = arith.constant 5 : i32
    %c0_i32_49 = arith.constant 0 : i32
    %c0_i32_50 = arith.constant 0 : i32
    %109 = tpu.memref_slice %arg3[%33, %c0_i32_50] : memref<6x160xf32, #tpu.memory_space<any>> -> memref<1x160xf32, #tpu.memory_space<any>>
    %110 = tpu.memref_squeeze %109 : memref<1x160xf32, #tpu.memory_space<any>> -> memref<160xf32, #tpu.memory_space<any>>
    %c0_i32_51 = arith.constant 0 : i32
    %111 = tpu.memref_slice %arg7[%c5_i32_48, %c0_i32_51] : memref<8x160xf32, #tpu.memory_space<vmem>> -> memref<1x160xf32, #tpu.memory_space<vmem>>
    %112 = tpu.memref_squeeze %111 : memref<1x160xf32, #tpu.memory_space<vmem>> -> memref<160xf32, #tpu.memory_space<vmem>>
    %113 = tpu.memref_slice %arg9[%c0_i32_49] : memref<2x!tpu.dma_semaphore, #tpu.memory_space<semaphore_mem>> -> memref<1x!tpu.dma_semaphore, #tpu.memory_space<semaphore_mem>>
    %114 = tpu.memref_squeeze %113 : memref<1x!tpu.dma_semaphore, #tpu.memory_space<semaphore_mem>> -> memref<!tpu.dma_semaphore, #tpu.memory_space<semaphore_mem>>
    tpu.enqueue_dma source(%110 : memref<160xf32, #tpu.memory_space<any>>) target(%112 : memref<160xf32, #tpu.memory_space<vmem>>) target_semaphore(%114 : memref<!tpu.dma_semaphore, #tpu.memory_space<semaphore_mem>>)
    %c5_i32_52 = arith.constant 5 : i32
    %c1_i32_53 = arith.constant 1 : i32
    %c0_i32_54 = arith.constant 0 : i32
    %115 = tpu.memref_slice %arg4[%36, %c0_i32_54] : memref<5x160xf32, #tpu.memory_space<any>> -> memref<1x160xf32, #tpu.memory_space<any>>
    %116 = tpu.memref_squeeze %115 : memref<1x160xf32, #tpu.memory_space<any>> -> memref<160xf32, #tpu.memory_space<any>>
    %c0_i32_55 = arith.constant 0 : i32
    %117 = tpu.memref_slice %arg8[%c5_i32_52, %c0_i32_55] : memref<8x160xf32, #tpu.memory_space<vmem>> -> memref<1x160xf32, #tpu.memory_space<vmem>>
    %118 = tpu.memref_squeeze %117 : memref<1x160xf32, #tpu.memory_space<vmem>> -> memref<160xf32, #tpu.memory_space<vmem>>
    %119 = tpu.memref_slice %arg9[%c1_i32_53] : memref<2x!tpu.dma_semaphore, #tpu.memory_space<semaphore_mem>> -> memref<1x!tpu.dma_semaphore, #tpu.memory_space<semaphore_mem>>
    %120 = tpu.memref_squeeze %119 : memref<1x!tpu.dma_semaphore, #tpu.memory_space<semaphore_mem>> -> memref<!tpu.dma_semaphore, #tpu.memory_space<semaphore_mem>>
    tpu.enqueue_dma source(%116 : memref<160xf32, #tpu.memory_space<any>>) target(%118 : memref<160xf32, #tpu.memory_space<vmem>>) target_semaphore(%120 : memref<!tpu.dma_semaphore, #tpu.memory_space<semaphore_mem>>)
    %c6_i32_56 = arith.constant 6 : i32
    %c0_i32_57 = arith.constant 0 : i32
    %c0_i32_58 = arith.constant 0 : i32
    %121 = tpu.memref_slice %arg3[%39, %c0_i32_58] : memref<6x160xf32, #tpu.memory_space<any>> -> memref<1x160xf32, #tpu.memory_space<any>>
    %122 = tpu.memref_squeeze %121 : memref<1x160xf32, #tpu.memory_space<any>> -> memref<160xf32, #tpu.memory_space<any>>
    %c0_i32_59 = arith.constant 0 : i32
    %123 = tpu.memref_slice %arg7[%c6_i32_56, %c0_i32_59] : memref<8x160xf32, #tpu.memory_space<vmem>> -> memref<1x160xf32, #tpu.memory_space<vmem>>
    %124 = tpu.memref_squeeze %123 : memref<1x160xf32, #tpu.memory_space<vmem>> -> memref<160xf32, #tpu.memory_space<vmem>>
    %125 = tpu.memref_slice %arg9[%c0_i32_57] : memref<2x!tpu.dma_semaphore, #tpu.memory_space<semaphore_mem>> -> memref<1x!tpu.dma_semaphore, #tpu.memory_space<semaphore_mem>>
    %126 = tpu.memref_squeeze %125 : memref<1x!tpu.dma_semaphore, #tpu.memory_space<semaphore_mem>> -> memref<!tpu.dma_semaphore, #tpu.memory_space<semaphore_mem>>
    tpu.enqueue_dma source(%122 : memref<160xf32, #tpu.memory_space<any>>) target(%124 : memref<160xf32, #tpu.memory_space<vmem>>) target_semaphore(%126 : memref<!tpu.dma_semaphore, #tpu.memory_space<semaphore_mem>>)
    %c6_i32_60 = arith.constant 6 : i32
    %c1_i32_61 = arith.constant 1 : i32
    %c0_i32_62 = arith.constant 0 : i32
    %127 = tpu.memref_slice %arg4[%42, %c0_i32_62] : memref<5x160xf32, #tpu.memory_space<any>> -> memref<1x160xf32, #tpu.memory_space<any>>
    %128 = tpu.memref_squeeze %127 : memref<1x160xf32, #tpu.memory_space<any>> -> memref<160xf32, #tpu.memory_space<any>>
    %c0_i32_63 = arith.constant 0 : i32
    %129 = tpu.memref_slice %arg8[%c6_i32_60, %c0_i32_63] : memref<8x160xf32, #tpu.memory_space<vmem>> -> memref<1x160xf32, #tpu.memory_space<vmem>>
    %130 = tpu.memref_squeeze %129 : memref<1x160xf32, #tpu.memory_space<vmem>> -> memref<160xf32, #tpu.memory_space<vmem>>
    %131 = tpu.memref_slice %arg9[%c1_i32_61] : memref<2x!tpu.dma_semaphore, #tpu.memory_space<semaphore_mem>> -> memref<1x!tpu.dma_semaphore, #tpu.memory_space<semaphore_mem>>
    %132 = tpu.memref_squeeze %131 : memref<1x!tpu.dma_semaphore, #tpu.memory_space<semaphore_mem>> -> memref<!tpu.dma_semaphore, #tpu.memory_space<semaphore_mem>>
    tpu.enqueue_dma source(%128 : memref<160xf32, #tpu.memory_space<any>>) target(%130 : memref<160xf32, #tpu.memory_space<vmem>>) target_semaphore(%132 : memref<!tpu.dma_semaphore, #tpu.memory_space<semaphore_mem>>)
    %c7_i32_64 = arith.constant 7 : i32
    %c0_i32_65 = arith.constant 0 : i32
    %c0_i32_66 = arith.constant 0 : i32
    %133 = tpu.memref_slice %arg3[%45, %c0_i32_66] : memref<6x160xf32, #tpu.memory_space<any>> -> memref<1x160xf32, #tpu.memory_space<any>>
    %134 = tpu.memref_squeeze %133 : memref<1x160xf32, #tpu.memory_space<any>> -> memref<160xf32, #tpu.memory_space<any>>
    %c0_i32_67 = arith.constant 0 : i32
    %135 = tpu.memref_slice %arg7[%c7_i32_64, %c0_i32_67] : memref<8x160xf32, #tpu.memory_space<vmem>> -> memref<1x160xf32, #tpu.memory_space<vmem>>
    %136 = tpu.memref_squeeze %135 : memref<1x160xf32, #tpu.memory_space<vmem>> -> memref<160xf32, #tpu.memory_space<vmem>>
    %137 = tpu.memref_slice %arg9[%c0_i32_65] : memref<2x!tpu.dma_semaphore, #tpu.memory_space<semaphore_mem>> -> memref<1x!tpu.dma_semaphore, #tpu.memory_space<semaphore_mem>>
    %138 = tpu.memref_squeeze %137 : memref<1x!tpu.dma_semaphore, #tpu.memory_space<semaphore_mem>> -> memref<!tpu.dma_semaphore, #tpu.memory_space<semaphore_mem>>
    tpu.enqueue_dma source(%134 : memref<160xf32, #tpu.memory_space<any>>) target(%136 : memref<160xf32, #tpu.memory_space<vmem>>) target_semaphore(%138 : memref<!tpu.dma_semaphore, #tpu.memory_space<semaphore_mem>>)
    %c7_i32_68 = arith.constant 7 : i32
    %c1_i32_69 = arith.constant 1 : i32
    %c0_i32_70 = arith.constant 0 : i32
    %139 = tpu.memref_slice %arg4[%48, %c0_i32_70] : memref<5x160xf32, #tpu.memory_space<any>> -> memref<1x160xf32, #tpu.memory_space<any>>
    %140 = tpu.memref_squeeze %139 : memref<1x160xf32, #tpu.memory_space<any>> -> memref<160xf32, #tpu.memory_space<any>>
    %c0_i32_71 = arith.constant 0 : i32
    %141 = tpu.memref_slice %arg8[%c7_i32_68, %c0_i32_71] : memref<8x160xf32, #tpu.memory_space<vmem>> -> memref<1x160xf32, #tpu.memory_space<vmem>>
    %142 = tpu.memref_squeeze %141 : memref<1x160xf32, #tpu.memory_space<vmem>> -> memref<160xf32, #tpu.memory_space<vmem>>
    %143 = tpu.memref_slice %arg9[%c1_i32_69] : memref<2x!tpu.dma_semaphore, #tpu.memory_space<semaphore_mem>> -> memref<1x!tpu.dma_semaphore, #tpu.memory_space<semaphore_mem>>
    %144 = tpu.memref_squeeze %143 : memref<1x!tpu.dma_semaphore, #tpu.memory_space<semaphore_mem>> -> memref<!tpu.dma_semaphore, #tpu.memory_space<semaphore_mem>>
    tpu.enqueue_dma source(%140 : memref<160xf32, #tpu.memory_space<any>>) target(%142 : memref<160xf32, #tpu.memory_space<vmem>>) target_semaphore(%144 : memref<!tpu.dma_semaphore, #tpu.memory_space<semaphore_mem>>)
    %c0_i32_72 = arith.constant 0 : i32
    %c0_i32_73 = arith.constant 0 : i32
    %c0_i32_74 = arith.constant 0 : i32
    %145 = tpu.memref_slice %arg3[%3, %c0_i32_74] : memref<6x160xf32, #tpu.memory_space<any>> -> memref<1x160xf32, #tpu.memory_space<any>>
    %146 = tpu.memref_squeeze %145 : memref<1x160xf32, #tpu.memory_space<any>> -> memref<160xf32, #tpu.memory_space<any>>
    %c0_i32_75 = arith.constant 0 : i32
    %147 = tpu.memref_slice %arg7[%c0_i32_72, %c0_i32_75] : memref<8x160xf32, #tpu.memory_space<vmem>> -> memref<1x160xf32, #tpu.memory_space<vmem>>
    %148 = tpu.memref_squeeze %147 : memref<1x160xf32, #tpu.memory_space<vmem>> -> memref<160xf32, #tpu.memory_space<vmem>>
    %149 = tpu.memref_slice %arg9[%c0_i32_73] : memref<2x!tpu.dma_semaphore, #tpu.memory_space<semaphore_mem>> -> memref<1x!tpu.dma_semaphore, #tpu.memory_space<semaphore_mem>>
    %150 = tpu.memref_squeeze %149 : memref<1x!tpu.dma_semaphore, #tpu.memory_space<semaphore_mem>> -> memref<!tpu.dma_semaphore, #tpu.memory_space<semaphore_mem>>
    tpu.wait_dma2 semaphore(%150 : memref<!tpu.dma_semaphore, #tpu.memory_space<semaphore_mem>>) src(%146 : memref<160xf32, #tpu.memory_space<any>>) dst(%148 : memref<160xf32, #tpu.memory_space<vmem>>)
    %c0_i32_76 = arith.constant 0 : i32
    %c1_i32_77 = arith.constant 1 : i32
    %c0_i32_78 = arith.constant 0 : i32
    %151 = tpu.memref_slice %arg4[%6, %c0_i32_78] : memref<5x160xf32, #tpu.memory_space<any>> -> memref<1x160xf32, #tpu.memory_space<any>>
    %152 = tpu.memref_squeeze %151 : memref<1x160xf32, #tpu.memory_space<any>> -> memref<160xf32, #tpu.memory_space<any>>
    %c0_i32_79 = arith.constant 0 : i32
    %153 = tpu.memref_slice %arg8[%c0_i32_76, %c0_i32_79] : memref<8x160xf32, #tpu.memory_space<vmem>> -> memref<1x160xf32, #tpu.memory_space<vmem>>
    %154 = tpu.memref_squeeze %153 : memref<1x160xf32, #tpu.memory_space<vmem>> -> memref<160xf32, #tpu.memory_space<vmem>>
    %155 = tpu.memref_slice %arg9[%c1_i32_77] : memref<2x!tpu.dma_semaphore, #tpu.memory_space<semaphore_mem>> -> memref<1x!tpu.dma_semaphore, #tpu.memory_space<semaphore_mem>>
    %156 = tpu.memref_squeeze %155 : memref<1x!tpu.dma_semaphore, #tpu.memory_space<semaphore_mem>> -> memref<!tpu.dma_semaphore, #tpu.memory_space<semaphore_mem>>
    tpu.wait_dma2 semaphore(%156 : memref<!tpu.dma_semaphore, #tpu.memory_space<semaphore_mem>>) src(%152 : memref<160xf32, #tpu.memory_space<any>>) dst(%154 : memref<160xf32, #tpu.memory_space<vmem>>)
    %c1_i32_80 = arith.constant 1 : i32
    %c0_i32_81 = arith.constant 0 : i32
    %c0_i32_82 = arith.constant 0 : i32
    %157 = tpu.memref_slice %arg3[%9, %c0_i32_82] : memref<6x160xf32, #tpu.memory_space<any>> -> memref<1x160xf32, #tpu.memory_space<any>>
    %158 = tpu.memref_squeeze %157 : memref<1x160xf32, #tpu.memory_space<any>> -> memref<160xf32, #tpu.memory_space<any>>
    %c0_i32_83 = arith.constant 0 : i32
    %159 = tpu.memref_slice %arg7[%c1_i32_80, %c0_i32_83] : memref<8x160xf32, #tpu.memory_space<vmem>> -> memref<1x160xf32, #tpu.memory_space<vmem>>
    %160 = tpu.memref_squeeze %159 : memref<1x160xf32, #tpu.memory_space<vmem>> -> memref<160xf32, #tpu.memory_space<vmem>>
    %161 = tpu.memref_slice %arg9[%c0_i32_81] : memref<2x!tpu.dma_semaphore, #tpu.memory_space<semaphore_mem>> -> memref<1x!tpu.dma_semaphore, #tpu.memory_space<semaphore_mem>>
    %162 = tpu.memref_squeeze %161 : memref<1x!tpu.dma_semaphore, #tpu.memory_space<semaphore_mem>> -> memref<!tpu.dma_semaphore, #tpu.memory_space<semaphore_mem>>
    tpu.wait_dma2 semaphore(%162 : memref<!tpu.dma_semaphore, #tpu.memory_space<semaphore_mem>>) src(%158 : memref<160xf32, #tpu.memory_space<any>>) dst(%160 : memref<160xf32, #tpu.memory_space<vmem>>)
    %c1_i32_84 = arith.constant 1 : i32
    %c1_i32_85 = arith.constant 1 : i32
    %c0_i32_86 = arith.constant 0 : i32
    %163 = tpu.memref_slice %arg4[%12, %c0_i32_86] : memref<5x160xf32, #tpu.memory_space<any>> -> memref<1x160xf32, #tpu.memory_space<any>>
    %164 = tpu.memref_squeeze %163 : memref<1x160xf32, #tpu.memory_space<any>> -> memref<160xf32, #tpu.memory_space<any>>
    %c0_i32_87 = arith.constant 0 : i32
    %165 = tpu.memref_slice %arg8[%c1_i32_84, %c0_i32_87] : memref<8x160xf32, #tpu.memory_space<vmem>> -> memref<1x160xf32, #tpu.memory_space<vmem>>
    %166 = tpu.memref_squeeze %165 : memref<1x160xf32, #tpu.memory_space<vmem>> -> memref<160xf32, #tpu.memory_space<vmem>>
    %167 = tpu.memref_slice %arg9[%c1_i32_85] : memref<2x!tpu.dma_semaphore, #tpu.memory_space<semaphore_mem>> -> memref<1x!tpu.dma_semaphore, #tpu.memory_space<semaphore_mem>>
    %168 = tpu.memref_squeeze %167 : memref<1x!tpu.dma_semaphore, #tpu.memory_space<semaphore_mem>> -> memref<!tpu.dma_semaphore, #tpu.memory_space<semaphore_mem>>
    tpu.wait_dma2 semaphore(%168 : memref<!tpu.dma_semaphore, #tpu.memory_space<semaphore_mem>>) src(%164 : memref<160xf32, #tpu.memory_space<any>>) dst(%166 : memref<160xf32, #tpu.memory_space<vmem>>)
    %c2_i32_88 = arith.constant 2 : i32
    %c0_i32_89 = arith.constant 0 : i32
    %c0_i32_90 = arith.constant 0 : i32
    %169 = tpu.memref_slice %arg3[%15, %c0_i32_90] : memref<6x160xf32, #tpu.memory_space<any>> -> memref<1x160xf32, #tpu.memory_space<any>>
    %170 = tpu.memref_squeeze %169 : memref<1x160xf32, #tpu.memory_space<any>> -> memref<160xf32, #tpu.memory_space<any>>
    %c0_i32_91 = arith.constant 0 : i32
    %171 = tpu.memref_slice %arg7[%c2_i32_88, %c0_i32_91] : memref<8x160xf32, #tpu.memory_space<vmem>> -> memref<1x160xf32, #tpu.memory_space<vmem>>
    %172 = tpu.memref_squeeze %171 : memref<1x160xf32, #tpu.memory_space<vmem>> -> memref<160xf32, #tpu.memory_space<vmem>>
    %173 = tpu.memref_slice %arg9[%c0_i32_89] : memref<2x!tpu.dma_semaphore, #tpu.memory_space<semaphore_mem>> -> memref<1x!tpu.dma_semaphore, #tpu.memory_space<semaphore_mem>>
    %174 = tpu.memref_squeeze %173 : memref<1x!tpu.dma_semaphore, #tpu.memory_space<semaphore_mem>> -> memref<!tpu.dma_semaphore, #tpu.memory_space<semaphore_mem>>
    tpu.wait_dma2 semaphore(%174 : memref<!tpu.dma_semaphore, #tpu.memory_space<semaphore_mem>>) src(%170 : memref<160xf32, #tpu.memory_space<any>>) dst(%172 : memref<160xf32, #tpu.memory_space<vmem>>)
    %c2_i32_92 = arith.constant 2 : i32
    %c1_i32_93 = arith.constant 1 : i32
    %c0_i32_94 = arith.constant 0 : i32
    %175 = tpu.memref_slice %arg4[%18, %c0_i32_94] : memref<5x160xf32, #tpu.memory_space<any>> -> memref<1x160xf32, #tpu.memory_space<any>>
    %176 = tpu.memref_squeeze %175 : memref<1x160xf32, #tpu.memory_space<any>> -> memref<160xf32, #tpu.memory_space<any>>
    %c0_i32_95 = arith.constant 0 : i32
    %177 = tpu.memref_slice %arg8[%c2_i32_92, %c0_i32_95] : memref<8x160xf32, #tpu.memory_space<vmem>> -> memref<1x160xf32, #tpu.memory_space<vmem>>
    %178 = tpu.memref_squeeze %177 : memref<1x160xf32, #tpu.memory_space<vmem>> -> memref<160xf32, #tpu.memory_space<vmem>>
    %179 = tpu.memref_slice %arg9[%c1_i32_93] : memref<2x!tpu.dma_semaphore, #tpu.memory_space<semaphore_mem>> -> memref<1x!tpu.dma_semaphore, #tpu.memory_space<semaphore_mem>>
    %180 = tpu.memref_squeeze %179 : memref<1x!tpu.dma_semaphore, #tpu.memory_space<semaphore_mem>> -> memref<!tpu.dma_semaphore, #tpu.memory_space<semaphore_mem>>
    tpu.wait_dma2 semaphore(%180 : memref<!tpu.dma_semaphore, #tpu.memory_space<semaphore_mem>>) src(%176 : memref<160xf32, #tpu.memory_space<any>>) dst(%178 : memref<160xf32, #tpu.memory_space<vmem>>)
    %c3_i32_96 = arith.constant 3 : i32
    %c0_i32_97 = arith.constant 0 : i32
    %c0_i32_98 = arith.constant 0 : i32
    %181 = tpu.memref_slice %arg3[%21, %c0_i32_98] : memref<6x160xf32, #tpu.memory_space<any>> -> memref<1x160xf32, #tpu.memory_space<any>>
    %182 = tpu.memref_squeeze %181 : memref<1x160xf32, #tpu.memory_space<any>> -> memref<160xf32, #tpu.memory_space<any>>
    %c0_i32_99 = arith.constant 0 : i32
    %183 = tpu.memref_slice %arg7[%c3_i32_96, %c0_i32_99] : memref<8x160xf32, #tpu.memory_space<vmem>> -> memref<1x160xf32, #tpu.memory_space<vmem>>
    %184 = tpu.memref_squeeze %183 : memref<1x160xf32, #tpu.memory_space<vmem>> -> memref<160xf32, #tpu.memory_space<vmem>>
    %185 = tpu.memref_slice %arg9[%c0_i32_97] : memref<2x!tpu.dma_semaphore, #tpu.memory_space<semaphore_mem>> -> memref<1x!tpu.dma_semaphore, #tpu.memory_space<semaphore_mem>>
    %186 = tpu.memref_squeeze %185 : memref<1x!tpu.dma_semaphore, #tpu.memory_space<semaphore_mem>> -> memref<!tpu.dma_semaphore, #tpu.memory_space<semaphore_mem>>
    tpu.wait_dma2 semaphore(%186 : memref<!tpu.dma_semaphore, #tpu.memory_space<semaphore_mem>>) src(%182 : memref<160xf32, #tpu.memory_space<any>>) dst(%184 : memref<160xf32, #tpu.memory_space<vmem>>)
    %c3_i32_100 = arith.constant 3 : i32
    %c1_i32_101 = arith.constant 1 : i32
    %c0_i32_102 = arith.constant 0 : i32
    %187 = tpu.memref_slice %arg4[%24, %c0_i32_102] : memref<5x160xf32, #tpu.memory_space<any>> -> memref<1x160xf32, #tpu.memory_space<any>>
    %188 = tpu.memref_squeeze %187 : memref<1x160xf32, #tpu.memory_space<any>> -> memref<160xf32, #tpu.memory_space<any>>
    %c0_i32_103 = arith.constant 0 : i32
    %189 = tpu.memref_slice %arg8[%c3_i32_100, %c0_i32_103] : memref<8x160xf32, #tpu.memory_space<vmem>> -> memref<1x160xf32, #tpu.memory_space<vmem>>
    %190 = tpu.memref_squeeze %189 : memref<1x160xf32, #tpu.memory_space<vmem>> -> memref<160xf32, #tpu.memory_space<vmem>>
    %191 = tpu.memref_slice %arg9[%c1_i32_101] : memref<2x!tpu.dma_semaphore, #tpu.memory_space<semaphore_mem>> -> memref<1x!tpu.dma_semaphore, #tpu.memory_space<semaphore_mem>>
    %192 = tpu.memref_squeeze %191 : memref<1x!tpu.dma_semaphore, #tpu.memory_space<semaphore_mem>> -> memref<!tpu.dma_semaphore, #tpu.memory_space<semaphore_mem>>
    tpu.wait_dma2 semaphore(%192 : memref<!tpu.dma_semaphore, #tpu.memory_space<semaphore_mem>>) src(%188 : memref<160xf32, #tpu.memory_space<any>>) dst(%190 : memref<160xf32, #tpu.memory_space<vmem>>)
    %c4_i32_104 = arith.constant 4 : i32
    %c0_i32_105 = arith.constant 0 : i32
    %c0_i32_106 = arith.constant 0 : i32
    %193 = tpu.memref_slice %arg3[%27, %c0_i32_106] : memref<6x160xf32, #tpu.memory_space<any>> -> memref<1x160xf32, #tpu.memory_space<any>>
    %194 = tpu.memref_squeeze %193 : memref<1x160xf32, #tpu.memory_space<any>> -> memref<160xf32, #tpu.memory_space<any>>
    %c0_i32_107 = arith.constant 0 : i32
    %195 = tpu.memref_slice %arg7[%c4_i32_104, %c0_i32_107] : memref<8x160xf32, #tpu.memory_space<vmem>> -> memref<1x160xf32, #tpu.memory_space<vmem>>
    %196 = tpu.memref_squeeze %195 : memref<1x160xf32, #tpu.memory_space<vmem>> -> memref<160xf32, #tpu.memory_space<vmem>>
    %197 = tpu.memref_slice %arg9[%c0_i32_105] : memref<2x!tpu.dma_semaphore, #tpu.memory_space<semaphore_mem>> -> memref<1x!tpu.dma_semaphore, #tpu.memory_space<semaphore_mem>>
    %198 = tpu.memref_squeeze %197 : memref<1x!tpu.dma_semaphore, #tpu.memory_space<semaphore_mem>> -> memref<!tpu.dma_semaphore, #tpu.memory_space<semaphore_mem>>
    tpu.wait_dma2 semaphore(%198 : memref<!tpu.dma_semaphore, #tpu.memory_space<semaphore_mem>>) src(%194 : memref<160xf32, #tpu.memory_space<any>>) dst(%196 : memref<160xf32, #tpu.memory_space<vmem>>)
    %c4_i32_108 = arith.constant 4 : i32
    %c1_i32_109 = arith.constant 1 : i32
    %c0_i32_110 = arith.constant 0 : i32
    %199 = tpu.memref_slice %arg4[%30, %c0_i32_110] : memref<5x160xf32, #tpu.memory_space<any>> -> memref<1x160xf32, #tpu.memory_space<any>>
    %200 = tpu.memref_squeeze %199 : memref<1x160xf32, #tpu.memory_space<any>> -> memref<160xf32, #tpu.memory_space<any>>
    %c0_i32_111 = arith.constant 0 : i32
    %201 = tpu.memref_slice %arg8[%c4_i32_108, %c0_i32_111] : memref<8x160xf32, #tpu.memory_space<vmem>> -> memref<1x160xf32, #tpu.memory_space<vmem>>
    %202 = tpu.memref_squeeze %201 : memref<1x160xf32, #tpu.memory_space<vmem>> -> memref<160xf32, #tpu.memory_space<vmem>>
    %203 = tpu.memref_slice %arg9[%c1_i32_109] : memref<2x!tpu.dma_semaphore, #tpu.memory_space<semaphore_mem>> -> memref<1x!tpu.dma_semaphore, #tpu.memory_space<semaphore_mem>>
    %204 = tpu.memref_squeeze %203 : memref<1x!tpu.dma_semaphore, #tpu.memory_space<semaphore_mem>> -> memref<!tpu.dma_semaphore, #tpu.memory_space<semaphore_mem>>
    tpu.wait_dma2 semaphore(%204 : memref<!tpu.dma_semaphore, #tpu.memory_space<semaphore_mem>>) src(%200 : memref<160xf32, #tpu.memory_space<any>>) dst(%202 : memref<160xf32, #tpu.memory_space<vmem>>)
    %c5_i32_112 = arith.constant 5 : i32
    %c0_i32_113 = arith.constant 0 : i32
    %c0_i32_114 = arith.constant 0 : i32
    %205 = tpu.memref_slice %arg3[%33, %c0_i32_114] : memref<6x160xf32, #tpu.memory_space<any>> -> memref<1x160xf32, #tpu.memory_space<any>>
    %206 = tpu.memref_squeeze %205 : memref<1x160xf32, #tpu.memory_space<any>> -> memref<160xf32, #tpu.memory_space<any>>
    %c0_i32_115 = arith.constant 0 : i32
    %207 = tpu.memref_slice %arg7[%c5_i32_112, %c0_i32_115] : memref<8x160xf32, #tpu.memory_space<vmem>> -> memref<1x160xf32, #tpu.memory_space<vmem>>
    %208 = tpu.memref_squeeze %207 : memref<1x160xf32, #tpu.memory_space<vmem>> -> memref<160xf32, #tpu.memory_space<vmem>>
    %209 = tpu.memref_slice %arg9[%c0_i32_113] : memref<2x!tpu.dma_semaphore, #tpu.memory_space<semaphore_mem>> -> memref<1x!tpu.dma_semaphore, #tpu.memory_space<semaphore_mem>>
    %210 = tpu.memref_squeeze %209 : memref<1x!tpu.dma_semaphore, #tpu.memory_space<semaphore_mem>> -> memref<!tpu.dma_semaphore, #tpu.memory_space<semaphore_mem>>
    tpu.wait_dma2 semaphore(%210 : memref<!tpu.dma_semaphore, #tpu.memory_space<semaphore_mem>>) src(%206 : memref<160xf32, #tpu.memory_space<any>>) dst(%208 : memref<160xf32, #tpu.memory_space<vmem>>)
    %c5_i32_116 = arith.constant 5 : i32
    %c1_i32_117 = arith.constant 1 : i32
    %c0_i32_118 = arith.constant 0 : i32
    %211 = tpu.memref_slice %arg4[%36, %c0_i32_118] : memref<5x160xf32, #tpu.memory_space<any>> -> memref<1x160xf32, #tpu.memory_space<any>>
    %212 = tpu.memref_squeeze %211 : memref<1x160xf32, #tpu.memory_space<any>> -> memref<160xf32, #tpu.memory_space<any>>
    %c0_i32_119 = arith.constant 0 : i32
    %213 = tpu.memref_slice %arg8[%c5_i32_116, %c0_i32_119] : memref<8x160xf32, #tpu.memory_space<vmem>> -> memref<1x160xf32, #tpu.memory_space<vmem>>
    %214 = tpu.memref_squeeze %213 : memref<1x160xf32, #tpu.memory_space<vmem>> -> memref<160xf32, #tpu.memory_space<vmem>>
    %215 = tpu.memref_slice %arg9[%c1_i32_117] : memref<2x!tpu.dma_semaphore, #tpu.memory_space<semaphore_mem>> -> memref<1x!tpu.dma_semaphore, #tpu.memory_space<semaphore_mem>>
    %216 = tpu.memref_squeeze %215 : memref<1x!tpu.dma_semaphore, #tpu.memory_space<semaphore_mem>> -> memref<!tpu.dma_semaphore, #tpu.memory_space<semaphore_mem>>
    tpu.wait_dma2 semaphore(%216 : memref<!tpu.dma_semaphore, #tpu.memory_space<semaphore_mem>>) src(%212 : memref<160xf32, #tpu.memory_space<any>>) dst(%214 : memref<160xf32, #tpu.memory_space<vmem>>)
    %c6_i32_120 = arith.constant 6 : i32
    %c0_i32_121 = arith.constant 0 : i32
    %c0_i32_122 = arith.constant 0 : i32
    %217 = tpu.memref_slice %arg3[%39, %c0_i32_122] : memref<6x160xf32, #tpu.memory_space<any>> -> memref<1x160xf32, #tpu.memory_space<any>>
    %218 = tpu.memref_squeeze %217 : memref<1x160xf32, #tpu.memory_space<any>> -> memref<160xf32, #tpu.memory_space<any>>
    %c0_i32_123 = arith.constant 0 : i32
    %219 = tpu.memref_slice %arg7[%c6_i32_120, %c0_i32_123] : memref<8x160xf32, #tpu.memory_space<vmem>> -> memref<1x160xf32, #tpu.memory_space<vmem>>
    %220 = tpu.memref_squeeze %219 : memref<1x160xf32, #tpu.memory_space<vmem>> -> memref<160xf32, #tpu.memory_space<vmem>>
    %221 = tpu.memref_slice %arg9[%c0_i32_121] : memref<2x!tpu.dma_semaphore, #tpu.memory_space<semaphore_mem>> -> memref<1x!tpu.dma_semaphore, #tpu.memory_space<semaphore_mem>>
    %222 = tpu.memref_squeeze %221 : memref<1x!tpu.dma_semaphore, #tpu.memory_space<semaphore_mem>> -> memref<!tpu.dma_semaphore, #tpu.memory_space<semaphore_mem>>
    tpu.wait_dma2 semaphore(%222 : memref<!tpu.dma_semaphore, #tpu.memory_space<semaphore_mem>>) src(%218 : memref<160xf32, #tpu.memory_space<any>>) dst(%220 : memref<160xf32, #tpu.memory_space<vmem>>)
    %c6_i32_124 = arith.constant 6 : i32
    %c1_i32_125 = arith.constant 1 : i32
    %c0_i32_126 = arith.constant 0 : i32
    %223 = tpu.memref_slice %arg4[%42, %c0_i32_126] : memref<5x160xf32, #tpu.memory_space<any>> -> memref<1x160xf32, #tpu.memory_space<any>>
    %224 = tpu.memref_squeeze %223 : memref<1x160xf32, #tpu.memory_space<any>> -> memref<160xf32, #tpu.memory_space<any>>
    %c0_i32_127 = arith.constant 0 : i32
    %225 = tpu.memref_slice %arg8[%c6_i32_124, %c0_i32_127] : memref<8x160xf32, #tpu.memory_space<vmem>> -> memref<1x160xf32, #tpu.memory_space<vmem>>
    %226 = tpu.memref_squeeze %225 : memref<1x160xf32, #tpu.memory_space<vmem>> -> memref<160xf32, #tpu.memory_space<vmem>>
    %227 = tpu.memref_slice %arg9[%c1_i32_125] : memref<2x!tpu.dma_semaphore, #tpu.memory_space<semaphore_mem>> -> memref<1x!tpu.dma_semaphore, #tpu.memory_space<semaphore_mem>>
    %228 = tpu.memref_squeeze %227 : memref<1x!tpu.dma_semaphore, #tpu.memory_space<semaphore_mem>> -> memref<!tpu.dma_semaphore, #tpu.memory_space<semaphore_mem>>
    tpu.wait_dma2 semaphore(%228 : memref<!tpu.dma_semaphore, #tpu.memory_space<semaphore_mem>>) src(%224 : memref<160xf32, #tpu.memory_space<any>>) dst(%226 : memref<160xf32, #tpu.memory_space<vmem>>)
    %c7_i32_128 = arith.constant 7 : i32
    %c0_i32_129 = arith.constant 0 : i32
    %c0_i32_130 = arith.constant 0 : i32
    %229 = tpu.memref_slice %arg3[%45, %c0_i32_130] : memref<6x160xf32, #tpu.memory_space<any>> -> memref<1x160xf32, #tpu.memory_space<any>>
    %230 = tpu.memref_squeeze %229 : memref<1x160xf32, #tpu.memory_space<any>> -> memref<160xf32, #tpu.memory_space<any>>
    %c0_i32_131 = arith.constant 0 : i32
    %231 = tpu.memref_slice %arg7[%c7_i32_128, %c0_i32_131] : memref<8x160xf32, #tpu.memory_space<vmem>> -> memref<1x160xf32, #tpu.memory_space<vmem>>
    %232 = tpu.memref_squeeze %231 : memref<1x160xf32, #tpu.memory_space<vmem>> -> memref<160xf32, #tpu.memory_space<vmem>>
    %233 = tpu.memref_slice %arg9[%c0_i32_129] : memref<2x!tpu.dma_semaphore, #tpu.memory_space<semaphore_mem>> -> memref<1x!tpu.dma_semaphore, #tpu.memory_space<semaphore_mem>>
    %234 = tpu.memref_squeeze %233 : memref<1x!tpu.dma_semaphore, #tpu.memory_space<semaphore_mem>> -> memref<!tpu.dma_semaphore, #tpu.memory_space<semaphore_mem>>
    tpu.wait_dma2 semaphore(%234 : memref<!tpu.dma_semaphore, #tpu.memory_space<semaphore_mem>>) src(%230 : memref<160xf32, #tpu.memory_space<any>>) dst(%232 : memref<160xf32, #tpu.memory_space<vmem>>)
    %c7_i32_132 = arith.constant 7 : i32
    %c1_i32_133 = arith.constant 1 : i32
    %c0_i32_134 = arith.constant 0 : i32
    %235 = tpu.memref_slice %arg4[%48, %c0_i32_134] : memref<5x160xf32, #tpu.memory_space<any>> -> memref<1x160xf32, #tpu.memory_space<any>>
    %236 = tpu.memref_squeeze %235 : memref<1x160xf32, #tpu.memory_space<any>> -> memref<160xf32, #tpu.memory_space<any>>
    %c0_i32_135 = arith.constant 0 : i32
    %237 = tpu.memref_slice %arg8[%c7_i32_132, %c0_i32_135] : memref<8x160xf32, #tpu.memory_space<vmem>> -> memref<1x160xf32, #tpu.memory_space<vmem>>
    %238 = tpu.memref_squeeze %237 : memref<1x160xf32, #tpu.memory_space<vmem>> -> memref<160xf32, #tpu.memory_space<vmem>>
    %239 = tpu.memref_slice %arg9[%c1_i32_133] : memref<2x!tpu.dma_semaphore, #tpu.memory_space<semaphore_mem>> -> memref<1x!tpu.dma_semaphore, #tpu.memory_space<semaphore_mem>>
    %240 = tpu.memref_squeeze %239 : memref<1x!tpu.dma_semaphore, #tpu.memory_space<semaphore_mem>> -> memref<!tpu.dma_semaphore, #tpu.memory_space<semaphore_mem>>
    tpu.wait_dma2 semaphore(%240 : memref<!tpu.dma_semaphore, #tpu.memory_space<semaphore_mem>>) src(%236 : memref<160xf32, #tpu.memory_space<any>>) dst(%238 : memref<160xf32, #tpu.memory_space<vmem>>)
    %c0 = arith.constant 0 : index
    %c0_136 = arith.constant 0 : index
    %241 = vector.load %arg7[%c0, %c0_136] : memref<8x160xf32, #tpu.memory_space<vmem>>, vector<8x160xf32>
    %c0_137 = arith.constant 0 : index
    %c0_138 = arith.constant 0 : index
    %242 = vector.load %arg5[%c0_137, %c0_138] : memref<8x160xf32, #tpu.memory_space<vmem>>, vector<8x160xf32>
    tpu.vector_store %arg5[%c0_137, %c0_138], %241 {strides = array<i32>} : memref<8x160xf32, #tpu.memory_space<vmem>>, vector<8x160xf32>,
    %c0_139 = arith.constant 0 : index
    %c0_140 = arith.constant 0 : index
    %243 = vector.load %arg8[%c0_139, %c0_140] : memref<8x160xf32, #tpu.memory_space<vmem>>, vector<8x160xf32>
    %c0_141 = arith.constant 0 : index
    %c0_142 = arith.constant 0 : index
    %244 = vector.load %arg6[%c0_141, %c0_142] : memref<8x160xf32, #tpu.memory_space<vmem>>, vector<8x160xf32>
    tpu.vector_store %arg6[%c0_141, %c0_142], %243 {strides = array<i32>} : memref<8x160xf32, #tpu.memory_space<vmem>>, vector<8x160xf32>,
    return
  }
  func.func @transform_2(%arg0: i32, %arg1: memref<8xi32, #tpu.memory_space<smem>>, %arg2: memref<8xi32, #tpu.memory_space<smem>>) -> (i32, i32) {
    %c0_i32 = arith.constant 0 : i32
    %c0_i32_0 = arith.constant 0 : i32
    return %arg0, %c0_i32 : i32, i32
  }
  func.func @transform_3(%arg0: i32, %arg1: memref<8xi32, #tpu.memory_space<smem>>, %arg2: memref<8xi32, #tpu.memory_space<smem>>) -> (i32, i32) {
    %c0_i32 = arith.constant 0 : i32
    %c0_i32_0 = arith.constant 0 : i32
    return %arg0, %c0_i32 : i32, i32
  }
}

</mosaic_0001>

<llo_original>
// kernel: embedding_forward.5
$region0: #{embedding_forward.5}
  #allocation0 [shape = 'u32[]', space=smem, size = 0x4, offset = 0x4, fixed_abs, tag = 'smem constant byte address 0x4 - core index']
  #allocation1 [shape = 'u32[144,128]{1,0:T(1,128)}', space=vmem, size = 0x12000, scoped, tag = 'internal scratch']
  #allocation2 [shape = 'f32[8,160]{1,0:T(8,128)}', space=vmem, size = 0x2000, scoped, tag = 'scratch operand']
  #allocation3 [shape = 'f32[8,160]{1,0:T(8,128)}', space=vmem, size = 0x2000, scoped, tag = 'scratch operand']
  #allocation4 [shape = 's32[2]{0}', space=sflag, size = 0x8, scoped, tag = 'scratch operand']
  #allocation5 [shape = 's32[1]{0}', space=sflag, size = 0x4, scoped, tag = 'scoped memory for embedding_forward.5']
  #allocation6 [shape = 'u8[512]{0}', space=smem, size = 0x200, scoped, tag = 'prefetched SMEM operand 0']
  #allocation7 [shape = 'u8[512]{0}', space=smem, size = 0x200, scoped, tag = 'prefetched SMEM operand 1']
  #allocation12 [shape = 's32[]', space=sflag, size = 0x4, offset = 0, fixed_abs, tag = 'sflag constant byte address 0x0 - dummy sync flag']
  #allocation13 [shape = 's32[]', space=sflag, size = 0x4, offset = 0, fixed_abs, tag = 'sflag constant byte address 0x0 - dummy sync flag']
  #allocation14 [shape = 's32[]', space=sflag, size = 0x4, offset = 0, fixed_abs, tag = 'sflag constant byte address 0x0 - dummy sync flag']
  #allocation15 [shape = 's32[]', space=sflag, size = 0x4, offset = 0, fixed_abs, tag = 'sflag constant byte address 0x0 - dummy sync flag']
  #allocation16 [shape = 's32[]', space=sflag, size = 0x4, offset = 0, fixed_abs, tag = 'sflag constant byte address 0x0 - dummy sync flag']
  #allocation17 [shape = 's32[]', space=sflag, size = 0x4, offset = 0, fixed_abs, tag = 'sflag constant byte address 0x0 - dummy sync flag']
  #allocation18 [shape = 's32[]', space=sflag, size = 0x4, offset = 0, fixed_abs, tag = 'sflag constant byte address 0x0 - dummy sync flag']
  #allocation19 [shape = 's32[]', space=sflag, size = 0x4, offset = 0, fixed_abs, tag = 'sflag constant byte address 0x0 - dummy sync flag']
  #allocation20 [shape = 's32[]', space=sflag, size = 0x4, offset = 0, fixed_abs, tag = 'sflag constant byte address 0x0 - dummy sync flag']
  #allocation21 [shape = 's32[]', space=sflag, size = 0x4, offset = 0, fixed_abs, tag = 'sflag constant byte address 0x0 - dummy sync flag']
  #allocation22 [shape = 's32[]', space=sflag, size = 0x4, offset = 0, fixed_abs, tag = 'sflag constant byte address 0x0 - dummy sync flag']
  #allocation23 [shape = 's32[]', space=sflag, size = 0x4, offset = 0, fixed_abs, tag = 'sflag constant byte address 0x0 - dummy sync flag']
  #allocation24 [shape = 's32[]', space=sflag, size = 0x4, offset = 0, fixed_abs, tag = 'sflag constant byte address 0x0 - dummy sync flag']
  #allocation25 [shape = 's32[]', space=sflag, size = 0x4, offset = 0, fixed_abs, tag = 'sflag constant byte address 0x0 - dummy sync flag']
  #allocation26 [shape = 's32[]', space=sflag, size = 0x4, offset = 0, fixed_abs, tag = 'sflag constant byte address 0x0 - dummy sync flag']
  #allocation27 [shape = 's32[]', space=sflag, size = 0x4, offset = 0, fixed_abs, tag = 'sflag constant byte address 0x0 - dummy sync flag']
  %s0 = inlined_call_operand.vmem [shape: s32[8], index: 0, kind: input, shape index: {}]
  %s1 = inlined_call_operand.vmem [shape: s32[8], index: 1, kind: input, shape index: {}]
  %s2 = inlined_call_operand.vmem [shape: f32[6,160], index: 2, kind: input, shape index: {}]
  %s3 = inlined_call_operand.vmem [shape: f32[5,160], index: 3, kind: input, shape index: {}]
  %s4 = inlined_call_operand.hbm [shape: f32[4,160], index: 4, kind: output, shape index: {0}]
  %s5 = inlined_call_operand.hbm [shape: f32[4,160], index: 5, kind: output, shape index: {1}]
  %6 = xla_tuple %s4, %s5
  %s7 = sld [smem:[#allocation0]]
  $region498: #{embedding_forward.5} parent=0
    _
  %s9 = ssub.s32 1, %s7
  %s10 = scalar_select 0, %s9, %s7
  %s11 = sshll.u32 %s0, 4
  %s12 = int_to_ptr.vmem [resolvable:$true] %s11
  %14 = dma.vmem_to_smem %s12, 16, [#allocation6], [#allocation5]
  %s15 = sshll.u32 %s1, 4
  %s16 = int_to_ptr.vmem [resolvable:$true] %s15
  %18 = dma.vmem_to_smem %s16, 16, [#allocation7], [#allocation5]
  %19 = dma.done [#allocation5], 32
  %20 = sfence
  $region1: #{embedding_forward.5} parent=0
    #allocation8 [shape = 'u8[8192]{0}', space=vmem, size = 0x2000, scoped, tag = 'output window, operand 0, single buffered']
    #allocation9 [shape = 's32[1]{0}', space=sflag, size = 0x4, scoped, tag = 'scoped memory for embedding_forward.5']
    #allocation10 [shape = 'u8[8192]{0}', space=vmem, size = 0x2000, scoped, tag = 'output window, operand 1, single buffered']
    #allocation11 [shape = 's32[1]{0}', space=sflag, size = 0x4, scoped, tag = 'scoped memory for embedding_forward.5']
    %21 = vsyncpa [#allocation9], 0
    %22 = vsyncpa [#allocation11], 0
    %s23 = smul.u32 0, 8
    %s24 = sld [smem:[#allocation6 + %s23]]
    %s25 = sld [smem:[#allocation7 + %s23]]
    %s26 = sadd.s32 %s23, 1
    %s27 = sld [smem:[#allocation6 + %s26]]
    %s28 = sld [smem:[#allocation7 + %s26]]
    %s29 = sadd.s32 %s23, 2
    %s30 = sld [smem:[#allocation6 + %s29]]
    %s31 = sld [smem:[#allocation7 + %s29]]
    %s32 = sadd.s32 %s23, 3
    %s33 = sld [smem:[#allocation6 + %s32]]
    %s34 = sld [smem:[#allocation7 + %s32]]
    %s35 = sadd.s32 %s23, 4
    %s36 = sld [smem:[#allocation6 + %s35]]
    %s37 = sld [smem:[#allocation7 + %s35]]
    %s38 = sadd.s32 %s23, 5
    %s39 = sld [smem:[#allocation6 + %s38]]
    %s40 = sld [smem:[#allocation7 + %s38]]
    %s41 = sadd.s32 %s23, 6
    %s42 = sld [smem:[#allocation6 + %s41]]
    %s43 = sld [smem:[#allocation7 + %s41]]
    %s44 = sadd.s32 %s23, 7
    %s45 = sld [smem:[#allocation6 + %s44]]
    %s46 = sld [smem:[#allocation7 + %s44]]
    %s47 = sshrl.u32 %s24, 3
    %s48 = sand.u32 %s24, 7
    %s49 = smul.u32 %s47, 16
    %s50 = sadd.s32 %s48, %s49
    %s51 = scalar_lea.vmem %s2, %s50
    %p53 = scmp.lt.u32.totalorder 1, 8
    %p54 = pneg %p53
    // Predicated region
    $region2: #{embedding_forward.5} parent=1 // pred_check
      _
    $region3: #{embedding_forward.5} parent=1 // pred_check_branch
      %56 = sbr.rel (%p53) target = $region5
    $region4: #{embedding_forward.5} parent=1 // pred_region
      %s74 = sand.u32 1, 7
      %p75 = scmp.eq.s32.totalorder %s74, 0
      %p76 = pneg %p75
      // Predicated region
      $region17: #{embedding_forward.5} parent=4 // pred_check
        _
      $region18: #{embedding_forward.5} parent=4 // pred_check_branch
        %78 = sbr.rel (%p75) target = $region20
      $region19: #{embedding_forward.5} parent=4 // pred_region
        %s79 = sand.u32 1, 7
        %s80 = ssub.s32 1, %s79
        %s81 = scalar_lea.vmem %s51, %s80
        %s82 = ssub.s32 1, %s79
        %s83 = scalar_lea.vmem [#allocation2], %s82
        %s84 = sshll.u32 1, %s79
        %s85 = ssub.s32 %s84, 1
        loop: start=0, step=1, limit=1
        $region21: #{embedding_forward.5} parent=19 // loop_pre_header
          _
        $region22: #{embedding_forward.5} parent=19 // loop_header
          %s87 = sphi 0, %s91
          %p88 = scmp.ge.s32.totalorder %s87, 1
          %s92 = sphi %s81, %s81
          %s93 = sphi %s83, %s83
        $region23: #{embedding_forward.5} parent=19 // loop_header_branch
          %90 = sbr.rel (%p88) target = $region27
        $region24: #{embedding_forward.5} parent=19 // loop_body
          %v94 = vld [vmem:[%s92] sm:%s85]
          %95 = vst [vmem:[%s93] sm:%s85] %v94
          %v96 = vld [vmem:[%s92 + $0x8] sm:%s85]
          %97 = vst [vmem:[%s93 + $0x8] sm:%s85] %v96
        $region25: #{embedding_forward.5} parent=19 // loop_footer
          %s91 = sadd.s32 1, %s87
        $region26: #{embedding_forward.5} parent=19 // loop_footer_branch
          %86 = sbr.rel target = $region22
        $region27: #{embedding_forward.5} parent=19 // loop_exit
          _
      $region20: #{embedding_forward.5} parent=4 // pred_fallthru
        _
    $region5: #{embedding_forward.5} parent=1 // pred_fallthru
      _
    // Predicated region
    $region6: #{embedding_forward.5} parent=1 // pred_check
      %p57 = pneg %p53
    $region7: #{embedding_forward.5} parent=1 // pred_check_branch
      %59 = sbr.rel (%p57) target = $region9
    $region8: #{embedding_forward.5} parent=1 // pred_region
      %s60 = sshll.u32 1, 1
      %s61 = ssub.s32 %s60, 1
      loop: start=0, step=1, limit=1
      $region10: #{embedding_forward.5} parent=8 // loop_pre_header
        _
      $region11: #{embedding_forward.5} parent=8 // loop_header
        %s63 = sphi 0, %s67
        %p64 = scmp.ge.s32.totalorder %s63, 1
        %s68 = sphi %s51, %s51
        %s69 = sphi [#allocation2], [#allocation2]
      $region12: #{embedding_forward.5} parent=8 // loop_header_branch
        %66 = sbr.rel (%p64) target = $region16
      $region13: #{embedding_forward.5} parent=8 // loop_body
        %v70 = vld [vmem:[%s68] sm:%s61]
        %71 = vst [vmem:[%s69] sm:%s61] %v70
        %v72 = vld [vmem:[%s68 + $0x8] sm:%s61]
        %73 = vst [vmem:[%s69 + $0x8] sm:%s61] %v72
      $region14: #{embedding_forward.5} parent=8 // loop_footer
        %s67 = sadd.s32 1, %s63
      $region15: #{embedding_forward.5} parent=8 // loop_footer_branch
        %62 = sbr.rel target = $region11
      $region16: #{embedding_forward.5} parent=8 // loop_exit
        _
    $region9: #{embedding_forward.5} parent=1 // pred_fallthru
      _
    // Predicated region
    $region28: #{embedding_forward.5} parent=1 // pred_check
      _
    $region29: #{embedding_forward.5} parent=1 // pred_check_branch
      %100 = sbr.rel (0) target = $region31
    $region30: #{embedding_forward.5} parent=1 // pred_region
      %101 = vsyncadd [#allocation4], 32
    $region31: #{embedding_forward.5} parent=1 // pred_fallthru
      _
    %s102 = sshrl.u32 %s25, 3
    %s103 = sand.u32 %s25, 7
    %s104 = smul.u32 %s102, 16
    %s105 = sadd.s32 %s103, %s104
    %s106 = scalar_lea.vmem %s3, %s105
    %s107 = scalar_lea.sflag [#allocation4], 1
    %p109 = scmp.lt.u32.totalorder 1, 8
    %p110 = pneg %p109
    // Predicated region
    $region32: #{embedding_forward.5} parent=1 // pred_check
      _
    $region33: #{embedding_forward.5} parent=1 // pred_check_branch
      %112 = sbr.rel (%p109) target = $region35
    $region34: #{embedding_forward.5} parent=1 // pred_region
      %s130 = sand.u32 1, 7
      %p131 = scmp.eq.s32.totalorder %s130, 0
      %p132 = pneg %p131
      // Predicated region
      $region47: #{embedding_forward.5} parent=34 // pred_check
        _
      $region48: #{embedding_forward.5} parent=34 // pred_check_branch
        %134 = sbr.rel (%p131) target = $region50
      $region49: #{embedding_forward.5} parent=34 // pred_region
        %s135 = sand.u32 1, 7
        %s136 = ssub.s32 1, %s135
        %s137 = scalar_lea.vmem %s106, %s136
        %s138 = ssub.s32 1, %s135
        %s139 = scalar_lea.vmem [#allocation3], %s138
        %s140 = sshll.u32 1, %s135
        %s141 = ssub.s32 %s140, 1
        loop: start=0, step=1, limit=1
        $region51: #{embedding_forward.5} parent=49 // loop_pre_header
          _
        $region52: #{embedding_forward.5} parent=49 // loop_header
          %s143 = sphi 0, %s147
          %p144 = scmp.ge.s32.totalorder %s143, 1
          %s148 = sphi %s137, %s137
          %s149 = sphi %s139, %s139
        $region53: #{embedding_forward.5} parent=49 // loop_header_branch
          %146 = sbr.rel (%p144) target = $region57
        $region54: #{embedding_forward.5} parent=49 // loop_body
          %v150 = vld [vmem:[%s148] sm:%s141]
          %151 = vst [vmem:[%s149] sm:%s141] %v150
          %v152 = vld [vmem:[%s148 + $0x8] sm:%s141]
          %153 = vst [vmem:[%s149 + $0x8] sm:%s141] %v152
        $region55: #{embedding_forward.5} parent=49 // loop_footer
          %s147 = sadd.s32 1, %s143
        $region56: #{embedding_forward.5} parent=49 // loop_footer_branch
          %142 = sbr.rel target = $region52
        $region57: #{embedding_forward.5} parent=49 // loop_exit
          _
      $region50: #{embedding_forward.5} parent=34 // pred_fallthru
        _
    $region35: #{embedding_forward.5} parent=1 // pred_fallthru
      _
    // Predicated region
    $region36: #{embedding_forward.5} parent=1 // pred_check
      %p113 = pneg %p109
    $region37: #{embedding_forward.5} parent=1 // pred_check_branch
      %115 = sbr.rel (%p113) target = $region39
    $region38: #{embedding_forward.5} parent=1 // pred_region
      %s116 = sshll.u32 1, 1
      %s117 = ssub.s32 %s116, 1
      loop: start=0, step=1, limit=1
      $region40: #{embedding_forward.5} parent=38 // loop_pre_header
        _
      $region41: #{embedding_forward.5} parent=38 // loop_header
        %s119 = sphi 0, %s123
        %p120 = scmp.ge.s32.totalorder %s119, 1
        %s124 = sphi %s106, %s106
        %s125 = sphi [#allocation3], [#allocation3]
      $region42: #{embedding_forward.5} parent=38 // loop_header_branch
        %122 = sbr.rel (%p120) target = $region46
      $region43: #{embedding_forward.5} parent=38 // loop_body
        %v126 = vld [vmem:[%s124] sm:%s117]
        %127 = vst [vmem:[%s125] sm:%s117] %v126
        %v128 = vld [vmem:[%s124 + $0x8] sm:%s117]
        %129 = vst [vmem:[%s125 + $0x8] sm:%s117] %v128
      $region44: #{embedding_forward.5} parent=38 // loop_footer
        %s123 = sadd.s32 1, %s119
      $region45: #{embedding_forward.5} parent=38 // loop_footer_branch
        %118 = sbr.rel target = $region41
      $region46: #{embedding_forward.5} parent=38 // loop_exit
        _
    $region39: #{embedding_forward.5} parent=1 // pred_fallthru
      _
    // Predicated region
    $region58: #{embedding_forward.5} parent=1 // pred_check
      _
    $region59: #{embedding_forward.5} parent=1 // pred_check_branch
      %156 = sbr.rel (0) target = $region61
    $region60: #{embedding_forward.5} parent=1 // pred_region
      %157 = vsyncadd %s107, 32
    $region61: #{embedding_forward.5} parent=1 // pred_fallthru
      _
    %s158 = sshrl.u32 %s27, 3
    %s159 = sand.u32 %s27, 7
    %s160 = smul.u32 %s158, 16
    %s161 = sadd.s32 %s159, %s160
    %s162 = scalar_lea.vmem %s2, %s161
    %s163 = scalar_lea.vmem [#allocation2], 1
    %p165 = scmp.lt.u32.totalorder 1, 8
    %p166 = pneg %p165
    // Predicated region
    $region62: #{embedding_forward.5} parent=1 // pred_check
      _
    $region63: #{embedding_forward.5} parent=1 // pred_check_branch
      %168 = sbr.rel (%p165) target = $region65
    $region64: #{embedding_forward.5} parent=1 // pred_region
      %s186 = sand.u32 1, 7
      %p187 = scmp.eq.s32.totalorder %s186, 0
      %p188 = pneg %p187
      // Predicated region
      $region77: #{embedding_forward.5} parent=64 // pred_check
        _
      $region78: #{embedding_forward.5} parent=64 // pred_check_branch
        %190 = sbr.rel (%p187) target = $region80
      $region79: #{embedding_forward.5} parent=64 // pred_region
        %s191 = sand.u32 1, 7
        %s192 = ssub.s32 1, %s191
        %s193 = scalar_lea.vmem %s162, %s192
        %s194 = ssub.s32 1, %s191
        %s195 = scalar_lea.vmem %s163, %s194 [#allocation2]
        %s196 = sshll.u32 1, %s191
        %s197 = ssub.s32 %s196, 1
        loop: start=0, step=1, limit=1
        $region81: #{embedding_forward.5} parent=79 // loop_pre_header
          _
        $region82: #{embedding_forward.5} parent=79 // loop_header
          %s199 = sphi 0, %s203
          %p200 = scmp.ge.s32.totalorder %s199, 1
          %s204 = sphi %s193, %s193
          %s205 = sphi %s195, %s195
        $region83: #{embedding_forward.5} parent=79 // loop_header_branch
          %202 = sbr.rel (%p200) target = $region87
        $region84: #{embedding_forward.5} parent=79 // loop_body
          %v206 = vld [vmem:[%s204] sm:%s197]
          %207 = vst [vmem:[%s205] sm:%s197] %v206
          %v208 = vld [vmem:[%s204 + $0x8] sm:%s197]
          %209 = vst [vmem:[%s205 + $0x8] sm:%s197] %v208
        $region85: #{embedding_forward.5} parent=79 // loop_footer
          %s203 = sadd.s32 1, %s199
        $region86: #{embedding_forward.5} parent=79 // loop_footer_branch
          %198 = sbr.rel target = $region82
        $region87: #{embedding_forward.5} parent=79 // loop_exit
          _
      $region80: #{embedding_forward.5} parent=64 // pred_fallthru
        _
    $region65: #{embedding_forward.5} parent=1 // pred_fallthru
      _
    // Predicated region
    $region66: #{embedding_forward.5} parent=1 // pred_check
      %p169 = pneg %p165
    $region67: #{embedding_forward.5} parent=1 // pred_check_branch
      %171 = sbr.rel (%p169) target = $region69
    $region68: #{embedding_forward.5} parent=1 // pred_region
      %s172 = sshll.u32 1, 1
      %s173 = ssub.s32 %s172, 1
      loop: start=0, step=1, limit=1
      $region70: #{embedding_forward.5} parent=68 // loop_pre_header
        _
      $region71: #{embedding_forward.5} parent=68 // loop_header
        %s175 = sphi 0, %s179
        %p176 = scmp.ge.s32.totalorder %s175, 1
        %s180 = sphi %s162, %s162
        %s181 = sphi %s163, %s163
      $region72: #{embedding_forward.5} parent=68 // loop_header_branch
        %178 = sbr.rel (%p176) target = $region76
      $region73: #{embedding_forward.5} parent=68 // loop_body
        %v182 = vld [vmem:[%s180] sm:%s173]
        %183 = vst [vmem:[%s181] sm:%s173] %v182
        %v184 = vld [vmem:[%s180 + $0x8] sm:%s173]
        %185 = vst [vmem:[%s181 + $0x8] sm:%s173] %v184
      $region74: #{embedding_forward.5} parent=68 // loop_footer
        %s179 = sadd.s32 1, %s175
      $region75: #{embedding_forward.5} parent=68 // loop_footer_branch
        %174 = sbr.rel target = $region71
      $region76: #{embedding_forward.5} parent=68 // loop_exit
        _
    $region69: #{embedding_forward.5} parent=1 // pred_fallthru
      _
    // Predicated region
    $region88: #{embedding_forward.5} parent=1 // pred_check
      _
    $region89: #{embedding_forward.5} parent=1 // pred_check_branch
      %212 = sbr.rel (0) target = $region91
    $region90: #{embedding_forward.5} parent=1 // pred_region
      %213 = vsyncadd [#allocation4], 32
    $region91: #{embedding_forward.5} parent=1 // pred_fallthru
      _
    %s214 = sshrl.u32 %s28, 3
    %s215 = sand.u32 %s28, 7
    %s216 = smul.u32 %s214, 16
    %s217 = sadd.s32 %s215, %s216
    %s218 = scalar_lea.vmem %s3, %s217
    %s219 = scalar_lea.vmem [#allocation3], 1
    %p221 = scmp.lt.u32.totalorder 1, 8
    %p222 = pneg %p221
    // Predicated region
    $region92: #{embedding_forward.5} parent=1 // pred_check
      _
    $region93: #{embedding_forward.5} parent=1 // pred_check_branch
      %224 = sbr.rel (%p221) target = $region95
    $region94: #{embedding_forward.5} parent=1 // pred_region
      %s242 = sand.u32 1, 7
      %p243 = scmp.eq.s32.totalorder %s242, 0
      %p244 = pneg %p243
      // Predicated region
      $region107: #{embedding_forward.5} parent=94 // pred_check
        _
      $region108: #{embedding_forward.5} parent=94 // pred_check_branch
        %246 = sbr.rel (%p243) target = $region110
      $region109: #{embedding_forward.5} parent=94 // pred_region
        %s247 = sand.u32 1, 7
        %s248 = ssub.s32 1, %s247
        %s249 = scalar_lea.vmem %s218, %s248
        %s250 = ssub.s32 1, %s247
        %s251 = scalar_lea.vmem %s219, %s250 [#allocation3]
        %s252 = sshll.u32 1, %s247
        %s253 = ssub.s32 %s252, 1
        loop: start=0, step=1, limit=1
        $region111: #{embedding_forward.5} parent=109 // loop_pre_header
          _
        $region112: #{embedding_forward.5} parent=109 // loop_header
          %s255 = sphi 0, %s259
          %p256 = scmp.ge.s32.totalorder %s255, 1
          %s260 = sphi %s249, %s249
          %s261 = sphi %s251, %s251
        $region113: #{embedding_forward.5} parent=109 // loop_header_branch
          %258 = sbr.rel (%p256) target = $region117
        $region114: #{embedding_forward.5} parent=109 // loop_body
          %v262 = vld [vmem:[%s260] sm:%s253]
          %263 = vst [vmem:[%s261] sm:%s253] %v262
          %v264 = vld [vmem:[%s260 + $0x8] sm:%s253]
          %265 = vst [vmem:[%s261 + $0x8] sm:%s253] %v264
        $region115: #{embedding_forward.5} parent=109 // loop_footer
          %s259 = sadd.s32 1, %s255
        $region116: #{embedding_forward.5} parent=109 // loop_footer_branch
          %254 = sbr.rel target = $region112
        $region117: #{embedding_forward.5} parent=109 // loop_exit
          _
      $region110: #{embedding_forward.5} parent=94 // pred_fallthru
        _
    $region95: #{embedding_forward.5} parent=1 // pred_fallthru
      _
    // Predicated region
    $region96: #{embedding_forward.5} parent=1 // pred_check
      %p225 = pneg %p221
    $region97: #{embedding_forward.5} parent=1 // pred_check_branch
      %227 = sbr.rel (%p225) target = $region99
    $region98: #{embedding_forward.5} parent=1 // pred_region
      %s228 = sshll.u32 1, 1
      %s229 = ssub.s32 %s228, 1
      loop: start=0, step=1, limit=1
      $region100: #{embedding_forward.5} parent=98 // loop_pre_header
        _
      $region101: #{embedding_forward.5} parent=98 // loop_header
        %s231 = sphi 0, %s235
        %p232 = scmp.ge.s32.totalorder %s231, 1
        %s236 = sphi %s218, %s218
        %s237 = sphi %s219, %s219
      $region102: #{embedding_forward.5} parent=98 // loop_header_branch
        %234 = sbr.rel (%p232) target = $region106
      $region103: #{embedding_forward.5} parent=98 // loop_body
        %v238 = vld [vmem:[%s236] sm:%s229]
        %239 = vst [vmem:[%s237] sm:%s229] %v238
        %v240 = vld [vmem:[%s236 + $0x8] sm:%s229]
        %241 = vst [vmem:[%s237 + $0x8] sm:%s229] %v240
      $region104: #{embedding_forward.5} parent=98 // loop_footer
        %s235 = sadd.s32 1, %s231
      $region105: #{embedding_forward.5} parent=98 // loop_footer_branch
        %230 = sbr.rel target = $region101
      $region106: #{embedding_forward.5} parent=98 // loop_exit
        _
    $region99: #{embedding_forward.5} parent=1 // pred_fallthru
      _
    // Predicated region
    $region118: #{embedding_forward.5} parent=1 // pred_check
      _
    $region119: #{embedding_forward.5} parent=1 // pred_check_branch
      %268 = sbr.rel (0) target = $region121
    $region120: #{embedding_forward.5} parent=1 // pred_region
      %269 = vsyncadd %s107, 32
    $region121: #{embedding_forward.5} parent=1 // pred_fallthru
      _
    %s270 = sshrl.u32 %s30, 3
    %s271 = sand.u32 %s30, 7
    %s272 = smul.u32 %s270, 16
    %s273 = sadd.s32 %s271, %s272
    %s274 = scalar_lea.vmem %s2, %s273
    %s275 = scalar_lea.vmem [#allocation2], 2
    %p277 = scmp.lt.u32.totalorder 1, 8
    %p278 = pneg %p277
    // Predicated region
    $region122: #{embedding_forward.5} parent=1 // pred_check
      _
    $region123: #{embedding_forward.5} parent=1 // pred_check_branch
      %280 = sbr.rel (%p277) target = $region125
    $region124: #{embedding_forward.5} parent=1 // pred_region
      %s298 = sand.u32 1, 7
      %p299 = scmp.eq.s32.totalorder %s298, 0
      %p300 = pneg %p299
      // Predicated region
      $region137: #{embedding_forward.5} parent=124 // pred_check
        _
      $region138: #{embedding_forward.5} parent=124 // pred_check_branch
        %302 = sbr.rel (%p299) target = $region140
      $region139: #{embedding_forward.5} parent=124 // pred_region
        %s303 = sand.u32 1, 7
        %s304 = ssub.s32 1, %s303
        %s305 = scalar_lea.vmem %s274, %s304
        %s306 = ssub.s32 1, %s303
        %s307 = scalar_lea.vmem %s275, %s306 [#allocation2]
        %s308 = sshll.u32 1, %s303
        %s309 = ssub.s32 %s308, 1
        loop: start=0, step=1, limit=1
        $region141: #{embedding_forward.5} parent=139 // loop_pre_header
          _
        $region142: #{embedding_forward.5} parent=139 // loop_header
          %s311 = sphi 0, %s315
          %p312 = scmp.ge.s32.totalorder %s311, 1
          %s316 = sphi %s305, %s305
          %s317 = sphi %s307, %s307
        $region143: #{embedding_forward.5} parent=139 // loop_header_branch
          %314 = sbr.rel (%p312) target = $region147
        $region144: #{embedding_forward.5} parent=139 // loop_body
          %v318 = vld [vmem:[%s316] sm:%s309]
          %319 = vst [vmem:[%s317] sm:%s309] %v318
          %v320 = vld [vmem:[%s316 + $0x8] sm:%s309]
          %321 = vst [vmem:[%s317 + $0x8] sm:%s309] %v320
        $region145: #{embedding_forward.5} parent=139 // loop_footer
          %s315 = sadd.s32 1, %s311
        $region146: #{embedding_forward.5} parent=139 // loop_footer_branch
          %310 = sbr.rel target = $region142
        $region147: #{embedding_forward.5} parent=139 // loop_exit
          _
      $region140: #{embedding_forward.5} parent=124 // pred_fallthru
        _
    $region125: #{embedding_forward.5} parent=1 // pred_fallthru
      _
    // Predicated region
    $region126: #{embedding_forward.5} parent=1 // pred_check
      %p281 = pneg %p277
    $region127: #{embedding_forward.5} parent=1 // pred_check_branch
      %283 = sbr.rel (%p281) target = $region129
    $region128: #{embedding_forward.5} parent=1 // pred_region
      %s284 = sshll.u32 1, 1
      %s285 = ssub.s32 %s284, 1
      loop: start=0, step=1, limit=1
      $region130: #{embedding_forward.5} parent=128 // loop_pre_header
        _
      $region131: #{embedding_forward.5} parent=128 // loop_header
        %s287 = sphi 0, %s291
        %p288 = scmp.ge.s32.totalorder %s287, 1
        %s292 = sphi %s274, %s274
        %s293 = sphi %s275, %s275
      $region132: #{embedding_forward.5} parent=128 // loop_header_branch
        %290 = sbr.rel (%p288) target = $region136
      $region133: #{embedding_forward.5} parent=128 // loop_body
        %v294 = vld [vmem:[%s292] sm:%s285]
        %295 = vst [vmem:[%s293] sm:%s285] %v294
        %v296 = vld [vmem:[%s292 + $0x8] sm:%s285]
        %297 = vst [vmem:[%s293 + $0x8] sm:%s285] %v296
      $region134: #{embedding_forward.5} parent=128 // loop_footer
        %s291 = sadd.s32 1, %s287
      $region135: #{embedding_forward.5} parent=128 // loop_footer_branch
        %286 = sbr.rel target = $region131
      $region136: #{embedding_forward.5} parent=128 // loop_exit
        _
    $region129: #{embedding_forward.5} parent=1 // pred_fallthru
      _
    // Predicated region
    $region148: #{embedding_forward.5} parent=1 // pred_check
      _
    $region149: #{embedding_forward.5} parent=1 // pred_check_branch
      %324 = sbr.rel (0) target = $region151
    $region150: #{embedding_forward.5} parent=1 // pred_region
      %325 = vsyncadd [#allocation4], 32
    $region151: #{embedding_forward.5} parent=1 // pred_fallthru
      _
    %s326 = sshrl.u32 %s31, 3
    %s327 = sand.u32 %s31, 7
    %s328 = smul.u32 %s326, 16
    %s329 = sadd.s32 %s327, %s328
    %s330 = scalar_lea.vmem %s3, %s329
    %s331 = scalar_lea.vmem [#allocation3], 2
    %p333 = scmp.lt.u32.totalorder 1, 8
    %p334 = pneg %p333
    // Predicated region
    $region152: #{embedding_forward.5} parent=1 // pred_check
      _
    $region153: #{embedding_forward.5} parent=1 // pred_check_branch
      %336 = sbr.rel (%p333) target = $region155
    $region154: #{embedding_forward.5} parent=1 // pred_region
      %s354 = sand.u32 1, 7
      %p355 = scmp.eq.s32.totalorder %s354, 0
      %p356 = pneg %p355
      // Predicated region
      $region167: #{embedding_forward.5} parent=154 // pred_check
        _
      $region168: #{embedding_forward.5} parent=154 // pred_check_branch
        %358 = sbr.rel (%p355) target = $region170
      $region169: #{embedding_forward.5} parent=154 // pred_region
        %s359 = sand.u32 1, 7
        %s360 = ssub.s32 1, %s359
        %s361 = scalar_lea.vmem %s330, %s360
        %s362 = ssub.s32 1, %s359
        %s363 = scalar_lea.vmem %s331, %s362 [#allocation3]
        %s364 = sshll.u32 1, %s359
        %s365 = ssub.s32 %s364, 1
        loop: start=0, step=1, limit=1
        $region171: #{embedding_forward.5} parent=169 // loop_pre_header
          _
        $region172: #{embedding_forward.5} parent=169 // loop_header
          %s367 = sphi 0, %s371
          %p368 = scmp.ge.s32.totalorder %s367, 1
          %s372 = sphi %s361, %s361
          %s373 = sphi %s363, %s363
        $region173: #{embedding_forward.5} parent=169 // loop_header_branch
          %370 = sbr.rel (%p368) target = $region177
        $region174: #{embedding_forward.5} parent=169 // loop_body
          %v374 = vld [vmem:[%s372] sm:%s365]
          %375 = vst [vmem:[%s373] sm:%s365] %v374
          %v376 = vld [vmem:[%s372 + $0x8] sm:%s365]
          %377 = vst [vmem:[%s373 + $0x8] sm:%s365] %v376
        $region175: #{embedding_forward.5} parent=169 // loop_footer
          %s371 = sadd.s32 1, %s367
        $region176: #{embedding_forward.5} parent=169 // loop_footer_branch
          %366 = sbr.rel target = $region172
        $region177: #{embedding_forward.5} parent=169 // loop_exit
          _
      $region170: #{embedding_forward.5} parent=154 // pred_fallthru
        _
    $region155: #{embedding_forward.5} parent=1 // pred_fallthru
      _
    // Predicated region
    $region156: #{embedding_forward.5} parent=1 // pred_check
      %p337 = pneg %p333
    $region157: #{embedding_forward.5} parent=1 // pred_check_branch
      %339 = sbr.rel (%p337) target = $region159
    $region158: #{embedding_forward.5} parent=1 // pred_region
      %s340 = sshll.u32 1, 1
      %s341 = ssub.s32 %s340, 1
      loop: start=0, step=1, limit=1
      $region160: #{embedding_forward.5} parent=158 // loop_pre_header
        _
      $region161: #{embedding_forward.5} parent=158 // loop_header
        %s343 = sphi 0, %s347
        %p344 = scmp.ge.s32.totalorder %s343, 1
        %s348 = sphi %s330, %s330
        %s349 = sphi %s331, %s331
      $region162: #{embedding_forward.5} parent=158 // loop_header_branch
        %346 = sbr.rel (%p344) target = $region166
      $region163: #{embedding_forward.5} parent=158 // loop_body
        %v350 = vld [vmem:[%s348] sm:%s341]
        %351 = vst [vmem:[%s349] sm:%s341] %v350
        %v352 = vld [vmem:[%s348 + $0x8] sm:%s341]
        %353 = vst [vmem:[%s349 + $0x8] sm:%s341] %v352
      $region164: #{embedding_forward.5} parent=158 // loop_footer
        %s347 = sadd.s32 1, %s343
      $region165: #{embedding_forward.5} parent=158 // loop_footer_branch
        %342 = sbr.rel target = $region161
      $region166: #{embedding_forward.5} parent=158 // loop_exit
        _
    $region159: #{embedding_forward.5} parent=1 // pred_fallthru
      _
    // Predicated region
    $region178: #{embedding_forward.5} parent=1 // pred_check
      _
    $region179: #{embedding_forward.5} parent=1 // pred_check_branch
      %380 = sbr.rel (0) target = $region181
    $region180: #{embedding_forward.5} parent=1 // pred_region
      %381 = vsyncadd %s107, 32
    $region181: #{embedding_forward.5} parent=1 // pred_fallthru
      _
    %s382 = sshrl.u32 %s33, 3
    %s383 = sand.u32 %s33, 7
    %s384 = smul.u32 %s382, 16
    %s385 = sadd.s32 %s383, %s384
    %s386 = scalar_lea.vmem %s2, %s385
    %s387 = scalar_lea.vmem [#allocation2], 3
    %p389 = scmp.lt.u32.totalorder 1, 8
    %p390 = pneg %p389
    // Predicated region
    $region182: #{embedding_forward.5} parent=1 // pred_check
      _
    $region183: #{embedding_forward.5} parent=1 // pred_check_branch
      %392 = sbr.rel (%p389) target = $region185
    $region184: #{embedding_forward.5} parent=1 // pred_region
      %s410 = sand.u32 1, 7
      %p411 = scmp.eq.s32.totalorder %s410, 0
      %p412 = pneg %p411
      // Predicated region
      $region197: #{embedding_forward.5} parent=184 // pred_check
        _
      $region198: #{embedding_forward.5} parent=184 // pred_check_branch
        %414 = sbr.rel (%p411) target = $region200
      $region199: #{embedding_forward.5} parent=184 // pred_region
        %s415 = sand.u32 1, 7
        %s416 = ssub.s32 1, %s415
        %s417 = scalar_lea.vmem %s386, %s416
        %s418 = ssub.s32 1, %s415
        %s419 = scalar_lea.vmem %s387, %s418 [#allocation2]
        %s420 = sshll.u32 1, %s415
        %s421 = ssub.s32 %s420, 1
        loop: start=0, step=1, limit=1
        $region201: #{embedding_forward.5} parent=199 // loop_pre_header
          _
        $region202: #{embedding_forward.5} parent=199 // loop_header
          %s423 = sphi 0, %s427
          %p424 = scmp.ge.s32.totalorder %s423, 1
          %s428 = sphi %s417, %s417
          %s429 = sphi %s419, %s419
        $region203: #{embedding_forward.5} parent=199 // loop_header_branch
          %426 = sbr.rel (%p424) target = $region207
        $region204: #{embedding_forward.5} parent=199 // loop_body
          %v430 = vld [vmem:[%s428] sm:%s421]
          %431 = vst [vmem:[%s429] sm:%s421] %v430
          %v432 = vld [vmem:[%s428 + $0x8] sm:%s421]
          %433 = vst [vmem:[%s429 + $0x8] sm:%s421] %v432
        $region205: #{embedding_forward.5} parent=199 // loop_footer
          %s427 = sadd.s32 1, %s423
        $region206: #{embedding_forward.5} parent=199 // loop_footer_branch
          %422 = sbr.rel target = $region202
        $region207: #{embedding_forward.5} parent=199 // loop_exit
          _
      $region200: #{embedding_forward.5} parent=184 // pred_fallthru
        _
    $region185: #{embedding_forward.5} parent=1 // pred_fallthru
      _
    // Predicated region
    $region186: #{embedding_forward.5} parent=1 // pred_check
      %p393 = pneg %p389
    $region187: #{embedding_forward.5} parent=1 // pred_check_branch
      %395 = sbr.rel (%p393) target = $region189
    $region188: #{embedding_forward.5} parent=1 // pred_region
      %s396 = sshll.u32 1, 1
      %s397 = ssub.s32 %s396, 1
      loop: start=0, step=1, limit=1
      $region190: #{embedding_forward.5} parent=188 // loop_pre_header
        _
      $region191: #{embedding_forward.5} parent=188 // loop_header
        %s399 = sphi 0, %s403
        %p400 = scmp.ge.s32.totalorder %s399, 1
        %s404 = sphi %s386, %s386
        %s405 = sphi %s387, %s387
      $region192: #{embedding_forward.5} parent=188 // loop_header_branch
        %402 = sbr.rel (%p400) target = $region196
      $region193: #{embedding_forward.5} parent=188 // loop_body
        %v406 = vld [vmem:[%s404] sm:%s397]
        %407 = vst [vmem:[%s405] sm:%s397] %v406
        %v408 = vld [vmem:[%s404 + $0x8] sm:%s397]
        %409 = vst [vmem:[%s405 + $0x8] sm:%s397] %v408
      $region194: #{embedding_forward.5} parent=188 // loop_footer
        %s403 = sadd.s32 1, %s399
      $region195: #{embedding_forward.5} parent=188 // loop_footer_branch
        %398 = sbr.rel target = $region191
      $region196: #{embedding_forward.5} parent=188 // loop_exit
        _
    $region189: #{embedding_forward.5} parent=1 // pred_fallthru
      _
    // Predicated region
    $region208: #{embedding_forward.5} parent=1 // pred_check
      _
    $region209: #{embedding_forward.5} parent=1 // pred_check_branch
      %436 = sbr.rel (0) target = $region211
    $region210: #{embedding_forward.5} parent=1 // pred_region
      %437 = vsyncadd [#allocation4], 32
    $region211: #{embedding_forward.5} parent=1 // pred_fallthru
      _
    %s438 = sshrl.u32 %s34, 3
    %s439 = sand.u32 %s34, 7
    %s440 = smul.u32 %s438, 16
    %s441 = sadd.s32 %s439, %s440
    %s442 = scalar_lea.vmem %s3, %s441
    %s443 = scalar_lea.vmem [#allocation3], 3
    %p445 = scmp.lt.u32.totalorder 1, 8
    %p446 = pneg %p445
    // Predicated region
    $region212: #{embedding_forward.5} parent=1 // pred_check
      _
    $region213: #{embedding_forward.5} parent=1 // pred_check_branch
      %448 = sbr.rel (%p445) target = $region215
    $region214: #{embedding_forward.5} parent=1 // pred_region
      %s466 = sand.u32 1, 7
      %p467 = scmp.eq.s32.totalorder %s466, 0
      %p468 = pneg %p467
      // Predicated region
      $region227: #{embedding_forward.5} parent=214 // pred_check
        _
      $region228: #{embedding_forward.5} parent=214 // pred_check_branch
        %470 = sbr.rel (%p467) target = $region230
      $region229: #{embedding_forward.5} parent=214 // pred_region
        %s471 = sand.u32 1, 7
        %s472 = ssub.s32 1, %s471
        %s473 = scalar_lea.vmem %s442, %s472
        %s474 = ssub.s32 1, %s471
        %s475 = scalar_lea.vmem %s443, %s474 [#allocation3]
        %s476 = sshll.u32 1, %s471
        %s477 = ssub.s32 %s476, 1
        loop: start=0, step=1, limit=1
        $region231: #{embedding_forward.5} parent=229 // loop_pre_header
          _
        $region232: #{embedding_forward.5} parent=229 // loop_header
          %s479 = sphi 0, %s483
          %p480 = scmp.ge.s32.totalorder %s479, 1
          %s484 = sphi %s473, %s473
          %s485 = sphi %s475, %s475
        $region233: #{embedding_forward.5} parent=229 // loop_header_branch
          %482 = sbr.rel (%p480) target = $region237
        $region234: #{embedding_forward.5} parent=229 // loop_body
          %v486 = vld [vmem:[%s484] sm:%s477]
          %487 = vst [vmem:[%s485] sm:%s477] %v486
          %v488 = vld [vmem:[%s484 + $0x8] sm:%s477]
          %489 = vst [vmem:[%s485 + $0x8] sm:%s477] %v488
        $region235: #{embedding_forward.5} parent=229 // loop_footer
          %s483 = sadd.s32 1, %s479
        $region236: #{embedding_forward.5} parent=229 // loop_footer_branch
          %478 = sbr.rel target = $region232
        $region237: #{embedding_forward.5} parent=229 // loop_exit
          _
      $region230: #{embedding_forward.5} parent=214 // pred_fallthru
        _
    $region215: #{embedding_forward.5} parent=1 // pred_fallthru
      _
    // Predicated region
    $region216: #{embedding_forward.5} parent=1 // pred_check
      %p449 = pneg %p445
    $region217: #{embedding_forward.5} parent=1 // pred_check_branch
      %451 = sbr.rel (%p449) target = $region219
    $region218: #{embedding_forward.5} parent=1 // pred_region
      %s452 = sshll.u32 1, 1
      %s453 = ssub.s32 %s452, 1
      loop: start=0, step=1, limit=1
      $region220: #{embedding_forward.5} parent=218 // loop_pre_header
        _
      $region221: #{embedding_forward.5} parent=218 // loop_header
        %s455 = sphi 0, %s459
        %p456 = scmp.ge.s32.totalorder %s455, 1
        %s460 = sphi %s442, %s442
        %s461 = sphi %s443, %s443
      $region222: #{embedding_forward.5} parent=218 // loop_header_branch
        %458 = sbr.rel (%p456) target = $region226
      $region223: #{embedding_forward.5} parent=218 // loop_body
        %v462 = vld [vmem:[%s460] sm:%s453]
        %463 = vst [vmem:[%s461] sm:%s453] %v462
        %v464 = vld [vmem:[%s460 + $0x8] sm:%s453]
        %465 = vst [vmem:[%s461 + $0x8] sm:%s453] %v464
      $region224: #{embedding_forward.5} parent=218 // loop_footer
        %s459 = sadd.s32 1, %s455
      $region225: #{embedding_forward.5} parent=218 // loop_footer_branch
        %454 = sbr.rel target = $region221
      $region226: #{embedding_forward.5} parent=218 // loop_exit
        _
    $region219: #{embedding_forward.5} parent=1 // pred_fallthru
      _
    // Predicated region
    $region238: #{embedding_forward.5} parent=1 // pred_check
      _
    $region239: #{embedding_forward.5} parent=1 // pred_check_branch
      %492 = sbr.rel (0) target = $region241
    $region240: #{embedding_forward.5} parent=1 // pred_region
      %493 = vsyncadd %s107, 32
    $region241: #{embedding_forward.5} parent=1 // pred_fallthru
      _
    %s494 = sshrl.u32 %s36, 3
    %s495 = sand.u32 %s36, 7
    %s496 = smul.u32 %s494, 16
    %s497 = sadd.s32 %s495, %s496
    %s498 = scalar_lea.vmem %s2, %s497
    %s499 = scalar_lea.vmem [#allocation2], 4
    %p501 = scmp.lt.u32.totalorder 1, 8
    %p502 = pneg %p501
    // Predicated region
    $region242: #{embedding_forward.5} parent=1 // pred_check
      _
    $region243: #{embedding_forward.5} parent=1 // pred_check_branch
      %504 = sbr.rel (%p501) target = $region245
    $region244: #{embedding_forward.5} parent=1 // pred_region
      %s522 = sand.u32 1, 7
      %p523 = scmp.eq.s32.totalorder %s522, 0
      %p524 = pneg %p523
      // Predicated region
      $region257: #{embedding_forward.5} parent=244 // pred_check
        _
      $region258: #{embedding_forward.5} parent=244 // pred_check_branch
        %526 = sbr.rel (%p523) target = $region260
      $region259: #{embedding_forward.5} parent=244 // pred_region
        %s527 = sand.u32 1, 7
        %s528 = ssub.s32 1, %s527
        %s529 = scalar_lea.vmem %s498, %s528
        %s530 = ssub.s32 1, %s527
        %s531 = scalar_lea.vmem %s499, %s530 [#allocation2]
        %s532 = sshll.u32 1, %s527
        %s533 = ssub.s32 %s532, 1
        loop: start=0, step=1, limit=1
        $region261: #{embedding_forward.5} parent=259 // loop_pre_header
          _
        $region262: #{embedding_forward.5} parent=259 // loop_header
          %s535 = sphi 0, %s539
          %p536 = scmp.ge.s32.totalorder %s535, 1
          %s540 = sphi %s529, %s529
          %s541 = sphi %s531, %s531
        $region263: #{embedding_forward.5} parent=259 // loop_header_branch
          %538 = sbr.rel (%p536) target = $region267
        $region264: #{embedding_forward.5} parent=259 // loop_body
          %v542 = vld [vmem:[%s540] sm:%s533]
          %543 = vst [vmem:[%s541] sm:%s533] %v542
          %v544 = vld [vmem:[%s540 + $0x8] sm:%s533]
          %545 = vst [vmem:[%s541 + $0x8] sm:%s533] %v544
        $region265: #{embedding_forward.5} parent=259 // loop_footer
          %s539 = sadd.s32 1, %s535
        $region266: #{embedding_forward.5} parent=259 // loop_footer_branch
          %534 = sbr.rel target = $region262
        $region267: #{embedding_forward.5} parent=259 // loop_exit
          _
      $region260: #{embedding_forward.5} parent=244 // pred_fallthru
        _
    $region245: #{embedding_forward.5} parent=1 // pred_fallthru
      _
    // Predicated region
    $region246: #{embedding_forward.5} parent=1 // pred_check
      %p505 = pneg %p501
    $region247: #{embedding_forward.5} parent=1 // pred_check_branch
      %507 = sbr.rel (%p505) target = $region249
    $region248: #{embedding_forward.5} parent=1 // pred_region
      %s508 = sshll.u32 1, 1
      %s509 = ssub.s32 %s508, 1
      loop: start=0, step=1, limit=1
      $region250: #{embedding_forward.5} parent=248 // loop_pre_header
        _
      $region251: #{embedding_forward.5} parent=248 // loop_header
        %s511 = sphi 0, %s515
        %p512 = scmp.ge.s32.totalorder %s511, 1
        %s516 = sphi %s498, %s498
        %s517 = sphi %s499, %s499
      $region252: #{embedding_forward.5} parent=248 // loop_header_branch
        %514 = sbr.rel (%p512) target = $region256
      $region253: #{embedding_forward.5} parent=248 // loop_body
        %v518 = vld [vmem:[%s516] sm:%s509]
        %519 = vst [vmem:[%s517] sm:%s509] %v518
        %v520 = vld [vmem:[%s516 + $0x8] sm:%s509]
        %521 = vst [vmem:[%s517 + $0x8] sm:%s509] %v520
      $region254: #{embedding_forward.5} parent=248 // loop_footer
        %s515 = sadd.s32 1, %s511
      $region255: #{embedding_forward.5} parent=248 // loop_footer_branch
        %510 = sbr.rel target = $region251
      $region256: #{embedding_forward.5} parent=248 // loop_exit
        _
    $region249: #{embedding_forward.5} parent=1 // pred_fallthru
      _
    // Predicated region
    $region268: #{embedding_forward.5} parent=1 // pred_check
      _
    $region269: #{embedding_forward.5} parent=1 // pred_check_branch
      %548 = sbr.rel (0) target = $region271
    $region270: #{embedding_forward.5} parent=1 // pred_region
      %549 = vsyncadd [#allocation4], 32
    $region271: #{embedding_forward.5} parent=1 // pred_fallthru
      _
    %s550 = sshrl.u32 %s37, 3
    %s551 = sand.u32 %s37, 7
    %s552 = smul.u32 %s550, 16
    %s553 = sadd.s32 %s551, %s552
    %s554 = scalar_lea.vmem %s3, %s553
    %s555 = scalar_lea.vmem [#allocation3], 4
    %p557 = scmp.lt.u32.totalorder 1, 8
    %p558 = pneg %p557
    // Predicated region
    $region272: #{embedding_forward.5} parent=1 // pred_check
      _
    $region273: #{embedding_forward.5} parent=1 // pred_check_branch
      %560 = sbr.rel (%p557) target = $region275
    $region274: #{embedding_forward.5} parent=1 // pred_region
      %s578 = sand.u32 1, 7
      %p579 = scmp.eq.s32.totalorder %s578, 0
      %p580 = pneg %p579
      // Predicated region
      $region287: #{embedding_forward.5} parent=274 // pred_check
        _
      $region288: #{embedding_forward.5} parent=274 // pred_check_branch
        %582 = sbr.rel (%p579) target = $region290
      $region289: #{embedding_forward.5} parent=274 // pred_region
        %s583 = sand.u32 1, 7
        %s584 = ssub.s32 1, %s583
        %s585 = scalar_lea.vmem %s554, %s584
        %s586 = ssub.s32 1, %s583
        %s587 = scalar_lea.vmem %s555, %s586 [#allocation3]
        %s588 = sshll.u32 1, %s583
        %s589 = ssub.s32 %s588, 1
        loop: start=0, step=1, limit=1
        $region291: #{embedding_forward.5} parent=289 // loop_pre_header
          _
        $region292: #{embedding_forward.5} parent=289 // loop_header
          %s591 = sphi 0, %s595
          %p592 = scmp.ge.s32.totalorder %s591, 1
          %s596 = sphi %s585, %s585
          %s597 = sphi %s587, %s587
        $region293: #{embedding_forward.5} parent=289 // loop_header_branch
          %594 = sbr.rel (%p592) target = $region297
        $region294: #{embedding_forward.5} parent=289 // loop_body
          %v598 = vld [vmem:[%s596] sm:%s589]
          %599 = vst [vmem:[%s597] sm:%s589] %v598
          %v600 = vld [vmem:[%s596 + $0x8] sm:%s589]
          %601 = vst [vmem:[%s597 + $0x8] sm:%s589] %v600
        $region295: #{embedding_forward.5} parent=289 // loop_footer
          %s595 = sadd.s32 1, %s591
        $region296: #{embedding_forward.5} parent=289 // loop_footer_branch
          %590 = sbr.rel target = $region292
        $region297: #{embedding_forward.5} parent=289 // loop_exit
          _
      $region290: #{embedding_forward.5} parent=274 // pred_fallthru
        _
    $region275: #{embedding_forward.5} parent=1 // pred_fallthru
      _
    // Predicated region
    $region276: #{embedding_forward.5} parent=1 // pred_check
      %p561 = pneg %p557
    $region277: #{embedding_forward.5} parent=1 // pred_check_branch
      %563 = sbr.rel (%p561) target = $region279
    $region278: #{embedding_forward.5} parent=1 // pred_region
      %s564 = sshll.u32 1, 1
      %s565 = ssub.s32 %s564, 1
      loop: start=0, step=1, limit=1
      $region280: #{embedding_forward.5} parent=278 // loop_pre_header
        _
      $region281: #{embedding_forward.5} parent=278 // loop_header
        %s567 = sphi 0, %s571
        %p568 = scmp.ge.s32.totalorder %s567, 1
        %s572 = sphi %s554, %s554
        %s573 = sphi %s555, %s555
      $region282: #{embedding_forward.5} parent=278 // loop_header_branch
        %570 = sbr.rel (%p568) target = $region286
      $region283: #{embedding_forward.5} parent=278 // loop_body
        %v574 = vld [vmem:[%s572] sm:%s565]
        %575 = vst [vmem:[%s573] sm:%s565] %v574
        %v576 = vld [vmem:[%s572 + $0x8] sm:%s565]
        %577 = vst [vmem:[%s573 + $0x8] sm:%s565] %v576
      $region284: #{embedding_forward.5} parent=278 // loop_footer
        %s571 = sadd.s32 1, %s567
      $region285: #{embedding_forward.5} parent=278 // loop_footer_branch
        %566 = sbr.rel target = $region281
      $region286: #{embedding_forward.5} parent=278 // loop_exit
        _
    $region279: #{embedding_forward.5} parent=1 // pred_fallthru
      _
    // Predicated region
    $region298: #{embedding_forward.5} parent=1 // pred_check
      _
    $region299: #{embedding_forward.5} parent=1 // pred_check_branch
      %604 = sbr.rel (0) target = $region301
    $region300: #{embedding_forward.5} parent=1 // pred_region
      %605 = vsyncadd %s107, 32
    $region301: #{embedding_forward.5} parent=1 // pred_fallthru
      _
    %s606 = sshrl.u32 %s39, 3
    %s607 = sand.u32 %s39, 7
    %s608 = smul.u32 %s606, 16
    %s609 = sadd.s32 %s607, %s608
    %s610 = scalar_lea.vmem %s2, %s609
    %s611 = scalar_lea.vmem [#allocation2], 5
    %p613 = scmp.lt.u32.totalorder 1, 8
    %p614 = pneg %p613
    // Predicated region
    $region302: #{embedding_forward.5} parent=1 // pred_check
      _
    $region303: #{embedding_forward.5} parent=1 // pred_check_branch
      %616 = sbr.rel (%p613) target = $region305
    $region304: #{embedding_forward.5} parent=1 // pred_region
      %s634 = sand.u32 1, 7
      %p635 = scmp.eq.s32.totalorder %s634, 0
      %p636 = pneg %p635
      // Predicated region
      $region317: #{embedding_forward.5} parent=304 // pred_check
        _
      $region318: #{embedding_forward.5} parent=304 // pred_check_branch
        %638 = sbr.rel (%p635) target = $region320
      $region319: #{embedding_forward.5} parent=304 // pred_region
        %s639 = sand.u32 1, 7
        %s640 = ssub.s32 1, %s639
        %s641 = scalar_lea.vmem %s610, %s640
        %s642 = ssub.s32 1, %s639
        %s643 = scalar_lea.vmem %s611, %s642 [#allocation2]
        %s644 = sshll.u32 1, %s639
        %s645 = ssub.s32 %s644, 1
        loop: start=0, step=1, limit=1
        $region321: #{embedding_forward.5} parent=319 // loop_pre_header
          _
        $region322: #{embedding_forward.5} parent=319 // loop_header
          %s647 = sphi 0, %s651
          %p648 = scmp.ge.s32.totalorder %s647, 1
          %s652 = sphi %s641, %s641
          %s653 = sphi %s643, %s643
        $region323: #{embedding_forward.5} parent=319 // loop_header_branch
          %650 = sbr.rel (%p648) target = $region327
        $region324: #{embedding_forward.5} parent=319 // loop_body
          %v654 = vld [vmem:[%s652] sm:%s645]
          %655 = vst [vmem:[%s653] sm:%s645] %v654
          %v656 = vld [vmem:[%s652 + $0x8] sm:%s645]
          %657 = vst [vmem:[%s653 + $0x8] sm:%s645] %v656
        $region325: #{embedding_forward.5} parent=319 // loop_footer
          %s651 = sadd.s32 1, %s647
        $region326: #{embedding_forward.5} parent=319 // loop_footer_branch
          %646 = sbr.rel target = $region322
        $region327: #{embedding_forward.5} parent=319 // loop_exit
          _
      $region320: #{embedding_forward.5} parent=304 // pred_fallthru
        _
    $region305: #{embedding_forward.5} parent=1 // pred_fallthru
      _
    // Predicated region
    $region306: #{embedding_forward.5} parent=1 // pred_check
      %p617 = pneg %p613
    $region307: #{embedding_forward.5} parent=1 // pred_check_branch
      %619 = sbr.rel (%p617) target = $region309
    $region308: #{embedding_forward.5} parent=1 // pred_region
      %s620 = sshll.u32 1, 1
      %s621 = ssub.s32 %s620, 1
      loop: start=0, step=1, limit=1
      $region310: #{embedding_forward.5} parent=308 // loop_pre_header
        _
      $region311: #{embedding_forward.5} parent=308 // loop_header
        %s623 = sphi 0, %s627
        %p624 = scmp.ge.s32.totalorder %s623, 1
        %s628 = sphi %s610, %s610
        %s629 = sphi %s611, %s611
      $region312: #{embedding_forward.5} parent=308 // loop_header_branch
        %626 = sbr.rel (%p624) target = $region316
      $region313: #{embedding_forward.5} parent=308 // loop_body
        %v630 = vld [vmem:[%s628] sm:%s621]
        %631 = vst [vmem:[%s629] sm:%s621] %v630
        %v632 = vld [vmem:[%s628 + $0x8] sm:%s621]
        %633 = vst [vmem:[%s629 + $0x8] sm:%s621] %v632
      $region314: #{embedding_forward.5} parent=308 // loop_footer
        %s627 = sadd.s32 1, %s623
      $region315: #{embedding_forward.5} parent=308 // loop_footer_branch
        %622 = sbr.rel target = $region311
      $region316: #{embedding_forward.5} parent=308 // loop_exit
        _
    $region309: #{embedding_forward.5} parent=1 // pred_fallthru
      _
    // Predicated region
    $region328: #{embedding_forward.5} parent=1 // pred_check
      _
    $region329: #{embedding_forward.5} parent=1 // pred_check_branch
      %660 = sbr.rel (0) target = $region331
    $region330: #{embedding_forward.5} parent=1 // pred_region
      %661 = vsyncadd [#allocation4], 32
    $region331: #{embedding_forward.5} parent=1 // pred_fallthru
      _
    %s662 = sshrl.u32 %s40, 3
    %s663 = sand.u32 %s40, 7
    %s664 = smul.u32 %s662, 16
    %s665 = sadd.s32 %s663, %s664
    %s666 = scalar_lea.vmem %s3, %s665
    %s667 = scalar_lea.vmem [#allocation3], 5
    %p669 = scmp.lt.u32.totalorder 1, 8
    %p670 = pneg %p669
    // Predicated region
    $region332: #{embedding_forward.5} parent=1 // pred_check
      _
    $region333: #{embedding_forward.5} parent=1 // pred_check_branch
      %672 = sbr.rel (%p669) target = $region335
    $region334: #{embedding_forward.5} parent=1 // pred_region
      %s690 = sand.u32 1, 7
      %p691 = scmp.eq.s32.totalorder %s690, 0
      %p692 = pneg %p691
      // Predicated region
      $region347: #{embedding_forward.5} parent=334 // pred_check
        _
      $region348: #{embedding_forward.5} parent=334 // pred_check_branch
        %694 = sbr.rel (%p691) target = $region350
      $region349: #{embedding_forward.5} parent=334 // pred_region
        %s695 = sand.u32 1, 7
        %s696 = ssub.s32 1, %s695
        %s697 = scalar_lea.vmem %s666, %s696
        %s698 = ssub.s32 1, %s695
        %s699 = scalar_lea.vmem %s667, %s698 [#allocation3]
        %s700 = sshll.u32 1, %s695
        %s701 = ssub.s32 %s700, 1
        loop: start=0, step=1, limit=1
        $region351: #{embedding_forward.5} parent=349 // loop_pre_header
          _
        $region352: #{embedding_forward.5} parent=349 // loop_header
          %s703 = sphi 0, %s707
          %p704 = scmp.ge.s32.totalorder %s703, 1
          %s708 = sphi %s697, %s697
          %s709 = sphi %s699, %s699
        $region353: #{embedding_forward.5} parent=349 // loop_header_branch
          %706 = sbr.rel (%p704) target = $region357
        $region354: #{embedding_forward.5} parent=349 // loop_body
          %v710 = vld [vmem:[%s708] sm:%s701]
          %711 = vst [vmem:[%s709] sm:%s701] %v710
          %v712 = vld [vmem:[%s708 + $0x8] sm:%s701]
          %713 = vst [vmem:[%s709 + $0x8] sm:%s701] %v712
        $region355: #{embedding_forward.5} parent=349 // loop_footer
          %s707 = sadd.s32 1, %s703
        $region356: #{embedding_forward.5} parent=349 // loop_footer_branch
          %702 = sbr.rel target = $region352
        $region357: #{embedding_forward.5} parent=349 // loop_exit
          _
      $region350: #{embedding_forward.5} parent=334 // pred_fallthru
        _
    $region335: #{embedding_forward.5} parent=1 // pred_fallthru
      _
    // Predicated region
    $region336: #{embedding_forward.5} parent=1 // pred_check
      %p673 = pneg %p669
    $region337: #{embedding_forward.5} parent=1 // pred_check_branch
      %675 = sbr.rel (%p673) target = $region339
    $region338: #{embedding_forward.5} parent=1 // pred_region
      %s676 = sshll.u32 1, 1
      %s677 = ssub.s32 %s676, 1
      loop: start=0, step=1, limit=1
      $region340: #{embedding_forward.5} parent=338 // loop_pre_header
        _
      $region341: #{embedding_forward.5} parent=338 // loop_header
        %s679 = sphi 0, %s683
        %p680 = scmp.ge.s32.totalorder %s679, 1
        %s684 = sphi %s666, %s666
        %s685 = sphi %s667, %s667
      $region342: #{embedding_forward.5} parent=338 // loop_header_branch
        %682 = sbr.rel (%p680) target = $region346
      $region343: #{embedding_forward.5} parent=338 // loop_body
        %v686 = vld [vmem:[%s684] sm:%s677]
        %687 = vst [vmem:[%s685] sm:%s677] %v686
        %v688 = vld [vmem:[%s684 + $0x8] sm:%s677]
        %689 = vst [vmem:[%s685 + $0x8] sm:%s677] %v688
      $region344: #{embedding_forward.5} parent=338 // loop_footer
        %s683 = sadd.s32 1, %s679
      $region345: #{embedding_forward.5} parent=338 // loop_footer_branch
        %678 = sbr.rel target = $region341
      $region346: #{embedding_forward.5} parent=338 // loop_exit
        _
    $region339: #{embedding_forward.5} parent=1 // pred_fallthru
      _
    // Predicated region
    $region358: #{embedding_forward.5} parent=1 // pred_check
      _
    $region359: #{embedding_forward.5} parent=1 // pred_check_branch
      %716 = sbr.rel (0) target = $region361
    $region360: #{embedding_forward.5} parent=1 // pred_region
      %717 = vsyncadd %s107, 32
    $region361: #{embedding_forward.5} parent=1 // pred_fallthru
      _
    %s718 = sshrl.u32 %s42, 3
    %s719 = sand.u32 %s42, 7
    %s720 = smul.u32 %s718, 16
    %s721 = sadd.s32 %s719, %s720
    %s722 = scalar_lea.vmem %s2, %s721
    %s723 = scalar_lea.vmem [#allocation2], 6
    %p725 = scmp.lt.u32.totalorder 1, 8
    %p726 = pneg %p725
    // Predicated region
    $region362: #{embedding_forward.5} parent=1 // pred_check
      _
    $region363: #{embedding_forward.5} parent=1 // pred_check_branch
      %728 = sbr.rel (%p725) target = $region365
    $region364: #{embedding_forward.5} parent=1 // pred_region
      %s746 = sand.u32 1, 7
      %p747 = scmp.eq.s32.totalorder %s746, 0
      %p748 = pneg %p747
      // Predicated region
      $region377: #{embedding_forward.5} parent=364 // pred_check
        _
      $region378: #{embedding_forward.5} parent=364 // pred_check_branch
        %750 = sbr.rel (%p747) target = $region380
      $region379: #{embedding_forward.5} parent=364 // pred_region
        %s751 = sand.u32 1, 7
        %s752 = ssub.s32 1, %s751
        %s753 = scalar_lea.vmem %s722, %s752
        %s754 = ssub.s32 1, %s751
        %s755 = scalar_lea.vmem %s723, %s754 [#allocation2]
        %s756 = sshll.u32 1, %s751
        %s757 = ssub.s32 %s756, 1
        loop: start=0, step=1, limit=1
        $region381: #{embedding_forward.5} parent=379 // loop_pre_header
          _
        $region382: #{embedding_forward.5} parent=379 // loop_header
          %s759 = sphi 0, %s763
          %p760 = scmp.ge.s32.totalorder %s759, 1
          %s764 = sphi %s753, %s753
          %s765 = sphi %s755, %s755
        $region383: #{embedding_forward.5} parent=379 // loop_header_branch
          %762 = sbr.rel (%p760) target = $region387
        $region384: #{embedding_forward.5} parent=379 // loop_body
          %v766 = vld [vmem:[%s764] sm:%s757]
          %767 = vst [vmem:[%s765] sm:%s757] %v766
          %v768 = vld [vmem:[%s764 + $0x8] sm:%s757]
          %769 = vst [vmem:[%s765 + $0x8] sm:%s757] %v768
        $region385: #{embedding_forward.5} parent=379 // loop_footer
          %s763 = sadd.s32 1, %s759
        $region386: #{embedding_forward.5} parent=379 // loop_footer_branch
          %758 = sbr.rel target = $region382
        $region387: #{embedding_forward.5} parent=379 // loop_exit
          _
      $region380: #{embedding_forward.5} parent=364 // pred_fallthru
        _
    $region365: #{embedding_forward.5} parent=1 // pred_fallthru
      _
    // Predicated region
    $region366: #{embedding_forward.5} parent=1 // pred_check
      %p729 = pneg %p725
    $region367: #{embedding_forward.5} parent=1 // pred_check_branch
      %731 = sbr.rel (%p729) target = $region369
    $region368: #{embedding_forward.5} parent=1 // pred_region
      %s732 = sshll.u32 1, 1
      %s733 = ssub.s32 %s732, 1
      loop: start=0, step=1, limit=1
      $region370: #{embedding_forward.5} parent=368 // loop_pre_header
        _
      $region371: #{embedding_forward.5} parent=368 // loop_header
        %s735 = sphi 0, %s739
        %p736 = scmp.ge.s32.totalorder %s735, 1
        %s740 = sphi %s722, %s722
        %s741 = sphi %s723, %s723
      $region372: #{embedding_forward.5} parent=368 // loop_header_branch
        %738 = sbr.rel (%p736) target = $region376
      $region373: #{embedding_forward.5} parent=368 // loop_body
        %v742 = vld [vmem:[%s740] sm:%s733]
        %743 = vst [vmem:[%s741] sm:%s733] %v742
        %v744 = vld [vmem:[%s740 + $0x8] sm:%s733]
        %745 = vst [vmem:[%s741 + $0x8] sm:%s733] %v744
      $region374: #{embedding_forward.5} parent=368 // loop_footer
        %s739 = sadd.s32 1, %s735
      $region375: #{embedding_forward.5} parent=368 // loop_footer_branch
        %734 = sbr.rel target = $region371
      $region376: #{embedding_forward.5} parent=368 // loop_exit
        _
    $region369: #{embedding_forward.5} parent=1 // pred_fallthru
      _
    // Predicated region
    $region388: #{embedding_forward.5} parent=1 // pred_check
      _
    $region389: #{embedding_forward.5} parent=1 // pred_check_branch
      %772 = sbr.rel (0) target = $region391
    $region390: #{embedding_forward.5} parent=1 // pred_region
      %773 = vsyncadd [#allocation4], 32
    $region391: #{embedding_forward.5} parent=1 // pred_fallthru
      _
    %s774 = sshrl.u32 %s43, 3
    %s775 = sand.u32 %s43, 7
    %s776 = smul.u32 %s774, 16
    %s777 = sadd.s32 %s775, %s776
    %s778 = scalar_lea.vmem %s3, %s777
    %s779 = scalar_lea.vmem [#allocation3], 6
    %p781 = scmp.lt.u32.totalorder 1, 8
    %p782 = pneg %p781
    // Predicated region
    $region392: #{embedding_forward.5} parent=1 // pred_check
      _
    $region393: #{embedding_forward.5} parent=1 // pred_check_branch
      %784 = sbr.rel (%p781) target = $region395
    $region394: #{embedding_forward.5} parent=1 // pred_region
      %s802 = sand.u32 1, 7
      %p803 = scmp.eq.s32.totalorder %s802, 0
      %p804 = pneg %p803
      // Predicated region
      $region407: #{embedding_forward.5} parent=394 // pred_check
        _
      $region408: #{embedding_forward.5} parent=394 // pred_check_branch
        %806 = sbr.rel (%p803) target = $region410
      $region409: #{embedding_forward.5} parent=394 // pred_region
        %s807 = sand.u32 1, 7
        %s808 = ssub.s32 1, %s807
        %s809 = scalar_lea.vmem %s778, %s808
        %s810 = ssub.s32 1, %s807
        %s811 = scalar_lea.vmem %s779, %s810 [#allocation3]
        %s812 = sshll.u32 1, %s807
        %s813 = ssub.s32 %s812, 1
        loop: start=0, step=1, limit=1
        $region411: #{embedding_forward.5} parent=409 // loop_pre_header
          _
        $region412: #{embedding_forward.5} parent=409 // loop_header
          %s815 = sphi 0, %s819
          %p816 = scmp.ge.s32.totalorder %s815, 1
          %s820 = sphi %s809, %s809
          %s821 = sphi %s811, %s811
        $region413: #{embedding_forward.5} parent=409 // loop_header_branch
          %818 = sbr.rel (%p816) target = $region417
        $region414: #{embedding_forward.5} parent=409 // loop_body
          %v822 = vld [vmem:[%s820] sm:%s813]
          %823 = vst [vmem:[%s821] sm:%s813] %v822
          %v824 = vld [vmem:[%s820 + $0x8] sm:%s813]
          %825 = vst [vmem:[%s821 + $0x8] sm:%s813] %v824
        $region415: #{embedding_forward.5} parent=409 // loop_footer
          %s819 = sadd.s32 1, %s815
        $region416: #{embedding_forward.5} parent=409 // loop_footer_branch
          %814 = sbr.rel target = $region412
        $region417: #{embedding_forward.5} parent=409 // loop_exit
          _
      $region410: #{embedding_forward.5} parent=394 // pred_fallthru
        _
    $region395: #{embedding_forward.5} parent=1 // pred_fallthru
      _
    // Predicated region
    $region396: #{embedding_forward.5} parent=1 // pred_check
      %p785 = pneg %p781
    $region397: #{embedding_forward.5} parent=1 // pred_check_branch
      %787 = sbr.rel (%p785) target = $region399
    $region398: #{embedding_forward.5} parent=1 // pred_region
      %s788 = sshll.u32 1, 1
      %s789 = ssub.s32 %s788, 1
      loop: start=0, step=1, limit=1
      $region400: #{embedding_forward.5} parent=398 // loop_pre_header
        _
      $region401: #{embedding_forward.5} parent=398 // loop_header
        %s791 = sphi 0, %s795
        %p792 = scmp.ge.s32.totalorder %s791, 1
        %s796 = sphi %s778, %s778
        %s797 = sphi %s779, %s779
      $region402: #{embedding_forward.5} parent=398 // loop_header_branch
        %794 = sbr.rel (%p792) target = $region406
      $region403: #{embedding_forward.5} parent=398 // loop_body
        %v798 = vld [vmem:[%s796] sm:%s789]
        %799 = vst [vmem:[%s797] sm:%s789] %v798
        %v800 = vld [vmem:[%s796 + $0x8] sm:%s789]
        %801 = vst [vmem:[%s797 + $0x8] sm:%s789] %v800
      $region404: #{embedding_forward.5} parent=398 // loop_footer
        %s795 = sadd.s32 1, %s791
      $region405: #{embedding_forward.5} parent=398 // loop_footer_branch
        %790 = sbr.rel target = $region401
      $region406: #{embedding_forward.5} parent=398 // loop_exit
        _
    $region399: #{embedding_forward.5} parent=1 // pred_fallthru
      _
    // Predicated region
    $region418: #{embedding_forward.5} parent=1 // pred_check
      _
    $region419: #{embedding_forward.5} parent=1 // pred_check_branch
      %828 = sbr.rel (0) target = $region421
    $region420: #{embedding_forward.5} parent=1 // pred_region
      %829 = vsyncadd %s107, 32
    $region421: #{embedding_forward.5} parent=1 // pred_fallthru
      _
    %s830 = sshrl.u32 %s45, 3
    %s831 = sand.u32 %s45, 7
    %s832 = smul.u32 %s830, 16
    %s833 = sadd.s32 %s831, %s832
    %s834 = scalar_lea.vmem %s2, %s833
    %s835 = scalar_lea.vmem [#allocation2], 7
    %p837 = scmp.lt.u32.totalorder 1, 8
    %p838 = pneg %p837
    // Predicated region
    $region422: #{embedding_forward.5} parent=1 // pred_check
      _
    $region423: #{embedding_forward.5} parent=1 // pred_check_branch
      %840 = sbr.rel (%p837) target = $region425
    $region424: #{embedding_forward.5} parent=1 // pred_region
      %s858 = sand.u32 1, 7
      %p859 = scmp.eq.s32.totalorder %s858, 0
      %p860 = pneg %p859
      // Predicated region
      $region437: #{embedding_forward.5} parent=424 // pred_check
        _
      $region438: #{embedding_forward.5} parent=424 // pred_check_branch
        %862 = sbr.rel (%p859) target = $region440
      $region439: #{embedding_forward.5} parent=424 // pred_region
        %s863 = sand.u32 1, 7
        %s864 = ssub.s32 1, %s863
        %s865 = scalar_lea.vmem %s834, %s864
        %s866 = ssub.s32 1, %s863
        %s867 = scalar_lea.vmem %s835, %s866 [#allocation2]
        %s868 = sshll.u32 1, %s863
        %s869 = ssub.s32 %s868, 1
        loop: start=0, step=1, limit=1
        $region441: #{embedding_forward.5} parent=439 // loop_pre_header
          _
        $region442: #{embedding_forward.5} parent=439 // loop_header
          %s871 = sphi 0, %s875
          %p872 = scmp.ge.s32.totalorder %s871, 1
          %s876 = sphi %s865, %s865
          %s877 = sphi %s867, %s867
        $region443: #{embedding_forward.5} parent=439 // loop_header_branch
          %874 = sbr.rel (%p872) target = $region447
        $region444: #{embedding_forward.5} parent=439 // loop_body
          %v878 = vld [vmem:[%s876] sm:%s869]
          %879 = vst [vmem:[%s877] sm:%s869] %v878
          %v880 = vld [vmem:[%s876 + $0x8] sm:%s869]
          %881 = vst [vmem:[%s877 + $0x8] sm:%s869] %v880
        $region445: #{embedding_forward.5} parent=439 // loop_footer
          %s875 = sadd.s32 1, %s871
        $region446: #{embedding_forward.5} parent=439 // loop_footer_branch
          %870 = sbr.rel target = $region442
        $region447: #{embedding_forward.5} parent=439 // loop_exit
          _
      $region440: #{embedding_forward.5} parent=424 // pred_fallthru
        _
    $region425: #{embedding_forward.5} parent=1 // pred_fallthru
      _
    // Predicated region
    $region426: #{embedding_forward.5} parent=1 // pred_check
      %p841 = pneg %p837
    $region427: #{embedding_forward.5} parent=1 // pred_check_branch
      %843 = sbr.rel (%p841) target = $region429
    $region428: #{embedding_forward.5} parent=1 // pred_region
      %s844 = sshll.u32 1, 1
      %s845 = ssub.s32 %s844, 1
      loop: start=0, step=1, limit=1
      $region430: #{embedding_forward.5} parent=428 // loop_pre_header
        _
      $region431: #{embedding_forward.5} parent=428 // loop_header
        %s847 = sphi 0, %s851
        %p848 = scmp.ge.s32.totalorder %s847, 1
        %s852 = sphi %s834, %s834
        %s853 = sphi %s835, %s835
      $region432: #{embedding_forward.5} parent=428 // loop_header_branch
        %850 = sbr.rel (%p848) target = $region436
      $region433: #{embedding_forward.5} parent=428 // loop_body
        %v854 = vld [vmem:[%s852] sm:%s845]
        %855 = vst [vmem:[%s853] sm:%s845] %v854
        %v856 = vld [vmem:[%s852 + $0x8] sm:%s845]
        %857 = vst [vmem:[%s853 + $0x8] sm:%s845] %v856
      $region434: #{embedding_forward.5} parent=428 // loop_footer
        %s851 = sadd.s32 1, %s847
      $region435: #{embedding_forward.5} parent=428 // loop_footer_branch
        %846 = sbr.rel target = $region431
      $region436: #{embedding_forward.5} parent=428 // loop_exit
        _
    $region429: #{embedding_forward.5} parent=1 // pred_fallthru
      _
    // Predicated region
    $region448: #{embedding_forward.5} parent=1 // pred_check
      _
    $region449: #{embedding_forward.5} parent=1 // pred_check_branch
      %884 = sbr.rel (0) target = $region451
    $region450: #{embedding_forward.5} parent=1 // pred_region
      %885 = vsyncadd [#allocation4], 32
    $region451: #{embedding_forward.5} parent=1 // pred_fallthru
      _
    %s886 = sshrl.u32 %s46, 3
    %s887 = sand.u32 %s46, 7
    %s888 = smul.u32 %s886, 16
    %s889 = sadd.s32 %s887, %s888
    %s890 = scalar_lea.vmem %s3, %s889
    %s891 = scalar_lea.vmem [#allocation3], 7
    %p893 = scmp.lt.u32.totalorder 1, 8
    %p894 = pneg %p893
    // Predicated region
    $region452: #{embedding_forward.5} parent=1 // pred_check
      _
    $region453: #{embedding_forward.5} parent=1 // pred_check_branch
      %896 = sbr.rel (%p893) target = $region455
    $region454: #{embedding_forward.5} parent=1 // pred_region
      %s914 = sand.u32 1, 7
      %p915 = scmp.eq.s32.totalorder %s914, 0
      %p916 = pneg %p915
      // Predicated region
      $region467: #{embedding_forward.5} parent=454 // pred_check
        _
      $region468: #{embedding_forward.5} parent=454 // pred_check_branch
        %918 = sbr.rel (%p915) target = $region470
      $region469: #{embedding_forward.5} parent=454 // pred_region
        %s919 = sand.u32 1, 7
        %s920 = ssub.s32 1, %s919
        %s921 = scalar_lea.vmem %s890, %s920
        %s922 = ssub.s32 1, %s919
        %s923 = scalar_lea.vmem %s891, %s922 [#allocation3]
        %s924 = sshll.u32 1, %s919
        %s925 = ssub.s32 %s924, 1
        loop: start=0, step=1, limit=1
        $region471: #{embedding_forward.5} parent=469 // loop_pre_header
          _
        $region472: #{embedding_forward.5} parent=469 // loop_header
          %s927 = sphi 0, %s931
          %p928 = scmp.ge.s32.totalorder %s927, 1
          %s932 = sphi %s921, %s921
          %s933 = sphi %s923, %s923
        $region473: #{embedding_forward.5} parent=469 // loop_header_branch
          %930 = sbr.rel (%p928) target = $region477
        $region474: #{embedding_forward.5} parent=469 // loop_body
          %v934 = vld [vmem:[%s932] sm:%s925]
          %935 = vst [vmem:[%s933] sm:%s925] %v934
          %v936 = vld [vmem:[%s932 + $0x8] sm:%s925]
          %937 = vst [vmem:[%s933 + $0x8] sm:%s925] %v936
        $region475: #{embedding_forward.5} parent=469 // loop_footer
          %s931 = sadd.s32 1, %s927
        $region476: #{embedding_forward.5} parent=469 // loop_footer_branch
          %926 = sbr.rel target = $region472
        $region477: #{embedding_forward.5} parent=469 // loop_exit
          _
      $region470: #{embedding_forward.5} parent=454 // pred_fallthru
        _
    $region455: #{embedding_forward.5} parent=1 // pred_fallthru
      _
    // Predicated region
    $region456: #{embedding_forward.5} parent=1 // pred_check
      %p897 = pneg %p893
    $region457: #{embedding_forward.5} parent=1 // pred_check_branch
      %899 = sbr.rel (%p897) target = $region459
    $region458: #{embedding_forward.5} parent=1 // pred_region
      %s900 = sshll.u32 1, 1
      %s901 = ssub.s32 %s900, 1
      loop: start=0, step=1, limit=1
      $region460: #{embedding_forward.5} parent=458 // loop_pre_header
        _
      $region461: #{embedding_forward.5} parent=458 // loop_header
        %s903 = sphi 0, %s907
        %p904 = scmp.ge.s32.totalorder %s903, 1
        %s908 = sphi %s890, %s890
        %s909 = sphi %s891, %s891
      $region462: #{embedding_forward.5} parent=458 // loop_header_branch
        %906 = sbr.rel (%p904) target = $region466
      $region463: #{embedding_forward.5} parent=458 // loop_body
        %v910 = vld [vmem:[%s908] sm:%s901]
        %911 = vst [vmem:[%s909] sm:%s901] %v910
        %v912 = vld [vmem:[%s908 + $0x8] sm:%s901]
        %913 = vst [vmem:[%s909 + $0x8] sm:%s901] %v912
      $region464: #{embedding_forward.5} parent=458 // loop_footer
        %s907 = sadd.s32 1, %s903
      $region465: #{embedding_forward.5} parent=458 // loop_footer_branch
        %902 = sbr.rel target = $region461
      $region466: #{embedding_forward.5} parent=458 // loop_exit
        _
    $region459: #{embedding_forward.5} parent=1 // pred_fallthru
      _
    // Predicated region
    $region478: #{embedding_forward.5} parent=1 // pred_check
      _
    $region479: #{embedding_forward.5} parent=1 // pred_check_branch
      %940 = sbr.rel (0) target = $region481
    $region480: #{embedding_forward.5} parent=1 // pred_region
      %941 = vsyncadd %s107, 32
    $region481: #{embedding_forward.5} parent=1 // pred_fallthru
      _
    %943 = dma.done [#allocation4], 32
    %945 = dma.done %s107, 32
    %947 = dma.done [#allocation4], 32
    %949 = dma.done %s107, 32
    %951 = dma.done [#allocation4], 32
    %953 = dma.done %s107, 32
    %955 = dma.done [#allocation4], 32
    %957 = dma.done %s107, 32
    %959 = dma.done [#allocation4], 32
    %961 = dma.done %s107, 32
    %963 = dma.done [#allocation4], 32
    %965 = dma.done %s107, 32
    %967 = dma.done [#allocation4], 32
    %969 = dma.done %s107, 32
    %971 = dma.done [#allocation4], 32
    %973 = dma.done %s107, 32
    %v974 = vld [vmem:[#allocation2] sm:$0xff]
    %v975 = vld [vmem:[#allocation2 + $0x8] sm:$0xff]
    %v978 = vcombine.low %v974, %v975
    %v979 = vcombine.high %v974, %v975
    %vm982 = vcmask 1043456
    %vm983 = vcmask 261124
    %vm984 = vmor %vm983, %vm982
    %985 = vst.msk [vmem:[#allocation8] sm:$0xff] %vm984, %v978
    %986 = vst.msk [vmem:[#allocation8 + $0x8] sm:$0xff] %vm984, %v979
    %v987 = vld [vmem:[#allocation3] sm:$0xff]
    %v988 = vld [vmem:[#allocation3 + $0x8] sm:$0xff]
    %v991 = vcombine.low %v987, %v988
    %v992 = vcombine.high %v987, %v988
    %995 = vst.msk [vmem:[#allocation10] sm:$0xff] %vm984, %v991
    %996 = vst.msk [vmem:[#allocation10 + $0x8] sm:$0xff] %vm984, %v992
    // Predicated region
    $region482: #{embedding_forward.5} parent=1 // pred_check
      _
    $region483: #{embedding_forward.5} parent=1 // pred_check_branch
      %998 = sbr.rel (0) target = $region485
    $region484: #{embedding_forward.5} parent=1 // pred_region
      %s1000 = ssub.s32 256, 128
      %1001 = vsyncadd [#allocation9], %s1000
      %s1002 = sshll.u32 [#allocation8], 4
      %s1003 = int_to_ptr.vmem [resolvable:$true] %s1002
      %1008 = dma.vmem_to_hbm [thread:$0]  %s1003, 128, %s4, [#allocation9], 128, 128, 8
    $region485: #{embedding_forward.5} parent=1 // pred_fallthru
      _
    // Predicated region
    $region486: #{embedding_forward.5} parent=1 // pred_check
      _
    $region487: #{embedding_forward.5} parent=1 // pred_check_branch
      %1010 = sbr.rel (0) target = $region489
    $region488: #{embedding_forward.5} parent=1 // pred_region
      %s1012 = ssub.s32 256, 128
      %1013 = vsyncadd [#allocation11], %s1012
      %s1014 = sshll.u32 [#allocation10], 4
      %s1015 = int_to_ptr.vmem [resolvable:$true] %s1014
      %1020 = dma.vmem_to_hbm [thread:$0]  %s1015, 128, %s5, [#allocation11], 128, 128, 8
    $region489: #{embedding_forward.5} parent=1 // pred_fallthru
      _
    // Predicated region
    $region490: #{embedding_forward.5} parent=1 // pred_check
      _
    $region491: #{embedding_forward.5} parent=1 // pred_check_branch
      %1022 = sbr.rel (0) target = $region493
    $region492: #{embedding_forward.5} parent=1 // pred_region
      %1023 = dma.done [#allocation9], 256
    $region493: #{embedding_forward.5} parent=1 // pred_fallthru
      _
    // Predicated region
    $region494: #{embedding_forward.5} parent=1 // pred_check
      _
    $region495: #{embedding_forward.5} parent=1 // pred_check_branch
      %1025 = sbr.rel (0) target = $region497
    $region496: #{embedding_forward.5} parent=1 // pred_region
      %1026 = dma.done [#allocation11], 256
    $region497: #{embedding_forward.5} parent=1 // pred_fallthru
      _
    %1027 = vsyncpa [#allocation9], 1
    %1028 = vsyncpa [#allocation11], 1
  %1029 = vsyncmov [#allocation4]
  %s1030 = vpop.sfrf %1029
  %p1031 = scmp.eq.s32.totalorder %s1030, 0
  %p1032 = pneg %p1031
  %1034 = shalt.err (%p1032)
  %s1035 = scalar_lea.sflag [#allocation4], 1
  %1036 = vsyncmov %s1035
  %s1037 = vpop.sfrf %1036
  %p1038 = scmp.eq.s32.totalorder %s1037, 0
  %p1039 = pneg %p1038
  %1041 = shalt.err (%p1039)

// kernel: embedding_forward.3
$region0: #{embedding_forward.3}
  #allocation0 [shape = 'u32[]', space=smem, size = 0x4, offset = 0x4, fixed_abs, tag = 'smem constant byte address 0x4 - core index']
  #allocation1 [shape = 'u32[144,128]{1,0:T(1,128)}', space=vmem, size = 0x12000, scoped, tag = 'internal scratch']
  %s0 = inlined_call_operand.vmem [shape: bf16[6,1024], index: 0, kind: input, shape index: {}]
  %s1 = inlined_call_operand.vmem [shape: bf16[1024,32], index: 1, kind: input, shape index: {}]
  %s2 = inlined_call_operand.vmem [shape: f32[1,32], index: 2, kind: input, shape index: {}]
  %s3 = inlined_call_operand.vmem [shape: bf16[6,1024], index: 3, kind: input, shape index: {}]
  %s4 = inlined_call_operand.vmem [shape: bf16[1024,32], index: 4, kind: input, shape index: {}]
  %s5 = inlined_call_operand.vmem [shape: f32[1,32], index: 5, kind: input, shape index: {}]
  %s6 = inlined_call_operand.vmem [shape: bf16[6,881], index: 6, kind: input, shape index: {}]
  %s7 = inlined_call_operand.vmem [shape: bf16[881,32], index: 7, kind: input, shape index: {}]
  %s8 = inlined_call_operand.vmem [shape: f32[1,32], index: 8, kind: input, shape index: {}]
  %s9 = inlined_call_operand.vmem [shape: bf16[6,166], index: 9, kind: input, shape index: {}]
  %s10 = inlined_call_operand.vmem [shape: bf16[166,32], index: 10, kind: input, shape index: {}]
  %s11 = inlined_call_operand.vmem [shape: f32[1,32], index: 11, kind: input, shape index: {}]
  %s12 = inlined_call_operand.vmem [shape: bf16[6,2048], index: 12, kind: input, shape index: {}]
  %s13 = inlined_call_operand.vmem [shape: bf16[2048,32], index: 13, kind: input, shape index: {}]
  %s14 = inlined_call_operand.vmem [shape: f32[1,32], index: 14, kind: input, shape index: {}]
  %s15 = inlined_call_operand.vmem [shape: f32[6,160], index: 15, kind: output, shape index: {}]
  %s16 = sld [smem:[#allocation0]]
  $region70: #{embedding_forward.3} parent=0
    _
  %s18 = ssub.s32 1, %s16
  %s19 = scalar_select 0, %s18, %s16
  // Predicated region
  $region2: #{embedding_forward.3} parent=0 // pred_check
    _
  $region3: #{embedding_forward.3} parent=0 // pred_check_branch
    %21 = sbr.rel (0) target = $region5
  $region4: #{embedding_forward.3} parent=0 // pred_region
    _
  $region5: #{embedding_forward.3} parent=0 // pred_fallthru
    _
  // Predicated region
  $region6: #{embedding_forward.3} parent=0 // pred_check
    _
  $region7: #{embedding_forward.3} parent=0 // pred_check_branch
    %23 = sbr.rel (0) target = $region9
  $region8: #{embedding_forward.3} parent=0 // pred_region
    _
  $region9: #{embedding_forward.3} parent=0 // pred_fallthru
    _
  // Predicated region
  $region10: #{embedding_forward.3} parent=0 // pred_check
    _
  $region11: #{embedding_forward.3} parent=0 // pred_check_branch
    %25 = sbr.rel (0) target = $region13
  $region12: #{embedding_forward.3} parent=0 // pred_region
    _
  $region13: #{embedding_forward.3} parent=0 // pred_fallthru
    _
  // Predicated region
  $region14: #{embedding_forward.3} parent=0 // pred_check
    _
  $region15: #{embedding_forward.3} parent=0 // pred_check_branch
    %27 = sbr.rel (0) target = $region17
  $region16: #{embedding_forward.3} parent=0 // pred_region
    _
  $region17: #{embedding_forward.3} parent=0 // pred_fallthru
    _
  // Predicated region
  $region18: #{embedding_forward.3} parent=0 // pred_check
    _
  $region19: #{embedding_forward.3} parent=0 // pred_check_branch
    %29 = sbr.rel (0) target = $region21
  $region20: #{embedding_forward.3} parent=0 // pred_region
    _
  $region21: #{embedding_forward.3} parent=0 // pred_fallthru
    _
  // Predicated region
  $region22: #{embedding_forward.3} parent=0 // pred_check
    _
  $region23: #{embedding_forward.3} parent=0 // pred_check_branch
    %31 = sbr.rel (0) target = $region25
  $region24: #{embedding_forward.3} parent=0 // pred_region
    _
  $region25: #{embedding_forward.3} parent=0 // pred_fallthru
    _
  // Predicated region
  $region26: #{embedding_forward.3} parent=0 // pred_check
    _
  $region27: #{embedding_forward.3} parent=0 // pred_check_branch
    %33 = sbr.rel (0) target = $region29
  $region28: #{embedding_forward.3} parent=0 // pred_region
    _
  $region29: #{embedding_forward.3} parent=0 // pred_fallthru
    _
  // Predicated region
  $region30: #{embedding_forward.3} parent=0 // pred_check
    _
  $region31: #{embedding_forward.3} parent=0 // pred_check_branch
    %35 = sbr.rel (0) target = $region33
  $region32: #{embedding_forward.3} parent=0 // pred_region
    _
  $region33: #{embedding_forward.3} parent=0 // pred_fallthru
    _
  // Predicated region
  $region34: #{embedding_forward.3} parent=0 // pred_check
    _
  $region35: #{embedding_forward.3} parent=0 // pred_check_branch
    %37 = sbr.rel (0) target = $region37
  $region36: #{embedding_forward.3} parent=0 // pred_region
    _
  $region37: #{embedding_forward.3} parent=0 // pred_fallthru
    _
  // Predicated region
  $region38: #{embedding_forward.3} parent=0 // pred_check
    _
  $region39: #{embedding_forward.3} parent=0 // pred_check_branch
    %39 = sbr.rel (0) target = $region41
  $region40: #{embedding_forward.3} parent=0 // pred_region
    _
  $region41: #{embedding_forward.3} parent=0 // pred_fallthru
    _
  // Predicated region
  $region42: #{embedding_forward.3} parent=0 // pred_check
    _
  $region43: #{embedding_forward.3} parent=0 // pred_check_branch
    %41 = sbr.rel (0) target = $region45
  $region44: #{embedding_forward.3} parent=0 // pred_region
    _
  $region45: #{embedding_forward.3} parent=0 // pred_fallthru
    _
  // Predicated region
  $region46: #{embedding_forward.3} parent=0 // pred_check
    _
  $region47: #{embedding_forward.3} parent=0 // pred_check_branch
    %43 = sbr.rel (0) target = $region49
  $region48: #{embedding_forward.3} parent=0 // pred_region
    _
  $region49: #{embedding_forward.3} parent=0 // pred_fallthru
    _
  // Predicated region
  $region50: #{embedding_forward.3} parent=0 // pred_check
    _
  $region51: #{embedding_forward.3} parent=0 // pred_check_branch
    %45 = sbr.rel (0) target = $region53
  $region52: #{embedding_forward.3} parent=0 // pred_region
    _
  $region53: #{embedding_forward.3} parent=0 // pred_fallthru
    _
  // Predicated region
  $region54: #{embedding_forward.3} parent=0 // pred_check
    _
  $region55: #{embedding_forward.3} parent=0 // pred_check_branch
    %47 = sbr.rel (0) target = $region57
  $region56: #{embedding_forward.3} parent=0 // pred_region
    _
  $region57: #{embedding_forward.3} parent=0 // pred_fallthru
    _
  // Predicated region
  $region58: #{embedding_forward.3} parent=0 // pred_check
    _
  $region59: #{embedding_forward.3} parent=0 // pred_check_branch
    %49 = sbr.rel (0) target = $region61
  $region60: #{embedding_forward.3} parent=0 // pred_region
    _
  $region61: #{embedding_forward.3} parent=0 // pred_fallthru
    _
  %v51 = vld [vmem:[%s0] sm:$0xff]
  %v52 = vld [vmem:[%s0 + $0x8] sm:$0xff]
  %v53 = vld [vmem:[%s0 + $0x10] sm:$0xff]
  %v54 = vld [vmem:[%s0 + $0x18] sm:$0xff]
  %v55 = vld [vmem:[%s1] sm:$0xf]
  %v56 = vld [vmem:[%s1 + $0x4] sm:$0xf]
  %v57 = vld [vmem:[%s1 + $0x8] sm:$0xf]
  %v58 = vld [vmem:[%s1 + $0xc] sm:$0xf]
  %v59 = vld [vmem:[%s1 + $0x10] sm:$0xf]
  %v60 = vld [vmem:[%s1 + $0x14] sm:$0xf]
  %v61 = vld [vmem:[%s1 + $0x18] sm:$0xf]
  %v62 = vld [vmem:[%s1 + $0x1c] sm:$0xf]
  %v63 = vld [vmem:[%s1 + $0x20] sm:$0xf]
  %v64 = vld [vmem:[%s1 + $0x24] sm:$0xf]
  %v65 = vld [vmem:[%s1 + $0x28] sm:$0xf]
  %v66 = vld [vmem:[%s1 + $0x2c] sm:$0xf]
  %v67 = vld [vmem:[%s1 + $0x30] sm:$0xf]
  %v68 = vld [vmem:[%s1 + $0x34] sm:$0xf]
  %v69 = vld [vmem:[%s1 + $0x38] sm:$0xf]
  %v70 = vld [vmem:[%s1 + $0x3c] sm:$0xf]
  %v71 = vld [vmem:[%s1 + $0x40] sm:$0xf]
  %v72 = vld [vmem:[%s1 + $0x44] sm:$0xf]
  %v73 = vld [vmem:[%s1 + $0x48] sm:$0xf]
  %v74 = vld [vmem:[%s1 + $0x4c] sm:$0xf]
  %v75 = vld [vmem:[%s1 + $0x50] sm:$0xf]
  %v76 = vld [vmem:[%s1 + $0x54] sm:$0xf]
  %v77 = vld [vmem:[%s1 + $0x58] sm:$0xf]
  %v78 = vld [vmem:[%s1 + $0x5c] sm:$0xf]
  %v79 = vld [vmem:[%s1 + $0x60] sm:$0xf]
  %v80 = vld [vmem:[%s1 + $0x64] sm:$0xf]
  %v81 = vld [vmem:[%s1 + $0x68] sm:$0xf]
  %v82 = vld [vmem:[%s1 + $0x6c] sm:$0xf]
  %v83 = vld [vmem:[%s1 + $0x70] sm:$0xf]
  %v84 = vld [vmem:[%s1 + $0x74] sm:$0xf]
  %v85 = vld [vmem:[%s1 + $0x78] sm:$0xf]
  %v86 = vld [vmem:[%s1 + $0x7c] sm:$0xf]
  %v87 = vld [vmem:[%s1 + $0x80] sm:$0xf]
  %v88 = vld [vmem:[%s1 + $0x84] sm:$0xf]
  %v89 = vld [vmem:[%s1 + $0x88] sm:$0xf]
  %v90 = vld [vmem:[%s1 + $0x8c] sm:$0xf]
  %v91 = vld [vmem:[%s1 + $0x90] sm:$0xf]
  %v92 = vld [vmem:[%s1 + $0x94] sm:$0xf]
  %v93 = vld [vmem:[%s1 + $0x98] sm:$0xf]
  %v94 = vld [vmem:[%s1 + $0x9c] sm:$0xf]
  %v95 = vld [vmem:[%s1 + $0xa0] sm:$0xf]
  %v96 = vld [vmem:[%s1 + $0xa4] sm:$0xf]
  %v97 = vld [vmem:[%s1 + $0xa8] sm:$0xf]
  %v98 = vld [vmem:[%s1 + $0xac] sm:$0xf]
  %v99 = vld [vmem:[%s1 + $0xb0] sm:$0xf]
  %v100 = vld [vmem:[%s1 + $0xb4] sm:$0xf]
  %v101 = vld [vmem:[%s1 + $0xb8] sm:$0xf]
  %v102 = vld [vmem:[%s1 + $0xbc] sm:$0xf]
  %v103 = vld [vmem:[%s1 + $0xc0] sm:$0xf]
  %v104 = vld [vmem:[%s1 + $0xc4] sm:$0xf]
  %v105 = vld [vmem:[%s1 + $0xc8] sm:$0xf]
  %v106 = vld [vmem:[%s1 + $0xcc] sm:$0xf]
  %v107 = vld [vmem:[%s1 + $0xd0] sm:$0xf]
  %v108 = vld [vmem:[%s1 + $0xd4] sm:$0xf]
  %v109 = vld [vmem:[%s1 + $0xd8] sm:$0xf]
  %v110 = vld [vmem:[%s1 + $0xdc] sm:$0xf]
  %v111 = vld [vmem:[%s1 + $0xe0] sm:$0xf]
  %v112 = vld [vmem:[%s1 + $0xe4] sm:$0xf]
  %v113 = vld [vmem:[%s1 + $0xe8] sm:$0xf]
  %v114 = vld [vmem:[%s1 + $0xec] sm:$0xf]
  %v115 = vld [vmem:[%s1 + $0xf0] sm:$0xf]
  %v116 = vld [vmem:[%s1 + $0xf4] sm:$0xf]
  %v117 = vld [vmem:[%s1 + $0xf8] sm:$0xf]
  %v118 = vld [vmem:[%s1 + $0xfc] sm:$0xf]
  %v119 = vld [vmem:[%s1 + $0x100] sm:$0xf]
  %v120 = vld [vmem:[%s1 + $0x104] sm:$0xf]
  %v121 = vld [vmem:[%s1 + $0x108] sm:$0xf]
  %v122 = vld [vmem:[%s1 + $0x10c] sm:$0xf]
  %v123 = vld [vmem:[%s1 + $0x110] sm:$0xf]
  %v124 = vld [vmem:[%s1 + $0x114] sm:$0xf]
  %v125 = vld [vmem:[%s1 + $0x118] sm:$0xf]
  %v126 = vld [vmem:[%s1 + $0x11c] sm:$0xf]
  %v127 = vld [vmem:[%s1 + $0x120] sm:$0xf]
  %v128 = vld [vmem:[%s1 + $0x124] sm:$0xf]
  %v129 = vld [vmem:[%s1 + $0x128] sm:$0xf]
  %v130 = vld [vmem:[%s1 + $0x12c] sm:$0xf]
  %v131 = vld [vmem:[%s1 + $0x130] sm:$0xf]
  %v132 = vld [vmem:[%s1 + $0x134] sm:$0xf]
  %v133 = vld [vmem:[%s1 + $0x138] sm:$0xf]
  %v134 = vld [vmem:[%s1 + $0x13c] sm:$0xf]
  %v135 = vld [vmem:[%s1 + $0x140] sm:$0xf]
  %v136 = vld [vmem:[%s1 + $0x144] sm:$0xf]
  %v137 = vld [vmem:[%s1 + $0x148] sm:$0xf]
  %v138 = vld [vmem:[%s1 + $0x14c] sm:$0xf]
  %v139 = vld [vmem:[%s1 + $0x150] sm:$0xf]
  %v140 = vld [vmem:[%s1 + $0x154] sm:$0xf]
  %v141 = vld [vmem:[%s1 + $0x158] sm:$0xf]
  %v142 = vld [vmem:[%s1 + $0x15c] sm:$0xf]
  %v143 = vld [vmem:[%s1 + $0x160] sm:$0xf]
  %v144 = vld [vmem:[%s1 + $0x164] sm:$0xf]
  %v145 = vld [vmem:[%s1 + $0x168] sm:$0xf]
  %v146 = vld [vmem:[%s1 + $0x16c] sm:$0xf]
  %v147 = vld [vmem:[%s1 + $0x170] sm:$0xf]
  %v148 = vld [vmem:[%s1 + $0x174] sm:$0xf]
  %v149 = vld [vmem:[%s1 + $0x178] sm:$0xf]
  %v150 = vld [vmem:[%s1 + $0x17c] sm:$0xf]
  %v151 = vld [vmem:[%s1 + $0x180] sm:$0xf]
  %v152 = vld [vmem:[%s1 + $0x184] sm:$0xf]
  %v153 = vld [vmem:[%s1 + $0x188] sm:$0xf]
  %v154 = vld [vmem:[%s1 + $0x18c] sm:$0xf]
  %v155 = vld [vmem:[%s1 + $0x190] sm:$0xf]
  %v156 = vld [vmem:[%s1 + $0x194] sm:$0xf]
  %v157 = vld [vmem:[%s1 + $0x198] sm:$0xf]
  %v158 = vld [vmem:[%s1 + $0x19c] sm:$0xf]
  %v159 = vld [vmem:[%s1 + $0x1a0] sm:$0xf]
  %v160 = vld [vmem:[%s1 + $0x1a4] sm:$0xf]
  %v161 = vld [vmem:[%s1 + $0x1a8] sm:$0xf]
  %v162 = vld [vmem:[%s1 + $0x1ac] sm:$0xf]
  %v163 = vld [vmem:[%s1 + $0x1b0] sm:$0xf]
  %v164 = vld [vmem:[%s1 + $0x1b4] sm:$0xf]
  %v165 = vld [vmem:[%s1 + $0x1b8] sm:$0xf]
  %v166 = vld [vmem:[%s1 + $0x1bc] sm:$0xf]
  %v167 = vld [vmem:[%s1 + $0x1c0] sm:$0xf]
  %v168 = vld [vmem:[%s1 + $0x1c4] sm:$0xf]
  %v169 = vld [vmem:[%s1 + $0x1c8] sm:$0xf]
  %v170 = vld [vmem:[%s1 + $0x1cc] sm:$0xf]
  %v171 = vld [vmem:[%s1 + $0x1d0] sm:$0xf]
  %v172 = vld [vmem:[%s1 + $0x1d4] sm:$0xf]
  %v173 = vld [vmem:[%s1 + $0x1d8] sm:$0xf]
  %v174 = vld [vmem:[%s1 + $0x1dc] sm:$0xf]
  %v175 = vld [vmem:[%s1 + $0x1e0] sm:$0xf]
  %v176 = vld [vmem:[%s1 + $0x1e4] sm:$0xf]
  %v177 = vld [vmem:[%s1 + $0x1e8] sm:$0xf]
  %v178 = vld [vmem:[%s1 + $0x1ec] sm:$0xf]
  %v179 = vld [vmem:[%s1 + $0x1f0] sm:$0xf]
  %v180 = vld [vmem:[%s1 + $0x1f4] sm:$0xf]
  %v181 = vld [vmem:[%s1 + $0x1f8] sm:$0xf]
  %v182 = vld [vmem:[%s1 + $0x1fc] sm:$0xf]
  %v183 = vld [vmem:[%s2] sm:$0x1]
  %v185 = vlaneseq
  %v186 = vshrl.u32 %v185, 7
  %v187 = vsub.s32 0, %v186
  %v188 = vrot.slane %v183, %v187
  %v194 = vunpack.c.l.b16 %v51
  %v195 = vunpack.c.h.b16 %v51
  %v196 = vunpack.c.l.b16 %v52
  %v197 = vunpack.c.h.b16 %v52
  %v198 = vunpack.c.l.b16 %v53
  %v199 = vunpack.c.h.b16 %v53
  %v200 = vunpack.c.l.b16 %v54
  %v201 = vunpack.c.h.b16 %v54
  %v202 = vpack.c.b16 %v194, %v194
  %v203 = vpack.c.b16 %v195, %v195
  %v204 = vpack.c.b16 %v196, %v196
  %v205 = vpack.c.b16 %v197, %v197
  %v206 = vpack.c.b16 %v198, %v198
  %v207 = vpack.c.b16 %v199, %v199
  %v208 = vpack.c.b16 %v200, %v200
  %v209 = vpack.c.b16 %v201, %v201
  %v346 = vunpack.c.l.b16 %v55
  %v347 = vunpack.c.l.b16 %v56
  %v348 = vunpack.c.l.b16 %v57
  %v349 = vunpack.c.l.b16 %v58
  %v350 = vunpack.c.l.b16 %v59
  %v351 = vunpack.c.l.b16 %v60
  %v352 = vunpack.c.l.b16 %v61
  %v353 = vunpack.c.l.b16 %v62
  %v354 = vunpack.c.l.b16 %v63
  %v355 = vunpack.c.l.b16 %v64
  %v356 = vunpack.c.l.b16 %v65
  %v357 = vunpack.c.l.b16 %v66
  %v358 = vunpack.c.l.b16 %v67
  %v359 = vunpack.c.l.b16 %v68
  %v360 = vunpack.c.l.b16 %v69
  %v361 = vunpack.c.l.b16 %v70
  %v362 = vunpack.c.l.b16 %v71
  %v363 = vunpack.c.l.b16 %v72
  %v364 = vunpack.c.l.b16 %v73
  %v365 = vunpack.c.l.b16 %v74
  %v366 = vunpack.c.l.b16 %v75
  %v367 = vunpack.c.l.b16 %v76
  %v368 = vunpack.c.l.b16 %v77
  %v369 = vunpack.c.l.b16 %v78
  %v370 = vunpack.c.l.b16 %v79
  %v371 = vunpack.c.l.b16 %v80
  %v372 = vunpack.c.l.b16 %v81
  %v373 = vunpack.c.l.b16 %v82
  %v374 = vunpack.c.l.b16 %v83
  %v375 = vunpack.c.l.b16 %v84
  %v376 = vunpack.c.l.b16 %v85
  %v377 = vunpack.c.l.b16 %v86
  %v378 = vunpack.c.l.b16 %v87
  %v379 = vunpack.c.l.b16 %v88
  %v380 = vunpack.c.l.b16 %v89
  %v381 = vunpack.c.l.b16 %v90
  %v382 = vunpack.c.l.b16 %v91
  %v383 = vunpack.c.l.b16 %v92
  %v384 = vunpack.c.l.b16 %v93
  %v385 = vunpack.c.l.b16 %v94
  %v386 = vunpack.c.l.b16 %v95
  %v387 = vunpack.c.l.b16 %v96
  %v388 = vunpack.c.l.b16 %v97
  %v389 = vunpack.c.l.b16 %v98
  %v390 = vunpack.c.l.b16 %v99
  %v391 = vunpack.c.l.b16 %v100
  %v392 = vunpack.c.l.b16 %v101
  %v393 = vunpack.c.l.b16 %v102
  %v394 = vunpack.c.l.b16 %v103
  %v395 = vunpack.c.l.b16 %v104
  %v396 = vunpack.c.l.b16 %v105
  %v397 = vunpack.c.l.b16 %v106
  %v398 = vunpack.c.l.b16 %v107
  %v399 = vunpack.c.l.b16 %v108
  %v400 = vunpack.c.l.b16 %v109
  %v401 = vunpack.c.l.b16 %v110
  %v402 = vunpack.c.l.b16 %v111
  %v403 = vunpack.c.l.b16 %v112
  %v404 = vunpack.c.l.b16 %v113
  %v405 = vunpack.c.l.b16 %v114
  %v406 = vunpack.c.l.b16 %v115
  %v407 = vunpack.c.l.b16 %v116
  %v408 = vunpack.c.l.b16 %v117
  %v409 = vunpack.c.l.b16 %v118
  %v410 = vunpack.c.l.b16 %v119
  %v411 = vunpack.c.l.b16 %v120
  %v412 = vunpack.c.l.b16 %v121
  %v413 = vunpack.c.l.b16 %v122
  %v414 = vunpack.c.l.b16 %v123
  %v415 = vunpack.c.l.b16 %v124
  %v416 = vunpack.c.l.b16 %v125
  %v417 = vunpack.c.l.b16 %v126
  %v418 = vunpack.c.l.b16 %v127
  %v419 = vunpack.c.l.b16 %v128
  %v420 = vunpack.c.l.b16 %v129
  %v421 = vunpack.c.l.b16 %v130
  %v422 = vunpack.c.l.b16 %v131
  %v423 = vunpack.c.l.b16 %v132
  %v424 = vunpack.c.l.b16 %v133
  %v425 = vunpack.c.l.b16 %v134
  %v426 = vunpack.c.l.b16 %v135
  %v427 = vunpack.c.l.b16 %v136
  %v428 = vunpack.c.l.b16 %v137
  %v429 = vunpack.c.l.b16 %v138
  %v430 = vunpack.c.l.b16 %v139
  %v431 = vunpack.c.l.b16 %v140
  %v432 = vunpack.c.l.b16 %v141
  %v433 = vunpack.c.l.b16 %v142
  %v434 = vunpack.c.l.b16 %v143
  %v435 = vunpack.c.l.b16 %v144
  %v436 = vunpack.c.l.b16 %v145
  %v437 = vunpack.c.l.b16 %v146
  %v438 = vunpack.c.l.b16 %v147
  %v439 = vunpack.c.l.b16 %v148
  %v440 = vunpack.c.l.b16 %v149
  %v441 = vunpack.c.l.b16 %v150
  %v442 = vunpack.c.l.b16 %v151
  %v443 = vunpack.c.l.b16 %v152
  %v444 = vunpack.c.l.b16 %v153
  %v445 = vunpack.c.l.b16 %v154
  %v446 = vunpack.c.l.b16 %v155
  %v447 = vunpack.c.l.b16 %v156
  %v448 = vunpack.c.l.b16 %v157
  %v449 = vunpack.c.l.b16 %v158
  %v450 = vunpack.c.l.b16 %v159
  %v451 = vunpack.c.l.b16 %v160
  %v452 = vunpack.c.l.b16 %v161
  %v453 = vunpack.c.l.b16 %v162
  %v454 = vunpack.c.l.b16 %v163
  %v455 = vunpack.c.l.b16 %v164
  %v456 = vunpack.c.l.b16 %v165
  %v457 = vunpack.c.l.b16 %v166
  %v458 = vunpack.c.l.b16 %v167
  %v459 = vunpack.c.l.b16 %v168
  %v460 = vunpack.c.l.b16 %v169
  %v461 = vunpack.c.l.b16 %v170
  %v462 = vunpack.c.l.b16 %v171
  %v463 = vunpack.c.l.b16 %v172
  %v464 = vunpack.c.l.b16 %v173
  %v465 = vunpack.c.l.b16 %v174
  %v466 = vunpack.c.l.b16 %v175
  %v467 = vunpack.c.l.b16 %v176
  %v468 = vunpack.c.l.b16 %v177
  %v469 = vunpack.c.l.b16 %v178
  %v470 = vunpack.c.l.b16 %v179
  %v471 = vunpack.c.l.b16 %v180
  %v472 = vunpack.c.l.b16 %v181
  %v473 = vunpack.c.l.b16 %v182
  %v474 = vpack.c.b16 %v347, %v346
  %v475 = vpack.c.b16 %v349, %v348
  %v476 = vpack.c.b16 %v351, %v350
  %v477 = vpack.c.b16 %v353, %v352
  %v478 = vpack.c.b16 %v355, %v354
  %v479 = vpack.c.b16 %v357, %v356
  %v480 = vpack.c.b16 %v359, %v358
  %v481 = vpack.c.b16 %v361, %v360
  %v482 = vpack.c.b16 %v363, %v362
  %v483 = vpack.c.b16 %v365, %v364
  %v484 = vpack.c.b16 %v367, %v366
  %v485 = vpack.c.b16 %v369, %v368
  %v486 = vpack.c.b16 %v371, %v370
  %v487 = vpack.c.b16 %v373, %v372
  %v488 = vpack.c.b16 %v375, %v374
  %v489 = vpack.c.b16 %v377, %v376
  %v490 = vpack.c.b16 %v379, %v378
  %v491 = vpack.c.b16 %v381, %v380
  %v492 = vpack.c.b16 %v383, %v382
  %v493 = vpack.c.b16 %v385, %v384
  %v494 = vpack.c.b16 %v387, %v386
  %v495 = vpack.c.b16 %v389, %v388
  %v496 = vpack.c.b16 %v391, %v390
  %v497 = vpack.c.b16 %v393, %v392
  %v498 = vpack.c.b16 %v395, %v394
  %v499 = vpack.c.b16 %v397, %v396
  %v500 = vpack.c.b16 %v399, %v398
  %v501 = vpack.c.b16 %v401, %v400
  %v502 = vpack.c.b16 %v403, %v402
  %v503 = vpack.c.b16 %v405, %v404
  %v504 = vpack.c.b16 %v407, %v406
  %v505 = vpack.c.b16 %v409, %v408
  %v506 = vpack.c.b16 %v411, %v410
  %v507 = vpack.c.b16 %v413, %v412
  %v508 = vpack.c.b16 %v415, %v414
  %v509 = vpack.c.b16 %v417, %v416
  %v510 = vpack.c.b16 %v419, %v418
  %v511 = vpack.c.b16 %v421, %v420
  %v512 = vpack.c.b16 %v423, %v422
  %v513 = vpack.c.b16 %v425, %v424
  %v514 = vpack.c.b16 %v427, %v426
  %v515 = vpack.c.b16 %v429, %v428
  %v516 = vpack.c.b16 %v431, %v430
  %v517 = vpack.c.b16 %v433, %v432
  %v518 = vpack.c.b16 %v435, %v434
  %v519 = vpack.c.b16 %v437, %v436
  %v520 = vpack.c.b16 %v439, %v438
  %v521 = vpack.c.b16 %v441, %v440
  %v522 = vpack.c.b16 %v443, %v442
  %v523 = vpack.c.b16 %v445, %v444
  %v524 = vpack.c.b16 %v447, %v446
  %v525 = vpack.c.b16 %v449, %v448
  %v526 = vpack.c.b16 %v451, %v450
  %v527 = vpack.c.b16 %v453, %v452
  %v528 = vpack.c.b16 %v455, %v454
  %v529 = vpack.c.b16 %v457, %v456
  %v530 = vpack.c.b16 %v459, %v458
  %v531 = vpack.c.b16 %v461, %v460
  %v532 = vpack.c.b16 %v463, %v462
  %v533 = vpack.c.b16 %v465, %v464
  %v534 = vpack.c.b16 %v467, %v466
  %v535 = vpack.c.b16 %v469, %v468
  %v536 = vpack.c.b16 %v471, %v470
  %v537 = vpack.c.b16 %v473, %v472
  %602 = vmatprep.subr.bf16.mxu0 0
  %603 = vmatpush1.bf16.msra.mxu0 %v481
  %604 = vmatprep.subr.bf16.mxu0 0
  %605 = vmatpush1.bf16.msra.mxu0 %v480
  %606 = vmatprep.subr.bf16.mxu0 0
  %607 = vmatpush1.bf16.msra.mxu0 %v479
  %608 = vmatprep.subr.bf16.mxu0 0
  %609 = vmatpush1.bf16.msra.mxu0 %v478
  %610 = vmatprep.subr.bf16.mxu0 0
  %611 = vmatpush1.bf16.msra.mxu0 %v477
  %612 = vmatprep.subr.bf16.mxu0 0
  %613 = vmatpush1.bf16.msra.mxu0 %v476
  %614 = vmatprep.subr.bf16.mxu0 0
  %615 = vmatpush1.bf16.msra.mxu0 %v475
  %616 = vmatprep.subr.bf16.mxu0 0
  %617 = vmatpush1.bf16.msra.mxu0 %v474
  %618 = vmatprep.subr.bf16.mxu0 0
  %619 = vmatpush2.bf16.msra.mxu0 %v489
  %620 = vmatprep.subr.bf16.mxu0 0
  %621 = vmatpush2.bf16.msra.mxu0 %v488
  %622 = vmatprep.subr.bf16.mxu0 0
  %623 = vmatpush2.bf16.msra.mxu0 %v487
  %624 = vmatprep.subr.bf16.mxu0 0
  %625 = vmatpush2.bf16.msra.mxu0 %v486
  %626 = vmatprep.subr.bf16.mxu0 0
  %627 = vmatpush2.bf16.msra.mxu0 %v485
  %628 = vmatprep.subr.bf16.mxu0 0
  %629 = vmatpush2.bf16.msra.mxu0 %v484
  %630 = vmatprep.subr.bf16.mxu0 0
  %631 = vmatpush2.bf16.msra.mxu0 %v483
  %632 = vmatprep.subr.bf16.mxu0 0
  %633 = vmatpush2.bf16.msra.mxu0 %v482
  %634 = vmatprep.mubr.bf16.mxu0 %v203
  %635 = vmatmul.mubr.bf16.gmra.mxu0 %v202
  %v636 = vpop.f32.mrf.mxu0
  %v637 = vadd.f32 %v188, %v636
  %v638 = vpop.f32.mrf.mxu0
  %v639 = vpop.f32.mrf.mxu0
  %v640 = vpop.f32.mrf.mxu0
  %641 = vdwg.mxu0
  %642 = vmatprep.subr.bf16.mxu0 0
  %643 = vmatpush1.bf16.msra.mxu0 %v497
  %644 = vmatprep.subr.bf16.mxu0 0
  %645 = vmatpush1.bf16.msra.mxu0 %v496
  %646 = vmatprep.subr.bf16.mxu0 0
  %647 = vmatpush1.bf16.msra.mxu0 %v495
  %648 = vmatprep.subr.bf16.mxu0 0
  %649 = vmatpush1.bf16.msra.mxu0 %v494
  %650 = vmatprep.subr.bf16.mxu0 0
  %651 = vmatpush1.bf16.msra.mxu0 %v493
  %652 = vmatprep.subr.bf16.mxu0 0
  %653 = vmatpush1.bf16.msra.mxu0 %v492
  %654 = vmatprep.subr.bf16.mxu0 0
  %655 = vmatpush1.bf16.msra.mxu0 %v491
  %656 = vmatprep.subr.bf16.mxu0 0
  %657 = vmatpush1.bf16.msra.mxu0 %v490
  %658 = vmatprep.subr.bf16.mxu0 0
  %659 = vmatpush2.bf16.msra.mxu0 %v505
  %660 = vmatprep.subr.bf16.mxu0 0
  %661 = vmatpush2.bf16.msra.mxu0 %v504
  %662 = vmatprep.subr.bf16.mxu0 0
  %663 = vmatpush2.bf16.msra.mxu0 %v503
  %664 = vmatprep.subr.bf16.mxu0 0
  %665 = vmatpush2.bf16.msra.mxu0 %v502
  %666 = vmatprep.subr.bf16.mxu0 0
  %667 = vmatpush2.bf16.msra.mxu0 %v501
  %668 = vmatprep.subr.bf16.mxu0 0
  %669 = vmatpush2.bf16.msra.mxu0 %v500
  %670 = vmatprep.subr.bf16.mxu0 0
  %671 = vmatpush2.bf16.msra.mxu0 %v499
  %672 = vmatprep.subr.bf16.mxu0 0
  %673 = vmatpush2.bf16.msra.mxu0 %v498
  %674 = vmatprep.mubr.bf16.mxu0 %v205
  %675 = vmatmul.mubr.bf16.gmra.mxu0 %v204
  %v676 = vpop.f32.mrf.mxu0
  %v677 = vadd.f32 %v637, %v676
  %v678 = vpop.f32.mrf.mxu0
  %v679 = vpop.f32.mrf.mxu0
  %v680 = vpop.f32.mrf.mxu0
  %681 = vdwg.mxu0
  %682 = vmatprep.subr.bf16.mxu0 0
  %683 = vmatpush1.bf16.msra.mxu0 %v513
  %684 = vmatprep.subr.bf16.mxu0 0
  %685 = vmatpush1.bf16.msra.mxu0 %v512
  %686 = vmatprep.subr.bf16.mxu0 0
  %687 = vmatpush1.bf16.msra.mxu0 %v511
  %688 = vmatprep.subr.bf16.mxu0 0
  %689 = vmatpush1.bf16.msra.mxu0 %v510
  %690 = vmatprep.subr.bf16.mxu0 0
  %691 = vmatpush1.bf16.msra.mxu0 %v509
  %692 = vmatprep.subr.bf16.mxu0 0
  %693 = vmatpush1.bf16.msra.mxu0 %v508
  %694 = vmatprep.subr.bf16.mxu0 0
  %695 = vmatpush1.bf16.msra.mxu0 %v507
  %696 = vmatprep.subr.bf16.mxu0 0
  %697 = vmatpush1.bf16.msra.mxu0 %v506
  %698 = vmatprep.subr.bf16.mxu0 0
  %699 = vmatpush2.bf16.msra.mxu0 %v521
  %700 = vmatprep.subr.bf16.mxu0 0
  %701 = vmatpush2.bf16.msra.mxu0 %v520
  %702 = vmatprep.subr.bf16.mxu0 0
  %703 = vmatpush2.bf16.msra.mxu0 %v519
  %704 = vmatprep.subr.bf16.mxu0 0
  %705 = vmatpush2.bf16.msra.mxu0 %v518
  %706 = vmatprep.subr.bf16.mxu0 0
  %707 = vmatpush2.bf16.msra.mxu0 %v517
  %708 = vmatprep.subr.bf16.mxu0 0
  %709 = vmatpush2.bf16.msra.mxu0 %v516
  %710 = vmatprep.subr.bf16.mxu0 0
  %711 = vmatpush2.bf16.msra.mxu0 %v515
  %712 = vmatprep.subr.bf16.mxu0 0
  %713 = vmatpush2.bf16.msra.mxu0 %v514
  %714 = vmatprep.mubr.bf16.mxu0 %v207
  %715 = vmatmul.mubr.bf16.gmra.mxu0 %v206
  %v716 = vpop.f32.mrf.mxu0
  %v717 = vadd.f32 %v677, %v716
  %v718 = vpop.f32.mrf.mxu0
  %v719 = vpop.f32.mrf.mxu0
  %v720 = vpop.f32.mrf.mxu0
  %721 = vdwg.mxu0
  %722 = vmatprep.subr.bf16.mxu0 0
  %723 = vmatpush1.bf16.msra.mxu0 %v529
  %724 = vmatprep.subr.bf16.mxu0 0
  %725 = vmatpush1.bf16.msra.mxu0 %v528
  %726 = vmatprep.subr.bf16.mxu0 0
  %727 = vmatpush1.bf16.msra.mxu0 %v527
  %728 = vmatprep.subr.bf16.mxu0 0
  %729 = vmatpush1.bf16.msra.mxu0 %v526
  %730 = vmatprep.subr.bf16.mxu0 0
  %731 = vmatpush1.bf16.msra.mxu0 %v525
  %732 = vmatprep.subr.bf16.mxu0 0
  %733 = vmatpush1.bf16.msra.mxu0 %v524
  %734 = vmatprep.subr.bf16.mxu0 0
  %735 = vmatpush1.bf16.msra.mxu0 %v523
  %736 = vmatprep.subr.bf16.mxu0 0
  %737 = vmatpush1.bf16.msra.mxu0 %v522
  %738 = vmatprep.subr.bf16.mxu0 0
  %739 = vmatpush2.bf16.msra.mxu0 %v537
  %740 = vmatprep.subr.bf16.mxu0 0
  %741 = vmatpush2.bf16.msra.mxu0 %v536
  %742 = vmatprep.subr.bf16.mxu0 0
  %743 = vmatpush2.bf16.msra.mxu0 %v535
  %744 = vmatprep.subr.bf16.mxu0 0
  %745 = vmatpush2.bf16.msra.mxu0 %v534
  %746 = vmatprep.subr.bf16.mxu0 0
  %747 = vmatpush2.bf16.msra.mxu0 %v533
  %748 = vmatprep.subr.bf16.mxu0 0
  %749 = vmatpush2.bf16.msra.mxu0 %v532
  %750 = vmatprep.subr.bf16.mxu0 0
  %751 = vmatpush2.bf16.msra.mxu0 %v531
  %752 = vmatprep.subr.bf16.mxu0 0
  %753 = vmatpush2.bf16.msra.mxu0 %v530
  %754 = vmatprep.mubr.bf16.mxu0 %v209
  %755 = vmatmul.mubr.bf16.gmra.mxu0 %v208
  %v756 = vpop.f32.mrf.mxu0
  %v757 = vadd.f32 %v717, %v756
  %v758 = vpop.f32.mrf.mxu0
  %v759 = vpop.f32.mrf.mxu0
  %v760 = vpop.f32.mrf.mxu0
  %761 = vdwg.mxu0
  %v762 = vmax.f32 %v757, 0.0
  %vm763 = vcmask 261120
  %764 = vst.msk [vmem:[%s15] sm:$0xff] %vm763, %v762
  %v765 = vld [vmem:[%s3] sm:$0xff]
  %v766 = vld [vmem:[%s3 + $0x8] sm:$0xff]
  %v767 = vld [vmem:[%s3 + $0x10] sm:$0xff]
  %v768 = vld [vmem:[%s3 + $0x18] sm:$0xff]
  %v769 = vld [vmem:[%s4] sm:$0xf]
  %v770 = vld [vmem:[%s4 + $0x4] sm:$0xf]
  %v771 = vld [vmem:[%s4 + $0x8] sm:$0xf]
  %v772 = vld [vmem:[%s4 + $0xc] sm:$0xf]
  %v773 = vld [vmem:[%s4 + $0x10] sm:$0xf]
  %v774 = vld [vmem:[%s4 + $0x14] sm:$0xf]
  %v775 = vld [vmem:[%s4 + $0x18] sm:$0xf]
  %v776 = vld [vmem:[%s4 + $0x1c] sm:$0xf]
  %v777 = vld [vmem:[%s4 + $0x20] sm:$0xf]
  %v778 = vld [vmem:[%s4 + $0x24] sm:$0xf]
  %v779 = vld [vmem:[%s4 + $0x28] sm:$0xf]
  %v780 = vld [vmem:[%s4 + $0x2c] sm:$0xf]
  %v781 = vld [vmem:[%s4 + $0x30] sm:$0xf]
  %v782 = vld [vmem:[%s4 + $0x34] sm:$0xf]
  %v783 = vld [vmem:[%s4 + $0x38] sm:$0xf]
  %v784 = vld [vmem:[%s4 + $0x3c] sm:$0xf]
  %v785 = vld [vmem:[%s4 + $0x40] sm:$0xf]
  %v786 = vld [vmem:[%s4 + $0x44] sm:$0xf]
  %v787 = vld [vmem:[%s4 + $0x48] sm:$0xf]
  %v788 = vld [vmem:[%s4 + $0x4c] sm:$0xf]
  %v789 = vld [vmem:[%s4 + $0x50] sm:$0xf]
  %v790 = vld [vmem:[%s4 + $0x54] sm:$0xf]
  %v791 = vld [vmem:[%s4 + $0x58] sm:$0xf]
  %v792 = vld [vmem:[%s4 + $0x5c] sm:$0xf]
  %v793 = vld [vmem:[%s4 + $0x60] sm:$0xf]
  %v794 = vld [vmem:[%s4 + $0x64] sm:$0xf]
  %v795 = vld [vmem:[%s4 + $0x68] sm:$0xf]
  %v796 = vld [vmem:[%s4 + $0x6c] sm:$0xf]
  %v797 = vld [vmem:[%s4 + $0x70] sm:$0xf]
  %v798 = vld [vmem:[%s4 + $0x74] sm:$0xf]
  %v799 = vld [vmem:[%s4 + $0x78] sm:$0xf]
  %v800 = vld [vmem:[%s4 + $0x7c] sm:$0xf]
  %v801 = vld [vmem:[%s4 + $0x80] sm:$0xf]
  %v802 = vld [vmem:[%s4 + $0x84] sm:$0xf]
  %v803 = vld [vmem:[%s4 + $0x88] sm:$0xf]
  %v804 = vld [vmem:[%s4 + $0x8c] sm:$0xf]
  %v805 = vld [vmem:[%s4 + $0x90] sm:$0xf]
  %v806 = vld [vmem:[%s4 + $0x94] sm:$0xf]
  %v807 = vld [vmem:[%s4 + $0x98] sm:$0xf]
  %v808 = vld [vmem:[%s4 + $0x9c] sm:$0xf]
  %v809 = vld [vmem:[%s4 + $0xa0] sm:$0xf]
  %v810 = vld [vmem:[%s4 + $0xa4] sm:$0xf]
  %v811 = vld [vmem:[%s4 + $0xa8] sm:$0xf]
  %v812 = vld [vmem:[%s4 + $0xac] sm:$0xf]
  %v813 = vld [vmem:[%s4 + $0xb0] sm:$0xf]
  %v814 = vld [vmem:[%s4 + $0xb4] sm:$0xf]
  %v815 = vld [vmem:[%s4 + $0xb8] sm:$0xf]
  %v816 = vld [vmem:[%s4 + $0xbc] sm:$0xf]
  %v817 = vld [vmem:[%s4 + $0xc0] sm:$0xf]
  %v818 = vld [vmem:[%s4 + $0xc4] sm:$0xf]
  %v819 = vld [vmem:[%s4 + $0xc8] sm:$0xf]
  %v820 = vld [vmem:[%s4 + $0xcc] sm:$0xf]
  %v821 = vld [vmem:[%s4 + $0xd0] sm:$0xf]
  %v822 = vld [vmem:[%s4 + $0xd4] sm:$0xf]
  %v823 = vld [vmem:[%s4 + $0xd8] sm:$0xf]
  %v824 = vld [vmem:[%s4 + $0xdc] sm:$0xf]
  %v825 = vld [vmem:[%s4 + $0xe0] sm:$0xf]
  %v826 = vld [vmem:[%s4 + $0xe4] sm:$0xf]
  %v827 = vld [vmem:[%s4 + $0xe8] sm:$0xf]
  %v828 = vld [vmem:[%s4 + $0xec] sm:$0xf]
  %v829 = vld [vmem:[%s4 + $0xf0] sm:$0xf]
  %v830 = vld [vmem:[%s4 + $0xf4] sm:$0xf]
  %v831 = vld [vmem:[%s4 + $0xf8] sm:$0xf]
  %v832 = vld [vmem:[%s4 + $0xfc] sm:$0xf]
  %v833 = vld [vmem:[%s4 + $0x100] sm:$0xf]
  %v834 = vld [vmem:[%s4 + $0x104] sm:$0xf]
  %v835 = vld [vmem:[%s4 + $0x108] sm:$0xf]
  %v836 = vld [vmem:[%s4 + $0x10c] sm:$0xf]
  %v837 = vld [vmem:[%s4 + $0x110] sm:$0xf]
  %v838 = vld [vmem:[%s4 + $0x114] sm:$0xf]
  %v839 = vld [vmem:[%s4 + $0x118] sm:$0xf]
  %v840 = vld [vmem:[%s4 + $0x11c] sm:$0xf]
  %v841 = vld [vmem:[%s4 + $0x120] sm:$0xf]
  %v842 = vld [vmem:[%s4 + $0x124] sm:$0xf]
  %v843 = vld [vmem:[%s4 + $0x128] sm:$0xf]
  %v844 = vld [vmem:[%s4 + $0x12c] sm:$0xf]
  %v845 = vld [vmem:[%s4 + $0x130] sm:$0xf]
  %v846 = vld [vmem:[%s4 + $0x134] sm:$0xf]
  %v847 = vld [vmem:[%s4 + $0x138] sm:$0xf]
  %v848 = vld [vmem:[%s4 + $0x13c] sm:$0xf]
  %v849 = vld [vmem:[%s4 + $0x140] sm:$0xf]
  %v850 = vld [vmem:[%s4 + $0x144] sm:$0xf]
  %v851 = vld [vmem:[%s4 + $0x148] sm:$0xf]
  %v852 = vld [vmem:[%s4 + $0x14c] sm:$0xf]
  %v853 = vld [vmem:[%s4 + $0x150] sm:$0xf]
  %v854 = vld [vmem:[%s4 + $0x154] sm:$0xf]
  %v855 = vld [vmem:[%s4 + $0x158] sm:$0xf]
  %v856 = vld [vmem:[%s4 + $0x15c] sm:$0xf]
  %v857 = vld [vmem:[%s4 + $0x160] sm:$0xf]
  %v858 = vld [vmem:[%s4 + $0x164] sm:$0xf]
  %v859 = vld [vmem:[%s4 + $0x168] sm:$0xf]
  %v860 = vld [vmem:[%s4 + $0x16c] sm:$0xf]
  %v861 = vld [vmem:[%s4 + $0x170] sm:$0xf]
  %v862 = vld [vmem:[%s4 + $0x174] sm:$0xf]
  %v863 = vld [vmem:[%s4 + $0x178] sm:$0xf]
  %v864 = vld [vmem:[%s4 + $0x17c] sm:$0xf]
  %v865 = vld [vmem:[%s4 + $0x180] sm:$0xf]
  %v866 = vld [vmem:[%s4 + $0x184] sm:$0xf]
  %v867 = vld [vmem:[%s4 + $0x188] sm:$0xf]
  %v868 = vld [vmem:[%s4 + $0x18c] sm:$0xf]
  %v869 = vld [vmem:[%s4 + $0x190] sm:$0xf]
  %v870 = vld [vmem:[%s4 + $0x194] sm:$0xf]
  %v871 = vld [vmem:[%s4 + $0x198] sm:$0xf]
  %v872 = vld [vmem:[%s4 + $0x19c] sm:$0xf]
  %v873 = vld [vmem:[%s4 + $0x1a0] sm:$0xf]
  %v874 = vld [vmem:[%s4 + $0x1a4] sm:$0xf]
  %v875 = vld [vmem:[%s4 + $0x1a8] sm:$0xf]
  %v876 = vld [vmem:[%s4 + $0x1ac] sm:$0xf]
  %v877 = vld [vmem:[%s4 + $0x1b0] sm:$0xf]
  %v878 = vld [vmem:[%s4 + $0x1b4] sm:$0xf]
  %v879 = vld [vmem:[%s4 + $0x1b8] sm:$0xf]
  %v880 = vld [vmem:[%s4 + $0x1bc] sm:$0xf]
  %v881 = vld [vmem:[%s4 + $0x1c0] sm:$0xf]
  %v882 = vld [vmem:[%s4 + $0x1c4] sm:$0xf]
  %v883 = vld [vmem:[%s4 + $0x1c8] sm:$0xf]
  %v884 = vld [vmem:[%s4 + $0x1cc] sm:$0xf]
  %v885 = vld [vmem:[%s4 + $0x1d0] sm:$0xf]
  %v886 = vld [vmem:[%s4 + $0x1d4] sm:$0xf]
  %v887 = vld [vmem:[%s4 + $0x1d8] sm:$0xf]
  %v888 = vld [vmem:[%s4 + $0x1dc] sm:$0xf]
  %v889 = vld [vmem:[%s4 + $0x1e0] sm:$0xf]
  %v890 = vld [vmem:[%s4 + $0x1e4] sm:$0xf]
  %v891 = vld [vmem:[%s4 + $0x1e8] sm:$0xf]
  %v892 = vld [vmem:[%s4 + $0x1ec] sm:$0xf]
  %v893 = vld [vmem:[%s4 + $0x1f0] sm:$0xf]
  %v894 = vld [vmem:[%s4 + $0x1f4] sm:$0xf]
  %v895 = vld [vmem:[%s4 + $0x1f8] sm:$0xf]
  %v896 = vld [vmem:[%s4 + $0x1fc] sm:$0xf]
  %v897 = vld [vmem:[%s5] sm:$0x1]
  %v899 = vlaneseq
  %v900 = vshrl.u32 %v899, 7
  %v901 = vsub.s32 0, %v900
  %v902 = vrot.slane %v897, %v901
  %v908 = vunpack.c.l.b16 %v765
  %v909 = vunpack.c.h.b16 %v765
  %v910 = vunpack.c.l.b16 %v766
  %v911 = vunpack.c.h.b16 %v766
  %v912 = vunpack.c.l.b16 %v767
  %v913 = vunpack.c.h.b16 %v767
  %v914 = vunpack.c.l.b16 %v768
  %v915 = vunpack.c.h.b16 %v768
  %v916 = vpack.c.b16 %v908, %v908
  %v917 = vpack.c.b16 %v909, %v909
  %v918 = vpack.c.b16 %v910, %v910
  %v919 = vpack.c.b16 %v911, %v911
  %v920 = vpack.c.b16 %v912, %v912
  %v921 = vpack.c.b16 %v913, %v913
  %v922 = vpack.c.b16 %v914, %v914
  %v923 = vpack.c.b16 %v915, %v915
  %v1060 = vunpack.c.l.b16 %v769
  %v1061 = vunpack.c.l.b16 %v770
  %v1062 = vunpack.c.l.b16 %v771
  %v1063 = vunpack.c.l.b16 %v772
  %v1064 = vunpack.c.l.b16 %v773
  %v1065 = vunpack.c.l.b16 %v774
  %v1066 = vunpack.c.l.b16 %v775
  %v1067 = vunpack.c.l.b16 %v776
  %v1068 = vunpack.c.l.b16 %v777
  %v1069 = vunpack.c.l.b16 %v778
  %v1070 = vunpack.c.l.b16 %v779
  %v1071 = vunpack.c.l.b16 %v780
  %v1072 = vunpack.c.l.b16 %v781
  %v1073 = vunpack.c.l.b16 %v782
  %v1074 = vunpack.c.l.b16 %v783
  %v1075 = vunpack.c.l.b16 %v784
  %v1076 = vunpack.c.l.b16 %v785
  %v1077 = vunpack.c.l.b16 %v786
  %v1078 = vunpack.c.l.b16 %v787
  %v1079 = vunpack.c.l.b16 %v788
  %v1080 = vunpack.c.l.b16 %v789
  %v1081 = vunpack.c.l.b16 %v790
  %v1082 = vunpack.c.l.b16 %v791
  %v1083 = vunpack.c.l.b16 %v792
  %v1084 = vunpack.c.l.b16 %v793
  %v1085 = vunpack.c.l.b16 %v794
  %v1086 = vunpack.c.l.b16 %v795
  %v1087 = vunpack.c.l.b16 %v796
  %v1088 = vunpack.c.l.b16 %v797
  %v1089 = vunpack.c.l.b16 %v798
  %v1090 = vunpack.c.l.b16 %v799
  %v1091 = vunpack.c.l.b16 %v800
  %v1092 = vunpack.c.l.b16 %v801
  %v1093 = vunpack.c.l.b16 %v802
  %v1094 = vunpack.c.l.b16 %v803
  %v1095 = vunpack.c.l.b16 %v804
  %v1096 = vunpack.c.l.b16 %v805
  %v1097 = vunpack.c.l.b16 %v806
  %v1098 = vunpack.c.l.b16 %v807
  %v1099 = vunpack.c.l.b16 %v808
  %v1100 = vunpack.c.l.b16 %v809
  %v1101 = vunpack.c.l.b16 %v810
  %v1102 = vunpack.c.l.b16 %v811
  %v1103 = vunpack.c.l.b16 %v812
  %v1104 = vunpack.c.l.b16 %v813
  %v1105 = vunpack.c.l.b16 %v814
  %v1106 = vunpack.c.l.b16 %v815
  %v1107 = vunpack.c.l.b16 %v816
  %v1108 = vunpack.c.l.b16 %v817
  %v1109 = vunpack.c.l.b16 %v818
  %v1110 = vunpack.c.l.b16 %v819
  %v1111 = vunpack.c.l.b16 %v820
  %v1112 = vunpack.c.l.b16 %v821
  %v1113 = vunpack.c.l.b16 %v822
  %v1114 = vunpack.c.l.b16 %v823
  %v1115 = vunpack.c.l.b16 %v824
  %v1116 = vunpack.c.l.b16 %v825
  %v1117 = vunpack.c.l.b16 %v826
  %v1118 = vunpack.c.l.b16 %v827
  %v1119 = vunpack.c.l.b16 %v828
  %v1120 = vunpack.c.l.b16 %v829
  %v1121 = vunpack.c.l.b16 %v830
  %v1122 = vunpack.c.l.b16 %v831
  %v1123 = vunpack.c.l.b16 %v832
  %v1124 = vunpack.c.l.b16 %v833
  %v1125 = vunpack.c.l.b16 %v834
  %v1126 = vunpack.c.l.b16 %v835
  %v1127 = vunpack.c.l.b16 %v836
  %v1128 = vunpack.c.l.b16 %v837
  %v1129 = vunpack.c.l.b16 %v838
  %v1130 = vunpack.c.l.b16 %v839
  %v1131 = vunpack.c.l.b16 %v840
  %v1132 = vunpack.c.l.b16 %v841
  %v1133 = vunpack.c.l.b16 %v842
  %v1134 = vunpack.c.l.b16 %v843
  %v1135 = vunpack.c.l.b16 %v844
  %v1136 = vunpack.c.l.b16 %v845
  %v1137 = vunpack.c.l.b16 %v846
  %v1138 = vunpack.c.l.b16 %v847
  %v1139 = vunpack.c.l.b16 %v848
  %v1140 = vunpack.c.l.b16 %v849
  %v1141 = vunpack.c.l.b16 %v850
  %v1142 = vunpack.c.l.b16 %v851
  %v1143 = vunpack.c.l.b16 %v852
  %v1144 = vunpack.c.l.b16 %v853
  %v1145 = vunpack.c.l.b16 %v854
  %v1146 = vunpack.c.l.b16 %v855
  %v1147 = vunpack.c.l.b16 %v856
  %v1148 = vunpack.c.l.b16 %v857
  %v1149 = vunpack.c.l.b16 %v858
  %v1150 = vunpack.c.l.b16 %v859
  %v1151 = vunpack.c.l.b16 %v860
  %v1152 = vunpack.c.l.b16 %v861
  %v1153 = vunpack.c.l.b16 %v862
  %v1154 = vunpack.c.l.b16 %v863
  %v1155 = vunpack.c.l.b16 %v864
  %v1156 = vunpack.c.l.b16 %v865
  %v1157 = vunpack.c.l.b16 %v866
  %v1158 = vunpack.c.l.b16 %v867
  %v1159 = vunpack.c.l.b16 %v868
  %v1160 = vunpack.c.l.b16 %v869
  %v1161 = vunpack.c.l.b16 %v870
  %v1162 = vunpack.c.l.b16 %v871
  %v1163 = vunpack.c.l.b16 %v872
  %v1164 = vunpack.c.l.b16 %v873
  %v1165 = vunpack.c.l.b16 %v874
  %v1166 = vunpack.c.l.b16 %v875
  %v1167 = vunpack.c.l.b16 %v876
  %v1168 = vunpack.c.l.b16 %v877
  %v1169 = vunpack.c.l.b16 %v878
  %v1170 = vunpack.c.l.b16 %v879
  %v1171 = vunpack.c.l.b16 %v880
  %v1172 = vunpack.c.l.b16 %v881
  %v1173 = vunpack.c.l.b16 %v882
  %v1174 = vunpack.c.l.b16 %v883
  %v1175 = vunpack.c.l.b16 %v884
  %v1176 = vunpack.c.l.b16 %v885
  %v1177 = vunpack.c.l.b16 %v886
  %v1178 = vunpack.c.l.b16 %v887
  %v1179 = vunpack.c.l.b16 %v888
  %v1180 = vunpack.c.l.b16 %v889
  %v1181 = vunpack.c.l.b16 %v890
  %v1182 = vunpack.c.l.b16 %v891
  %v1183 = vunpack.c.l.b16 %v892
  %v1184 = vunpack.c.l.b16 %v893
  %v1185 = vunpack.c.l.b16 %v894
  %v1186 = vunpack.c.l.b16 %v895
  %v1187 = vunpack.c.l.b16 %v896
  %v1188 = vpack.c.b16 %v1061, %v1060
  %v1189 = vpack.c.b16 %v1063, %v1062
  %v1190 = vpack.c.b16 %v1065, %v1064
  %v1191 = vpack.c.b16 %v1067, %v1066
  %v1192 = vpack.c.b16 %v1069, %v1068
  %v1193 = vpack.c.b16 %v1071, %v1070
  %v1194 = vpack.c.b16 %v1073, %v1072
  %v1195 = vpack.c.b16 %v1075, %v1074
  %v1196 = vpack.c.b16 %v1077, %v1076
  %v1197 = vpack.c.b16 %v1079, %v1078
  %v1198 = vpack.c.b16 %v1081, %v1080
  %v1199 = vpack.c.b16 %v1083, %v1082
  %v1200 = vpack.c.b16 %v1085, %v1084
  %v1201 = vpack.c.b16 %v1087, %v1086
  %v1202 = vpack.c.b16 %v1089, %v1088
  %v1203 = vpack.c.b16 %v1091, %v1090
  %v1204 = vpack.c.b16 %v1093, %v1092
  %v1205 = vpack.c.b16 %v1095, %v1094
  %v1206 = vpack.c.b16 %v1097, %v1096
  %v1207 = vpack.c.b16 %v1099, %v1098
  %v1208 = vpack.c.b16 %v1101, %v1100
  %v1209 = vpack.c.b16 %v1103, %v1102
  %v1210 = vpack.c.b16 %v1105, %v1104
  %v1211 = vpack.c.b16 %v1107, %v1106
  %v1212 = vpack.c.b16 %v1109, %v1108
  %v1213 = vpack.c.b16 %v1111, %v1110
  %v1214 = vpack.c.b16 %v1113, %v1112
  %v1215 = vpack.c.b16 %v1115, %v1114
  %v1216 = vpack.c.b16 %v1117, %v1116
  %v1217 = vpack.c.b16 %v1119, %v1118
  %v1218 = vpack.c.b16 %v1121, %v1120
  %v1219 = vpack.c.b16 %v1123, %v1122
  %v1220 = vpack.c.b16 %v1125, %v1124
  %v1221 = vpack.c.b16 %v1127, %v1126
  %v1222 = vpack.c.b16 %v1129, %v1128
  %v1223 = vpack.c.b16 %v1131, %v1130
  %v1224 = vpack.c.b16 %v1133, %v1132
  %v1225 = vpack.c.b16 %v1135, %v1134
  %v1226 = vpack.c.b16 %v1137, %v1136
  %v1227 = vpack.c.b16 %v1139, %v1138
  %v1228 = vpack.c.b16 %v1141, %v1140
  %v1229 = vpack.c.b16 %v1143, %v1142
  %v1230 = vpack.c.b16 %v1145, %v1144
  %v1231 = vpack.c.b16 %v1147, %v1146
  %v1232 = vpack.c.b16 %v1149, %v1148
  %v1233 = vpack.c.b16 %v1151, %v1150
  %v1234 = vpack.c.b16 %v1153, %v1152
  %v1235 = vpack.c.b16 %v1155, %v1154
  %v1236 = vpack.c.b16 %v1157, %v1156
  %v1237 = vpack.c.b16 %v1159, %v1158
  %v1238 = vpack.c.b16 %v1161, %v1160
  %v1239 = vpack.c.b16 %v1163, %v1162
  %v1240 = vpack.c.b16 %v1165, %v1164
  %v1241 = vpack.c.b16 %v1167, %v1166
  %v1242 = vpack.c.b16 %v1169, %v1168
  %v1243 = vpack.c.b16 %v1171, %v1170
  %v1244 = vpack.c.b16 %v1173, %v1172
  %v1245 = vpack.c.b16 %v1175, %v1174
  %v1246 = vpack.c.b16 %v1177, %v1176
  %v1247 = vpack.c.b16 %v1179, %v1178
  %v1248 = vpack.c.b16 %v1181, %v1180
  %v1249 = vpack.c.b16 %v1183, %v1182
  %v1250 = vpack.c.b16 %v1185, %v1184
  %v1251 = vpack.c.b16 %v1187, %v1186
  %1316 = vmatprep.subr.bf16.mxu0 0
  %1317 = vmatpush1.bf16.msra.mxu0 %v1195
  %1318 = vmatprep.subr.bf16.mxu0 0
  %1319 = vmatpush1.bf16.msra.mxu0 %v1194
  %1320 = vmatprep.subr.bf16.mxu0 0
  %1321 = vmatpush1.bf16.msra.mxu0 %v1193
  %1322 = vmatprep.subr.bf16.mxu0 0
  %1323 = vmatpush1.bf16.msra.mxu0 %v1192
  %1324 = vmatprep.subr.bf16.mxu0 0
  %1325 = vmatpush1.bf16.msra.mxu0 %v1191
  %1326 = vmatprep.subr.bf16.mxu0 0
  %1327 = vmatpush1.bf16.msra.mxu0 %v1190
  %1328 = vmatprep.subr.bf16.mxu0 0
  %1329 = vmatpush1.bf16.msra.mxu0 %v1189
  %1330 = vmatprep.subr.bf16.mxu0 0
  %1331 = vmatpush1.bf16.msra.mxu0 %v1188
  %1332 = vmatprep.subr.bf16.mxu0 0
  %1333 = vmatpush2.bf16.msra.mxu0 %v1203
  %1334 = vmatprep.subr.bf16.mxu0 0
  %1335 = vmatpush2.bf16.msra.mxu0 %v1202
  %1336 = vmatprep.subr.bf16.mxu0 0
  %1337 = vmatpush2.bf16.msra.mxu0 %v1201
  %1338 = vmatprep.subr.bf16.mxu0 0
  %1339 = vmatpush2.bf16.msra.mxu0 %v1200
  %1340 = vmatprep.subr.bf16.mxu0 0
  %1341 = vmatpush2.bf16.msra.mxu0 %v1199
  %1342 = vmatprep.subr.bf16.mxu0 0
  %1343 = vmatpush2.bf16.msra.mxu0 %v1198
  %1344 = vmatprep.subr.bf16.mxu0 0
  %1345 = vmatpush2.bf16.msra.mxu0 %v1197
  %1346 = vmatprep.subr.bf16.mxu0 0
  %1347 = vmatpush2.bf16.msra.mxu0 %v1196
  %1348 = vmatprep.mubr.bf16.mxu0 %v917
  %1349 = vmatmul.mubr.bf16.gmra.mxu0 %v916
  %v1350 = vpop.f32.mrf.mxu0
  %v1351 = vadd.f32 %v902, %v1350
  %v1352 = vpop.f32.mrf.mxu0
  %v1353 = vpop.f32.mrf.mxu0
  %v1354 = vpop.f32.mrf.mxu0
  %1355 = vdwg.mxu0
  %1356 = vmatprep.subr.bf16.mxu0 0
  %1357 = vmatpush1.bf16.msra.mxu0 %v1211
  %1358 = vmatprep.subr.bf16.mxu0 0
  %1359 = vmatpush1.bf16.msra.mxu0 %v1210
  %1360 = vmatprep.subr.bf16.mxu0 0
  %1361 = vmatpush1.bf16.msra.mxu0 %v1209
  %1362 = vmatprep.subr.bf16.mxu0 0
  %1363 = vmatpush1.bf16.msra.mxu0 %v1208
  %1364 = vmatprep.subr.bf16.mxu0 0
  %1365 = vmatpush1.bf16.msra.mxu0 %v1207
  %1366 = vmatprep.subr.bf16.mxu0 0
  %1367 = vmatpush1.bf16.msra.mxu0 %v1206
  %1368 = vmatprep.subr.bf16.mxu0 0
  %1369 = vmatpush1.bf16.msra.mxu0 %v1205
  %1370 = vmatprep.subr.bf16.mxu0 0
  %1371 = vmatpush1.bf16.msra.mxu0 %v1204
  %1372 = vmatprep.subr.bf16.mxu0 0
  %1373 = vmatpush2.bf16.msra.mxu0 %v1219
  %1374 = vmatprep.subr.bf16.mxu0 0
  %1375 = vmatpush2.bf16.msra.mxu0 %v1218
  %1376 = vmatprep.subr.bf16.mxu0 0
  %1377 = vmatpush2.bf16.msra.mxu0 %v1217
  %1378 = vmatprep.subr.bf16.mxu0 0
  %1379 = vmatpush2.bf16.msra.mxu0 %v1216
  %1380 = vmatprep.subr.bf16.mxu0 0
  %1381 = vmatpush2.bf16.msra.mxu0 %v1215
  %1382 = vmatprep.subr.bf16.mxu0 0
  %1383 = vmatpush2.bf16.msra.mxu0 %v1214
  %1384 = vmatprep.subr.bf16.mxu0 0
  %1385 = vmatpush2.bf16.msra.mxu0 %v1213
  %1386 = vmatprep.subr.bf16.mxu0 0
  %1387 = vmatpush2.bf16.msra.mxu0 %v1212
  %1388 = vmatprep.mubr.bf16.mxu0 %v919
  %1389 = vmatmul.mubr.bf16.gmra.mxu0 %v918
  %v1390 = vpop.f32.mrf.mxu0
  %v1391 = vadd.f32 %v1351, %v1390
  %v1392 = vpop.f32.mrf.mxu0
  %v1393 = vpop.f32.mrf.mxu0
  %v1394 = vpop.f32.mrf.mxu0
  %1395 = vdwg.mxu0
  %1396 = vmatprep.subr.bf16.mxu0 0
  %1397 = vmatpush1.bf16.msra.mxu0 %v1227
  %1398 = vmatprep.subr.bf16.mxu0 0
  %1399 = vmatpush1.bf16.msra.mxu0 %v1226
  %1400 = vmatprep.subr.bf16.mxu0 0
  %1401 = vmatpush1.bf16.msra.mxu0 %v1225
  %1402 = vmatprep.subr.bf16.mxu0 0
  %1403 = vmatpush1.bf16.msra.mxu0 %v1224
  %1404 = vmatprep.subr.bf16.mxu0 0
  %1405 = vmatpush1.bf16.msra.mxu0 %v1223
  %1406 = vmatprep.subr.bf16.mxu0 0
  %1407 = vmatpush1.bf16.msra.mxu0 %v1222
  %1408 = vmatprep.subr.bf16.mxu0 0
  %1409 = vmatpush1.bf16.msra.mxu0 %v1221
  %1410 = vmatprep.subr.bf16.mxu0 0
  %1411 = vmatpush1.bf16.msra.mxu0 %v1220
  %1412 = vmatprep.subr.bf16.mxu0 0
  %1413 = vmatpush2.bf16.msra.mxu0 %v1235
  %1414 = vmatprep.subr.bf16.mxu0 0
  %1415 = vmatpush2.bf16.msra.mxu0 %v1234
  %1416 = vmatprep.subr.bf16.mxu0 0
  %1417 = vmatpush2.bf16.msra.mxu0 %v1233
  %1418 = vmatprep.subr.bf16.mxu0 0
  %1419 = vmatpush2.bf16.msra.mxu0 %v1232
  %1420 = vmatprep.subr.bf16.mxu0 0
  %1421 = vmatpush2.bf16.msra.mxu0 %v1231
  %1422 = vmatprep.subr.bf16.mxu0 0
  %1423 = vmatpush2.bf16.msra.mxu0 %v1230
  %1424 = vmatprep.subr.bf16.mxu0 0
  %1425 = vmatpush2.bf16.msra.mxu0 %v1229
  %1426 = vmatprep.subr.bf16.mxu0 0
  %1427 = vmatpush2.bf16.msra.mxu0 %v1228
  %1428 = vmatprep.mubr.bf16.mxu0 %v921
  %1429 = vmatmul.mubr.bf16.gmra.mxu0 %v920
  %v1430 = vpop.f32.mrf.mxu0
  %v1431 = vadd.f32 %v1391, %v1430
  %v1432 = vpop.f32.mrf.mxu0
  %v1433 = vpop.f32.mrf.mxu0
  %v1434 = vpop.f32.mrf.mxu0
  %1435 = vdwg.mxu0
  %1436 = vmatprep.subr.bf16.mxu0 0
  %1437 = vmatpush1.bf16.msra.mxu0 %v1243
  %1438 = vmatprep.subr.bf16.mxu0 0
  %1439 = vmatpush1.bf16.msra.mxu0 %v1242
  %1440 = vmatprep.subr.bf16.mxu0 0
  %1441 = vmatpush1.bf16.msra.mxu0 %v1241
  %1442 = vmatprep.subr.bf16.mxu0 0
  %1443 = vmatpush1.bf16.msra.mxu0 %v1240
  %1444 = vmatprep.subr.bf16.mxu0 0
  %1445 = vmatpush1.bf16.msra.mxu0 %v1239
  %1446 = vmatprep.subr.bf16.mxu0 0
  %1447 = vmatpush1.bf16.msra.mxu0 %v1238
  %1448 = vmatprep.subr.bf16.mxu0 0
  %1449 = vmatpush1.bf16.msra.mxu0 %v1237
  %1450 = vmatprep.subr.bf16.mxu0 0
  %1451 = vmatpush1.bf16.msra.mxu0 %v1236
  %1452 = vmatprep.subr.bf16.mxu0 0
  %1453 = vmatpush2.bf16.msra.mxu0 %v1251
  %1454 = vmatprep.subr.bf16.mxu0 0
  %1455 = vmatpush2.bf16.msra.mxu0 %v1250
  %1456 = vmatprep.subr.bf16.mxu0 0
  %1457 = vmatpush2.bf16.msra.mxu0 %v1249
  %1458 = vmatprep.subr.bf16.mxu0 0
  %1459 = vmatpush2.bf16.msra.mxu0 %v1248
  %1460 = vmatprep.subr.bf16.mxu0 0
  %1461 = vmatpush2.bf16.msra.mxu0 %v1247
  %1462 = vmatprep.subr.bf16.mxu0 0
  %1463 = vmatpush2.bf16.msra.mxu0 %v1246
  %1464 = vmatprep.subr.bf16.mxu0 0
  %1465 = vmatpush2.bf16.msra.mxu0 %v1245
  %1466 = vmatprep.subr.bf16.mxu0 0
  %1467 = vmatpush2.bf16.msra.mxu0 %v1244
  %1468 = vmatprep.mubr.bf16.mxu0 %v923
  %1469 = vmatmul.mubr.bf16.gmra.mxu0 %v922
  %v1470 = vpop.f32.mrf.mxu0
  %v1471 = vadd.f32 %v1431, %v1470
  %v1472 = vpop.f32.mrf.mxu0
  %v1473 = vpop.f32.mrf.mxu0
  %v1474 = vpop.f32.mrf.mxu0
  %1475 = vdwg.mxu0
  %v1476 = vmax.f32 %v1471, 0.0
  %1478 = vrot.lane.b32.xlu0 %v1476, 32
  %v1479 = vpop.permute.xlu0 %1478
  %vm1481 = vcmask 523520
  %1482 = vst.msk [vmem:[%s15] sm:$0xff] %vm1481, %v1479
  %v1483 = vld [vmem:[%s6] sm:$0xff]
  %v1484 = vld [vmem:[%s6 + $0x8] sm:$0xff]
  %v1485 = vld [vmem:[%s6 + $0x10] sm:$0xff]
  %v1486 = vld [vmem:[%s6 + $0x18] sm:$0xf]
  %v1487 = vld [vmem:[%s7] sm:$0xf]
  %v1488 = vld [vmem:[%s7 + $0x4] sm:$0xf]
  %v1489 = vld [vmem:[%s7 + $0x8] sm:$0xf]
  %v1490 = vld [vmem:[%s7 + $0xc] sm:$0xf]
  %v1491 = vld [vmem:[%s7 + $0x10] sm:$0xf]
  %v1492 = vld [vmem:[%s7 + $0x14] sm:$0xf]
  %v1493 = vld [vmem:[%s7 + $0x18] sm:$0xf]
  %v1494 = vld [vmem:[%s7 + $0x1c] sm:$0xf]
  %v1495 = vld [vmem:[%s7 + $0x20] sm:$0xf]
  %v1496 = vld [vmem:[%s7 + $0x24] sm:$0xf]
  %v1497 = vld [vmem:[%s7 + $0x28] sm:$0xf]
  %v1498 = vld [vmem:[%s7 + $0x2c] sm:$0xf]
  %v1499 = vld [vmem:[%s7 + $0x30] sm:$0xf]
  %v1500 = vld [vmem:[%s7 + $0x34] sm:$0xf]
  %v1501 = vld [vmem:[%s7 + $0x38] sm:$0xf]
  %v1502 = vld [vmem:[%s7 + $0x3c] sm:$0xf]
  %v1503 = vld [vmem:[%s7 + $0x40] sm:$0xf]
  %v1504 = vld [vmem:[%s7 + $0x44] sm:$0xf]
  %v1505 = vld [vmem:[%s7 + $0x48] sm:$0xf]
  %v1506 = vld [vmem:[%s7 + $0x4c] sm:$0xf]
  %v1507 = vld [vmem:[%s7 + $0x50] sm:$0xf]
  %v1508 = vld [vmem:[%s7 + $0x54] sm:$0xf]
  %v1509 = vld [vmem:[%s7 + $0x58] sm:$0xf]
  %v1510 = vld [vmem:[%s7 + $0x5c] sm:$0xf]
  %v1511 = vld [vmem:[%s7 + $0x60] sm:$0xf]
  %v1512 = vld [vmem:[%s7 + $0x64] sm:$0xf]
  %v1513 = vld [vmem:[%s7 + $0x68] sm:$0xf]
  %v1514 = vld [vmem:[%s7 + $0x6c] sm:$0xf]
  %v1515 = vld [vmem:[%s7 + $0x70] sm:$0xf]
  %v1516 = vld [vmem:[%s7 + $0x74] sm:$0xf]
  %v1517 = vld [vmem:[%s7 + $0x78] sm:$0xf]
  %v1518 = vld [vmem:[%s7 + $0x7c] sm:$0xf]
  %v1519 = vld [vmem:[%s7 + $0x80] sm:$0xf]
  %v1520 = vld [vmem:[%s7 + $0x84] sm:$0xf]
  %v1521 = vld [vmem:[%s7 + $0x88] sm:$0xf]
  %v1522 = vld [vmem:[%s7 + $0x8c] sm:$0xf]
  %v1523 = vld [vmem:[%s7 + $0x90] sm:$0xf]
  %v1524 = vld [vmem:[%s7 + $0x94] sm:$0xf]
  %v1525 = vld [vmem:[%s7 + $0x98] sm:$0xf]
  %v1526 = vld [vmem:[%s7 + $0x9c] sm:$0xf]
  %v1527 = vld [vmem:[%s7 + $0xa0] sm:$0xf]
  %v1528 = vld [vmem:[%s7 + $0xa4] sm:$0xf]
  %v1529 = vld [vmem:[%s7 + $0xa8] sm:$0xf]
  %v1530 = vld [vmem:[%s7 + $0xac] sm:$0xf]
  %v1531 = vld [vmem:[%s7 + $0xb0] sm:$0xf]
  %v1532 = vld [vmem:[%s7 + $0xb4] sm:$0xf]
  %v1533 = vld [vmem:[%s7 + $0xb8] sm:$0xf]
  %v1534 = vld [vmem:[%s7 + $0xbc] sm:$0xf]
  %v1535 = vld [vmem:[%s7 + $0xc0] sm:$0xf]
  %v1536 = vld [vmem:[%s7 + $0xc4] sm:$0xf]
  %v1537 = vld [vmem:[%s7 + $0xc8] sm:$0xf]
  %v1538 = vld [vmem:[%s7 + $0xcc] sm:$0xf]
  %v1539 = vld [vmem:[%s7 + $0xd0] sm:$0xf]
  %v1540 = vld [vmem:[%s7 + $0xd4] sm:$0xf]
  %v1541 = vld [vmem:[%s7 + $0xd8] sm:$0xf]
  %v1542 = vld [vmem:[%s7 + $0xdc] sm:$0xf]
  %v1543 = vld [vmem:[%s7 + $0xe0] sm:$0xf]
  %v1544 = vld [vmem:[%s7 + $0xe4] sm:$0xf]
  %v1545 = vld [vmem:[%s7 + $0xe8] sm:$0xf]
  %v1546 = vld [vmem:[%s7 + $0xec] sm:$0xf]
  %v1547 = vld [vmem:[%s7 + $0xf0] sm:$0xf]
  %v1548 = vld [vmem:[%s7 + $0xf4] sm:$0xf]
  %v1549 = vld [vmem:[%s7 + $0xf8] sm:$0xf]
  %v1550 = vld [vmem:[%s7 + $0xfc] sm:$0xf]
  %v1551 = vld [vmem:[%s7 + $0x100] sm:$0xf]
  %v1552 = vld [vmem:[%s7 + $0x104] sm:$0xf]
  %v1553 = vld [vmem:[%s7 + $0x108] sm:$0xf]
  %v1554 = vld [vmem:[%s7 + $0x10c] sm:$0xf]
  %v1555 = vld [vmem:[%s7 + $0x110] sm:$0xf]
  %v1556 = vld [vmem:[%s7 + $0x114] sm:$0xf]
  %v1557 = vld [vmem:[%s7 + $0x118] sm:$0xf]
  %v1558 = vld [vmem:[%s7 + $0x11c] sm:$0xf]
  %v1559 = vld [vmem:[%s7 + $0x120] sm:$0xf]
  %v1560 = vld [vmem:[%s7 + $0x124] sm:$0xf]
  %v1561 = vld [vmem:[%s7 + $0x128] sm:$0xf]
  %v1562 = vld [vmem:[%s7 + $0x12c] sm:$0xf]
  %v1563 = vld [vmem:[%s7 + $0x130] sm:$0xf]
  %v1564 = vld [vmem:[%s7 + $0x134] sm:$0xf]
  %v1565 = vld [vmem:[%s7 + $0x138] sm:$0xf]
  %v1566 = vld [vmem:[%s7 + $0x13c] sm:$0xf]
  %v1567 = vld [vmem:[%s7 + $0x140] sm:$0xf]
  %v1568 = vld [vmem:[%s7 + $0x144] sm:$0xf]
  %v1569 = vld [vmem:[%s7 + $0x148] sm:$0xf]
  %v1570 = vld [vmem:[%s7 + $0x14c] sm:$0xf]
  %v1571 = vld [vmem:[%s7 + $0x150] sm:$0xf]
  %v1572 = vld [vmem:[%s7 + $0x154] sm:$0xf]
  %v1573 = vld [vmem:[%s7 + $0x158] sm:$0xf]
  %v1574 = vld [vmem:[%s7 + $0x15c] sm:$0xf]
  %v1575 = vld [vmem:[%s7 + $0x160] sm:$0xf]
  %v1576 = vld [vmem:[%s7 + $0x164] sm:$0xf]
  %v1577 = vld [vmem:[%s7 + $0x168] sm:$0xf]
  %v1578 = vld [vmem:[%s7 + $0x16c] sm:$0xf]
  %v1579 = vld [vmem:[%s7 + $0x170] sm:$0xf]
  %v1580 = vld [vmem:[%s7 + $0x174] sm:$0xf]
  %v1581 = vld [vmem:[%s7 + $0x178] sm:$0xf]
  %v1582 = vld [vmem:[%s7 + $0x17c] sm:$0xf]
  %v1583 = vld [vmem:[%s7 + $0x180] sm:$0xf]
  %v1584 = vld [vmem:[%s7 + $0x184] sm:$0xf]
  %v1585 = vld [vmem:[%s7 + $0x188] sm:$0xf]
  %v1586 = vld [vmem:[%s7 + $0x18c] sm:$0xf]
  %v1587 = vld [vmem:[%s7 + $0x190] sm:$0xf]
  %v1588 = vld [vmem:[%s7 + $0x194] sm:$0xf]
  %v1589 = vld [vmem:[%s7 + $0x198] sm:$0xf]
  %v1590 = vld [vmem:[%s7 + $0x19c] sm:$0xf]
  %v1591 = vld [vmem:[%s7 + $0x1a0] sm:$0xf]
  %v1592 = vld [vmem:[%s7 + $0x1a4] sm:$0xf]
  %v1593 = vld [vmem:[%s7 + $0x1a8] sm:$0xf]
  %v1594 = vld [vmem:[%s7 + $0x1ac] sm:$0xf]
  %v1595 = vld [vmem:[%s7 + $0x1b0] sm:$0xf]
  %v1596 = vld [vmem:[%s7 + $0x1b4] sm:$0xf]
  %v1597 = vld [vmem:[%s7 + $0x1b8] sm:$0x1]
  %v1598 = vld [vmem:[%s8] sm:$0x1]
  %v1600 = vlaneseq
  %v1601 = vshrl.u32 %v1600, 7
  %v1602 = vsub.s32 0, %v1601
  %v1603 = vrot.slane %v1598, %v1602
  %v1609 = vunpack.c.l.b16 %v1483
  %v1610 = vunpack.c.h.b16 %v1483
  %v1611 = vunpack.c.l.b16 %v1484
  %v1612 = vunpack.c.h.b16 %v1484
  %v1613 = vunpack.c.l.b16 %v1485
  %v1614 = vunpack.c.h.b16 %v1485
  %v1615 = vunpack.c.l.b16 %v1486
  %v1616 = vpack.c.b16 %v1609, %v1609
  %v1617 = vpack.c.b16 %v1610, %v1610
  %v1618 = vpack.c.b16 %v1611, %v1611
  %v1619 = vpack.c.b16 %v1612, %v1612
  %v1620 = vpack.c.b16 %v1613, %v1613
  %v1621 = vpack.c.b16 %v1614, %v1614
  %v1622 = vpack.c.b16 %v1615, %v1615
  %v1740 = vunpack.c.l.b16 %v1487
  %v1741 = vunpack.c.l.b16 %v1488
  %v1742 = vunpack.c.l.b16 %v1489
  %v1743 = vunpack.c.l.b16 %v1490
  %v1744 = vunpack.c.l.b16 %v1491
  %v1745 = vunpack.c.l.b16 %v1492
  %v1746 = vunpack.c.l.b16 %v1493
  %v1747 = vunpack.c.l.b16 %v1494
  %v1748 = vunpack.c.l.b16 %v1495
  %v1749 = vunpack.c.l.b16 %v1496
  %v1750 = vunpack.c.l.b16 %v1497
  %v1751 = vunpack.c.l.b16 %v1498
  %v1752 = vunpack.c.l.b16 %v1499
  %v1753 = vunpack.c.l.b16 %v1500
  %v1754 = vunpack.c.l.b16 %v1501
  %v1755 = vunpack.c.l.b16 %v1502
  %v1756 = vunpack.c.l.b16 %v1503
  %v1757 = vunpack.c.l.b16 %v1504
  %v1758 = vunpack.c.l.b16 %v1505
  %v1759 = vunpack.c.l.b16 %v1506
  %v1760 = vunpack.c.l.b16 %v1507
  %v1761 = vunpack.c.l.b16 %v1508
  %v1762 = vunpack.c.l.b16 %v1509
  %v1763 = vunpack.c.l.b16 %v1510
  %v1764 = vunpack.c.l.b16 %v1511
  %v1765 = vunpack.c.l.b16 %v1512
  %v1766 = vunpack.c.l.b16 %v1513
  %v1767 = vunpack.c.l.b16 %v1514
  %v1768 = vunpack.c.l.b16 %v1515
  %v1769 = vunpack.c.l.b16 %v1516
  %v1770 = vunpack.c.l.b16 %v1517
  %v1771 = vunpack.c.l.b16 %v1518
  %v1772 = vunpack.c.l.b16 %v1519
  %v1773 = vunpack.c.l.b16 %v1520
  %v1774 = vunpack.c.l.b16 %v1521
  %v1775 = vunpack.c.l.b16 %v1522
  %v1776 = vunpack.c.l.b16 %v1523
  %v1777 = vunpack.c.l.b16 %v1524
  %v1778 = vunpack.c.l.b16 %v1525
  %v1779 = vunpack.c.l.b16 %v1526
  %v1780 = vunpack.c.l.b16 %v1527
  %v1781 = vunpack.c.l.b16 %v1528
  %v1782 = vunpack.c.l.b16 %v1529
  %v1783 = vunpack.c.l.b16 %v1530
  %v1784 = vunpack.c.l.b16 %v1531
  %v1785 = vunpack.c.l.b16 %v1532
  %v1786 = vunpack.c.l.b16 %v1533
  %v1787 = vunpack.c.l.b16 %v1534
  %v1788 = vunpack.c.l.b16 %v1535
  %v1789 = vunpack.c.l.b16 %v1536
  %v1790 = vunpack.c.l.b16 %v1537
  %v1791 = vunpack.c.l.b16 %v1538
  %v1792 = vunpack.c.l.b16 %v1539
  %v1793 = vunpack.c.l.b16 %v1540
  %v1794 = vunpack.c.l.b16 %v1541
  %v1795 = vunpack.c.l.b16 %v1542
  %v1796 = vunpack.c.l.b16 %v1543
  %v1797 = vunpack.c.l.b16 %v1544
  %v1798 = vunpack.c.l.b16 %v1545
  %v1799 = vunpack.c.l.b16 %v1546
  %v1800 = vunpack.c.l.b16 %v1547
  %v1801 = vunpack.c.l.b16 %v1548
  %v1802 = vunpack.c.l.b16 %v1549
  %v1803 = vunpack.c.l.b16 %v1550
  %v1804 = vunpack.c.l.b16 %v1551
  %v1805 = vunpack.c.l.b16 %v1552
  %v1806 = vunpack.c.l.b16 %v1553
  %v1807 = vunpack.c.l.b16 %v1554
  %v1808 = vunpack.c.l.b16 %v1555
  %v1809 = vunpack.c.l.b16 %v1556
  %v1810 = vunpack.c.l.b16 %v1557
  %v1811 = vunpack.c.l.b16 %v1558
  %v1812 = vunpack.c.l.b16 %v1559
  %v1813 = vunpack.c.l.b16 %v1560
  %v1814 = vunpack.c.l.b16 %v1561
  %v1815 = vunpack.c.l.b16 %v1562
  %v1816 = vunpack.c.l.b16 %v1563
  %v1817 = vunpack.c.l.b16 %v1564
  %v1818 = vunpack.c.l.b16 %v1565
  %v1819 = vunpack.c.l.b16 %v1566
  %v1820 = vunpack.c.l.b16 %v1567
  %v1821 = vunpack.c.l.b16 %v1568
  %v1822 = vunpack.c.l.b16 %v1569
  %v1823 = vunpack.c.l.b16 %v1570
  %v1824 = vunpack.c.l.b16 %v1571
  %v1825 = vunpack.c.l.b16 %v1572
  %v1826 = vunpack.c.l.b16 %v1573
  %v1827 = vunpack.c.l.b16 %v1574
  %v1828 = vunpack.c.l.b16 %v1575
  %v1829 = vunpack.c.l.b16 %v1576
  %v1830 = vunpack.c.l.b16 %v1577
  %v1831 = vunpack.c.l.b16 %v1578
  %v1832 = vunpack.c.l.b16 %v1579
  %v1833 = vunpack.c.l.b16 %v1580
  %v1834 = vunpack.c.l.b16 %v1581
  %v1835 = vunpack.c.l.b16 %v1582
  %v1836 = vunpack.c.l.b16 %v1583
  %v1837 = vunpack.c.l.b16 %v1584
  %v1838 = vunpack.c.l.b16 %v1585
  %v1839 = vunpack.c.l.b16 %v1586
  %v1840 = vunpack.c.l.b16 %v1587
  %v1841 = vunpack.c.l.b16 %v1588
  %v1842 = vunpack.c.l.b16 %v1589
  %v1843 = vunpack.c.l.b16 %v1590
  %v1844 = vunpack.c.l.b16 %v1591
  %v1845 = vunpack.c.l.b16 %v1592
  %v1846 = vunpack.c.l.b16 %v1593
  %v1847 = vunpack.c.l.b16 %v1594
  %v1848 = vunpack.c.l.b16 %v1595
  %v1849 = vunpack.c.l.b16 %v1596
  %v1850 = vunpack.c.l.b16 %v1597
  %v1851 = vpack.c.b16 %v1741, %v1740
  %v1852 = vpack.c.b16 %v1743, %v1742
  %v1853 = vpack.c.b16 %v1745, %v1744
  %v1854 = vpack.c.b16 %v1747, %v1746
  %v1855 = vpack.c.b16 %v1749, %v1748
  %v1856 = vpack.c.b16 %v1751, %v1750
  %v1857 = vpack.c.b16 %v1753, %v1752
  %v1858 = vpack.c.b16 %v1755, %v1754
  %v1859 = vpack.c.b16 %v1757, %v1756
  %v1860 = vpack.c.b16 %v1759, %v1758
  %v1861 = vpack.c.b16 %v1761, %v1760
  %v1862 = vpack.c.b16 %v1763, %v1762
  %v1863 = vpack.c.b16 %v1765, %v1764
  %v1864 = vpack.c.b16 %v1767, %v1766
  %v1865 = vpack.c.b16 %v1769, %v1768
  %v1866 = vpack.c.b16 %v1771, %v1770
  %v1867 = vpack.c.b16 %v1773, %v1772
  %v1868 = vpack.c.b16 %v1775, %v1774
  %v1869 = vpack.c.b16 %v1777, %v1776
  %v1870 = vpack.c.b16 %v1779, %v1778
  %v1871 = vpack.c.b16 %v1781, %v1780
  %v1872 = vpack.c.b16 %v1783, %v1782
  %v1873 = vpack.c.b16 %v1785, %v1784
  %v1874 = vpack.c.b16 %v1787, %v1786
  %v1875 = vpack.c.b16 %v1789, %v1788
  %v1876 = vpack.c.b16 %v1791, %v1790
  %v1877 = vpack.c.b16 %v1793, %v1792
  %v1878 = vpack.c.b16 %v1795, %v1794
  %v1879 = vpack.c.b16 %v1797, %v1796
  %v1880 = vpack.c.b16 %v1799, %v1798
  %v1881 = vpack.c.b16 %v1801, %v1800
  %v1882 = vpack.c.b16 %v1803, %v1802
  %v1883 = vpack.c.b16 %v1805, %v1804
  %v1884 = vpack.c.b16 %v1807, %v1806
  %v1885 = vpack.c.b16 %v1809, %v1808
  %v1886 = vpack.c.b16 %v1811, %v1810
  %v1887 = vpack.c.b16 %v1813, %v1812
  %v1888 = vpack.c.b16 %v1815, %v1814
  %v1889 = vpack.c.b16 %v1817, %v1816
  %v1890 = vpack.c.b16 %v1819, %v1818
  %v1891 = vpack.c.b16 %v1821, %v1820
  %v1892 = vpack.c.b16 %v1823, %v1822
  %v1893 = vpack.c.b16 %v1825, %v1824
  %v1894 = vpack.c.b16 %v1827, %v1826
  %v1895 = vpack.c.b16 %v1829, %v1828
  %v1896 = vpack.c.b16 %v1831, %v1830
  %v1897 = vpack.c.b16 %v1833, %v1832
  %v1898 = vpack.c.b16 %v1835, %v1834
  %v1899 = vpack.c.b16 %v1837, %v1836
  %v1900 = vpack.c.b16 %v1839, %v1838
  %v1901 = vpack.c.b16 %v1841, %v1840
  %v1902 = vpack.c.b16 %v1843, %v1842
  %v1903 = vpack.c.b16 %v1845, %v1844
  %v1904 = vpack.c.b16 %v1847, %v1846
  %v1905 = vpack.c.b16 %v1849, %v1848
  %v1906 = vpack.c.b16 %v1850, %v1850
  %vm1962 = vcmask 924672
  %v1964 = vsel %vm1962, %v1622, 0
  %vm1966 = vcmask 1040384
  %v1967 = vsel 0, 4294967295, 65535
  %v1968 = vsel %vm1966, %v1967, 0
  %v1970 = vand.u32 %v1906, %v1968
  %1972 = vmatprep.subr.bf16.mxu0 0
  %1973 = vmatpush1.bf16.msra.mxu0 %v1858
  %1974 = vmatprep.subr.bf16.mxu0 0
  %1975 = vmatpush1.bf16.msra.mxu0 %v1857
  %1976 = vmatprep.subr.bf16.mxu0 0
  %1977 = vmatpush1.bf16.msra.mxu0 %v1856
  %1978 = vmatprep.subr.bf16.mxu0 0
  %1979 = vmatpush1.bf16.msra.mxu0 %v1855
  %1980 = vmatprep.subr.bf16.mxu0 0
  %1981 = vmatpush1.bf16.msra.mxu0 %v1854
  %1982 = vmatprep.subr.bf16.mxu0 0
  %1983 = vmatpush1.bf16.msra.mxu0 %v1853
  %1984 = vmatprep.subr.bf16.mxu0 0
  %1985 = vmatpush1.bf16.msra.mxu0 %v1852
  %1986 = vmatprep.subr.bf16.mxu0 0
  %1987 = vmatpush1.bf16.msra.mxu0 %v1851
  %1988 = vmatprep.subr.bf16.mxu0 0
  %1989 = vmatpush2.bf16.msra.mxu0 %v1866
  %1990 = vmatprep.subr.bf16.mxu0 0
  %1991 = vmatpush2.bf16.msra.mxu0 %v1865
  %1992 = vmatprep.subr.bf16.mxu0 0
  %1993 = vmatpush2.bf16.msra.mxu0 %v1864
  %1994 = vmatprep.subr.bf16.mxu0 0
  %1995 = vmatpush2.bf16.msra.mxu0 %v1863
  %1996 = vmatprep.subr.bf16.mxu0 0
  %1997 = vmatpush2.bf16.msra.mxu0 %v1862
  %1998 = vmatprep.subr.bf16.mxu0 0
  %1999 = vmatpush2.bf16.msra.mxu0 %v1861
  %2000 = vmatprep.subr.bf16.mxu0 0
  %2001 = vmatpush2.bf16.msra.mxu0 %v1860
  %2002 = vmatprep.subr.bf16.mxu0 0
  %2003 = vmatpush2.bf16.msra.mxu0 %v1859
  %2004 = vmatprep.mubr.bf16.mxu0 %v1617
  %2005 = vmatmul.mubr.bf16.gmra.mxu0 %v1616
  %v2006 = vpop.f32.mrf.mxu0
  %v2007 = vadd.f32 %v1603, %v2006
  %v2008 = vpop.f32.mrf.mxu0
  %v2009 = vpop.f32.mrf.mxu0
  %v2010 = vpop.f32.mrf.mxu0
  %2011 = vdwg.mxu0
  %2012 = vmatprep.subr.bf16.mxu0 0
  %2013 = vmatpush1.bf16.msra.mxu0 %v1874
  %2014 = vmatprep.subr.bf16.mxu0 0
  %2015 = vmatpush1.bf16.msra.mxu0 %v1873
  %2016 = vmatprep.subr.bf16.mxu0 0
  %2017 = vmatpush1.bf16.msra.mxu0 %v1872
  %2018 = vmatprep.subr.bf16.mxu0 0
  %2019 = vmatpush1.bf16.msra.mxu0 %v1871
  %2020 = vmatprep.subr.bf16.mxu0 0
  %2021 = vmatpush1.bf16.msra.mxu0 %v1870
  %2022 = vmatprep.subr.bf16.mxu0 0
  %2023 = vmatpush1.bf16.msra.mxu0 %v1869
  %2024 = vmatprep.subr.bf16.mxu0 0
  %2025 = vmatpush1.bf16.msra.mxu0 %v1868
  %2026 = vmatprep.subr.bf16.mxu0 0
  %2027 = vmatpush1.bf16.msra.mxu0 %v1867
  %2028 = vmatprep.subr.bf16.mxu0 0
  %2029 = vmatpush2.bf16.msra.mxu0 %v1882
  %2030 = vmatprep.subr.bf16.mxu0 0
  %2031 = vmatpush2.bf16.msra.mxu0 %v1881
  %2032 = vmatprep.subr.bf16.mxu0 0
  %2033 = vmatpush2.bf16.msra.mxu0 %v1880
  %2034 = vmatprep.subr.bf16.mxu0 0
  %2035 = vmatpush2.bf16.msra.mxu0 %v1879
  %2036 = vmatprep.subr.bf16.mxu0 0
  %2037 = vmatpush2.bf16.msra.mxu0 %v1878
  %2038 = vmatprep.subr.bf16.mxu0 0
  %2039 = vmatpush2.bf16.msra.mxu0 %v1877
  %2040 = vmatprep.subr.bf16.mxu0 0
  %2041 = vmatpush2.bf16.msra.mxu0 %v1876
  %2042 = vmatprep.subr.bf16.mxu0 0
  %2043 = vmatpush2.bf16.msra.mxu0 %v1875
  %2044 = vmatprep.mubr.bf16.mxu0 %v1619
  %2045 = vmatmul.mubr.bf16.gmra.mxu0 %v1618
  %v2046 = vpop.f32.mrf.mxu0
  %v2047 = vadd.f32 %v2007, %v2046
  %v2048 = vpop.f32.mrf.mxu0
  %v2049 = vpop.f32.mrf.mxu0
  %v2050 = vpop.f32.mrf.mxu0
  %2051 = vdwg.mxu0
  %2052 = vmatprep.subr.bf16.mxu0 0
  %2053 = vmatpush1.bf16.msra.mxu0 %v1890
  %2054 = vmatprep.subr.bf16.mxu0 0
  %2055 = vmatpush1.bf16.msra.mxu0 %v1889
  %2056 = vmatprep.subr.bf16.mxu0 0
  %2057 = vmatpush1.bf16.msra.mxu0 %v1888
  %2058 = vmatprep.subr.bf16.mxu0 0
  %2059 = vmatpush1.bf16.msra.mxu0 %v1887
  %2060 = vmatprep.subr.bf16.mxu0 0
  %2061 = vmatpush1.bf16.msra.mxu0 %v1886
  %2062 = vmatprep.subr.bf16.mxu0 0
  %2063 = vmatpush1.bf16.msra.mxu0 %v1885
  %2064 = vmatprep.subr.bf16.mxu0 0
  %2065 = vmatpush1.bf16.msra.mxu0 %v1884
  %2066 = vmatprep.subr.bf16.mxu0 0
  %2067 = vmatpush1.bf16.msra.mxu0 %v1883
  %2068 = vmatprep.subr.bf16.mxu0 0
  %2069 = vmatpush2.bf16.msra.mxu0 %v1898
  %2070 = vmatprep.subr.bf16.mxu0 0
  %2071 = vmatpush2.bf16.msra.mxu0 %v1897
  %2072 = vmatprep.subr.bf16.mxu0 0
  %2073 = vmatpush2.bf16.msra.mxu0 %v1896
  %2074 = vmatprep.subr.bf16.mxu0 0
  %2075 = vmatpush2.bf16.msra.mxu0 %v1895
  %2076 = vmatprep.subr.bf16.mxu0 0
  %2077 = vmatpush2.bf16.msra.mxu0 %v1894
  %2078 = vmatprep.subr.bf16.mxu0 0
  %2079 = vmatpush2.bf16.msra.mxu0 %v1893
  %2080 = vmatprep.subr.bf16.mxu0 0
  %2081 = vmatpush2.bf16.msra.mxu0 %v1892
  %2082 = vmatprep.subr.bf16.mxu0 0
  %2083 = vmatpush2.bf16.msra.mxu0 %v1891
  %2084 = vmatprep.mubr.bf16.mxu0 %v1621
  %2085 = vmatmul.mubr.bf16.gmra.mxu0 %v1620
  %v2086 = vpop.f32.mrf.mxu0
  %v2087 = vadd.f32 %v2047, %v2086
  %v2088 = vpop.f32.mrf.mxu0
  %v2089 = vpop.f32.mrf.mxu0
  %v2090 = vpop.f32.mrf.mxu0
  %2091 = vdwg.mxu0
  %2092 = vmatprep.subr.bf16.mxu0 0
  %2093 = vmatpush1.bf16.msra.mxu0 %v1970
  %2094 = vmatprep.subr.bf16.mxu0 0
  %2095 = vmatpush1.bf16.msra.mxu0 %v1905
  %2096 = vmatprep.subr.bf16.mxu0 0
  %2097 = vmatpush1.bf16.msra.mxu0 %v1904
  %2098 = vmatprep.subr.bf16.mxu0 0
  %2099 = vmatpush1.bf16.msra.mxu0 %v1903
  %2100 = vmatprep.subr.bf16.mxu0 0
  %2101 = vmatpush1.bf16.msra.mxu0 %v1902
  %2102 = vmatprep.subr.bf16.mxu0 0
  %2103 = vmatpush1.bf16.msra.mxu0 %v1901
  %2104 = vmatprep.subr.bf16.mxu0 0
  %2105 = vmatpush1.bf16.msra.mxu0 %v1900
  %2106 = vmatprep.subr.bf16.mxu0 0
  %2107 = vmatpush1.bf16.msra.mxu0 %v1899
  %2108 = vmatprep.subr.bf16.mxu0 0
  %2109 = vmatpush2.bf16.msra.mxu0 0
  %2110 = vmatprep.subr.bf16.mxu0 0
  %2111 = vmatpush2.bf16.msra.mxu0 0
  %2112 = vmatprep.subr.bf16.mxu0 0
  %2113 = vmatpush2.bf16.msra.mxu0 0
  %2114 = vmatprep.subr.bf16.mxu0 0
  %2115 = vmatpush2.bf16.msra.mxu0 0
  %2116 = vmatprep.subr.bf16.mxu0 0
  %2117 = vmatpush2.bf16.msra.mxu0 0
  %2118 = vmatprep.subr.bf16.mxu0 0
  %2119 = vmatpush2.bf16.msra.mxu0 0
  %2120 = vmatprep.subr.bf16.mxu0 0
  %2121 = vmatpush2.bf16.msra.mxu0 0
  %2122 = vmatprep.subr.bf16.mxu0 0
  %2123 = vmatpush2.bf16.msra.mxu0 0
  %2124 = vmatprep.mubr.bf16.mxu0 0
  %2125 = vmatmul.mubr.bf16.gmra.mxu0 %v1964
  %v2126 = vpop.f32.mrf.mxu0
  %v2127 = vadd.f32 %v2087, %v2126
  %v2128 = vpop.f32.mrf.mxu0
  %v2129 = vpop.f32.mrf.mxu0
  %v2130 = vpop.f32.mrf.mxu0
  %2131 = vdwg.mxu0
  %v2132 = vmax.f32 %v2127, 0.0
  %2134 = vrot.lane.b32.xlu0 %v2132, 64
  %v2135 = vpop.permute.xlu0 %2134
  %vm2137 = vcmask 785920
  %2138 = vst.msk [vmem:[%s15] sm:$0xff] %vm2137, %v2135
  %v2139 = vld [vmem:[%s9] sm:$0xff]
  %v2140 = vld [vmem:[%s10] sm:$0xf]
  %v2141 = vld [vmem:[%s10 + $0x4] sm:$0xf]
  %v2142 = vld [vmem:[%s10 + $0x8] sm:$0xf]
  %v2143 = vld [vmem:[%s10 + $0xc] sm:$0xf]
  %v2144 = vld [vmem:[%s10 + $0x10] sm:$0xf]
  %v2145 = vld [vmem:[%s10 + $0x14] sm:$0xf]
  %v2146 = vld [vmem:[%s10 + $0x18] sm:$0xf]
  %v2147 = vld [vmem:[%s10 + $0x1c] sm:$0xf]
  %v2148 = vld [vmem:[%s10 + $0x20] sm:$0xf]
  %v2149 = vld [vmem:[%s10 + $0x24] sm:$0xf]
  %v2150 = vld [vmem:[%s10 + $0x28] sm:$0xf]
  %v2151 = vld [vmem:[%s10 + $0x2c] sm:$0xf]
  %v2152 = vld [vmem:[%s10 + $0x30] sm:$0xf]
  %v2153 = vld [vmem:[%s10 + $0x34] sm:$0xf]
  %v2154 = vld [vmem:[%s10 + $0x38] sm:$0xf]
  %v2155 = vld [vmem:[%s10 + $0x3c] sm:$0xf]
  %v2156 = vld [vmem:[%s10 + $0x40] sm:$0xf]
  %v2157 = vld [vmem:[%s10 + $0x44] sm:$0xf]
  %v2158 = vld [vmem:[%s10 + $0x48] sm:$0xf]
  %v2159 = vld [vmem:[%s10 + $0x4c] sm:$0xf]
  %v2160 = vld [vmem:[%s10 + $0x50] sm:$0x7]
  %v2161 = vld [vmem:[%s11] sm:$0x1]
  %v2163 = vlaneseq
  %v2164 = vshrl.u32 %v2163, 7
  %v2165 = vsub.s32 0, %v2164
  %v2166 = vrot.slane %v2161, %v2165
  %v2169 = vunpack.c.l.b16 %v2139
  %v2170 = vunpack.c.h.b16 %v2139
  %v2171 = vpack.c.b16 %v2169, %v2169
  %v2172 = vpack.c.b16 %v2170, %v2170
  %v2195 = vunpack.c.l.b16 %v2140
  %v2196 = vunpack.c.l.b16 %v2141
  %v2197 = vunpack.c.l.b16 %v2142
  %v2198 = vunpack.c.l.b16 %v2143
  %v2199 = vunpack.c.l.b16 %v2144
  %v2200 = vunpack.c.l.b16 %v2145
  %v2201 = vunpack.c.l.b16 %v2146
  %v2202 = vunpack.c.l.b16 %v2147
  %v2203 = vunpack.c.l.b16 %v2148
  %v2204 = vunpack.c.l.b16 %v2149
  %v2205 = vunpack.c.l.b16 %v2150
  %v2206 = vunpack.c.l.b16 %v2151
  %v2207 = vunpack.c.l.b16 %v2152
  %v2208 = vunpack.c.l.b16 %v2153
  %v2209 = vunpack.c.l.b16 %v2154
  %v2210 = vunpack.c.l.b16 %v2155
  %v2211 = vunpack.c.l.b16 %v2156
  %v2212 = vunpack.c.l.b16 %v2157
  %v2213 = vunpack.c.l.b16 %v2158
  %v2214 = vunpack.c.l.b16 %v2159
  %v2215 = vunpack.c.l.b16 %v2160
  %v2216 = vpack.c.b16 %v2196, %v2195
  %v2217 = vpack.c.b16 %v2198, %v2197
  %v2218 = vpack.c.b16 %v2200, %v2199
  %v2219 = vpack.c.b16 %v2202, %v2201
  %v2220 = vpack.c.b16 %v2204, %v2203
  %v2221 = vpack.c.b16 %v2206, %v2205
  %v2222 = vpack.c.b16 %v2208, %v2207
  %v2223 = vpack.c.b16 %v2210, %v2209
  %v2224 = vpack.c.b16 %v2212, %v2211
  %v2225 = vpack.c.b16 %v2214, %v2213
  %v2226 = vpack.c.b16 %v2215, %v2215
  %vm2237 = vcmask 310272
  %v2239 = vsel %vm2237, %v2172, 0
  %vm2241 = vcmask 1042432
  %v2243 = vsel %vm2241, %v2226, 0
  %2245 = vmatprep.subr.bf16.mxu0 0
  %2246 = vmatpush1.bf16.msra.mxu0 %v2223
  %2247 = vmatprep.subr.bf16.mxu0 0
  %2248 = vmatpush1.bf16.msra.mxu0 %v2222
  %2249 = vmatprep.subr.bf16.mxu0 0
  %2250 = vmatpush1.bf16.msra.mxu0 %v2221
  %2251 = vmatprep.subr.bf16.mxu0 0
  %2252 = vmatpush1.bf16.msra.mxu0 %v2220
  %2253 = vmatprep.subr.bf16.mxu0 0
  %2254 = vmatpush1.bf16.msra.mxu0 %v2219
  %2255 = vmatprep.subr.bf16.mxu0 0
  %2256 = vmatpush1.bf16.msra.mxu0 %v2218
  %2257 = vmatprep.subr.bf16.mxu0 0
  %2258 = vmatpush1.bf16.msra.mxu0 %v2217
  %2259 = vmatprep.subr.bf16.mxu0 0
  %2260 = vmatpush1.bf16.msra.mxu0 %v2216
  %2261 = vmatprep.subr.bf16.mxu0 0
  %2262 = vmatpush2.bf16.msra.mxu0 0
  %2263 = vmatprep.subr.bf16.mxu0 0
  %2264 = vmatpush2.bf16.msra.mxu0 0
  %2265 = vmatprep.subr.bf16.mxu0 0
  %2266 = vmatpush2.bf16.msra.mxu0 0
  %2267 = vmatprep.subr.bf16.mxu0 0
  %2268 = vmatpush2.bf16.msra.mxu0 0
  %2269 = vmatprep.subr.bf16.mxu0 0
  %2270 = vmatpush2.bf16.msra.mxu0 0
  %2271 = vmatprep.subr.bf16.mxu0 0
  %2272 = vmatpush2.bf16.msra.mxu0 %v2243
  %2273 = vmatprep.subr.bf16.mxu0 0
  %2274 = vmatpush2.bf16.msra.mxu0 %v2225
  %2275 = vmatprep.subr.bf16.mxu0 0
  %2276 = vmatpush2.bf16.msra.mxu0 %v2224
  %2277 = vmatprep.mubr.bf16.mxu0 %v2239
  %2278 = vmatmul.mubr.bf16.gmra.mxu0 %v2171
  %v2279 = vpop.f32.mrf.mxu0
  %v2280 = vadd.f32 %v2166, %v2279
  %v2281 = vpop.f32.mrf.mxu0
  %v2282 = vpop.f32.mrf.mxu0
  %v2283 = vpop.f32.mrf.mxu0
  %2284 = vdwg.mxu0
  %v2285 = vmax.f32 %v2280, 0.0
  %2287 = vrot.lane.b32.xlu0 %v2285, 96
  %v2288 = vpop.permute.xlu0 %2287
  %vm2290 = vcmask 1048320
  %2291 = vst.msk [vmem:[%s15] sm:$0xff] %vm2290, %v2288
  %v2292 = vld [vmem:[%s12] sm:$0xff]
  %v2293 = vld [vmem:[%s12 + $0x8] sm:$0xff]
  %v2294 = vld [vmem:[%s12 + $0x10] sm:$0xff]
  %v2295 = vld [vmem:[%s12 + $0x18] sm:$0xff]
  %v2296 = vld [vmem:[%s12 + $0x20] sm:$0xff]
  %v2297 = vld [vmem:[%s12 + $0x28] sm:$0xff]
  %v2298 = vld [vmem:[%s12 + $0x30] sm:$0xff]
  %v2299 = vld [vmem:[%s12 + $0x38] sm:$0xff]
  %v2300 = vld [vmem:[%s13] sm:$0xf]
  %v2301 = vld [vmem:[%s13 + $0x4] sm:$0xf]
  %v2302 = vld [vmem:[%s13 + $0x8] sm:$0xf]
  %v2303 = vld [vmem:[%s13 + $0xc] sm:$0xf]
  %v2304 = vld [vmem:[%s13 + $0x10] sm:$0xf]
  %v2305 = vld [vmem:[%s13 + $0x14] sm:$0xf]
  %v2306 = vld [vmem:[%s13 + $0x18] sm:$0xf]
  %v2307 = vld [vmem:[%s13 + $0x1c] sm:$0xf]
  %v2308 = vld [vmem:[%s13 + $0x20] sm:$0xf]
  %v2309 = vld [vmem:[%s13 + $0x24] sm:$0xf]
  %v2310 = vld [vmem:[%s13 + $0x28] sm:$0xf]
  %v2311 = vld [vmem:[%s13 + $0x2c] sm:$0xf]
  %v2312 = vld [vmem:[%s13 + $0x30] sm:$0xf]
  %v2313 = vld [vmem:[%s13 + $0x34] sm:$0xf]
  %v2314 = vld [vmem:[%s13 + $0x38] sm:$0xf]
  %v2315 = vld [vmem:[%s13 + $0x3c] sm:$0xf]
  %v2316 = vld [vmem:[%s13 + $0x40] sm:$0xf]
  %v2317 = vld [vmem:[%s13 + $0x44] sm:$0xf]
  %v2318 = vld [vmem:[%s13 + $0x48] sm:$0xf]
  %v2319 = vld [vmem:[%s13 + $0x4c] sm:$0xf]
  %v2320 = vld [vmem:[%s13 + $0x50] sm:$0xf]
  %v2321 = vld [vmem:[%s13 + $0x54] sm:$0xf]
  %v2322 = vld [vmem:[%s13 + $0x58] sm:$0xf]
  %v2323 = vld [vmem:[%s13 + $0x5c] sm:$0xf]
  %v2324 = vld [vmem:[%s13 + $0x60] sm:$0xf]
  %v2325 = vld [vmem:[%s13 + $0x64] sm:$0xf]
  %v2326 = vld [vmem:[%s13 + $0x68] sm:$0xf]
  %v2327 = vld [vmem:[%s13 + $0x6c] sm:$0xf]
  %v2328 = vld [vmem:[%s13 + $0x70] sm:$0xf]
  %v2329 = vld [vmem:[%s13 + $0x74] sm:$0xf]
  %v2330 = vld [vmem:[%s13 + $0x78] sm:$0xf]
  %v2331 = vld [vmem:[%s13 + $0x7c] sm:$0xf]
  %v2332 = vld [vmem:[%s13 + $0x80] sm:$0xf]
  %v2333 = vld [vmem:[%s13 + $0x84] sm:$0xf]
  %v2334 = vld [vmem:[%s13 + $0x88] sm:$0xf]
  %v2335 = vld [vmem:[%s13 + $0x8c] sm:$0xf]
  %v2336 = vld [vmem:[%s13 + $0x90] sm:$0xf]
  %v2337 = vld [vmem:[%s13 + $0x94] sm:$0xf]
  %v2338 = vld [vmem:[%s13 + $0x98] sm:$0xf]
  %v2339 = vld [vmem:[%s13 + $0x9c] sm:$0xf]
  %v2340 = vld [vmem:[%s13 + $0xa0] sm:$0xf]
  %v2341 = vld [vmem:[%s13 + $0xa4] sm:$0xf]
  %v2342 = vld [vmem:[%s13 + $0xa8] sm:$0xf]
  %v2343 = vld [vmem:[%s13 + $0xac] sm:$0xf]
  %v2344 = vld [vmem:[%s13 + $0xb0] sm:$0xf]
  %v2345 = vld [vmem:[%s13 + $0xb4] sm:$0xf]
  %v2346 = vld [vmem:[%s13 + $0xb8] sm:$0xf]
  %v2347 = vld [vmem:[%s13 + $0xbc] sm:$0xf]
  %v2348 = vld [vmem:[%s13 + $0xc0] sm:$0xf]
  %v2349 = vld [vmem:[%s13 + $0xc4] sm:$0xf]
  %v2350 = vld [vmem:[%s13 + $0xc8] sm:$0xf]
  %v2351 = vld [vmem:[%s13 + $0xcc] sm:$0xf]
  %v2352 = vld [vmem:[%s13 + $0xd0] sm:$0xf]
  %v2353 = vld [vmem:[%s13 + $0xd4] sm:$0xf]
  %v2354 = vld [vmem:[%s13 + $0xd8] sm:$0xf]
  %v2355 = vld [vmem:[%s13 + $0xdc] sm:$0xf]
  %v2356 = vld [vmem:[%s13 + $0xe0] sm:$0xf]
  %v2357 = vld [vmem:[%s13 + $0xe4] sm:$0xf]
  %v2358 = vld [vmem:[%s13 + $0xe8] sm:$0xf]
  %v2359 = vld [vmem:[%s13 + $0xec] sm:$0xf]
  %v2360 = vld [vmem:[%s13 + $0xf0] sm:$0xf]
  %v2361 = vld [vmem:[%s13 + $0xf4] sm:$0xf]
  %v2362 = vld [vmem:[%s13 + $0xf8] sm:$0xf]
  %v2363 = vld [vmem:[%s13 + $0xfc] sm:$0xf]
  %v2364 = vld [vmem:[%s13 + $0x100] sm:$0xf]
  %v2365 = vld [vmem:[%s13 + $0x104] sm:$0xf]
  %v2366 = vld [vmem:[%s13 + $0x108] sm:$0xf]
  %v2367 = vld [vmem:[%s13 + $0x10c] sm:$0xf]
  %v2368 = vld [vmem:[%s13 + $0x110] sm:$0xf]
  %v2369 = vld [vmem:[%s13 + $0x114] sm:$0xf]
  %v2370 = vld [vmem:[%s13 + $0x118] sm:$0xf]
  %v2371 = vld [vmem:[%s13 + $0x11c] sm:$0xf]
  %v2372 = vld [vmem:[%s13 + $0x120] sm:$0xf]
  %v2373 = vld [vmem:[%s13 + $0x124] sm:$0xf]
  %v2374 = vld [vmem:[%s13 + $0x128] sm:$0xf]
  %v2375 = vld [vmem:[%s13 + $0x12c] sm:$0xf]
  %v2376 = vld [vmem:[%s13 + $0x130] sm:$0xf]
  %v2377 = vld [vmem:[%s13 + $0x134] sm:$0xf]
  %v2378 = vld [vmem:[%s13 + $0x138] sm:$0xf]
  %v2379 = vld [vmem:[%s13 + $0x13c] sm:$0xf]
  %v2380 = vld [vmem:[%s13 + $0x140] sm:$0xf]
  %v2381 = vld [vmem:[%s13 + $0x144] sm:$0xf]
  %v2382 = vld [vmem:[%s13 + $0x148] sm:$0xf]
  %v2383 = vld [vmem:[%s13 + $0x14c] sm:$0xf]
  %v2384 = vld [vmem:[%s13 + $0x150] sm:$0xf]
  %v2385 = vld [vmem:[%s13 + $0x154] sm:$0xf]
  %v2386 = vld [vmem:[%s13 + $0x158] sm:$0xf]
  %v2387 = vld [vmem:[%s13 + $0x15c] sm:$0xf]
  %v2388 = vld [vmem:[%s13 + $0x160] sm:$0xf]
  %v2389 = vld [vmem:[%s13 + $0x164] sm:$0xf]
  %v2390 = vld [vmem:[%s13 + $0x168] sm:$0xf]
  %v2391 = vld [vmem:[%s13 + $0x16c] sm:$0xf]
  %v2392 = vld [vmem:[%s13 + $0x170] sm:$0xf]
  %v2393 = vld [vmem:[%s13 + $0x174] sm:$0xf]
  %v2394 = vld [vmem:[%s13 + $0x178] sm:$0xf]
  %v2395 = vld [vmem:[%s13 + $0x17c] sm:$0xf]
  %v2396 = vld [vmem:[%s13 + $0x180] sm:$0xf]
  %v2397 = vld [vmem:[%s13 + $0x184] sm:$0xf]
  %v2398 = vld [vmem:[%s13 + $0x188] sm:$0xf]
  %v2399 = vld [vmem:[%s13 + $0x18c] sm:$0xf]
  %v2400 = vld [vmem:[%s13 + $0x190] sm:$0xf]
  %v2401 = vld [vmem:[%s13 + $0x194] sm:$0xf]
  %v2402 = vld [vmem:[%s13 + $0x198] sm:$0xf]
  %v2403 = vld [vmem:[%s13 + $0x19c] sm:$0xf]
  %v2404 = vld [vmem:[%s13 + $0x1a0] sm:$0xf]
  %v2405 = vld [vmem:[%s13 + $0x1a4] sm:$0xf]
  %v2406 = vld [vmem:[%s13 + $0x1a8] sm:$0xf]
  %v2407 = vld [vmem:[%s13 + $0x1ac] sm:$0xf]
  %v2408 = vld [vmem:[%s13 + $0x1b0] sm:$0xf]
  %v2409 = vld [vmem:[%s13 + $0x1b4] sm:$0xf]
  %v2410 = vld [vmem:[%s13 + $0x1b8] sm:$0xf]
  %v2411 = vld [vmem:[%s13 + $0x1bc] sm:$0xf]
  %v2412 = vld [vmem:[%s13 + $0x1c0] sm:$0xf]
  %v2413 = vld [vmem:[%s13 + $0x1c4] sm:$0xf]
  %v2414 = vld [vmem:[%s13 + $0x1c8] sm:$0xf]
  %v2415 = vld [vmem:[%s13 + $0x1cc] sm:$0xf]
  %v2416 = vld [vmem:[%s13 + $0x1d0] sm:$0xf]
  %v2417 = vld [vmem:[%s13 + $0x1d4] sm:$0xf]
  %v2418 = vld [vmem:[%s13 + $0x1d8] sm:$0xf]
  %v2419 = vld [vmem:[%s13 + $0x1dc] sm:$0xf]
  %v2420 = vld [vmem:[%s13 + $0x1e0] sm:$0xf]
  %v2421 = vld [vmem:[%s13 + $0x1e4] sm:$0xf]
  %v2422 = vld [vmem:[%s13 + $0x1e8] sm:$0xf]
  %v2423 = vld [vmem:[%s13 + $0x1ec] sm:$0xf]
  %v2424 = vld [vmem:[%s13 + $0x1f0] sm:$0xf]
  %v2425 = vld [vmem:[%s13 + $0x1f4] sm:$0xf]
  %v2426 = vld [vmem:[%s13 + $0x1f8] sm:$0xf]
  %v2427 = vld [vmem:[%s13 + $0x1fc] sm:$0xf]
  %v2428 = vld [vmem:[%s13 + $0x200] sm:$0xf]
  %v2429 = vld [vmem:[%s13 + $0x204] sm:$0xf]
  %v2430 = vld [vmem:[%s13 + $0x208] sm:$0xf]
  %v2431 = vld [vmem:[%s13 + $0x20c] sm:$0xf]
  %v2432 = vld [vmem:[%s13 + $0x210] sm:$0xf]
  %v2433 = vld [vmem:[%s13 + $0x214] sm:$0xf]
  %v2434 = vld [vmem:[%s13 + $0x218] sm:$0xf]
  %v2435 = vld [vmem:[%s13 + $0x21c] sm:$0xf]
  %v2436 = vld [vmem:[%s13 + $0x220] sm:$0xf]
  %v2437 = vld [vmem:[%s13 + $0x224] sm:$0xf]
  %v2438 = vld [vmem:[%s13 + $0x228] sm:$0xf]
  %v2439 = vld [vmem:[%s13 + $0x22c] sm:$0xf]
  %v2440 = vld [vmem:[%s13 + $0x230] sm:$0xf]
  %v2441 = vld [vmem:[%s13 + $0x234] sm:$0xf]
  %v2442 = vld [vmem:[%s13 + $0x238] sm:$0xf]
  %v2443 = vld [vmem:[%s13 + $0x23c] sm:$0xf]
  %v2444 = vld [vmem:[%s13 + $0x240] sm:$0xf]
  %v2445 = vld [vmem:[%s13 + $0x244] sm:$0xf]
  %v2446 = vld [vmem:[%s13 + $0x248] sm:$0xf]
  %v2447 = vld [vmem:[%s13 + $0x24c] sm:$0xf]
  %v2448 = vld [vmem:[%s13 + $0x250] sm:$0xf]
  %v2449 = vld [vmem:[%s13 + $0x254] sm:$0xf]
  %v2450 = vld [vmem:[%s13 + $0x258] sm:$0xf]
  %v2451 = vld [vmem:[%s13 + $0x25c] sm:$0xf]
  %v2452 = vld [vmem:[%s13 + $0x260] sm:$0xf]
  %v2453 = vld [vmem:[%s13 + $0x264] sm:$0xf]
  %v2454 = vld [vmem:[%s13 + $0x268] sm:$0xf]
  %v2455 = vld [vmem:[%s13 + $0x26c] sm:$0xf]
  %v2456 = vld [vmem:[%s13 + $0x270] sm:$0xf]
  %v2457 = vld [vmem:[%s13 + $0x274] sm:$0xf]
  %v2458 = vld [vmem:[%s13 + $0x278] sm:$0xf]
  %v2459 = vld [vmem:[%s13 + $0x27c] sm:$0xf]
  %v2460 = vld [vmem:[%s13 + $0x280] sm:$0xf]
  %v2461 = vld [vmem:[%s13 + $0x284] sm:$0xf]
  %v2462 = vld [vmem:[%s13 + $0x288] sm:$0xf]
  %v2463 = vld [vmem:[%s13 + $0x28c] sm:$0xf]
  %v2464 = vld [vmem:[%s13 + $0x290] sm:$0xf]
  %v2465 = vld [vmem:[%s13 + $0x294] sm:$0xf]
  %v2466 = vld [vmem:[%s13 + $0x298] sm:$0xf]
  %v2467 = vld [vmem:[%s13 + $0x29c] sm:$0xf]
  %v2468 = vld [vmem:[%s13 + $0x2a0] sm:$0xf]
  %v2469 = vld [vmem:[%s13 + $0x2a4] sm:$0xf]
  %v2470 = vld [vmem:[%s13 + $0x2a8] sm:$0xf]
  %v2471 = vld [vmem:[%s13 + $0x2ac] sm:$0xf]
  %v2472 = vld [vmem:[%s13 + $0x2b0] sm:$0xf]
  %v2473 = vld [vmem:[%s13 + $0x2b4] sm:$0xf]
  %v2474 = vld [vmem:[%s13 + $0x2b8] sm:$0xf]
  %v2475 = vld [vmem:[%s13 + $0x2bc] sm:$0xf]
  %v2476 = vld [vmem:[%s13 + $0x2c0] sm:$0xf]
  %v2477 = vld [vmem:[%s13 + $0x2c4] sm:$0xf]
  %v2478 = vld [vmem:[%s13 + $0x2c8] sm:$0xf]
  %v2479 = vld [vmem:[%s13 + $0x2cc] sm:$0xf]
  %v2480 = vld [vmem:[%s13 + $0x2d0] sm:$0xf]
  %v2481 = vld [vmem:[%s13 + $0x2d4] sm:$0xf]
  %v2482 = vld [vmem:[%s13 + $0x2d8] sm:$0xf]
  %v2483 = vld [vmem:[%s13 + $0x2dc] sm:$0xf]
  %v2484 = vld [vmem:[%s13 + $0x2e0] sm:$0xf]
  %v2485 = vld [vmem:[%s13 + $0x2e4] sm:$0xf]
  %v2486 = vld [vmem:[%s13 + $0x2e8] sm:$0xf]
  %v2487 = vld [vmem:[%s13 + $0x2ec] sm:$0xf]
  %v2488 = vld [vmem:[%s13 + $0x2f0] sm:$0xf]
  %v2489 = vld [vmem:[%s13 + $0x2f4] sm:$0xf]
  %v2490 = vld [vmem:[%s13 + $0x2f8] sm:$0xf]
  %v2491 = vld [vmem:[%s13 + $0x2fc] sm:$0xf]
  %v2492 = vld [vmem:[%s13 + $0x300] sm:$0xf]
  %v2493 = vld [vmem:[%s13 + $0x304] sm:$0xf]
  %v2494 = vld [vmem:[%s13 + $0x308] sm:$0xf]
  %v2495 = vld [vmem:[%s13 + $0x30c] sm:$0xf]
  %v2496 = vld [vmem:[%s13 + $0x310] sm:$0xf]
  %v2497 = vld [vmem:[%s13 + $0x314] sm:$0xf]
  %v2498 = vld [vmem:[%s13 + $0x318] sm:$0xf]
  %v2499 = vld [vmem:[%s13 + $0x31c] sm:$0xf]
  %v2500 = vld [vmem:[%s13 + $0x320] sm:$0xf]
  %v2501 = vld [vmem:[%s13 + $0x324] sm:$0xf]
  %v2502 = vld [vmem:[%s13 + $0x328] sm:$0xf]
  %v2503 = vld [vmem:[%s13 + $0x32c] sm:$0xf]
  %v2504 = vld [vmem:[%s13 + $0x330] sm:$0xf]
  %v2505 = vld [vmem:[%s13 + $0x334] sm:$0xf]
  %v2506 = vld [vmem:[%s13 + $0x338] sm:$0xf]
  %v2507 = vld [vmem:[%s13 + $0x33c] sm:$0xf]
  %v2508 = vld [vmem:[%s13 + $0x340] sm:$0xf]
  %v2509 = vld [vmem:[%s13 + $0x344] sm:$0xf]
  %v2510 = vld [vmem:[%s13 + $0x348] sm:$0xf]
  %v2511 = vld [vmem:[%s13 + $0x34c] sm:$0xf]
  %v2512 = vld [vmem:[%s13 + $0x350] sm:$0xf]
  %v2513 = vld [vmem:[%s13 + $0x354] sm:$0xf]
  %v2514 = vld [vmem:[%s13 + $0x358] sm:$0xf]
  %v2515 = vld [vmem:[%s13 + $0x35c] sm:$0xf]
  %v2516 = vld [vmem:[%s13 + $0x360] sm:$0xf]
  %v2517 = vld [vmem:[%s13 + $0x364] sm:$0xf]
  %v2518 = vld [vmem:[%s13 + $0x368] sm:$0xf]
  %v2519 = vld [vmem:[%s13 + $0x36c] sm:$0xf]
  %v2520 = vld [vmem:[%s13 + $0x370] sm:$0xf]
  %v2521 = vld [vmem:[%s13 + $0x374] sm:$0xf]
  %v2522 = vld [vmem:[%s13 + $0x378] sm:$0xf]
  %v2523 = vld [vmem:[%s13 + $0x37c] sm:$0xf]
  %v2524 = vld [vmem:[%s13 + $0x380] sm:$0xf]
  %v2525 = vld [vmem:[%s13 + $0x384] sm:$0xf]
  %v2526 = vld [vmem:[%s13 + $0x388] sm:$0xf]
  %v2527 = vld [vmem:[%s13 + $0x38c] sm:$0xf]
  %v2528 = vld [vmem:[%s13 + $0x390] sm:$0xf]
  %v2529 = vld [vmem:[%s13 + $0x394] sm:$0xf]
  %v2530 = vld [vmem:[%s13 + $0x398] sm:$0xf]
  %v2531 = vld [vmem:[%s13 + $0x39c] sm:$0xf]
  %v2532 = vld [vmem:[%s13 + $0x3a0] sm:$0xf]
  %v2533 = vld [vmem:[%s13 + $0x3a4] sm:$0xf]
  %v2534 = vld [vmem:[%s13 + $0x3a8] sm:$0xf]
  %v2535 = vld [vmem:[%s13 + $0x3ac] sm:$0xf]
  %v2536 = vld [vmem:[%s13 + $0x3b0] sm:$0xf]
  %v2537 = vld [vmem:[%s13 + $0x3b4] sm:$0xf]
  %v2538 = vld [vmem:[%s13 + $0x3b8] sm:$0xf]
  %v2539 = vld [vmem:[%s13 + $0x3bc] sm:$0xf]
  %v2540 = vld [vmem:[%s13 + $0x3c0] sm:$0xf]
  %v2541 = vld [vmem:[%s13 + $0x3c4] sm:$0xf]
  %v2542 = vld [vmem:[%s13 + $0x3c8] sm:$0xf]
  %v2543 = vld [vmem:[%s13 + $0x3cc] sm:$0xf]
  %v2544 = vld [vmem:[%s13 + $0x3d0] sm:$0xf]
  %v2545 = vld [vmem:[%s13 + $0x3d4] sm:$0xf]
  %v2546 = vld [vmem:[%s13 + $0x3d8] sm:$0xf]
  %v2547 = vld [vmem:[%s13 + $0x3dc] sm:$0xf]
  %v2548 = vld [vmem:[%s13 + $0x3e0] sm:$0xf]
  %v2549 = vld [vmem:[%s13 + $0x3e4] sm:$0xf]
  %v2550 = vld [vmem:[%s13 + $0x3e8] sm:$0xf]
  %v2551 = vld [vmem:[%s13 + $0x3ec] sm:$0xf]
  %v2552 = vld [vmem:[%s13 + $0x3f0] sm:$0xf]
  %v2553 = vld [vmem:[%s13 + $0x3f4] sm:$0xf]
  %v2554 = vld [vmem:[%s13 + $0x3f8] sm:$0xf]
  %v2555 = vld [vmem:[%s13 + $0x3fc] sm:$0xf]
  %v2556 = vld [vmem:[%s14] sm:$0x1]
  %v2558 = vlaneseq
  %v2559 = vshrl.u32 %v2558, 7
  %v2560 = vsub.s32 0, %v2559
  %v2561 = vrot.slane %v2556, %v2560
  %v2571 = vunpack.c.l.b16 %v2292
  %v2572 = vunpack.c.h.b16 %v2292
  %v2573 = vunpack.c.l.b16 %v2293
  %v2574 = vunpack.c.h.b16 %v2293
  %v2575 = vunpack.c.l.b16 %v2294
  %v2576 = vunpack.c.h.b16 %v2294
  %v2577 = vunpack.c.l.b16 %v2295
  %v2578 = vunpack.c.h.b16 %v2295
  %v2579 = vunpack.c.l.b16 %v2296
  %v2580 = vunpack.c.h.b16 %v2296
  %v2581 = vunpack.c.l.b16 %v2297
  %v2582 = vunpack.c.h.b16 %v2297
  %v2583 = vunpack.c.l.b16 %v2298
  %v2584 = vunpack.c.h.b16 %v2298
  %v2585 = vunpack.c.l.b16 %v2299
  %v2586 = vunpack.c.h.b16 %v2299
  %v2587 = vpack.c.b16 %v2571, %v2571
  %v2588 = vpack.c.b16 %v2572, %v2572
  %v2589 = vpack.c.b16 %v2573, %v2573
  %v2590 = vpack.c.b16 %v2574, %v2574
  %v2591 = vpack.c.b16 %v2575, %v2575
  %v2592 = vpack.c.b16 %v2576, %v2576
  %v2593 = vpack.c.b16 %v2577, %v2577
  %v2594 = vpack.c.b16 %v2578, %v2578
  %v2595 = vpack.c.b16 %v2579, %v2579
  %v2596 = vpack.c.b16 %v2580, %v2580
  %v2597 = vpack.c.b16 %v2581, %v2581
  %v2598 = vpack.c.b16 %v2582, %v2582
  %v2599 = vpack.c.b16 %v2583, %v2583
  %v2600 = vpack.c.b16 %v2584, %v2584
  %v2601 = vpack.c.b16 %v2585, %v2585
  %v2602 = vpack.c.b16 %v2586, %v2586
  %v2875 = vunpack.c.l.b16 %v2300
  %v2876 = vunpack.c.l.b16 %v2301
  %v2877 = vunpack.c.l.b16 %v2302
  %v2878 = vunpack.c.l.b16 %v2303
  %v2879 = vunpack.c.l.b16 %v2304
  %v2880 = vunpack.c.l.b16 %v2305
  %v2881 = vunpack.c.l.b16 %v2306
  %v2882 = vunpack.c.l.b16 %v2307
  %v2883 = vunpack.c.l.b16 %v2308
  %v2884 = vunpack.c.l.b16 %v2309
  %v2885 = vunpack.c.l.b16 %v2310
  %v2886 = vunpack.c.l.b16 %v2311
  %v2887 = vunpack.c.l.b16 %v2312
  %v2888 = vunpack.c.l.b16 %v2313
  %v2889 = vunpack.c.l.b16 %v2314
  %v2890 = vunpack.c.l.b16 %v2315
  %v2891 = vunpack.c.l.b16 %v2316
  %v2892 = vunpack.c.l.b16 %v2317
  %v2893 = vunpack.c.l.b16 %v2318
  %v2894 = vunpack.c.l.b16 %v2319
  %v2895 = vunpack.c.l.b16 %v2320
  %v2896 = vunpack.c.l.b16 %v2321
  %v2897 = vunpack.c.l.b16 %v2322
  %v2898 = vunpack.c.l.b16 %v2323
  %v2899 = vunpack.c.l.b16 %v2324
  %v2900 = vunpack.c.l.b16 %v2325
  %v2901 = vunpack.c.l.b16 %v2326
  %v2902 = vunpack.c.l.b16 %v2327
  %v2903 = vunpack.c.l.b16 %v2328
  %v2904 = vunpack.c.l.b16 %v2329
  %v2905 = vunpack.c.l.b16 %v2330
  %v2906 = vunpack.c.l.b16 %v2331
  %v2907 = vunpack.c.l.b16 %v2332
  %v2908 = vunpack.c.l.b16 %v2333
  %v2909 = vunpack.c.l.b16 %v2334
  %v2910 = vunpack.c.l.b16 %v2335
  %v2911 = vunpack.c.l.b16 %v2336
  %v2912 = vunpack.c.l.b16 %v2337
  %v2913 = vunpack.c.l.b16 %v2338
  %v2914 = vunpack.c.l.b16 %v2339
  %v2915 = vunpack.c.l.b16 %v2340
  %v2916 = vunpack.c.l.b16 %v2341
  %v2917 = vunpack.c.l.b16 %v2342
  %v2918 = vunpack.c.l.b16 %v2343
  %v2919 = vunpack.c.l.b16 %v2344
  %v2920 = vunpack.c.l.b16 %v2345
  %v2921 = vunpack.c.l.b16 %v2346
  %v2922 = vunpack.c.l.b16 %v2347
  %v2923 = vunpack.c.l.b16 %v2348
  %v2924 = vunpack.c.l.b16 %v2349
  %v2925 = vunpack.c.l.b16 %v2350
  %v2926 = vunpack.c.l.b16 %v2351
  %v2927 = vunpack.c.l.b16 %v2352
  %v2928 = vunpack.c.l.b16 %v2353
  %v2929 = vunpack.c.l.b16 %v2354
  %v2930 = vunpack.c.l.b16 %v2355
  %v2931 = vunpack.c.l.b16 %v2356
  %v2932 = vunpack.c.l.b16 %v2357
  %v2933 = vunpack.c.l.b16 %v2358
  %v2934 = vunpack.c.l.b16 %v2359
  %v2935 = vunpack.c.l.b16 %v2360
  %v2936 = vunpack.c.l.b16 %v2361
  %v2937 = vunpack.c.l.b16 %v2362
  %v2938 = vunpack.c.l.b16 %v2363
  %v2939 = vunpack.c.l.b16 %v2364
  %v2940 = vunpack.c.l.b16 %v2365
  %v2941 = vunpack.c.l.b16 %v2366
  %v2942 = vunpack.c.l.b16 %v2367
  %v2943 = vunpack.c.l.b16 %v2368
  %v2944 = vunpack.c.l.b16 %v2369
  %v2945 = vunpack.c.l.b16 %v2370
  %v2946 = vunpack.c.l.b16 %v2371
  %v2947 = vunpack.c.l.b16 %v2372
  %v2948 = vunpack.c.l.b16 %v2373
  %v2949 = vunpack.c.l.b16 %v2374
  %v2950 = vunpack.c.l.b16 %v2375
  %v2951 = vunpack.c.l.b16 %v2376
  %v2952 = vunpack.c.l.b16 %v2377
  %v2953 = vunpack.c.l.b16 %v2378
  %v2954 = vunpack.c.l.b16 %v2379
  %v2955 = vunpack.c.l.b16 %v2380
  %v2956 = vunpack.c.l.b16 %v2381
  %v2957 = vunpack.c.l.b16 %v2382
  %v2958 = vunpack.c.l.b16 %v2383
  %v2959 = vunpack.c.l.b16 %v2384
  %v2960 = vunpack.c.l.b16 %v2385
  %v2961 = vunpack.c.l.b16 %v2386
  %v2962 = vunpack.c.l.b16 %v2387
  %v2963 = vunpack.c.l.b16 %v2388
  %v2964 = vunpack.c.l.b16 %v2389
  %v2965 = vunpack.c.l.b16 %v2390
  %v2966 = vunpack.c.l.b16 %v2391
  %v2967 = vunpack.c.l.b16 %v2392
  %v2968 = vunpack.c.l.b16 %v2393
  %v2969 = vunpack.c.l.b16 %v2394
  %v2970 = vunpack.c.l.b16 %v2395
  %v2971 = vunpack.c.l.b16 %v2396
  %v2972 = vunpack.c.l.b16 %v2397
  %v2973 = vunpack.c.l.b16 %v2398
  %v2974 = vunpack.c.l.b16 %v2399
  %v2975 = vunpack.c.l.b16 %v2400
  %v2976 = vunpack.c.l.b16 %v2401
  %v2977 = vunpack.c.l.b16 %v2402
  %v2978 = vunpack.c.l.b16 %v2403
  %v2979 = vunpack.c.l.b16 %v2404
  %v2980 = vunpack.c.l.b16 %v2405
  %v2981 = vunpack.c.l.b16 %v2406
  %v2982 = vunpack.c.l.b16 %v2407
  %v2983 = vunpack.c.l.b16 %v2408
  %v2984 = vunpack.c.l.b16 %v2409
  %v2985 = vunpack.c.l.b16 %v2410
  %v2986 = vunpack.c.l.b16 %v2411
  %v2987 = vunpack.c.l.b16 %v2412
  %v2988 = vunpack.c.l.b16 %v2413
  %v2989 = vunpack.c.l.b16 %v2414
  %v2990 = vunpack.c.l.b16 %v2415
  %v2991 = vunpack.c.l.b16 %v2416
  %v2992 = vunpack.c.l.b16 %v2417
  %v2993 = vunpack.c.l.b16 %v2418
  %v2994 = vunpack.c.l.b16 %v2419
  %v2995 = vunpack.c.l.b16 %v2420
  %v2996 = vunpack.c.l.b16 %v2421
  %v2997 = vunpack.c.l.b16 %v2422
  %v2998 = vunpack.c.l.b16 %v2423
  %v2999 = vunpack.c.l.b16 %v2424
  %v3000 = vunpack.c.l.b16 %v2425
  %v3001 = vunpack.c.l.b16 %v2426
  %v3002 = vunpack.c.l.b16 %v2427
  %v3003 = vunpack.c.l.b16 %v2428
  %v3004 = vunpack.c.l.b16 %v2429
  %v3005 = vunpack.c.l.b16 %v2430
  %v3006 = vunpack.c.l.b16 %v2431
  %v3007 = vunpack.c.l.b16 %v2432
  %v3008 = vunpack.c.l.b16 %v2433
  %v3009 = vunpack.c.l.b16 %v2434
  %v3010 = vunpack.c.l.b16 %v2435
  %v3011 = vunpack.c.l.b16 %v2436
  %v3012 = vunpack.c.l.b16 %v2437
  %v3013 = vunpack.c.l.b16 %v2438
  %v3014 = vunpack.c.l.b16 %v2439
  %v3015 = vunpack.c.l.b16 %v2440
  %v3016 = vunpack.c.l.b16 %v2441
  %v3017 = vunpack.c.l.b16 %v2442
  %v3018 = vunpack.c.l.b16 %v2443
  %v3019 = vunpack.c.l.b16 %v2444
  %v3020 = vunpack.c.l.b16 %v2445
  %v3021 = vunpack.c.l.b16 %v2446
  %v3022 = vunpack.c.l.b16 %v2447
  %v3023 = vunpack.c.l.b16 %v2448
  %v3024 = vunpack.c.l.b16 %v2449
  %v3025 = vunpack.c.l.b16 %v2450
  %v3026 = vunpack.c.l.b16 %v2451
  %v3027 = vunpack.c.l.b16 %v2452
  %v3028 = vunpack.c.l.b16 %v2453
  %v3029 = vunpack.c.l.b16 %v2454
  %v3030 = vunpack.c.l.b16 %v2455
  %v3031 = vunpack.c.l.b16 %v2456
  %v3032 = vunpack.c.l.b16 %v2457
  %v3033 = vunpack.c.l.b16 %v2458
  %v3034 = vunpack.c.l.b16 %v2459
  %v3035 = vunpack.c.l.b16 %v2460
  %v3036 = vunpack.c.l.b16 %v2461
  %v3037 = vunpack.c.l.b16 %v2462
  %v3038 = vunpack.c.l.b16 %v2463
  %v3039 = vunpack.c.l.b16 %v2464
  %v3040 = vunpack.c.l.b16 %v2465
  %v3041 = vunpack.c.l.b16 %v2466
  %v3042 = vunpack.c.l.b16 %v2467
  %v3043 = vunpack.c.l.b16 %v2468
  %v3044 = vunpack.c.l.b16 %v2469
  %v3045 = vunpack.c.l.b16 %v2470
  %v3046 = vunpack.c.l.b16 %v2471
  %v3047 = vunpack.c.l.b16 %v2472
  %v3048 = vunpack.c.l.b16 %v2473
  %v3049 = vunpack.c.l.b16 %v2474
  %v3050 = vunpack.c.l.b16 %v2475
  %v3051 = vunpack.c.l.b16 %v2476
  %v3052 = vunpack.c.l.b16 %v2477
  %v3053 = vunpack.c.l.b16 %v2478
  %v3054 = vunpack.c.l.b16 %v2479
  %v3055 = vunpack.c.l.b16 %v2480
  %v3056 = vunpack.c.l.b16 %v2481
  %v3057 = vunpack.c.l.b16 %v2482
  %v3058 = vunpack.c.l.b16 %v2483
  %v3059 = vunpack.c.l.b16 %v2484
  %v3060 = vunpack.c.l.b16 %v2485
  %v3061 = vunpack.c.l.b16 %v2486
  %v3062 = vunpack.c.l.b16 %v2487
  %v3063 = vunpack.c.l.b16 %v2488
  %v3064 = vunpack.c.l.b16 %v2489
  %v3065 = vunpack.c.l.b16 %v2490
  %v3066 = vunpack.c.l.b16 %v2491
  %v3067 = vunpack.c.l.b16 %v2492
  %v3068 = vunpack.c.l.b16 %v2493
  %v3069 = vunpack.c.l.b16 %v2494
  %v3070 = vunpack.c.l.b16 %v2495
  %v3071 = vunpack.c.l.b16 %v2496
  %v3072 = vunpack.c.l.b16 %v2497
  %v3073 = vunpack.c.l.b16 %v2498
  %v3074 = vunpack.c.l.b16 %v2499
  %v3075 = vunpack.c.l.b16 %v2500
  %v3076 = vunpack.c.l.b16 %v2501
  %v3077 = vunpack.c.l.b16 %v2502
  %v3078 = vunpack.c.l.b16 %v2503
  %v3079 = vunpack.c.l.b16 %v2504
  %v3080 = vunpack.c.l.b16 %v2505
  %v3081 = vunpack.c.l.b16 %v2506
  %v3082 = vunpack.c.l.b16 %v2507
  %v3083 = vunpack.c.l.b16 %v2508
  %v3084 = vunpack.c.l.b16 %v2509
  %v3085 = vunpack.c.l.b16 %v2510
  %v3086 = vunpack.c.l.b16 %v2511
  %v3087 = vunpack.c.l.b16 %v2512
  %v3088 = vunpack.c.l.b16 %v2513
  %v3089 = vunpack.c.l.b16 %v2514
  %v3090 = vunpack.c.l.b16 %v2515
  %v3091 = vunpack.c.l.b16 %v2516
  %v3092 = vunpack.c.l.b16 %v2517
  %v3093 = vunpack.c.l.b16 %v2518
  %v3094 = vunpack.c.l.b16 %v2519
  %v3095 = vunpack.c.l.b16 %v2520
  %v3096 = vunpack.c.l.b16 %v2521
  %v3097 = vunpack.c.l.b16 %v2522
  %v3098 = vunpack.c.l.b16 %v2523
  %v3099 = vunpack.c.l.b16 %v2524
  %v3100 = vunpack.c.l.b16 %v2525
  %v3101 = vunpack.c.l.b16 %v2526
  %v3102 = vunpack.c.l.b16 %v2527
  %v3103 = vunpack.c.l.b16 %v2528
  %v3104 = vunpack.c.l.b16 %v2529
  %v3105 = vunpack.c.l.b16 %v2530
  %v3106 = vunpack.c.l.b16 %v2531
  %v3107 = vunpack.c.l.b16 %v2532
  %v3108 = vunpack.c.l.b16 %v2533
  %v3109 = vunpack.c.l.b16 %v2534
  %v3110 = vunpack.c.l.b16 %v2535
  %v3111 = vunpack.c.l.b16 %v2536
  %v3112 = vunpack.c.l.b16 %v2537
  %v3113 = vunpack.c.l.b16 %v2538
  %v3114 = vunpack.c.l.b16 %v2539
  %v3115 = vunpack.c.l.b16 %v2540
  %v3116 = vunpack.c.l.b16 %v2541
  %v3117 = vunpack.c.l.b16 %v2542
  %v3118 = vunpack.c.l.b16 %v2543
  %v3119 = vunpack.c.l.b16 %v2544
  %v3120 = vunpack.c.l.b16 %v2545
  %v3121 = vunpack.c.l.b16 %v2546
  %v3122 = vunpack.c.l.b16 %v2547
  %v3123 = vunpack.c.l.b16 %v2548
  %v3124 = vunpack.c.l.b16 %v2549
  %v3125 = vunpack.c.l.b16 %v2550
  %v3126 = vunpack.c.l.b16 %v2551
  %v3127 = vunpack.c.l.b16 %v2552
  %v3128 = vunpack.c.l.b16 %v2553
  %v3129 = vunpack.c.l.b16 %v2554
  %v3130 = vunpack.c.l.b16 %v2555
  %v3131 = vpack.c.b16 %v2876, %v2875
  %v3132 = vpack.c.b16 %v2878, %v2877
  %v3133 = vpack.c.b16 %v2880, %v2879
  %v3134 = vpack.c.b16 %v2882, %v2881
  %v3135 = vpack.c.b16 %v2884, %v2883
  %v3136 = vpack.c.b16 %v2886, %v2885
  %v3137 = vpack.c.b16 %v2888, %v2887
  %v3138 = vpack.c.b16 %v2890, %v2889
  %v3139 = vpack.c.b16 %v2892, %v2891
  %v3140 = vpack.c.b16 %v2894, %v2893
  %v3141 = vpack.c.b16 %v2896, %v2895
  %v3142 = vpack.c.b16 %v2898, %v2897
  %v3143 = vpack.c.b16 %v2900, %v2899
  %v3144 = vpack.c.b16 %v2902, %v2901
  %v3145 = vpack.c.b16 %v2904, %v2903
  %v3146 = vpack.c.b16 %v2906, %v2905
  %v3147 = vpack.c.b16 %v2908, %v2907
  %v3148 = vpack.c.b16 %v2910, %v2909
  %v3149 = vpack.c.b16 %v2912, %v2911
  %v3150 = vpack.c.b16 %v2914, %v2913
  %v3151 = vpack.c.b16 %v2916, %v2915
  %v3152 = vpack.c.b16 %v2918, %v2917
  %v3153 = vpack.c.b16 %v2920, %v2919
  %v3154 = vpack.c.b16 %v2922, %v2921
  %v3155 = vpack.c.b16 %v2924, %v2923
  %v3156 = vpack.c.b16 %v2926, %v2925
  %v3157 = vpack.c.b16 %v2928, %v2927
  %v3158 = vpack.c.b16 %v2930, %v2929
  %v3159 = vpack.c.b16 %v2932, %v2931
  %v3160 = vpack.c.b16 %v2934, %v2933
  %v3161 = vpack.c.b16 %v2936, %v2935
  %v3162 = vpack.c.b16 %v2938, %v2937
  %v3163 = vpack.c.b16 %v2940, %v2939
  %v3164 = vpack.c.b16 %v2942, %v2941
  %v3165 = vpack.c.b16 %v2944, %v2943
  %v3166 = vpack.c.b16 %v2946, %v2945
  %v3167 = vpack.c.b16 %v2948, %v2947
  %v3168 = vpack.c.b16 %v2950, %v2949
  %v3169 = vpack.c.b16 %v2952, %v2951
  %v3170 = vpack.c.b16 %v2954, %v2953
  %v3171 = vpack.c.b16 %v2956, %v2955
  %v3172 = vpack.c.b16 %v2958, %v2957
  %v3173 = vpack.c.b16 %v2960, %v2959
  %v3174 = vpack.c.b16 %v2962, %v2961
  %v3175 = vpack.c.b16 %v2964, %v2963
  %v3176 = vpack.c.b16 %v2966, %v2965
  %v3177 = vpack.c.b16 %v2968, %v2967
  %v3178 = vpack.c.b16 %v2970, %v2969
  %v3179 = vpack.c.b16 %v2972, %v2971
  %v3180 = vpack.c.b16 %v2974, %v2973
  %v3181 = vpack.c.b16 %v2976, %v2975
  %v3182 = vpack.c.b16 %v2978, %v2977
  %v3183 = vpack.c.b16 %v2980, %v2979
  %v3184 = vpack.c.b16 %v2982, %v2981
  %v3185 = vpack.c.b16 %v2984, %v2983
  %v3186 = vpack.c.b16 %v2986, %v2985
  %v3187 = vpack.c.b16 %v2988, %v2987
  %v3188 = vpack.c.b16 %v2990, %v2989
  %v3189 = vpack.c.b16 %v2992, %v2991
  %v3190 = vpack.c.b16 %v2994, %v2993
  %v3191 = vpack.c.b16 %v2996, %v2995
  %v3192 = vpack.c.b16 %v2998, %v2997
  %v3193 = vpack.c.b16 %v3000, %v2999
  %v3194 = vpack.c.b16 %v3002, %v3001
  %v3195 = vpack.c.b16 %v3004, %v3003
  %v3196 = vpack.c.b16 %v3006, %v3005
  %v3197 = vpack.c.b16 %v3008, %v3007
  %v3198 = vpack.c.b16 %v3010, %v3009
  %v3199 = vpack.c.b16 %v3012, %v3011
  %v3200 = vpack.c.b16 %v3014, %v3013
  %v3201 = vpack.c.b16 %v3016, %v3015
  %v3202 = vpack.c.b16 %v3018, %v3017
  %v3203 = vpack.c.b16 %v3020, %v3019
  %v3204 = vpack.c.b16 %v3022, %v3021
  %v3205 = vpack.c.b16 %v3024, %v3023
  %v3206 = vpack.c.b16 %v3026, %v3025
  %v3207 = vpack.c.b16 %v3028, %v3027
  %v3208 = vpack.c.b16 %v3030, %v3029
  %v3209 = vpack.c.b16 %v3032, %v3031
  %v3210 = vpack.c.b16 %v3034, %v3033
  %v3211 = vpack.c.b16 %v3036, %v3035
  %v3212 = vpack.c.b16 %v3038, %v3037
  %v3213 = vpack.c.b16 %v3040, %v3039
  %v3214 = vpack.c.b16 %v3042, %v3041
  %v3215 = vpack.c.b16 %v3044, %v3043
  %v3216 = vpack.c.b16 %v3046, %v3045
  %v3217 = vpack.c.b16 %v3048, %v3047
  %v3218 = vpack.c.b16 %v3050, %v3049
  %v3219 = vpack.c.b16 %v3052, %v3051
  %v3220 = vpack.c.b16 %v3054, %v3053
  %v3221 = vpack.c.b16 %v3056, %v3055
  %v3222 = vpack.c.b16 %v3058, %v3057
  %v3223 = vpack.c.b16 %v3060, %v3059
  %v3224 = vpack.c.b16 %v3062, %v3061
  %v3225 = vpack.c.b16 %v3064, %v3063
  %v3226 = vpack.c.b16 %v3066, %v3065
  %v3227 = vpack.c.b16 %v3068, %v3067
  %v3228 = vpack.c.b16 %v3070, %v3069
  %v3229 = vpack.c.b16 %v3072, %v3071
  %v3230 = vpack.c.b16 %v3074, %v3073
  %v3231 = vpack.c.b16 %v3076, %v3075
  %v3232 = vpack.c.b16 %v3078, %v3077
  %v3233 = vpack.c.b16 %v3080, %v3079
  %v3234 = vpack.c.b16 %v3082, %v3081
  %v3235 = vpack.c.b16 %v3084, %v3083
  %v3236 = vpack.c.b16 %v3086, %v3085
  %v3237 = vpack.c.b16 %v3088, %v3087
  %v3238 = vpack.c.b16 %v3090, %v3089
  %v3239 = vpack.c.b16 %v3092, %v3091
  %v3240 = vpack.c.b16 %v3094, %v3093
  %v3241 = vpack.c.b16 %v3096, %v3095
  %v3242 = vpack.c.b16 %v3098, %v3097
  %v3243 = vpack.c.b16 %v3100, %v3099
  %v3244 = vpack.c.b16 %v3102, %v3101
  %v3245 = vpack.c.b16 %v3104, %v3103
  %v3246 = vpack.c.b16 %v3106, %v3105
  %v3247 = vpack.c.b16 %v3108, %v3107
  %v3248 = vpack.c.b16 %v3110, %v3109
  %v3249 = vpack.c.b16 %v3112, %v3111
  %v3250 = vpack.c.b16 %v3114, %v3113
  %v3251 = vpack.c.b16 %v3116, %v3115
  %v3252 = vpack.c.b16 %v3118, %v3117
  %v3253 = vpack.c.b16 %v3120, %v3119
  %v3254 = vpack.c.b16 %v3122, %v3121
  %v3255 = vpack.c.b16 %v3124, %v3123
  %v3256 = vpack.c.b16 %v3126, %v3125
  %v3257 = vpack.c.b16 %v3128, %v3127
  %v3258 = vpack.c.b16 %v3130, %v3129
  %3387 = vmatprep.subr.bf16.mxu0 0
  %3388 = vmatpush1.bf16.msra.mxu0 %v3138
  %3389 = vmatprep.subr.bf16.mxu0 0
  %3390 = vmatpush1.bf16.msra.mxu0 %v3137
  %3391 = vmatprep.subr.bf16.mxu0 0
  %3392 = vmatpush1.bf16.msra.mxu0 %v3136
  %3393 = vmatprep.subr.bf16.mxu0 0
  %3394 = vmatpush1.bf16.msra.mxu0 %v3135
  %3395 = vmatprep.subr.bf16.mxu0 0
  %3396 = vmatpush1.bf16.msra.mxu0 %v3134
  %3397 = vmatprep.subr.bf16.mxu0 0
  %3398 = vmatpush1.bf16.msra.mxu0 %v3133
  %3399 = vmatprep.subr.bf16.mxu0 0
  %3400 = vmatpush1.bf16.msra.mxu0 %v3132
  %3401 = vmatprep.subr.bf16.mxu0 0
  %3402 = vmatpush1.bf16.msra.mxu0 %v3131
  %3403 = vmatprep.subr.bf16.mxu0 0
  %3404 = vmatpush2.bf16.msra.mxu0 %v3146
  %3405 = vmatprep.subr.bf16.mxu0 0
  %3406 = vmatpush2.bf16.msra.mxu0 %v3145
  %3407 = vmatprep.subr.bf16.mxu0 0
  %3408 = vmatpush2.bf16.msra.mxu0 %v3144
  %3409 = vmatprep.subr.bf16.mxu0 0
  %3410 = vmatpush2.bf16.msra.mxu0 %v3143
  %3411 = vmatprep.subr.bf16.mxu0 0
  %3412 = vmatpush2.bf16.msra.mxu0 %v3142
  %3413 = vmatprep.subr.bf16.mxu0 0
  %3414 = vmatpush2.bf16.msra.mxu0 %v3141
  %3415 = vmatprep.subr.bf16.mxu0 0
  %3416 = vmatpush2.bf16.msra.mxu0 %v3140
  %3417 = vmatprep.subr.bf16.mxu0 0
  %3418 = vmatpush2.bf16.msra.mxu0 %v3139
  %3419 = vmatprep.mubr.bf16.mxu0 %v2588
  %3420 = vmatmul.mubr.bf16.gmra.mxu0 %v2587
  %v3421 = vpop.f32.mrf.mxu0
  %v3422 = vadd.f32 %v2561, %v3421
  %v3423 = vpop.f32.mrf.mxu0
  %v3424 = vpop.f32.mrf.mxu0
  %v3425 = vpop.f32.mrf.mxu0
  %3426 = vdwg.mxu0
  %3427 = vmatprep.subr.bf16.mxu0 0
  %3428 = vmatpush1.bf16.msra.mxu0 %v3154
  %3429 = vmatprep.subr.bf16.mxu0 0
  %3430 = vmatpush1.bf16.msra.mxu0 %v3153
  %3431 = vmatprep.subr.bf16.mxu0 0
  %3432 = vmatpush1.bf16.msra.mxu0 %v3152
  %3433 = vmatprep.subr.bf16.mxu0 0
  %3434 = vmatpush1.bf16.msra.mxu0 %v3151
  %3435 = vmatprep.subr.bf16.mxu0 0
  %3436 = vmatpush1.bf16.msra.mxu0 %v3150
  %3437 = vmatprep.subr.bf16.mxu0 0
  %3438 = vmatpush1.bf16.msra.mxu0 %v3149
  %3439 = vmatprep.subr.bf16.mxu0 0
  %3440 = vmatpush1.bf16.msra.mxu0 %v3148
  %3441 = vmatprep.subr.bf16.mxu0 0
  %3442 = vmatpush1.bf16.msra.mxu0 %v3147
  %3443 = vmatprep.subr.bf16.mxu0 0
  %3444 = vmatpush2.bf16.msra.mxu0 %v3162
  %3445 = vmatprep.subr.bf16.mxu0 0
  %3446 = vmatpush2.bf16.msra.mxu0 %v3161
  %3447 = vmatprep.subr.bf16.mxu0 0
  %3448 = vmatpush2.bf16.msra.mxu0 %v3160
  %3449 = vmatprep.subr.bf16.mxu0 0
  %3450 = vmatpush2.bf16.msra.mxu0 %v3159
  %3451 = vmatprep.subr.bf16.mxu0 0
  %3452 = vmatpush2.bf16.msra.mxu0 %v3158
  %3453 = vmatprep.subr.bf16.mxu0 0
  %3454 = vmatpush2.bf16.msra.mxu0 %v3157
  %3455 = vmatprep.subr.bf16.mxu0 0
  %3456 = vmatpush2.bf16.msra.mxu0 %v3156
  %3457 = vmatprep.subr.bf16.mxu0 0
  %3458 = vmatpush2.bf16.msra.mxu0 %v3155
  %3459 = vmatprep.mubr.bf16.mxu0 %v2590
  %3460 = vmatmul.mubr.bf16.gmra.mxu0 %v2589
  %v3461 = vpop.f32.mrf.mxu0
  %v3462 = vadd.f32 %v3422, %v3461
  %v3463 = vpop.f32.mrf.mxu0
  %v3464 = vpop.f32.mrf.mxu0
  %v3465 = vpop.f32.mrf.mxu0
  %3466 = vdwg.mxu0
  %3467 = vmatprep.subr.bf16.mxu0 0
  %3468 = vmatpush1.bf16.msra.mxu0 %v3170
  %3469 = vmatprep.subr.bf16.mxu0 0
  %3470 = vmatpush1.bf16.msra.mxu0 %v3169
  %3471 = vmatprep.subr.bf16.mxu0 0
  %3472 = vmatpush1.bf16.msra.mxu0 %v3168
  %3473 = vmatprep.subr.bf16.mxu0 0
  %3474 = vmatpush1.bf16.msra.mxu0 %v3167
  %3475 = vmatprep.subr.bf16.mxu0 0
  %3476 = vmatpush1.bf16.msra.mxu0 %v3166
  %3477 = vmatprep.subr.bf16.mxu0 0
  %3478 = vmatpush1.bf16.msra.mxu0 %v3165
  %3479 = vmatprep.subr.bf16.mxu0 0
  %3480 = vmatpush1.bf16.msra.mxu0 %v3164
  %3481 = vmatprep.subr.bf16.mxu0 0
  %3482 = vmatpush1.bf16.msra.mxu0 %v3163
  %3483 = vmatprep.subr.bf16.mxu0 0
  %3484 = vmatpush2.bf16.msra.mxu0 %v3178
  %3485 = vmatprep.subr.bf16.mxu0 0
  %3486 = vmatpush2.bf16.msra.mxu0 %v3177
  %3487 = vmatprep.subr.bf16.mxu0 0
  %3488 = vmatpush2.bf16.msra.mxu0 %v3176
  %3489 = vmatprep.subr.bf16.mxu0 0
  %3490 = vmatpush2.bf16.msra.mxu0 %v3175
  %3491 = vmatprep.subr.bf16.mxu0 0
  %3492 = vmatpush2.bf16.msra.mxu0 %v3174
  %3493 = vmatprep.subr.bf16.mxu0 0
  %3494 = vmatpush2.bf16.msra.mxu0 %v3173
  %3495 = vmatprep.subr.bf16.mxu0 0
  %3496 = vmatpush2.bf16.msra.mxu0 %v3172
  %3497 = vmatprep.subr.bf16.mxu0 0
  %3498 = vmatpush2.bf16.msra.mxu0 %v3171
  %3499 = vmatprep.mubr.bf16.mxu0 %v2592
  %3500 = vmatmul.mubr.bf16.gmra.mxu0 %v2591
  %v3501 = vpop.f32.mrf.mxu0
  %v3502 = vadd.f32 %v3462, %v3501
  %v3503 = vpop.f32.mrf.mxu0
  %v3504 = vpop.f32.mrf.mxu0
  %v3505 = vpop.f32.mrf.mxu0
  %3506 = vdwg.mxu0
  %3507 = vmatprep.subr.bf16.mxu0 0
  %3508 = vmatpush1.bf16.msra.mxu0 %v3186
  %3509 = vmatprep.subr.bf16.mxu0 0
  %3510 = vmatpush1.bf16.msra.mxu0 %v3185
  %3511 = vmatprep.subr.bf16.mxu0 0
  %3512 = vmatpush1.bf16.msra.mxu0 %v3184
  %3513 = vmatprep.subr.bf16.mxu0 0
  %3514 = vmatpush1.bf16.msra.mxu0 %v3183
  %3515 = vmatprep.subr.bf16.mxu0 0
  %3516 = vmatpush1.bf16.msra.mxu0 %v3182
  %3517 = vmatprep.subr.bf16.mxu0 0
  %3518 = vmatpush1.bf16.msra.mxu0 %v3181
  %3519 = vmatprep.subr.bf16.mxu0 0
  %3520 = vmatpush1.bf16.msra.mxu0 %v3180
  %3521 = vmatprep.subr.bf16.mxu0 0
  %3522 = vmatpush1.bf16.msra.mxu0 %v3179
  %3523 = vmatprep.subr.bf16.mxu0 0
  %3524 = vmatpush2.bf16.msra.mxu0 %v3194
  %3525 = vmatprep.subr.bf16.mxu0 0
  %3526 = vmatpush2.bf16.msra.mxu0 %v3193
  %3527 = vmatprep.subr.bf16.mxu0 0
  %3528 = vmatpush2.bf16.msra.mxu0 %v3192
  %3529 = vmatprep.subr.bf16.mxu0 0
  %3530 = vmatpush2.bf16.msra.mxu0 %v3191
  %3531 = vmatprep.subr.bf16.mxu0 0
  %3532 = vmatpush2.bf16.msra.mxu0 %v3190
  %3533 = vmatprep.subr.bf16.mxu0 0
  %3534 = vmatpush2.bf16.msra.mxu0 %v3189
  %3535 = vmatprep.subr.bf16.mxu0 0
  %3536 = vmatpush2.bf16.msra.mxu0 %v3188
  %3537 = vmatprep.subr.bf16.mxu0 0
  %3538 = vmatpush2.bf16.msra.mxu0 %v3187
  %3539 = vmatprep.mubr.bf16.mxu0 %v2594
  %3540 = vmatmul.mubr.bf16.gmra.mxu0 %v2593
  %v3541 = vpop.f32.mrf.mxu0
  %v3542 = vadd.f32 %v3502, %v3541
  %v3543 = vpop.f32.mrf.mxu0
  %v3544 = vpop.f32.mrf.mxu0
  %v3545 = vpop.f32.mrf.mxu0
  %3546 = vdwg.mxu0
  %3547 = vmatprep.subr.bf16.mxu0 0
  %3548 = vmatpush1.bf16.msra.mxu0 %v3202
  %3549 = vmatprep.subr.bf16.mxu0 0
  %3550 = vmatpush1.bf16.msra.mxu0 %v3201
  %3551 = vmatprep.subr.bf16.mxu0 0
  %3552 = vmatpush1.bf16.msra.mxu0 %v3200
  %3553 = vmatprep.subr.bf16.mxu0 0
  %3554 = vmatpush1.bf16.msra.mxu0 %v3199
  %3555 = vmatprep.subr.bf16.mxu0 0
  %3556 = vmatpush1.bf16.msra.mxu0 %v3198
  %3557 = vmatprep.subr.bf16.mxu0 0
  %3558 = vmatpush1.bf16.msra.mxu0 %v3197
  %3559 = vmatprep.subr.bf16.mxu0 0
  %3560 = vmatpush1.bf16.msra.mxu0 %v3196
  %3561 = vmatprep.subr.bf16.mxu0 0
  %3562 = vmatpush1.bf16.msra.mxu0 %v3195
  %3563 = vmatprep.subr.bf16.mxu0 0
  %3564 = vmatpush2.bf16.msra.mxu0 %v3210
  %3565 = vmatprep.subr.bf16.mxu0 0
  %3566 = vmatpush2.bf16.msra.mxu0 %v3209
  %3567 = vmatprep.subr.bf16.mxu0 0
  %3568 = vmatpush2.bf16.msra.mxu0 %v3208
  %3569 = vmatprep.subr.bf16.mxu0 0
  %3570 = vmatpush2.bf16.msra.mxu0 %v3207
  %3571 = vmatprep.subr.bf16.mxu0 0
  %3572 = vmatpush2.bf16.msra.mxu0 %v3206
  %3573 = vmatprep.subr.bf16.mxu0 0
  %3574 = vmatpush2.bf16.msra.mxu0 %v3205
  %3575 = vmatprep.subr.bf16.mxu0 0
  %3576 = vmatpush2.bf16.msra.mxu0 %v3204
  %3577 = vmatprep.subr.bf16.mxu0 0
  %3578 = vmatpush2.bf16.msra.mxu0 %v3203
  %3579 = vmatprep.mubr.bf16.mxu0 %v2596
  %3580 = vmatmul.mubr.bf16.gmra.mxu0 %v2595
  %v3581 = vpop.f32.mrf.mxu0
  %v3582 = vadd.f32 %v3542, %v3581
  %v3583 = vpop.f32.mrf.mxu0
  %v3584 = vpop.f32.mrf.mxu0
  %v3585 = vpop.f32.mrf.mxu0
  %3586 = vdwg.mxu0
  %3587 = vmatprep.subr.bf16.mxu0 0
  %3588 = vmatpush1.bf16.msra.mxu0 %v3218
  %3589 = vmatprep.subr.bf16.mxu0 0
  %3590 = vmatpush1.bf16.msra.mxu0 %v3217
  %3591 = vmatprep.subr.bf16.mxu0 0
  %3592 = vmatpush1.bf16.msra.mxu0 %v3216
  %3593 = vmatprep.subr.bf16.mxu0 0
  %3594 = vmatpush1.bf16.msra.mxu0 %v3215
  %3595 = vmatprep.subr.bf16.mxu0 0
  %3596 = vmatpush1.bf16.msra.mxu0 %v3214
  %3597 = vmatprep.subr.bf16.mxu0 0
  %3598 = vmatpush1.bf16.msra.mxu0 %v3213
  %3599 = vmatprep.subr.bf16.mxu0 0
  %3600 = vmatpush1.bf16.msra.mxu0 %v3212
  %3601 = vmatprep.subr.bf16.mxu0 0
  %3602 = vmatpush1.bf16.msra.mxu0 %v3211
  %3603 = vmatprep.subr.bf16.mxu0 0
  %3604 = vmatpush2.bf16.msra.mxu0 %v3226
  %3605 = vmatprep.subr.bf16.mxu0 0
  %3606 = vmatpush2.bf16.msra.mxu0 %v3225
  %3607 = vmatprep.subr.bf16.mxu0 0
  %3608 = vmatpush2.bf16.msra.mxu0 %v3224
  %3609 = vmatprep.subr.bf16.mxu0 0
  %3610 = vmatpush2.bf16.msra.mxu0 %v3223
  %3611 = vmatprep.subr.bf16.mxu0 0
  %3612 = vmatpush2.bf16.msra.mxu0 %v3222
  %3613 = vmatprep.subr.bf16.mxu0 0
  %3614 = vmatpush2.bf16.msra.mxu0 %v3221
  %3615 = vmatprep.subr.bf16.mxu0 0
  %3616 = vmatpush2.bf16.msra.mxu0 %v3220
  %3617 = vmatprep.subr.bf16.mxu0 0
  %3618 = vmatpush2.bf16.msra.mxu0 %v3219
  %3619 = vmatprep.mubr.bf16.mxu0 %v2598
  %3620 = vmatmul.mubr.bf16.gmra.mxu0 %v2597
  %v3621 = vpop.f32.mrf.mxu0
  %v3622 = vadd.f32 %v3582, %v3621
  %v3623 = vpop.f32.mrf.mxu0
  %v3624 = vpop.f32.mrf.mxu0
  %v3625 = vpop.f32.mrf.mxu0
  %3626 = vdwg.mxu0
  %3627 = vmatprep.subr.bf16.mxu0 0
  %3628 = vmatpush1.bf16.msra.mxu0 %v3234
  %3629 = vmatprep.subr.bf16.mxu0 0
  %3630 = vmatpush1.bf16.msra.mxu0 %v3233
  %3631 = vmatprep.subr.bf16.mxu0 0
  %3632 = vmatpush1.bf16.msra.mxu0 %v3232
  %3633 = vmatprep.subr.bf16.mxu0 0
  %3634 = vmatpush1.bf16.msra.mxu0 %v3231
  %3635 = vmatprep.subr.bf16.mxu0 0
  %3636 = vmatpush1.bf16.msra.mxu0 %v3230
  %3637 = vmatprep.subr.bf16.mxu0 0
  %3638 = vmatpush1.bf16.msra.mxu0 %v3229
  %3639 = vmatprep.subr.bf16.mxu0 0
  %3640 = vmatpush1.bf16.msra.mxu0 %v3228
  %3641 = vmatprep.subr.bf16.mxu0 0
  %3642 = vmatpush1.bf16.msra.mxu0 %v3227
  %3643 = vmatprep.subr.bf16.mxu0 0
  %3644 = vmatpush2.bf16.msra.mxu0 %v3242
  %3645 = vmatprep.subr.bf16.mxu0 0
  %3646 = vmatpush2.bf16.msra.mxu0 %v3241
  %3647 = vmatprep.subr.bf16.mxu0 0
  %3648 = vmatpush2.bf16.msra.mxu0 %v3240
  %3649 = vmatprep.subr.bf16.mxu0 0
  %3650 = vmatpush2.bf16.msra.mxu0 %v3239
  %3651 = vmatprep.subr.bf16.mxu0 0
  %3652 = vmatpush2.bf16.msra.mxu0 %v3238
  %3653 = vmatprep.subr.bf16.mxu0 0
  %3654 = vmatpush2.bf16.msra.mxu0 %v3237
  %3655 = vmatprep.subr.bf16.mxu0 0
  %3656 = vmatpush2.bf16.msra.mxu0 %v3236
  %3657 = vmatprep.subr.bf16.mxu0 0
  %3658 = vmatpush2.bf16.msra.mxu0 %v3235
  %3659 = vmatprep.mubr.bf16.mxu0 %v2600
  %3660 = vmatmul.mubr.bf16.gmra.mxu0 %v2599
  %v3661 = vpop.f32.mrf.mxu0
  %v3662 = vadd.f32 %v3622, %v3661
  %v3663 = vpop.f32.mrf.mxu0
  %v3664 = vpop.f32.mrf.mxu0
  %v3665 = vpop.f32.mrf.mxu0
  %3666 = vdwg.mxu0
  %3667 = vmatprep.subr.bf16.mxu0 0
  %3668 = vmatpush1.bf16.msra.mxu0 %v3250
  %3669 = vmatprep.subr.bf16.mxu0 0
  %3670 = vmatpush1.bf16.msra.mxu0 %v3249
  %3671 = vmatprep.subr.bf16.mxu0 0
  %3672 = vmatpush1.bf16.msra.mxu0 %v3248
  %3673 = vmatprep.subr.bf16.mxu0 0
  %3674 = vmatpush1.bf16.msra.mxu0 %v3247
  %3675 = vmatprep.subr.bf16.mxu0 0
  %3676 = vmatpush1.bf16.msra.mxu0 %v3246
  %3677 = vmatprep.subr.bf16.mxu0 0
  %3678 = vmatpush1.bf16.msra.mxu0 %v3245
  %3679 = vmatprep.subr.bf16.mxu0 0
  %3680 = vmatpush1.bf16.msra.mxu0 %v3244
  %3681 = vmatprep.subr.bf16.mxu0 0
  %3682 = vmatpush1.bf16.msra.mxu0 %v3243
  %3683 = vmatprep.subr.bf16.mxu0 0
  %3684 = vmatpush2.bf16.msra.mxu0 %v3258
  %3685 = vmatprep.subr.bf16.mxu0 0
  %3686 = vmatpush2.bf16.msra.mxu0 %v3257
  %3687 = vmatprep.subr.bf16.mxu0 0
  %3688 = vmatpush2.bf16.msra.mxu0 %v3256
  %3689 = vmatprep.subr.bf16.mxu0 0
  %3690 = vmatpush2.bf16.msra.mxu0 %v3255
  %3691 = vmatprep.subr.bf16.mxu0 0
  %3692 = vmatpush2.bf16.msra.mxu0 %v3254
  %3693 = vmatprep.subr.bf16.mxu0 0
  %3694 = vmatpush2.bf16.msra.mxu0 %v3253
  %3695 = vmatprep.subr.bf16.mxu0 0
  %3696 = vmatpush2.bf16.msra.mxu0 %v3252
  %3697 = vmatprep.subr.bf16.mxu0 0
  %3698 = vmatpush2.bf16.msra.mxu0 %v3251
  %3699 = vmatprep.mubr.bf16.mxu0 %v2602
  %3700 = vmatmul.mubr.bf16.gmra.mxu0 %v2601
  %v3701 = vpop.f32.mrf.mxu0
  %v3702 = vadd.f32 %v3662, %v3701
  %v3703 = vpop.f32.mrf.mxu0
  %v3704 = vpop.f32.mrf.mxu0
  %v3705 = vpop.f32.mrf.mxu0
  %3706 = vdwg.mxu0
  %v3707 = vmax.f32 %v3702, 0.0
  %3708 = vst.msk [vmem:[%s15 + $0x8] sm:$0xff] %vm763, %v3707
  // Predicated region
  $region62: #{embedding_forward.3} parent=0 // pred_check
    _
  $region63: #{embedding_forward.3} parent=0 // pred_check_branch
    %3710 = sbr.rel (0) target = $region65
  $region64: #{embedding_forward.3} parent=0 // pred_region
    _
  $region65: #{embedding_forward.3} parent=0 // pred_fallthru
    _
  // Predicated region
  $region66: #{embedding_forward.3} parent=0 // pred_check
    _
  $region67: #{embedding_forward.3} parent=0 // pred_check_branch
    %3712 = sbr.rel (0) target = $region69
  $region68: #{embedding_forward.3} parent=0 // pred_region
    _
  $region69: #{embedding_forward.3} parent=0 // pred_fallthru
    _

// kernel: embedding_forward.4
$region0: #{embedding_forward.4}
  #allocation0 [shape = 'u32[]', space=smem, size = 0x4, offset = 0x4, fixed_abs, tag = 'smem constant byte address 0x4 - core index']
  #allocation1 [shape = 'u32[144,128]{1,0:T(1,128)}', space=vmem, size = 0x12000, scoped, tag = 'internal scratch']
  %s0 = inlined_call_operand.vmem [shape: bf16[5,1372], index: 0, kind: input, shape index: {}]
  %s1 = inlined_call_operand.vmem [shape: bf16[1372,32], index: 1, kind: input, shape index: {}]
  %s2 = inlined_call_operand.vmem [shape: f32[1,32], index: 2, kind: input, shape index: {}]
  %s3 = inlined_call_operand.vmem [shape: bf16[5,1600], index: 3, kind: input, shape index: {}]
  %s4 = inlined_call_operand.vmem [shape: bf16[1600,32], index: 4, kind: input, shape index: {}]
  %s5 = inlined_call_operand.vmem [shape: f32[1,32], index: 5, kind: input, shape index: {}]
  %s6 = inlined_call_operand.vmem [shape: bf16[5,8000], index: 6, kind: input, shape index: {}]
  %s7 = inlined_call_operand.vmem [shape: bf16[8000,32], index: 7, kind: input, shape index: {}]
  %s8 = inlined_call_operand.vmem [shape: f32[1,32], index: 8, kind: input, shape index: {}]
  %s9 = inlined_call_operand.vmem [shape: bf16[5,22], index: 9, kind: input, shape index: {}]
  %s10 = inlined_call_operand.vmem [shape: bf16[22,32], index: 10, kind: input, shape index: {}]
  %s11 = inlined_call_operand.vmem [shape: f32[1,32], index: 11, kind: input, shape index: {}]
  %s12 = inlined_call_operand.vmem [shape: bf16[5,273], index: 12, kind: input, shape index: {}]
  %s13 = inlined_call_operand.vmem [shape: bf16[273,32], index: 13, kind: input, shape index: {}]
  %s14 = inlined_call_operand.vmem [shape: f32[1,32], index: 14, kind: input, shape index: {}]
  %s15 = inlined_call_operand.vmem [shape: f32[5,160], index: 15, kind: output, shape index: {}]
  %s16 = sld [smem:[#allocation0]]
  $region70: #{embedding_forward.4} parent=0
    _
  %s18 = ssub.s32 1, %s16
  %s19 = scalar_select 0, %s18, %s16
  // Predicated region
  $region2: #{embedding_forward.4} parent=0 // pred_check
    _
  $region3: #{embedding_forward.4} parent=0 // pred_check_branch
    %21 = sbr.rel (0) target = $region5
  $region4: #{embedding_forward.4} parent=0 // pred_region
    _
  $region5: #{embedding_forward.4} parent=0 // pred_fallthru
    _
  // Predicated region
  $region6: #{embedding_forward.4} parent=0 // pred_check
    _
  $region7: #{embedding_forward.4} parent=0 // pred_check_branch
    %23 = sbr.rel (0) target = $region9
  $region8: #{embedding_forward.4} parent=0 // pred_region
    _
  $region9: #{embedding_forward.4} parent=0 // pred_fallthru
    _
  // Predicated region
  $region10: #{embedding_forward.4} parent=0 // pred_check
    _
  $region11: #{embedding_forward.4} parent=0 // pred_check_branch
    %25 = sbr.rel (0) target = $region13
  $region12: #{embedding_forward.4} parent=0 // pred_region
    _
  $region13: #{embedding_forward.4} parent=0 // pred_fallthru
    _
  // Predicated region
  $region14: #{embedding_forward.4} parent=0 // pred_check
    _
  $region15: #{embedding_forward.4} parent=0 // pred_check_branch
    %27 = sbr.rel (0) target = $region17
  $region16: #{embedding_forward.4} parent=0 // pred_region
    _
  $region17: #{embedding_forward.4} parent=0 // pred_fallthru
    _
  // Predicated region
  $region18: #{embedding_forward.4} parent=0 // pred_check
    _
  $region19: #{embedding_forward.4} parent=0 // pred_check_branch
    %29 = sbr.rel (0) target = $region21
  $region20: #{embedding_forward.4} parent=0 // pred_region
    _
  $region21: #{embedding_forward.4} parent=0 // pred_fallthru
    _
  // Predicated region
  $region22: #{embedding_forward.4} parent=0 // pred_check
    _
  $region23: #{embedding_forward.4} parent=0 // pred_check_branch
    %31 = sbr.rel (0) target = $region25
  $region24: #{embedding_forward.4} parent=0 // pred_region
    _
  $region25: #{embedding_forward.4} parent=0 // pred_fallthru
    _
  // Predicated region
  $region26: #{embedding_forward.4} parent=0 // pred_check
    _
  $region27: #{embedding_forward.4} parent=0 // pred_check_branch
    %33 = sbr.rel (0) target = $region29
  $region28: #{embedding_forward.4} parent=0 // pred_region
    _
  $region29: #{embedding_forward.4} parent=0 // pred_fallthru
    _
  // Predicated region
  $region30: #{embedding_forward.4} parent=0 // pred_check
    _
  $region31: #{embedding_forward.4} parent=0 // pred_check_branch
    %35 = sbr.rel (0) target = $region33
  $region32: #{embedding_forward.4} parent=0 // pred_region
    _
  $region33: #{embedding_forward.4} parent=0 // pred_fallthru
    _
  // Predicated region
  $region34: #{embedding_forward.4} parent=0 // pred_check
    _
  $region35: #{embedding_forward.4} parent=0 // pred_check_branch
    %37 = sbr.rel (0) target = $region37
  $region36: #{embedding_forward.4} parent=0 // pred_region
    _
  $region37: #{embedding_forward.4} parent=0 // pred_fallthru
    _
  // Predicated region
  $region38: #{embedding_forward.4} parent=0 // pred_check
    _
  $region39: #{embedding_forward.4} parent=0 // pred_check_branch
    %39 = sbr.rel (0) target = $region41
  $region40: #{embedding_forward.4} parent=0 // pred_region
    _
  $region41: #{embedding_forward.4} parent=0 // pred_fallthru
    _
  // Predicated region
  $region42: #{embedding_forward.4} parent=0 // pred_check
    _
  $region43: #{embedding_forward.4} parent=0 // pred_check_branch
    %41 = sbr.rel (0) target = $region45
  $region44: #{embedding_forward.4} parent=0 // pred_region
    _
  $region45: #{embedding_forward.4} parent=0 // pred_fallthru
    _
  // Predicated region
  $region46: #{embedding_forward.4} parent=0 // pred_check
    _
  $region47: #{embedding_forward.4} parent=0 // pred_check_branch
    %43 = sbr.rel (0) target = $region49
  $region48: #{embedding_forward.4} parent=0 // pred_region
    _
  $region49: #{embedding_forward.4} parent=0 // pred_fallthru
    _
  // Predicated region
  $region50: #{embedding_forward.4} parent=0 // pred_check
    _
  $region51: #{embedding_forward.4} parent=0 // pred_check_branch
    %45 = sbr.rel (0) target = $region53
  $region52: #{embedding_forward.4} parent=0 // pred_region
    _
  $region53: #{embedding_forward.4} parent=0 // pred_fallthru
    _
  // Predicated region
  $region54: #{embedding_forward.4} parent=0 // pred_check
    _
  $region55: #{embedding_forward.4} parent=0 // pred_check_branch
    %47 = sbr.rel (0) target = $region57
  $region56: #{embedding_forward.4} parent=0 // pred_region
    _
  $region57: #{embedding_forward.4} parent=0 // pred_fallthru
    _
  // Predicated region
  $region58: #{embedding_forward.4} parent=0 // pred_check
    _
  $region59: #{embedding_forward.4} parent=0 // pred_check_branch
    %49 = sbr.rel (0) target = $region61
  $region60: #{embedding_forward.4} parent=0 // pred_region
    _
  $region61: #{embedding_forward.4} parent=0 // pred_fallthru
    _
  %v51 = vld [vmem:[%s0] sm:$0xff]
  %v52 = vld [vmem:[%s0 + $0x8] sm:$0xff]
  %v53 = vld [vmem:[%s0 + $0x10] sm:$0xff]
  %v54 = vld [vmem:[%s0 + $0x18] sm:$0xff]
  %v55 = vld [vmem:[%s0 + $0x20] sm:$0xff]
  %v56 = vld [vmem:[%s0 + $0x28] sm:$0xf]
  %v57 = vld [vmem:[%s1] sm:$0xf]
  %v58 = vld [vmem:[%s1 + $0x4] sm:$0xf]
  %v59 = vld [vmem:[%s1 + $0x8] sm:$0xf]
  %v60 = vld [vmem:[%s1 + $0xc] sm:$0xf]
  %v61 = vld [vmem:[%s1 + $0x10] sm:$0xf]
  %v62 = vld [vmem:[%s1 + $0x14] sm:$0xf]
  %v63 = vld [vmem:[%s1 + $0x18] sm:$0xf]
  %v64 = vld [vmem:[%s1 + $0x1c] sm:$0xf]
  %v65 = vld [vmem:[%s1 + $0x20] sm:$0xf]
  %v66 = vld [vmem:[%s1 + $0x24] sm:$0xf]
  %v67 = vld [vmem:[%s1 + $0x28] sm:$0xf]
  %v68 = vld [vmem:[%s1 + $0x2c] sm:$0xf]
  %v69 = vld [vmem:[%s1 + $0x30] sm:$0xf]
  %v70 = vld [vmem:[%s1 + $0x34] sm:$0xf]
  %v71 = vld [vmem:[%s1 + $0x38] sm:$0xf]
  %v72 = vld [vmem:[%s1 + $0x3c] sm:$0xf]
  %v73 = vld [vmem:[%s1 + $0x40] sm:$0xf]
  %v74 = vld [vmem:[%s1 + $0x44] sm:$0xf]
  %v75 = vld [vmem:[%s1 + $0x48] sm:$0xf]
  %v76 = vld [vmem:[%s1 + $0x4c] sm:$0xf]
  %v77 = vld [vmem:[%s1 + $0x50] sm:$0xf]
  %v78 = vld [vmem:[%s1 + $0x54] sm:$0xf]
  %v79 = vld [vmem:[%s1 + $0x58] sm:$0xf]
  %v80 = vld [vmem:[%s1 + $0x5c] sm:$0xf]
  %v81 = vld [vmem:[%s1 + $0x60] sm:$0xf]
  %v82 = vld [vmem:[%s1 + $0x64] sm:$0xf]
  %v83 = vld [vmem:[%s1 + $0x68] sm:$0xf]
  %v84 = vld [vmem:[%s1 + $0x6c] sm:$0xf]
  %v85 = vld [vmem:[%s1 + $0x70] sm:$0xf]
  %v86 = vld [vmem:[%s1 + $0x74] sm:$0xf]
  %v87 = vld [vmem:[%s1 + $0x78] sm:$0xf]
  %v88 = vld [vmem:[%s1 + $0x7c] sm:$0xf]
  %v89 = vld [vmem:[%s1 + $0x80] sm:$0xf]
  %v90 = vld [vmem:[%s1 + $0x84] sm:$0xf]
  %v91 = vld [vmem:[%s1 + $0x88] sm:$0xf]
  %v92 = vld [vmem:[%s1 + $0x8c] sm:$0xf]
  %v93 = vld [vmem:[%s1 + $0x90] sm:$0xf]
  %v94 = vld [vmem:[%s1 + $0x94] sm:$0xf]
  %v95 = vld [vmem:[%s1 + $0x98] sm:$0xf]
  %v96 = vld [vmem:[%s1 + $0x9c] sm:$0xf]
  %v97 = vld [vmem:[%s1 + $0xa0] sm:$0xf]
  %v98 = vld [vmem:[%s1 + $0xa4] sm:$0xf]
  %v99 = vld [vmem:[%s1 + $0xa8] sm:$0xf]
  %v100 = vld [vmem:[%s1 + $0xac] sm:$0xf]
  %v101 = vld [vmem:[%s1 + $0xb0] sm:$0xf]
  %v102 = vld [vmem:[%s1 + $0xb4] sm:$0xf]
  %v103 = vld [vmem:[%s1 + $0xb8] sm:$0xf]
  %v104 = vld [vmem:[%s1 + $0xbc] sm:$0xf]
  %v105 = vld [vmem:[%s1 + $0xc0] sm:$0xf]
  %v106 = vld [vmem:[%s1 + $0xc4] sm:$0xf]
  %v107 = vld [vmem:[%s1 + $0xc8] sm:$0xf]
  %v108 = vld [vmem:[%s1 + $0xcc] sm:$0xf]
  %v109 = vld [vmem:[%s1 + $0xd0] sm:$0xf]
  %v110 = vld [vmem:[%s1 + $0xd4] sm:$0xf]
  %v111 = vld [vmem:[%s1 + $0xd8] sm:$0xf]
  %v112 = vld [vmem:[%s1 + $0xdc] sm:$0xf]
  %v113 = vld [vmem:[%s1 + $0xe0] sm:$0xf]
  %v114 = vld [vmem:[%s1 + $0xe4] sm:$0xf]
  %v115 = vld [vmem:[%s1 + $0xe8] sm:$0xf]
  %v116 = vld [vmem:[%s1 + $0xec] sm:$0xf]
  %v117 = vld [vmem:[%s1 + $0xf0] sm:$0xf]
  %v118 = vld [vmem:[%s1 + $0xf4] sm:$0xf]
  %v119 = vld [vmem:[%s1 + $0xf8] sm:$0xf]
  %v120 = vld [vmem:[%s1 + $0xfc] sm:$0xf]
  %v121 = vld [vmem:[%s1 + $0x100] sm:$0xf]
  %v122 = vld [vmem:[%s1 + $0x104] sm:$0xf]
  %v123 = vld [vmem:[%s1 + $0x108] sm:$0xf]
  %v124 = vld [vmem:[%s1 + $0x10c] sm:$0xf]
  %v125 = vld [vmem:[%s1 + $0x110] sm:$0xf]
  %v126 = vld [vmem:[%s1 + $0x114] sm:$0xf]
  %v127 = vld [vmem:[%s1 + $0x118] sm:$0xf]
  %v128 = vld [vmem:[%s1 + $0x11c] sm:$0xf]
  %v129 = vld [vmem:[%s1 + $0x120] sm:$0xf]
  %v130 = vld [vmem:[%s1 + $0x124] sm:$0xf]
  %v131 = vld [vmem:[%s1 + $0x128] sm:$0xf]
  %v132 = vld [vmem:[%s1 + $0x12c] sm:$0xf]
  %v133 = vld [vmem:[%s1 + $0x130] sm:$0xf]
  %v134 = vld [vmem:[%s1 + $0x134] sm:$0xf]
  %v135 = vld [vmem:[%s1 + $0x138] sm:$0xf]
  %v136 = vld [vmem:[%s1 + $0x13c] sm:$0xf]
  %v137 = vld [vmem:[%s1 + $0x140] sm:$0xf]
  %v138 = vld [vmem:[%s1 + $0x144] sm:$0xf]
  %v139 = vld [vmem:[%s1 + $0x148] sm:$0xf]
  %v140 = vld [vmem:[%s1 + $0x14c] sm:$0xf]
  %v141 = vld [vmem:[%s1 + $0x150] sm:$0xf]
  %v142 = vld [vmem:[%s1 + $0x154] sm:$0xf]
  %v143 = vld [vmem:[%s1 + $0x158] sm:$0xf]
  %v144 = vld [vmem:[%s1 + $0x15c] sm:$0xf]
  %v145 = vld [vmem:[%s1 + $0x160] sm:$0xf]
  %v146 = vld [vmem:[%s1 + $0x164] sm:$0xf]
  %v147 = vld [vmem:[%s1 + $0x168] sm:$0xf]
  %v148 = vld [vmem:[%s1 + $0x16c] sm:$0xf]
  %v149 = vld [vmem:[%s1 + $0x170] sm:$0xf]
  %v150 = vld [vmem:[%s1 + $0x174] sm:$0xf]
  %v151 = vld [vmem:[%s1 + $0x178] sm:$0xf]
  %v152 = vld [vmem:[%s1 + $0x17c] sm:$0xf]
  %v153 = vld [vmem:[%s1 + $0x180] sm:$0xf]
  %v154 = vld [vmem:[%s1 + $0x184] sm:$0xf]
  %v155 = vld [vmem:[%s1 + $0x188] sm:$0xf]
  %v156 = vld [vmem:[%s1 + $0x18c] sm:$0xf]
  %v157 = vld [vmem:[%s1 + $0x190] sm:$0xf]
  %v158 = vld [vmem:[%s1 + $0x194] sm:$0xf]
  %v159 = vld [vmem:[%s1 + $0x198] sm:$0xf]
  %v160 = vld [vmem:[%s1 + $0x19c] sm:$0xf]
  %v161 = vld [vmem:[%s1 + $0x1a0] sm:$0xf]
  %v162 = vld [vmem:[%s1 + $0x1a4] sm:$0xf]
  %v163 = vld [vmem:[%s1 + $0x1a8] sm:$0xf]
  %v164 = vld [vmem:[%s1 + $0x1ac] sm:$0xf]
  %v165 = vld [vmem:[%s1 + $0x1b0] sm:$0xf]
  %v166 = vld [vmem:[%s1 + $0x1b4] sm:$0xf]
  %v167 = vld [vmem:[%s1 + $0x1b8] sm:$0xf]
  %v168 = vld [vmem:[%s1 + $0x1bc] sm:$0xf]
  %v169 = vld [vmem:[%s1 + $0x1c0] sm:$0xf]
  %v170 = vld [vmem:[%s1 + $0x1c4] sm:$0xf]
  %v171 = vld [vmem:[%s1 + $0x1c8] sm:$0xf]
  %v172 = vld [vmem:[%s1 + $0x1cc] sm:$0xf]
  %v173 = vld [vmem:[%s1 + $0x1d0] sm:$0xf]
  %v174 = vld [vmem:[%s1 + $0x1d4] sm:$0xf]
  %v175 = vld [vmem:[%s1 + $0x1d8] sm:$0xf]
  %v176 = vld [vmem:[%s1 + $0x1dc] sm:$0xf]
  %v177 = vld [vmem:[%s1 + $0x1e0] sm:$0xf]
  %v178 = vld [vmem:[%s1 + $0x1e4] sm:$0xf]
  %v179 = vld [vmem:[%s1 + $0x1e8] sm:$0xf]
  %v180 = vld [vmem:[%s1 + $0x1ec] sm:$0xf]
  %v181 = vld [vmem:[%s1 + $0x1f0] sm:$0xf]
  %v182 = vld [vmem:[%s1 + $0x1f4] sm:$0xf]
  %v183 = vld [vmem:[%s1 + $0x1f8] sm:$0xf]
  %v184 = vld [vmem:[%s1 + $0x1fc] sm:$0xf]
  %v185 = vld [vmem:[%s1 + $0x200] sm:$0xf]
  %v186 = vld [vmem:[%s1 + $0x204] sm:$0xf]
  %v187 = vld [vmem:[%s1 + $0x208] sm:$0xf]
  %v188 = vld [vmem:[%s1 + $0x20c] sm:$0xf]
  %v189 = vld [vmem:[%s1 + $0x210] sm:$0xf]
  %v190 = vld [vmem:[%s1 + $0x214] sm:$0xf]
  %v191 = vld [vmem:[%s1 + $0x218] sm:$0xf]
  %v192 = vld [vmem:[%s1 + $0x21c] sm:$0xf]
  %v193 = vld [vmem:[%s1 + $0x220] sm:$0xf]
  %v194 = vld [vmem:[%s1 + $0x224] sm:$0xf]
  %v195 = vld [vmem:[%s1 + $0x228] sm:$0xf]
  %v196 = vld [vmem:[%s1 + $0x22c] sm:$0xf]
  %v197 = vld [vmem:[%s1 + $0x230] sm:$0xf]
  %v198 = vld [vmem:[%s1 + $0x234] sm:$0xf]
  %v199 = vld [vmem:[%s1 + $0x238] sm:$0xf]
  %v200 = vld [vmem:[%s1 + $0x23c] sm:$0xf]
  %v201 = vld [vmem:[%s1 + $0x240] sm:$0xf]
  %v202 = vld [vmem:[%s1 + $0x244] sm:$0xf]
  %v203 = vld [vmem:[%s1 + $0x248] sm:$0xf]
  %v204 = vld [vmem:[%s1 + $0x24c] sm:$0xf]
  %v205 = vld [vmem:[%s1 + $0x250] sm:$0xf]
  %v206 = vld [vmem:[%s1 + $0x254] sm:$0xf]
  %v207 = vld [vmem:[%s1 + $0x258] sm:$0xf]
  %v208 = vld [vmem:[%s1 + $0x25c] sm:$0xf]
  %v209 = vld [vmem:[%s1 + $0x260] sm:$0xf]
  %v210 = vld [vmem:[%s1 + $0x264] sm:$0xf]
  %v211 = vld [vmem:[%s1 + $0x268] sm:$0xf]
  %v212 = vld [vmem:[%s1 + $0x26c] sm:$0xf]
  %v213 = vld [vmem:[%s1 + $0x270] sm:$0xf]
  %v214 = vld [vmem:[%s1 + $0x274] sm:$0xf]
  %v215 = vld [vmem:[%s1 + $0x278] sm:$0xf]
  %v216 = vld [vmem:[%s1 + $0x27c] sm:$0xf]
  %v217 = vld [vmem:[%s1 + $0x280] sm:$0xf]
  %v218 = vld [vmem:[%s1 + $0x284] sm:$0xf]
  %v219 = vld [vmem:[%s1 + $0x288] sm:$0xf]
  %v220 = vld [vmem:[%s1 + $0x28c] sm:$0xf]
  %v221 = vld [vmem:[%s1 + $0x290] sm:$0xf]
  %v222 = vld [vmem:[%s1 + $0x294] sm:$0xf]
  %v223 = vld [vmem:[%s1 + $0x298] sm:$0xf]
  %v224 = vld [vmem:[%s1 + $0x29c] sm:$0xf]
  %v225 = vld [vmem:[%s1 + $0x2a0] sm:$0xf]
  %v226 = vld [vmem:[%s1 + $0x2a4] sm:$0xf]
  %v227 = vld [vmem:[%s1 + $0x2a8] sm:$0xf]
  %v228 = vld [vmem:[%s1 + $0x2ac] sm:$0x3]
  %v229 = vld [vmem:[%s2] sm:$0x1]
  %v231 = vlaneseq
  %v232 = vshrl.u32 %v231, 7
  %v233 = vsub.s32 0, %v232
  %v234 = vrot.slane %v229, %v233
  %v242 = vunpack.c.l.b16 %v51
  %v243 = vunpack.c.h.b16 %v51
  %v244 = vunpack.c.l.b16 %v52
  %v245 = vunpack.c.h.b16 %v52
  %v246 = vunpack.c.l.b16 %v53
  %v247 = vunpack.c.h.b16 %v53
  %v248 = vunpack.c.l.b16 %v54
  %v249 = vunpack.c.h.b16 %v54
  %v250 = vunpack.c.l.b16 %v55
  %v251 = vunpack.c.h.b16 %v55
  %v252 = vunpack.c.l.b16 %v56
  %v253 = vpack.c.b16 %v242, %v242
  %v254 = vpack.c.b16 %v243, %v243
  %v255 = vpack.c.b16 %v244, %v244
  %v256 = vpack.c.b16 %v245, %v245
  %v257 = vpack.c.b16 %v246, %v246
  %v258 = vpack.c.b16 %v247, %v247
  %v259 = vpack.c.b16 %v248, %v248
  %v260 = vpack.c.b16 %v249, %v249
  %v261 = vpack.c.b16 %v250, %v250
  %v262 = vpack.c.b16 %v251, %v251
  %v263 = vpack.c.b16 %v252, %v252
  %v446 = vunpack.c.l.b16 %v57
  %v447 = vunpack.c.l.b16 %v58
  %v448 = vunpack.c.l.b16 %v59
  %v449 = vunpack.c.l.b16 %v60
  %v450 = vunpack.c.l.b16 %v61
  %v451 = vunpack.c.l.b16 %v62
  %v452 = vunpack.c.l.b16 %v63
  %v453 = vunpack.c.l.b16 %v64
  %v454 = vunpack.c.l.b16 %v65
  %v455 = vunpack.c.l.b16 %v66
  %v456 = vunpack.c.l.b16 %v67
  %v457 = vunpack.c.l.b16 %v68
  %v458 = vunpack.c.l.b16 %v69
  %v459 = vunpack.c.l.b16 %v70
  %v460 = vunpack.c.l.b16 %v71
  %v461 = vunpack.c.l.b16 %v72
  %v462 = vunpack.c.l.b16 %v73
  %v463 = vunpack.c.l.b16 %v74
  %v464 = vunpack.c.l.b16 %v75
  %v465 = vunpack.c.l.b16 %v76
  %v466 = vunpack.c.l.b16 %v77
  %v467 = vunpack.c.l.b16 %v78
  %v468 = vunpack.c.l.b16 %v79
  %v469 = vunpack.c.l.b16 %v80
  %v470 = vunpack.c.l.b16 %v81
  %v471 = vunpack.c.l.b16 %v82
  %v472 = vunpack.c.l.b16 %v83
  %v473 = vunpack.c.l.b16 %v84
  %v474 = vunpack.c.l.b16 %v85
  %v475 = vunpack.c.l.b16 %v86
  %v476 = vunpack.c.l.b16 %v87
  %v477 = vunpack.c.l.b16 %v88
  %v478 = vunpack.c.l.b16 %v89
  %v479 = vunpack.c.l.b16 %v90
  %v480 = vunpack.c.l.b16 %v91
  %v481 = vunpack.c.l.b16 %v92
  %v482 = vunpack.c.l.b16 %v93
  %v483 = vunpack.c.l.b16 %v94
  %v484 = vunpack.c.l.b16 %v95
  %v485 = vunpack.c.l.b16 %v96
  %v486 = vunpack.c.l.b16 %v97
  %v487 = vunpack.c.l.b16 %v98
  %v488 = vunpack.c.l.b16 %v99
  %v489 = vunpack.c.l.b16 %v100
  %v490 = vunpack.c.l.b16 %v101
  %v491 = vunpack.c.l.b16 %v102
  %v492 = vunpack.c.l.b16 %v103
  %v493 = vunpack.c.l.b16 %v104
  %v494 = vunpack.c.l.b16 %v105
  %v495 = vunpack.c.l.b16 %v106
  %v496 = vunpack.c.l.b16 %v107
  %v497 = vunpack.c.l.b16 %v108
  %v498 = vunpack.c.l.b16 %v109
  %v499 = vunpack.c.l.b16 %v110
  %v500 = vunpack.c.l.b16 %v111
  %v501 = vunpack.c.l.b16 %v112
  %v502 = vunpack.c.l.b16 %v113
  %v503 = vunpack.c.l.b16 %v114
  %v504 = vunpack.c.l.b16 %v115
  %v505 = vunpack.c.l.b16 %v116
  %v506 = vunpack.c.l.b16 %v117
  %v507 = vunpack.c.l.b16 %v118
  %v508 = vunpack.c.l.b16 %v119
  %v509 = vunpack.c.l.b16 %v120
  %v510 = vunpack.c.l.b16 %v121
  %v511 = vunpack.c.l.b16 %v122
  %v512 = vunpack.c.l.b16 %v123
  %v513 = vunpack.c.l.b16 %v124
  %v514 = vunpack.c.l.b16 %v125
  %v515 = vunpack.c.l.b16 %v126
  %v516 = vunpack.c.l.b16 %v127
  %v517 = vunpack.c.l.b16 %v128
  %v518 = vunpack.c.l.b16 %v129
  %v519 = vunpack.c.l.b16 %v130
  %v520 = vunpack.c.l.b16 %v131
  %v521 = vunpack.c.l.b16 %v132
  %v522 = vunpack.c.l.b16 %v133
  %v523 = vunpack.c.l.b16 %v134
  %v524 = vunpack.c.l.b16 %v135
  %v525 = vunpack.c.l.b16 %v136
  %v526 = vunpack.c.l.b16 %v137
  %v527 = vunpack.c.l.b16 %v138
  %v528 = vunpack.c.l.b16 %v139
  %v529 = vunpack.c.l.b16 %v140
  %v530 = vunpack.c.l.b16 %v141
  %v531 = vunpack.c.l.b16 %v142
  %v532 = vunpack.c.l.b16 %v143
  %v533 = vunpack.c.l.b16 %v144
  %v534 = vunpack.c.l.b16 %v145
  %v535 = vunpack.c.l.b16 %v146
  %v536 = vunpack.c.l.b16 %v147
  %v537 = vunpack.c.l.b16 %v148
  %v538 = vunpack.c.l.b16 %v149
  %v539 = vunpack.c.l.b16 %v150
  %v540 = vunpack.c.l.b16 %v151
  %v541 = vunpack.c.l.b16 %v152
  %v542 = vunpack.c.l.b16 %v153
  %v543 = vunpack.c.l.b16 %v154
  %v544 = vunpack.c.l.b16 %v155
  %v545 = vunpack.c.l.b16 %v156
  %v546 = vunpack.c.l.b16 %v157
  %v547 = vunpack.c.l.b16 %v158
  %v548 = vunpack.c.l.b16 %v159
  %v549 = vunpack.c.l.b16 %v160
  %v550 = vunpack.c.l.b16 %v161
  %v551 = vunpack.c.l.b16 %v162
  %v552 = vunpack.c.l.b16 %v163
  %v553 = vunpack.c.l.b16 %v164
  %v554 = vunpack.c.l.b16 %v165
  %v555 = vunpack.c.l.b16 %v166
  %v556 = vunpack.c.l.b16 %v167
  %v557 = vunpack.c.l.b16 %v168
  %v558 = vunpack.c.l.b16 %v169
  %v559 = vunpack.c.l.b16 %v170
  %v560 = vunpack.c.l.b16 %v171
  %v561 = vunpack.c.l.b16 %v172
  %v562 = vunpack.c.l.b16 %v173
  %v563 = vunpack.c.l.b16 %v174
  %v564 = vunpack.c.l.b16 %v175
  %v565 = vunpack.c.l.b16 %v176
  %v566 = vunpack.c.l.b16 %v177
  %v567 = vunpack.c.l.b16 %v178
  %v568 = vunpack.c.l.b16 %v179
  %v569 = vunpack.c.l.b16 %v180
  %v570 = vunpack.c.l.b16 %v181
  %v571 = vunpack.c.l.b16 %v182
  %v572 = vunpack.c.l.b16 %v183
  %v573 = vunpack.c.l.b16 %v184
  %v574 = vunpack.c.l.b16 %v185
  %v575 = vunpack.c.l.b16 %v186
  %v576 = vunpack.c.l.b16 %v187
  %v577 = vunpack.c.l.b16 %v188
  %v578 = vunpack.c.l.b16 %v189
  %v579 = vunpack.c.l.b16 %v190
  %v580 = vunpack.c.l.b16 %v191
  %v581 = vunpack.c.l.b16 %v192
  %v582 = vunpack.c.l.b16 %v193
  %v583 = vunpack.c.l.b16 %v194
  %v584 = vunpack.c.l.b16 %v195
  %v585 = vunpack.c.l.b16 %v196
  %v586 = vunpack.c.l.b16 %v197
  %v587 = vunpack.c.l.b16 %v198
  %v588 = vunpack.c.l.b16 %v199
  %v589 = vunpack.c.l.b16 %v200
  %v590 = vunpack.c.l.b16 %v201
  %v591 = vunpack.c.l.b16 %v202
  %v592 = vunpack.c.l.b16 %v203
  %v593 = vunpack.c.l.b16 %v204
  %v594 = vunpack.c.l.b16 %v205
  %v595 = vunpack.c.l.b16 %v206
  %v596 = vunpack.c.l.b16 %v207
  %v597 = vunpack.c.l.b16 %v208
  %v598 = vunpack.c.l.b16 %v209
  %v599 = vunpack.c.l.b16 %v210
  %v600 = vunpack.c.l.b16 %v211
  %v601 = vunpack.c.l.b16 %v212
  %v602 = vunpack.c.l.b16 %v213
  %v603 = vunpack.c.l.b16 %v214
  %v604 = vunpack.c.l.b16 %v215
  %v605 = vunpack.c.l.b16 %v216
  %v606 = vunpack.c.l.b16 %v217
  %v607 = vunpack.c.l.b16 %v218
  %v608 = vunpack.c.l.b16 %v219
  %v609 = vunpack.c.l.b16 %v220
  %v610 = vunpack.c.l.b16 %v221
  %v611 = vunpack.c.l.b16 %v222
  %v612 = vunpack.c.l.b16 %v223
  %v613 = vunpack.c.l.b16 %v224
  %v614 = vunpack.c.l.b16 %v225
  %v615 = vunpack.c.l.b16 %v226
  %v616 = vunpack.c.l.b16 %v227
  %v617 = vunpack.c.l.b16 %v228
  %v618 = vpack.c.b16 %v447, %v446
  %v619 = vpack.c.b16 %v449, %v448
  %v620 = vpack.c.b16 %v451, %v450
  %v621 = vpack.c.b16 %v453, %v452
  %v622 = vpack.c.b16 %v455, %v454
  %v623 = vpack.c.b16 %v457, %v456
  %v624 = vpack.c.b16 %v459, %v458
  %v625 = vpack.c.b16 %v461, %v460
  %v626 = vpack.c.b16 %v463, %v462
  %v627 = vpack.c.b16 %v465, %v464
  %v628 = vpack.c.b16 %v467, %v466
  %v629 = vpack.c.b16 %v469, %v468
  %v630 = vpack.c.b16 %v471, %v470
  %v631 = vpack.c.b16 %v473, %v472
  %v632 = vpack.c.b16 %v475, %v474
  %v633 = vpack.c.b16 %v477, %v476
  %v634 = vpack.c.b16 %v479, %v478
  %v635 = vpack.c.b16 %v481, %v480
  %v636 = vpack.c.b16 %v483, %v482
  %v637 = vpack.c.b16 %v485, %v484
  %v638 = vpack.c.b16 %v487, %v486
  %v639 = vpack.c.b16 %v489, %v488
  %v640 = vpack.c.b16 %v491, %v490
  %v641 = vpack.c.b16 %v493, %v492
  %v642 = vpack.c.b16 %v495, %v494
  %v643 = vpack.c.b16 %v497, %v496
  %v644 = vpack.c.b16 %v499, %v498
  %v645 = vpack.c.b16 %v501, %v500
  %v646 = vpack.c.b16 %v503, %v502
  %v647 = vpack.c.b16 %v505, %v504
  %v648 = vpack.c.b16 %v507, %v506
  %v649 = vpack.c.b16 %v509, %v508
  %v650 = vpack.c.b16 %v511, %v510
  %v651 = vpack.c.b16 %v513, %v512
  %v652 = vpack.c.b16 %v515, %v514
  %v653 = vpack.c.b16 %v517, %v516
  %v654 = vpack.c.b16 %v519, %v518
  %v655 = vpack.c.b16 %v521, %v520
  %v656 = vpack.c.b16 %v523, %v522
  %v657 = vpack.c.b16 %v525, %v524
  %v658 = vpack.c.b16 %v527, %v526
  %v659 = vpack.c.b16 %v529, %v528
  %v660 = vpack.c.b16 %v531, %v530
  %v661 = vpack.c.b16 %v533, %v532
  %v662 = vpack.c.b16 %v535, %v534
  %v663 = vpack.c.b16 %v537, %v536
  %v664 = vpack.c.b16 %v539, %v538
  %v665 = vpack.c.b16 %v541, %v540
  %v666 = vpack.c.b16 %v543, %v542
  %v667 = vpack.c.b16 %v545, %v544
  %v668 = vpack.c.b16 %v547, %v546
  %v669 = vpack.c.b16 %v549, %v548
  %v670 = vpack.c.b16 %v551, %v550
  %v671 = vpack.c.b16 %v553, %v552
  %v672 = vpack.c.b16 %v555, %v554
  %v673 = vpack.c.b16 %v557, %v556
  %v674 = vpack.c.b16 %v559, %v558
  %v675 = vpack.c.b16 %v561, %v560
  %v676 = vpack.c.b16 %v563, %v562
  %v677 = vpack.c.b16 %v565, %v564
  %v678 = vpack.c.b16 %v567, %v566
  %v679 = vpack.c.b16 %v569, %v568
  %v680 = vpack.c.b16 %v571, %v570
  %v681 = vpack.c.b16 %v573, %v572
  %v682 = vpack.c.b16 %v575, %v574
  %v683 = vpack.c.b16 %v577, %v576
  %v684 = vpack.c.b16 %v579, %v578
  %v685 = vpack.c.b16 %v581, %v580
  %v686 = vpack.c.b16 %v583, %v582
  %v687 = vpack.c.b16 %v585, %v584
  %v688 = vpack.c.b16 %v587, %v586
  %v689 = vpack.c.b16 %v589, %v588
  %v690 = vpack.c.b16 %v591, %v590
  %v691 = vpack.c.b16 %v593, %v592
  %v692 = vpack.c.b16 %v595, %v594
  %v693 = vpack.c.b16 %v597, %v596
  %v694 = vpack.c.b16 %v599, %v598
  %v695 = vpack.c.b16 %v601, %v600
  %v696 = vpack.c.b16 %v603, %v602
  %v697 = vpack.c.b16 %v605, %v604
  %v698 = vpack.c.b16 %v607, %v606
  %v699 = vpack.c.b16 %v609, %v608
  %v700 = vpack.c.b16 %v611, %v610
  %v701 = vpack.c.b16 %v613, %v612
  %v702 = vpack.c.b16 %v615, %v614
  %v703 = vpack.c.b16 %v617, %v616
  %vm789 = vcmask 752640
  %v791 = vsel %vm789, %v263, 0
  %vm793 = vcmask 1045504
  %v795 = vsel %vm793, %v703, 0
  %797 = vmatprep.subr.bf16.mxu0 0
  %798 = vmatpush1.bf16.msra.mxu0 %v625
  %799 = vmatprep.subr.bf16.mxu0 0
  %800 = vmatpush1.bf16.msra.mxu0 %v624
  %801 = vmatprep.subr.bf16.mxu0 0
  %802 = vmatpush1.bf16.msra.mxu0 %v623
  %803 = vmatprep.subr.bf16.mxu0 0
  %804 = vmatpush1.bf16.msra.mxu0 %v622
  %805 = vmatprep.subr.bf16.mxu0 0
  %806 = vmatpush1.bf16.msra.mxu0 %v621
  %807 = vmatprep.subr.bf16.mxu0 0
  %808 = vmatpush1.bf16.msra.mxu0 %v620
  %809 = vmatprep.subr.bf16.mxu0 0
  %810 = vmatpush1.bf16.msra.mxu0 %v619
  %811 = vmatprep.subr.bf16.mxu0 0
  %812 = vmatpush1.bf16.msra.mxu0 %v618
  %813 = vmatprep.subr.bf16.mxu0 0
  %814 = vmatpush2.bf16.msra.mxu0 %v633
  %815 = vmatprep.subr.bf16.mxu0 0
  %816 = vmatpush2.bf16.msra.mxu0 %v632
  %817 = vmatprep.subr.bf16.mxu0 0
  %818 = vmatpush2.bf16.msra.mxu0 %v631
  %819 = vmatprep.subr.bf16.mxu0 0
  %820 = vmatpush2.bf16.msra.mxu0 %v630
  %821 = vmatprep.subr.bf16.mxu0 0
  %822 = vmatpush2.bf16.msra.mxu0 %v629
  %823 = vmatprep.subr.bf16.mxu0 0
  %824 = vmatpush2.bf16.msra.mxu0 %v628
  %825 = vmatprep.subr.bf16.mxu0 0
  %826 = vmatpush2.bf16.msra.mxu0 %v627
  %827 = vmatprep.subr.bf16.mxu0 0
  %828 = vmatpush2.bf16.msra.mxu0 %v626
  %829 = vmatprep.mubr.bf16.mxu0 %v254
  %830 = vmatmul.mubr.bf16.gmra.mxu0 %v253
  %v831 = vpop.f32.mrf.mxu0
  %v832 = vadd.f32 %v234, %v831
  %v833 = vpop.f32.mrf.mxu0
  %v834 = vpop.f32.mrf.mxu0
  %v835 = vpop.f32.mrf.mxu0
  %836 = vdwg.mxu0
  %837 = vmatprep.subr.bf16.mxu0 0
  %838 = vmatpush1.bf16.msra.mxu0 %v641
  %839 = vmatprep.subr.bf16.mxu0 0
  %840 = vmatpush1.bf16.msra.mxu0 %v640
  %841 = vmatprep.subr.bf16.mxu0 0
  %842 = vmatpush1.bf16.msra.mxu0 %v639
  %843 = vmatprep.subr.bf16.mxu0 0
  %844 = vmatpush1.bf16.msra.mxu0 %v638
  %845 = vmatprep.subr.bf16.mxu0 0
  %846 = vmatpush1.bf16.msra.mxu0 %v637
  %847 = vmatprep.subr.bf16.mxu0 0
  %848 = vmatpush1.bf16.msra.mxu0 %v636
  %849 = vmatprep.subr.bf16.mxu0 0
  %850 = vmatpush1.bf16.msra.mxu0 %v635
  %851 = vmatprep.subr.bf16.mxu0 0
  %852 = vmatpush1.bf16.msra.mxu0 %v634
  %853 = vmatprep.subr.bf16.mxu0 0
  %854 = vmatpush2.bf16.msra.mxu0 %v649
  %855 = vmatprep.subr.bf16.mxu0 0
  %856 = vmatpush2.bf16.msra.mxu0 %v648
  %857 = vmatprep.subr.bf16.mxu0 0
  %858 = vmatpush2.bf16.msra.mxu0 %v647
  %859 = vmatprep.subr.bf16.mxu0 0
  %860 = vmatpush2.bf16.msra.mxu0 %v646
  %861 = vmatprep.subr.bf16.mxu0 0
  %862 = vmatpush2.bf16.msra.mxu0 %v645
  %863 = vmatprep.subr.bf16.mxu0 0
  %864 = vmatpush2.bf16.msra.mxu0 %v644
  %865 = vmatprep.subr.bf16.mxu0 0
  %866 = vmatpush2.bf16.msra.mxu0 %v643
  %867 = vmatprep.subr.bf16.mxu0 0
  %868 = vmatpush2.bf16.msra.mxu0 %v642
  %869 = vmatprep.mubr.bf16.mxu0 %v256
  %870 = vmatmul.mubr.bf16.gmra.mxu0 %v255
  %v871 = vpop.f32.mrf.mxu0
  %v872 = vadd.f32 %v832, %v871
  %v873 = vpop.f32.mrf.mxu0
  %v874 = vpop.f32.mrf.mxu0
  %v875 = vpop.f32.mrf.mxu0
  %876 = vdwg.mxu0
  %877 = vmatprep.subr.bf16.mxu0 0
  %878 = vmatpush1.bf16.msra.mxu0 %v657
  %879 = vmatprep.subr.bf16.mxu0 0
  %880 = vmatpush1.bf16.msra.mxu0 %v656
  %881 = vmatprep.subr.bf16.mxu0 0
  %882 = vmatpush1.bf16.msra.mxu0 %v655
  %883 = vmatprep.subr.bf16.mxu0 0
  %884 = vmatpush1.bf16.msra.mxu0 %v654
  %885 = vmatprep.subr.bf16.mxu0 0
  %886 = vmatpush1.bf16.msra.mxu0 %v653
  %887 = vmatprep.subr.bf16.mxu0 0
  %888 = vmatpush1.bf16.msra.mxu0 %v652
  %889 = vmatprep.subr.bf16.mxu0 0
  %890 = vmatpush1.bf16.msra.mxu0 %v651
  %891 = vmatprep.subr.bf16.mxu0 0
  %892 = vmatpush1.bf16.msra.mxu0 %v650
  %893 = vmatprep.subr.bf16.mxu0 0
  %894 = vmatpush2.bf16.msra.mxu0 %v665
  %895 = vmatprep.subr.bf16.mxu0 0
  %896 = vmatpush2.bf16.msra.mxu0 %v664
  %897 = vmatprep.subr.bf16.mxu0 0
  %898 = vmatpush2.bf16.msra.mxu0 %v663
  %899 = vmatprep.subr.bf16.mxu0 0
  %900 = vmatpush2.bf16.msra.mxu0 %v662
  %901 = vmatprep.subr.bf16.mxu0 0
  %902 = vmatpush2.bf16.msra.mxu0 %v661
  %903 = vmatprep.subr.bf16.mxu0 0
  %904 = vmatpush2.bf16.msra.mxu0 %v660
  %905 = vmatprep.subr.bf16.mxu0 0
  %906 = vmatpush2.bf16.msra.mxu0 %v659
  %907 = vmatprep.subr.bf16.mxu0 0
  %908 = vmatpush2.bf16.msra.mxu0 %v658
  %909 = vmatprep.mubr.bf16.mxu0 %v258
  %910 = vmatmul.mubr.bf16.gmra.mxu0 %v257
  %v911 = vpop.f32.mrf.mxu0
  %v912 = vadd.f32 %v872, %v911
  %v913 = vpop.f32.mrf.mxu0
  %v914 = vpop.f32.mrf.mxu0
  %v915 = vpop.f32.mrf.mxu0
  %916 = vdwg.mxu0
  %917 = vmatprep.subr.bf16.mxu0 0
  %918 = vmatpush1.bf16.msra.mxu0 %v673
  %919 = vmatprep.subr.bf16.mxu0 0
  %920 = vmatpush1.bf16.msra.mxu0 %v672
  %921 = vmatprep.subr.bf16.mxu0 0
  %922 = vmatpush1.bf16.msra.mxu0 %v671
  %923 = vmatprep.subr.bf16.mxu0 0
  %924 = vmatpush1.bf16.msra.mxu0 %v670
  %925 = vmatprep.subr.bf16.mxu0 0
  %926 = vmatpush1.bf16.msra.mxu0 %v669
  %927 = vmatprep.subr.bf16.mxu0 0
  %928 = vmatpush1.bf16.msra.mxu0 %v668
  %929 = vmatprep.subr.bf16.mxu0 0
  %930 = vmatpush1.bf16.msra.mxu0 %v667
  %931 = vmatprep.subr.bf16.mxu0 0
  %932 = vmatpush1.bf16.msra.mxu0 %v666
  %933 = vmatprep.subr.bf16.mxu0 0
  %934 = vmatpush2.bf16.msra.mxu0 %v681
  %935 = vmatprep.subr.bf16.mxu0 0
  %936 = vmatpush2.bf16.msra.mxu0 %v680
  %937 = vmatprep.subr.bf16.mxu0 0
  %938 = vmatpush2.bf16.msra.mxu0 %v679
  %939 = vmatprep.subr.bf16.mxu0 0
  %940 = vmatpush2.bf16.msra.mxu0 %v678
  %941 = vmatprep.subr.bf16.mxu0 0
  %942 = vmatpush2.bf16.msra.mxu0 %v677
  %943 = vmatprep.subr.bf16.mxu0 0
  %944 = vmatpush2.bf16.msra.mxu0 %v676
  %945 = vmatprep.subr.bf16.mxu0 0
  %946 = vmatpush2.bf16.msra.mxu0 %v675
  %947 = vmatprep.subr.bf16.mxu0 0
  %948 = vmatpush2.bf16.msra.mxu0 %v674
  %949 = vmatprep.mubr.bf16.mxu0 %v260
  %950 = vmatmul.mubr.bf16.gmra.mxu0 %v259
  %v951 = vpop.f32.mrf.mxu0
  %v952 = vadd.f32 %v912, %v951
  %v953 = vpop.f32.mrf.mxu0
  %v954 = vpop.f32.mrf.mxu0
  %v955 = vpop.f32.mrf.mxu0
  %956 = vdwg.mxu0
  %957 = vmatprep.subr.bf16.mxu0 0
  %958 = vmatpush1.bf16.msra.mxu0 %v689
  %959 = vmatprep.subr.bf16.mxu0 0
  %960 = vmatpush1.bf16.msra.mxu0 %v688
  %961 = vmatprep.subr.bf16.mxu0 0
  %962 = vmatpush1.bf16.msra.mxu0 %v687
  %963 = vmatprep.subr.bf16.mxu0 0
  %964 = vmatpush1.bf16.msra.mxu0 %v686
  %965 = vmatprep.subr.bf16.mxu0 0
  %966 = vmatpush1.bf16.msra.mxu0 %v685
  %967 = vmatprep.subr.bf16.mxu0 0
  %968 = vmatpush1.bf16.msra.mxu0 %v684
  %969 = vmatprep.subr.bf16.mxu0 0
  %970 = vmatpush1.bf16.msra.mxu0 %v683
  %971 = vmatprep.subr.bf16.mxu0 0
  %972 = vmatpush1.bf16.msra.mxu0 %v682
  %973 = vmatprep.subr.bf16.mxu0 0
  %974 = vmatpush2.bf16.msra.mxu0 %v697
  %975 = vmatprep.subr.bf16.mxu0 0
  %976 = vmatpush2.bf16.msra.mxu0 %v696
  %977 = vmatprep.subr.bf16.mxu0 0
  %978 = vmatpush2.bf16.msra.mxu0 %v695
  %979 = vmatprep.subr.bf16.mxu0 0
  %980 = vmatpush2.bf16.msra.mxu0 %v694
  %981 = vmatprep.subr.bf16.mxu0 0
  %982 = vmatpush2.bf16.msra.mxu0 %v693
  %983 = vmatprep.subr.bf16.mxu0 0
  %984 = vmatpush2.bf16.msra.mxu0 %v692
  %985 = vmatprep.subr.bf16.mxu0 0
  %986 = vmatpush2.bf16.msra.mxu0 %v691
  %987 = vmatprep.subr.bf16.mxu0 0
  %988 = vmatpush2.bf16.msra.mxu0 %v690
  %989 = vmatprep.mubr.bf16.mxu0 %v262
  %990 = vmatmul.mubr.bf16.gmra.mxu0 %v261
  %v991 = vpop.f32.mrf.mxu0
  %v992 = vadd.f32 %v952, %v991
  %v993 = vpop.f32.mrf.mxu0
  %v994 = vpop.f32.mrf.mxu0
  %v995 = vpop.f32.mrf.mxu0
  %996 = vdwg.mxu0
  %997 = vmatprep.subr.bf16.mxu0 0
  %998 = vmatpush1.bf16.msra.mxu0 0
  %999 = vmatprep.subr.bf16.mxu0 0
  %1000 = vmatpush1.bf16.msra.mxu0 0
  %1001 = vmatprep.subr.bf16.mxu0 0
  %1002 = vmatpush1.bf16.msra.mxu0 %v795
  %1003 = vmatprep.subr.bf16.mxu0 0
  %1004 = vmatpush1.bf16.msra.mxu0 %v702
  %1005 = vmatprep.subr.bf16.mxu0 0
  %1006 = vmatpush1.bf16.msra.mxu0 %v701
  %1007 = vmatprep.subr.bf16.mxu0 0
  %1008 = vmatpush1.bf16.msra.mxu0 %v700
  %1009 = vmatprep.subr.bf16.mxu0 0
  %1010 = vmatpush1.bf16.msra.mxu0 %v699
  %1011 = vmatprep.subr.bf16.mxu0 0
  %1012 = vmatpush1.bf16.msra.mxu0 %v698
  %1013 = vmatprep.subr.bf16.mxu0 0
  %1014 = vmatpush2.bf16.msra.mxu0 0
  %1015 = vmatprep.subr.bf16.mxu0 0
  %1016 = vmatpush2.bf16.msra.mxu0 0
  %1017 = vmatprep.subr.bf16.mxu0 0
  %1018 = vmatpush2.bf16.msra.mxu0 0
  %1019 = vmatprep.subr.bf16.mxu0 0
  %1020 = vmatpush2.bf16.msra.mxu0 0
  %1021 = vmatprep.subr.bf16.mxu0 0
  %1022 = vmatpush2.bf16.msra.mxu0 0
  %1023 = vmatprep.subr.bf16.mxu0 0
  %1024 = vmatpush2.bf16.msra.mxu0 0
  %1025 = vmatprep.subr.bf16.mxu0 0
  %1026 = vmatpush2.bf16.msra.mxu0 0
  %1027 = vmatprep.subr.bf16.mxu0 0
  %1028 = vmatpush2.bf16.msra.mxu0 0
  %1029 = vmatprep.mubr.bf16.mxu0 0
  %1030 = vmatmul.mubr.bf16.gmra.mxu0 %v791
  %v1031 = vpop.f32.mrf.mxu0
  %v1032 = vadd.f32 %v992, %v1031
  %v1033 = vpop.f32.mrf.mxu0
  %v1034 = vpop.f32.mrf.mxu0
  %v1035 = vpop.f32.mrf.mxu0
  %1036 = vdwg.mxu0
  %v1037 = vmax.f32 %v1032, 0.0
  %vm1038 = vcmask 261120
  %1039 = vst.msk [vmem:[%s15] sm:$0xff] %vm1038, %v1037
  %v1040 = vld [vmem:[%s3] sm:$0xff]
  %v1041 = vld [vmem:[%s3 + $0x8] sm:$0xff]
  %v1042 = vld [vmem:[%s3 + $0x10] sm:$0xff]
  %v1043 = vld [vmem:[%s3 + $0x18] sm:$0xff]
  %v1044 = vld [vmem:[%s3 + $0x20] sm:$0xff]
  %v1045 = vld [vmem:[%s3 + $0x28] sm:$0xff]
  %v1046 = vld [vmem:[%s3 + $0x30] sm:$0xf]
  %v1047 = vld [vmem:[%s4] sm:$0xf]
  %v1048 = vld [vmem:[%s4 + $0x4] sm:$0xf]
  %v1049 = vld [vmem:[%s4 + $0x8] sm:$0xf]
  %v1050 = vld [vmem:[%s4 + $0xc] sm:$0xf]
  %v1051 = vld [vmem:[%s4 + $0x10] sm:$0xf]
  %v1052 = vld [vmem:[%s4 + $0x14] sm:$0xf]
  %v1053 = vld [vmem:[%s4 + $0x18] sm:$0xf]
  %v1054 = vld [vmem:[%s4 + $0x1c] sm:$0xf]
  %v1055 = vld [vmem:[%s4 + $0x20] sm:$0xf]
  %v1056 = vld [vmem:[%s4 + $0x24] sm:$0xf]
  %v1057 = vld [vmem:[%s4 + $0x28] sm:$0xf]
  %v1058 = vld [vmem:[%s4 + $0x2c] sm:$0xf]
  %v1059 = vld [vmem:[%s4 + $0x30] sm:$0xf]
  %v1060 = vld [vmem:[%s4 + $0x34] sm:$0xf]
  %v1061 = vld [vmem:[%s4 + $0x38] sm:$0xf]
  %v1062 = vld [vmem:[%s4 + $0x3c] sm:$0xf]
  %v1063 = vld [vmem:[%s4 + $0x40] sm:$0xf]
  %v1064 = vld [vmem:[%s4 + $0x44] sm:$0xf]
  %v1065 = vld [vmem:[%s4 + $0x48] sm:$0xf]
  %v1066 = vld [vmem:[%s4 + $0x4c] sm:$0xf]
  %v1067 = vld [vmem:[%s4 + $0x50] sm:$0xf]
  %v1068 = vld [vmem:[%s4 + $0x54] sm:$0xf]
  %v1069 = vld [vmem:[%s4 + $0x58] sm:$0xf]
  %v1070 = vld [vmem:[%s4 + $0x5c] sm:$0xf]
  %v1071 = vld [vmem:[%s4 + $0x60] sm:$0xf]
  %v1072 = vld [vmem:[%s4 + $0x64] sm:$0xf]
  %v1073 = vld [vmem:[%s4 + $0x68] sm:$0xf]
  %v1074 = vld [vmem:[%s4 + $0x6c] sm:$0xf]
  %v1075 = vld [vmem:[%s4 + $0x70] sm:$0xf]
  %v1076 = vld [vmem:[%s4 + $0x74] sm:$0xf]
  %v1077 = vld [vmem:[%s4 + $0x78] sm:$0xf]
  %v1078 = vld [vmem:[%s4 + $0x7c] sm:$0xf]
  %v1079 = vld [vmem:[%s4 + $0x80] sm:$0xf]
  %v1080 = vld [vmem:[%s4 + $0x84] sm:$0xf]
  %v1081 = vld [vmem:[%s4 + $0x88] sm:$0xf]
  %v1082 = vld [vmem:[%s4 + $0x8c] sm:$0xf]
  %v1083 = vld [vmem:[%s4 + $0x90] sm:$0xf]
  %v1084 = vld [vmem:[%s4 + $0x94] sm:$0xf]
  %v1085 = vld [vmem:[%s4 + $0x98] sm:$0xf]
  %v1086 = vld [vmem:[%s4 + $0x9c] sm:$0xf]
  %v1087 = vld [vmem:[%s4 + $0xa0] sm:$0xf]
  %v1088 = vld [vmem:[%s4 + $0xa4] sm:$0xf]
  %v1089 = vld [vmem:[%s4 + $0xa8] sm:$0xf]
  %v1090 = vld [vmem:[%s4 + $0xac] sm:$0xf]
  %v1091 = vld [vmem:[%s4 + $0xb0] sm:$0xf]
  %v1092 = vld [vmem:[%s4 + $0xb4] sm:$0xf]
  %v1093 = vld [vmem:[%s4 + $0xb8] sm:$0xf]
  %v1094 = vld [vmem:[%s4 + $0xbc] sm:$0xf]
  %v1095 = vld [vmem:[%s4 + $0xc0] sm:$0xf]
  %v1096 = vld [vmem:[%s4 + $0xc4] sm:$0xf]
  %v1097 = vld [vmem:[%s4 + $0xc8] sm:$0xf]
  %v1098 = vld [vmem:[%s4 + $0xcc] sm:$0xf]
  %v1099 = vld [vmem:[%s4 + $0xd0] sm:$0xf]
  %v1100 = vld [vmem:[%s4 + $0xd4] sm:$0xf]
  %v1101 = vld [vmem:[%s4 + $0xd8] sm:$0xf]
  %v1102 = vld [vmem:[%s4 + $0xdc] sm:$0xf]
  %v1103 = vld [vmem:[%s4 + $0xe0] sm:$0xf]
  %v1104 = vld [vmem:[%s4 + $0xe4] sm:$0xf]
  %v1105 = vld [vmem:[%s4 + $0xe8] sm:$0xf]
  %v1106 = vld [vmem:[%s4 + $0xec] sm:$0xf]
  %v1107 = vld [vmem:[%s4 + $0xf0] sm:$0xf]
  %v1108 = vld [vmem:[%s4 + $0xf4] sm:$0xf]
  %v1109 = vld [vmem:[%s4 + $0xf8] sm:$0xf]
  %v1110 = vld [vmem:[%s4 + $0xfc] sm:$0xf]
  %v1111 = vld [vmem:[%s4 + $0x100] sm:$0xf]
  %v1112 = vld [vmem:[%s4 + $0x104] sm:$0xf]
  %v1113 = vld [vmem:[%s4 + $0x108] sm:$0xf]
  %v1114 = vld [vmem:[%s4 + $0x10c] sm:$0xf]
  %v1115 = vld [vmem:[%s4 + $0x110] sm:$0xf]
  %v1116 = vld [vmem:[%s4 + $0x114] sm:$0xf]
  %v1117 = vld [vmem:[%s4 + $0x118] sm:$0xf]
  %v1118 = vld [vmem:[%s4 + $0x11c] sm:$0xf]
  %v1119 = vld [vmem:[%s4 + $0x120] sm:$0xf]
  %v1120 = vld [vmem:[%s4 + $0x124] sm:$0xf]
  %v1121 = vld [vmem:[%s4 + $0x128] sm:$0xf]
  %v1122 = vld [vmem:[%s4 + $0x12c] sm:$0xf]
  %v1123 = vld [vmem:[%s4 + $0x130] sm:$0xf]
  %v1124 = vld [vmem:[%s4 + $0x134] sm:$0xf]
  %v1125 = vld [vmem:[%s4 + $0x138] sm:$0xf]
  %v1126 = vld [vmem:[%s4 + $0x13c] sm:$0xf]
  %v1127 = vld [vmem:[%s4 + $0x140] sm:$0xf]
  %v1128 = vld [vmem:[%s4 + $0x144] sm:$0xf]
  %v1129 = vld [vmem:[%s4 + $0x148] sm:$0xf]
  %v1130 = vld [vmem:[%s4 + $0x14c] sm:$0xf]
  %v1131 = vld [vmem:[%s4 + $0x150] sm:$0xf]
  %v1132 = vld [vmem:[%s4 + $0x154] sm:$0xf]
  %v1133 = vld [vmem:[%s4 + $0x158] sm:$0xf]
  %v1134 = vld [vmem:[%s4 + $0x15c] sm:$0xf]
  %v1135 = vld [vmem:[%s4 + $0x160] sm:$0xf]
  %v1136 = vld [vmem:[%s4 + $0x164] sm:$0xf]
  %v1137 = vld [vmem:[%s4 + $0x168] sm:$0xf]
  %v1138 = vld [vmem:[%s4 + $0x16c] sm:$0xf]
  %v1139 = vld [vmem:[%s4 + $0x170] sm:$0xf]
  %v1140 = vld [vmem:[%s4 + $0x174] sm:$0xf]
  %v1141 = vld [vmem:[%s4 + $0x178] sm:$0xf]
  %v1142 = vld [vmem:[%s4 + $0x17c] sm:$0xf]
  %v1143 = vld [vmem:[%s4 + $0x180] sm:$0xf]
  %v1144 = vld [vmem:[%s4 + $0x184] sm:$0xf]
  %v1145 = vld [vmem:[%s4 + $0x188] sm:$0xf]
  %v1146 = vld [vmem:[%s4 + $0x18c] sm:$0xf]
  %v1147 = vld [vmem:[%s4 + $0x190] sm:$0xf]
  %v1148 = vld [vmem:[%s4 + $0x194] sm:$0xf]
  %v1149 = vld [vmem:[%s4 + $0x198] sm:$0xf]
  %v1150 = vld [vmem:[%s4 + $0x19c] sm:$0xf]
  %v1151 = vld [vmem:[%s4 + $0x1a0] sm:$0xf]
  %v1152 = vld [vmem:[%s4 + $0x1a4] sm:$0xf]
  %v1153 = vld [vmem:[%s4 + $0x1a8] sm:$0xf]
  %v1154 = vld [vmem:[%s4 + $0x1ac] sm:$0xf]
  %v1155 = vld [vmem:[%s4 + $0x1b0] sm:$0xf]
  %v1156 = vld [vmem:[%s4 + $0x1b4] sm:$0xf]
  %v1157 = vld [vmem:[%s4 + $0x1b8] sm:$0xf]
  %v1158 = vld [vmem:[%s4 + $0x1bc] sm:$0xf]
  %v1159 = vld [vmem:[%s4 + $0x1c0] sm:$0xf]
  %v1160 = vld [vmem:[%s4 + $0x1c4] sm:$0xf]
  %v1161 = vld [vmem:[%s4 + $0x1c8] sm:$0xf]
  %v1162 = vld [vmem:[%s4 + $0x1cc] sm:$0xf]
  %v1163 = vld [vmem:[%s4 + $0x1d0] sm:$0xf]
  %v1164 = vld [vmem:[%s4 + $0x1d4] sm:$0xf]
  %v1165 = vld [vmem:[%s4 + $0x1d8] sm:$0xf]
  %v1166 = vld [vmem:[%s4 + $0x1dc] sm:$0xf]
  %v1167 = vld [vmem:[%s4 + $0x1e0] sm:$0xf]
  %v1168 = vld [vmem:[%s4 + $0x1e4] sm:$0xf]
  %v1169 = vld [vmem:[%s4 + $0x1e8] sm:$0xf]
  %v1170 = vld [vmem:[%s4 + $0x1ec] sm:$0xf]
  %v1171 = vld [vmem:[%s4 + $0x1f0] sm:$0xf]
  %v1172 = vld [vmem:[%s4 + $0x1f4] sm:$0xf]
  %v1173 = vld [vmem:[%s4 + $0x1f8] sm:$0xf]
  %v1174 = vld [vmem:[%s4 + $0x1fc] sm:$0xf]
  %v1175 = vld [vmem:[%s4 + $0x200] sm:$0xf]
  %v1176 = vld [vmem:[%s4 + $0x204] sm:$0xf]
  %v1177 = vld [vmem:[%s4 + $0x208] sm:$0xf]
  %v1178 = vld [vmem:[%s4 + $0x20c] sm:$0xf]
  %v1179 = vld [vmem:[%s4 + $0x210] sm:$0xf]
  %v1180 = vld [vmem:[%s4 + $0x214] sm:$0xf]
  %v1181 = vld [vmem:[%s4 + $0x218] sm:$0xf]
  %v1182 = vld [vmem:[%s4 + $0x21c] sm:$0xf]
  %v1183 = vld [vmem:[%s4 + $0x220] sm:$0xf]
  %v1184 = vld [vmem:[%s4 + $0x224] sm:$0xf]
  %v1185 = vld [vmem:[%s4 + $0x228] sm:$0xf]
  %v1186 = vld [vmem:[%s4 + $0x22c] sm:$0xf]
  %v1187 = vld [vmem:[%s4 + $0x230] sm:$0xf]
  %v1188 = vld [vmem:[%s4 + $0x234] sm:$0xf]
  %v1189 = vld [vmem:[%s4 + $0x238] sm:$0xf]
  %v1190 = vld [vmem:[%s4 + $0x23c] sm:$0xf]
  %v1191 = vld [vmem:[%s4 + $0x240] sm:$0xf]
  %v1192 = vld [vmem:[%s4 + $0x244] sm:$0xf]
  %v1193 = vld [vmem:[%s4 + $0x248] sm:$0xf]
  %v1194 = vld [vmem:[%s4 + $0x24c] sm:$0xf]
  %v1195 = vld [vmem:[%s4 + $0x250] sm:$0xf]
  %v1196 = vld [vmem:[%s4 + $0x254] sm:$0xf]
  %v1197 = vld [vmem:[%s4 + $0x258] sm:$0xf]
  %v1198 = vld [vmem:[%s4 + $0x25c] sm:$0xf]
  %v1199 = vld [vmem:[%s4 + $0x260] sm:$0xf]
  %v1200 = vld [vmem:[%s4 + $0x264] sm:$0xf]
  %v1201 = vld [vmem:[%s4 + $0x268] sm:$0xf]
  %v1202 = vld [vmem:[%s4 + $0x26c] sm:$0xf]
  %v1203 = vld [vmem:[%s4 + $0x270] sm:$0xf]
  %v1204 = vld [vmem:[%s4 + $0x274] sm:$0xf]
  %v1205 = vld [vmem:[%s4 + $0x278] sm:$0xf]
  %v1206 = vld [vmem:[%s4 + $0x27c] sm:$0xf]
  %v1207 = vld [vmem:[%s4 + $0x280] sm:$0xf]
  %v1208 = vld [vmem:[%s4 + $0x284] sm:$0xf]
  %v1209 = vld [vmem:[%s4 + $0x288] sm:$0xf]
  %v1210 = vld [vmem:[%s4 + $0x28c] sm:$0xf]
  %v1211 = vld [vmem:[%s4 + $0x290] sm:$0xf]
  %v1212 = vld [vmem:[%s4 + $0x294] sm:$0xf]
  %v1213 = vld [vmem:[%s4 + $0x298] sm:$0xf]
  %v1214 = vld [vmem:[%s4 + $0x29c] sm:$0xf]
  %v1215 = vld [vmem:[%s4 + $0x2a0] sm:$0xf]
  %v1216 = vld [vmem:[%s4 + $0x2a4] sm:$0xf]
  %v1217 = vld [vmem:[%s4 + $0x2a8] sm:$0xf]
  %v1218 = vld [vmem:[%s4 + $0x2ac] sm:$0xf]
  %v1219 = vld [vmem:[%s4 + $0x2b0] sm:$0xf]
  %v1220 = vld [vmem:[%s4 + $0x2b4] sm:$0xf]
  %v1221 = vld [vmem:[%s4 + $0x2b8] sm:$0xf]
  %v1222 = vld [vmem:[%s4 + $0x2bc] sm:$0xf]
  %v1223 = vld [vmem:[%s4 + $0x2c0] sm:$0xf]
  %v1224 = vld [vmem:[%s4 + $0x2c4] sm:$0xf]
  %v1225 = vld [vmem:[%s4 + $0x2c8] sm:$0xf]
  %v1226 = vld [vmem:[%s4 + $0x2cc] sm:$0xf]
  %v1227 = vld [vmem:[%s4 + $0x2d0] sm:$0xf]
  %v1228 = vld [vmem:[%s4 + $0x2d4] sm:$0xf]
  %v1229 = vld [vmem:[%s4 + $0x2d8] sm:$0xf]
  %v1230 = vld [vmem:[%s4 + $0x2dc] sm:$0xf]
  %v1231 = vld [vmem:[%s4 + $0x2e0] sm:$0xf]
  %v1232 = vld [vmem:[%s4 + $0x2e4] sm:$0xf]
  %v1233 = vld [vmem:[%s4 + $0x2e8] sm:$0xf]
  %v1234 = vld [vmem:[%s4 + $0x2ec] sm:$0xf]
  %v1235 = vld [vmem:[%s4 + $0x2f0] sm:$0xf]
  %v1236 = vld [vmem:[%s4 + $0x2f4] sm:$0xf]
  %v1237 = vld [vmem:[%s4 + $0x2f8] sm:$0xf]
  %v1238 = vld [vmem:[%s4 + $0x2fc] sm:$0xf]
  %v1239 = vld [vmem:[%s4 + $0x300] sm:$0xf]
  %v1240 = vld [vmem:[%s4 + $0x304] sm:$0xf]
  %v1241 = vld [vmem:[%s4 + $0x308] sm:$0xf]
  %v1242 = vld [vmem:[%s4 + $0x30c] sm:$0xf]
  %v1243 = vld [vmem:[%s4 + $0x310] sm:$0xf]
  %v1244 = vld [vmem:[%s4 + $0x314] sm:$0xf]
  %v1245 = vld [vmem:[%s4 + $0x318] sm:$0xf]
  %v1246 = vld [vmem:[%s4 + $0x31c] sm:$0xf]
  %v1247 = vld [vmem:[%s5] sm:$0x1]
  %v1249 = vlaneseq
  %v1250 = vshrl.u32 %v1249, 7
  %v1251 = vsub.s32 0, %v1250
  %v1252 = vrot.slane %v1247, %v1251
  %v1261 = vunpack.c.l.b16 %v1040
  %v1262 = vunpack.c.h.b16 %v1040
  %v1263 = vunpack.c.l.b16 %v1041
  %v1264 = vunpack.c.h.b16 %v1041
  %v1265 = vunpack.c.l.b16 %v1042
  %v1266 = vunpack.c.h.b16 %v1042
  %v1267 = vunpack.c.l.b16 %v1043
  %v1268 = vunpack.c.h.b16 %v1043
  %v1269 = vunpack.c.l.b16 %v1044
  %v1270 = vunpack.c.h.b16 %v1044
  %v1271 = vunpack.c.l.b16 %v1045
  %v1272 = vunpack.c.h.b16 %v1045
  %v1273 = vunpack.c.l.b16 %v1046
  %v1274 = vpack.c.b16 %v1261, %v1261
  %v1275 = vpack.c.b16 %v1262, %v1262
  %v1276 = vpack.c.b16 %v1263, %v1263
  %v1277 = vpack.c.b16 %v1264, %v1264
  %v1278 = vpack.c.b16 %v1265, %v1265
  %v1279 = vpack.c.b16 %v1266, %v1266
  %v1280 = vpack.c.b16 %v1267, %v1267
  %v1281 = vpack.c.b16 %v1268, %v1268
  %v1282 = vpack.c.b16 %v1269, %v1269
  %v1283 = vpack.c.b16 %v1270, %v1270
  %v1284 = vpack.c.b16 %v1271, %v1271
  %v1285 = vpack.c.b16 %v1272, %v1272
  %v1286 = vpack.c.b16 %v1273, %v1273
  %v1499 = vunpack.c.l.b16 %v1047
  %v1500 = vunpack.c.l.b16 %v1048
  %v1501 = vunpack.c.l.b16 %v1049
  %v1502 = vunpack.c.l.b16 %v1050
  %v1503 = vunpack.c.l.b16 %v1051
  %v1504 = vunpack.c.l.b16 %v1052
  %v1505 = vunpack.c.l.b16 %v1053
  %v1506 = vunpack.c.l.b16 %v1054
  %v1507 = vunpack.c.l.b16 %v1055
  %v1508 = vunpack.c.l.b16 %v1056
  %v1509 = vunpack.c.l.b16 %v1057
  %v1510 = vunpack.c.l.b16 %v1058
  %v1511 = vunpack.c.l.b16 %v1059
  %v1512 = vunpack.c.l.b16 %v1060
  %v1513 = vunpack.c.l.b16 %v1061
  %v1514 = vunpack.c.l.b16 %v1062
  %v1515 = vunpack.c.l.b16 %v1063
  %v1516 = vunpack.c.l.b16 %v1064
  %v1517 = vunpack.c.l.b16 %v1065
  %v1518 = vunpack.c.l.b16 %v1066
  %v1519 = vunpack.c.l.b16 %v1067
  %v1520 = vunpack.c.l.b16 %v1068
  %v1521 = vunpack.c.l.b16 %v1069
  %v1522 = vunpack.c.l.b16 %v1070
  %v1523 = vunpack.c.l.b16 %v1071
  %v1524 = vunpack.c.l.b16 %v1072
  %v1525 = vunpack.c.l.b16 %v1073
  %v1526 = vunpack.c.l.b16 %v1074
  %v1527 = vunpack.c.l.b16 %v1075
  %v1528 = vunpack.c.l.b16 %v1076
  %v1529 = vunpack.c.l.b16 %v1077
  %v1530 = vunpack.c.l.b16 %v1078
  %v1531 = vunpack.c.l.b16 %v1079
  %v1532 = vunpack.c.l.b16 %v1080
  %v1533 = vunpack.c.l.b16 %v1081
  %v1534 = vunpack.c.l.b16 %v1082
  %v1535 = vunpack.c.l.b16 %v1083
  %v1536 = vunpack.c.l.b16 %v1084
  %v1537 = vunpack.c.l.b16 %v1085
  %v1538 = vunpack.c.l.b16 %v1086
  %v1539 = vunpack.c.l.b16 %v1087
  %v1540 = vunpack.c.l.b16 %v1088
  %v1541 = vunpack.c.l.b16 %v1089
  %v1542 = vunpack.c.l.b16 %v1090
  %v1543 = vunpack.c.l.b16 %v1091
  %v1544 = vunpack.c.l.b16 %v1092
  %v1545 = vunpack.c.l.b16 %v1093
  %v1546 = vunpack.c.l.b16 %v1094
  %v1547 = vunpack.c.l.b16 %v1095
  %v1548 = vunpack.c.l.b16 %v1096
  %v1549 = vunpack.c.l.b16 %v1097
  %v1550 = vunpack.c.l.b16 %v1098
  %v1551 = vunpack.c.l.b16 %v1099
  %v1552 = vunpack.c.l.b16 %v1100
  %v1553 = vunpack.c.l.b16 %v1101
  %v1554 = vunpack.c.l.b16 %v1102
  %v1555 = vunpack.c.l.b16 %v1103
  %v1556 = vunpack.c.l.b16 %v1104
  %v1557 = vunpack.c.l.b16 %v1105
  %v1558 = vunpack.c.l.b16 %v1106
  %v1559 = vunpack.c.l.b16 %v1107
  %v1560 = vunpack.c.l.b16 %v1108
  %v1561 = vunpack.c.l.b16 %v1109
  %v1562 = vunpack.c.l.b16 %v1110
  %v1563 = vunpack.c.l.b16 %v1111
  %v1564 = vunpack.c.l.b16 %v1112
  %v1565 = vunpack.c.l.b16 %v1113
  %v1566 = vunpack.c.l.b16 %v1114
  %v1567 = vunpack.c.l.b16 %v1115
  %v1568 = vunpack.c.l.b16 %v1116
  %v1569 = vunpack.c.l.b16 %v1117
  %v1570 = vunpack.c.l.b16 %v1118
  %v1571 = vunpack.c.l.b16 %v1119
  %v1572 = vunpack.c.l.b16 %v1120
  %v1573 = vunpack.c.l.b16 %v1121
  %v1574 = vunpack.c.l.b16 %v1122
  %v1575 = vunpack.c.l.b16 %v1123
  %v1576 = vunpack.c.l.b16 %v1124
  %v1577 = vunpack.c.l.b16 %v1125
  %v1578 = vunpack.c.l.b16 %v1126
  %v1579 = vunpack.c.l.b16 %v1127
  %v1580 = vunpack.c.l.b16 %v1128
  %v1581 = vunpack.c.l.b16 %v1129
  %v1582 = vunpack.c.l.b16 %v1130
  %v1583 = vunpack.c.l.b16 %v1131
  %v1584 = vunpack.c.l.b16 %v1132
  %v1585 = vunpack.c.l.b16 %v1133
  %v1586 = vunpack.c.l.b16 %v1134
  %v1587 = vunpack.c.l.b16 %v1135
  %v1588 = vunpack.c.l.b16 %v1136
  %v1589 = vunpack.c.l.b16 %v1137
  %v1590 = vunpack.c.l.b16 %v1138
  %v1591 = vunpack.c.l.b16 %v1139
  %v1592 = vunpack.c.l.b16 %v1140
  %v1593 = vunpack.c.l.b16 %v1141
  %v1594 = vunpack.c.l.b16 %v1142
  %v1595 = vunpack.c.l.b16 %v1143
  %v1596 = vunpack.c.l.b16 %v1144
  %v1597 = vunpack.c.l.b16 %v1145
  %v1598 = vunpack.c.l.b16 %v1146
  %v1599 = vunpack.c.l.b16 %v1147
  %v1600 = vunpack.c.l.b16 %v1148
  %v1601 = vunpack.c.l.b16 %v1149
  %v1602 = vunpack.c.l.b16 %v1150
  %v1603 = vunpack.c.l.b16 %v1151
  %v1604 = vunpack.c.l.b16 %v1152
  %v1605 = vunpack.c.l.b16 %v1153
  %v1606 = vunpack.c.l.b16 %v1154
  %v1607 = vunpack.c.l.b16 %v1155
  %v1608 = vunpack.c.l.b16 %v1156
  %v1609 = vunpack.c.l.b16 %v1157
  %v1610 = vunpack.c.l.b16 %v1158
  %v1611 = vunpack.c.l.b16 %v1159
  %v1612 = vunpack.c.l.b16 %v1160
  %v1613 = vunpack.c.l.b16 %v1161
  %v1614 = vunpack.c.l.b16 %v1162
  %v1615 = vunpack.c.l.b16 %v1163
  %v1616 = vunpack.c.l.b16 %v1164
  %v1617 = vunpack.c.l.b16 %v1165
  %v1618 = vunpack.c.l.b16 %v1166
  %v1619 = vunpack.c.l.b16 %v1167
  %v1620 = vunpack.c.l.b16 %v1168
  %v1621 = vunpack.c.l.b16 %v1169
  %v1622 = vunpack.c.l.b16 %v1170
  %v1623 = vunpack.c.l.b16 %v1171
  %v1624 = vunpack.c.l.b16 %v1172
  %v1625 = vunpack.c.l.b16 %v1173
  %v1626 = vunpack.c.l.b16 %v1174
  %v1627 = vunpack.c.l.b16 %v1175
  %v1628 = vunpack.c.l.b16 %v1176
  %v1629 = vunpack.c.l.b16 %v1177
  %v1630 = vunpack.c.l.b16 %v1178
  %v1631 = vunpack.c.l.b16 %v1179
  %v1632 = vunpack.c.l.b16 %v1180
  %v1633 = vunpack.c.l.b16 %v1181
  %v1634 = vunpack.c.l.b16 %v1182
  %v1635 = vunpack.c.l.b16 %v1183
  %v1636 = vunpack.c.l.b16 %v1184
  %v1637 = vunpack.c.l.b16 %v1185
  %v1638 = vunpack.c.l.b16 %v1186
  %v1639 = vunpack.c.l.b16 %v1187
  %v1640 = vunpack.c.l.b16 %v1188
  %v1641 = vunpack.c.l.b16 %v1189
  %v1642 = vunpack.c.l.b16 %v1190
  %v1643 = vunpack.c.l.b16 %v1191
  %v1644 = vunpack.c.l.b16 %v1192
  %v1645 = vunpack.c.l.b16 %v1193
  %v1646 = vunpack.c.l.b16 %v1194
  %v1647 = vunpack.c.l.b16 %v1195
  %v1648 = vunpack.c.l.b16 %v1196
  %v1649 = vunpack.c.l.b16 %v1197
  %v1650 = vunpack.c.l.b16 %v1198
  %v1651 = vunpack.c.l.b16 %v1199
  %v1652 = vunpack.c.l.b16 %v1200
  %v1653 = vunpack.c.l.b16 %v1201
  %v1654 = vunpack.c.l.b16 %v1202
  %v1655 = vunpack.c.l.b16 %v1203
  %v1656 = vunpack.c.l.b16 %v1204
  %v1657 = vunpack.c.l.b16 %v1205
  %v1658 = vunpack.c.l.b16 %v1206
  %v1659 = vunpack.c.l.b16 %v1207
  %v1660 = vunpack.c.l.b16 %v1208
  %v1661 = vunpack.c.l.b16 %v1209
  %v1662 = vunpack.c.l.b16 %v1210
  %v1663 = vunpack.c.l.b16 %v1211
  %v1664 = vunpack.c.l.b16 %v1212
  %v1665 = vunpack.c.l.b16 %v1213
  %v1666 = vunpack.c.l.b16 %v1214
  %v1667 = vunpack.c.l.b16 %v1215
  %v1668 = vunpack.c.l.b16 %v1216
  %v1669 = vunpack.c.l.b16 %v1217
  %v1670 = vunpack.c.l.b16 %v1218
  %v1671 = vunpack.c.l.b16 %v1219
  %v1672 = vunpack.c.l.b16 %v1220
  %v1673 = vunpack.c.l.b16 %v1221
  %v1674 = vunpack.c.l.b16 %v1222
  %v1675 = vunpack.c.l.b16 %v1223
  %v1676 = vunpack.c.l.b16 %v1224
  %v1677 = vunpack.c.l.b16 %v1225
  %v1678 = vunpack.c.l.b16 %v1226
  %v1679 = vunpack.c.l.b16 %v1227
  %v1680 = vunpack.c.l.b16 %v1228
  %v1681 = vunpack.c.l.b16 %v1229
  %v1682 = vunpack.c.l.b16 %v1230
  %v1683 = vunpack.c.l.b16 %v1231
  %v1684 = vunpack.c.l.b16 %v1232
  %v1685 = vunpack.c.l.b16 %v1233
  %v1686 = vunpack.c.l.b16 %v1234
  %v1687 = vunpack.c.l.b16 %v1235
  %v1688 = vunpack.c.l.b16 %v1236
  %v1689 = vunpack.c.l.b16 %v1237
  %v1690 = vunpack.c.l.b16 %v1238
  %v1691 = vunpack.c.l.b16 %v1239
  %v1692 = vunpack.c.l.b16 %v1240
  %v1693 = vunpack.c.l.b16 %v1241
  %v1694 = vunpack.c.l.b16 %v1242
  %v1695 = vunpack.c.l.b16 %v1243
  %v1696 = vunpack.c.l.b16 %v1244
  %v1697 = vunpack.c.l.b16 %v1245
  %v1698 = vunpack.c.l.b16 %v1246
  %v1699 = vpack.c.b16 %v1500, %v1499
  %v1700 = vpack.c.b16 %v1502, %v1501
  %v1701 = vpack.c.b16 %v1504, %v1503
  %v1702 = vpack.c.b16 %v1506, %v1505
  %v1703 = vpack.c.b16 %v1508, %v1507
  %v1704 = vpack.c.b16 %v1510, %v1509
  %v1705 = vpack.c.b16 %v1512, %v1511
  %v1706 = vpack.c.b16 %v1514, %v1513
  %v1707 = vpack.c.b16 %v1516, %v1515
  %v1708 = vpack.c.b16 %v1518, %v1517
  %v1709 = vpack.c.b16 %v1520, %v1519
  %v1710 = vpack.c.b16 %v1522, %v1521
  %v1711 = vpack.c.b16 %v1524, %v1523
  %v1712 = vpack.c.b16 %v1526, %v1525
  %v1713 = vpack.c.b16 %v1528, %v1527
  %v1714 = vpack.c.b16 %v1530, %v1529
  %v1715 = vpack.c.b16 %v1532, %v1531
  %v1716 = vpack.c.b16 %v1534, %v1533
  %v1717 = vpack.c.b16 %v1536, %v1535
  %v1718 = vpack.c.b16 %v1538, %v1537
  %v1719 = vpack.c.b16 %v1540, %v1539
  %v1720 = vpack.c.b16 %v1542, %v1541
  %v1721 = vpack.c.b16 %v1544, %v1543
  %v1722 = vpack.c.b16 %v1546, %v1545
  %v1723 = vpack.c.b16 %v1548, %v1547
  %v1724 = vpack.c.b16 %v1550, %v1549
  %v1725 = vpack.c.b16 %v1552, %v1551
  %v1726 = vpack.c.b16 %v1554, %v1553
  %v1727 = vpack.c.b16 %v1556, %v1555
  %v1728 = vpack.c.b16 %v1558, %v1557
  %v1729 = vpack.c.b16 %v1560, %v1559
  %v1730 = vpack.c.b16 %v1562, %v1561
  %v1731 = vpack.c.b16 %v1564, %v1563
  %v1732 = vpack.c.b16 %v1566, %v1565
  %v1733 = vpack.c.b16 %v1568, %v1567
  %v1734 = vpack.c.b16 %v1570, %v1569
  %v1735 = vpack.c.b16 %v1572, %v1571
  %v1736 = vpack.c.b16 %v1574, %v1573
  %v1737 = vpack.c.b16 %v1576, %v1575
  %v1738 = vpack.c.b16 %v1578, %v1577
  %v1739 = vpack.c.b16 %v1580, %v1579
  %v1740 = vpack.c.b16 %v1582, %v1581
  %v1741 = vpack.c.b16 %v1584, %v1583
  %v1742 = vpack.c.b16 %v1586, %v1585
  %v1743 = vpack.c.b16 %v1588, %v1587
  %v1744 = vpack.c.b16 %v1590, %v1589
  %v1745 = vpack.c.b16 %v1592, %v1591
  %v1746 = vpack.c.b16 %v1594, %v1593
  %v1747 = vpack.c.b16 %v1596, %v1595
  %v1748 = vpack.c.b16 %v1598, %v1597
  %v1749 = vpack.c.b16 %v1600, %v1599
  %v1750 = vpack.c.b16 %v1602, %v1601
  %v1751 = vpack.c.b16 %v1604, %v1603
  %v1752 = vpack.c.b16 %v1606, %v1605
  %v1753 = vpack.c.b16 %v1608, %v1607
  %v1754 = vpack.c.b16 %v1610, %v1609
  %v1755 = vpack.c.b16 %v1612, %v1611
  %v1756 = vpack.c.b16 %v1614, %v1613
  %v1757 = vpack.c.b16 %v1616, %v1615
  %v1758 = vpack.c.b16 %v1618, %v1617
  %v1759 = vpack.c.b16 %v1620, %v1619
  %v1760 = vpack.c.b16 %v1622, %v1621
  %v1761 = vpack.c.b16 %v1624, %v1623
  %v1762 = vpack.c.b16 %v1626, %v1625
  %v1763 = vpack.c.b16 %v1628, %v1627
  %v1764 = vpack.c.b16 %v1630, %v1629
  %v1765 = vpack.c.b16 %v1632, %v1631
  %v1766 = vpack.c.b16 %v1634, %v1633
  %v1767 = vpack.c.b16 %v1636, %v1635
  %v1768 = vpack.c.b16 %v1638, %v1637
  %v1769 = vpack.c.b16 %v1640, %v1639
  %v1770 = vpack.c.b16 %v1642, %v1641
  %v1771 = vpack.c.b16 %v1644, %v1643
  %v1772 = vpack.c.b16 %v1646, %v1645
  %v1773 = vpack.c.b16 %v1648, %v1647
  %v1774 = vpack.c.b16 %v1650, %v1649
  %v1775 = vpack.c.b16 %v1652, %v1651
  %v1776 = vpack.c.b16 %v1654, %v1653
  %v1777 = vpack.c.b16 %v1656, %v1655
  %v1778 = vpack.c.b16 %v1658, %v1657
  %v1779 = vpack.c.b16 %v1660, %v1659
  %v1780 = vpack.c.b16 %v1662, %v1661
  %v1781 = vpack.c.b16 %v1664, %v1663
  %v1782 = vpack.c.b16 %v1666, %v1665
  %v1783 = vpack.c.b16 %v1668, %v1667
  %v1784 = vpack.c.b16 %v1670, %v1669
  %v1785 = vpack.c.b16 %v1672, %v1671
  %v1786 = vpack.c.b16 %v1674, %v1673
  %v1787 = vpack.c.b16 %v1676, %v1675
  %v1788 = vpack.c.b16 %v1678, %v1677
  %v1789 = vpack.c.b16 %v1680, %v1679
  %v1790 = vpack.c.b16 %v1682, %v1681
  %v1791 = vpack.c.b16 %v1684, %v1683
  %v1792 = vpack.c.b16 %v1686, %v1685
  %v1793 = vpack.c.b16 %v1688, %v1687
  %v1794 = vpack.c.b16 %v1690, %v1689
  %v1795 = vpack.c.b16 %v1692, %v1691
  %v1796 = vpack.c.b16 %v1694, %v1693
  %v1797 = vpack.c.b16 %v1696, %v1695
  %v1798 = vpack.c.b16 %v1698, %v1697
  %vm1899 = vcmask 523264
  %v1901 = vsel %vm1899, %v1286, 0
  %1903 = vmatprep.subr.bf16.mxu0 0
  %1904 = vmatpush1.bf16.msra.mxu0 %v1706
  %1905 = vmatprep.subr.bf16.mxu0 0
  %1906 = vmatpush1.bf16.msra.mxu0 %v1705
  %1907 = vmatprep.subr.bf16.mxu0 0
  %1908 = vmatpush1.bf16.msra.mxu0 %v1704
  %1909 = vmatprep.subr.bf16.mxu0 0
  %1910 = vmatpush1.bf16.msra.mxu0 %v1703
  %1911 = vmatprep.subr.bf16.mxu0 0
  %1912 = vmatpush1.bf16.msra.mxu0 %v1702
  %1913 = vmatprep.subr.bf16.mxu0 0
  %1914 = vmatpush1.bf16.msra.mxu0 %v1701
  %1915 = vmatprep.subr.bf16.mxu0 0
  %1916 = vmatpush1.bf16.msra.mxu0 %v1700
  %1917 = vmatprep.subr.bf16.mxu0 0
  %1918 = vmatpush1.bf16.msra.mxu0 %v1699
  %1919 = vmatprep.subr.bf16.mxu0 0
  %1920 = vmatpush2.bf16.msra.mxu0 %v1714
  %1921 = vmatprep.subr.bf16.mxu0 0
  %1922 = vmatpush2.bf16.msra.mxu0 %v1713
  %1923 = vmatprep.subr.bf16.mxu0 0
  %1924 = vmatpush2.bf16.msra.mxu0 %v1712
  %1925 = vmatprep.subr.bf16.mxu0 0
  %1926 = vmatpush2.bf16.msra.mxu0 %v1711
  %1927 = vmatprep.subr.bf16.mxu0 0
  %1928 = vmatpush2.bf16.msra.mxu0 %v1710
  %1929 = vmatprep.subr.bf16.mxu0 0
  %1930 = vmatpush2.bf16.msra.mxu0 %v1709
  %1931 = vmatprep.subr.bf16.mxu0 0
  %1932 = vmatpush2.bf16.msra.mxu0 %v1708
  %1933 = vmatprep.subr.bf16.mxu0 0
  %1934 = vmatpush2.bf16.msra.mxu0 %v1707
  %1935 = vmatprep.mubr.bf16.mxu0 %v1275
  %1936 = vmatmul.mubr.bf16.gmra.mxu0 %v1274
  %v1937 = vpop.f32.mrf.mxu0
  %v1938 = vadd.f32 %v1252, %v1937
  %v1939 = vpop.f32.mrf.mxu0
  %v1940 = vpop.f32.mrf.mxu0
  %v1941 = vpop.f32.mrf.mxu0
  %1942 = vdwg.mxu0
  %1943 = vmatprep.subr.bf16.mxu0 0
  %1944 = vmatpush1.bf16.msra.mxu0 %v1722
  %1945 = vmatprep.subr.bf16.mxu0 0
  %1946 = vmatpush1.bf16.msra.mxu0 %v1721
  %1947 = vmatprep.subr.bf16.mxu0 0
  %1948 = vmatpush1.bf16.msra.mxu0 %v1720
  %1949 = vmatprep.subr.bf16.mxu0 0
  %1950 = vmatpush1.bf16.msra.mxu0 %v1719
  %1951 = vmatprep.subr.bf16.mxu0 0
  %1952 = vmatpush1.bf16.msra.mxu0 %v1718
  %1953 = vmatprep.subr.bf16.mxu0 0
  %1954 = vmatpush1.bf16.msra.mxu0 %v1717
  %1955 = vmatprep.subr.bf16.mxu0 0
  %1956 = vmatpush1.bf16.msra.mxu0 %v1716
  %1957 = vmatprep.subr.bf16.mxu0 0
  %1958 = vmatpush1.bf16.msra.mxu0 %v1715
  %1959 = vmatprep.subr.bf16.mxu0 0
  %1960 = vmatpush2.bf16.msra.mxu0 %v1730
  %1961 = vmatprep.subr.bf16.mxu0 0
  %1962 = vmatpush2.bf16.msra.mxu0 %v1729
  %1963 = vmatprep.subr.bf16.mxu0 0
  %1964 = vmatpush2.bf16.msra.mxu0 %v1728
  %1965 = vmatprep.subr.bf16.mxu0 0
  %1966 = vmatpush2.bf16.msra.mxu0 %v1727
  %1967 = vmatprep.subr.bf16.mxu0 0
  %1968 = vmatpush2.bf16.msra.mxu0 %v1726
  %1969 = vmatprep.subr.bf16.mxu0 0
  %1970 = vmatpush2.bf16.msra.mxu0 %v1725
  %1971 = vmatprep.subr.bf16.mxu0 0
  %1972 = vmatpush2.bf16.msra.mxu0 %v1724
  %1973 = vmatprep.subr.bf16.mxu0 0
  %1974 = vmatpush2.bf16.msra.mxu0 %v1723
  %1975 = vmatprep.mubr.bf16.mxu0 %v1277
  %1976 = vmatmul.mubr.bf16.gmra.mxu0 %v1276
  %v1977 = vpop.f32.mrf.mxu0
  %v1978 = vadd.f32 %v1938, %v1977
  %v1979 = vpop.f32.mrf.mxu0
  %v1980 = vpop.f32.mrf.mxu0
  %v1981 = vpop.f32.mrf.mxu0
  %1982 = vdwg.mxu0
  %1983 = vmatprep.subr.bf16.mxu0 0
  %1984 = vmatpush1.bf16.msra.mxu0 %v1738
  %1985 = vmatprep.subr.bf16.mxu0 0
  %1986 = vmatpush1.bf16.msra.mxu0 %v1737
  %1987 = vmatprep.subr.bf16.mxu0 0
  %1988 = vmatpush1.bf16.msra.mxu0 %v1736
  %1989 = vmatprep.subr.bf16.mxu0 0
  %1990 = vmatpush1.bf16.msra.mxu0 %v1735
  %1991 = vmatprep.subr.bf16.mxu0 0
  %1992 = vmatpush1.bf16.msra.mxu0 %v1734
  %1993 = vmatprep.subr.bf16.mxu0 0
  %1994 = vmatpush1.bf16.msra.mxu0 %v1733
  %1995 = vmatprep.subr.bf16.mxu0 0
  %1996 = vmatpush1.bf16.msra.mxu0 %v1732
  %1997 = vmatprep.subr.bf16.mxu0 0
  %1998 = vmatpush1.bf16.msra.mxu0 %v1731
  %1999 = vmatprep.subr.bf16.mxu0 0
  %2000 = vmatpush2.bf16.msra.mxu0 %v1746
  %2001 = vmatprep.subr.bf16.mxu0 0
  %2002 = vmatpush2.bf16.msra.mxu0 %v1745
  %2003 = vmatprep.subr.bf16.mxu0 0
  %2004 = vmatpush2.bf16.msra.mxu0 %v1744
  %2005 = vmatprep.subr.bf16.mxu0 0
  %2006 = vmatpush2.bf16.msra.mxu0 %v1743
  %2007 = vmatprep.subr.bf16.mxu0 0
  %2008 = vmatpush2.bf16.msra.mxu0 %v1742
  %2009 = vmatprep.subr.bf16.mxu0 0
  %2010 = vmatpush2.bf16.msra.mxu0 %v1741
  %2011 = vmatprep.subr.bf16.mxu0 0
  %2012 = vmatpush2.bf16.msra.mxu0 %v1740
  %2013 = vmatprep.subr.bf16.mxu0 0
  %2014 = vmatpush2.bf16.msra.mxu0 %v1739
  %2015 = vmatprep.mubr.bf16.mxu0 %v1279
  %2016 = vmatmul.mubr.bf16.gmra.mxu0 %v1278
  %v2017 = vpop.f32.mrf.mxu0
  %v2018 = vadd.f32 %v1978, %v2017
  %v2019 = vpop.f32.mrf.mxu0
  %v2020 = vpop.f32.mrf.mxu0
  %v2021 = vpop.f32.mrf.mxu0
  %2022 = vdwg.mxu0
  %2023 = vmatprep.subr.bf16.mxu0 0
  %2024 = vmatpush1.bf16.msra.mxu0 %v1754
  %2025 = vmatprep.subr.bf16.mxu0 0
  %2026 = vmatpush1.bf16.msra.mxu0 %v1753
  %2027 = vmatprep.subr.bf16.mxu0 0
  %2028 = vmatpush1.bf16.msra.mxu0 %v1752
  %2029 = vmatprep.subr.bf16.mxu0 0
  %2030 = vmatpush1.bf16.msra.mxu0 %v1751
  %2031 = vmatprep.subr.bf16.mxu0 0
  %2032 = vmatpush1.bf16.msra.mxu0 %v1750
  %2033 = vmatprep.subr.bf16.mxu0 0
  %2034 = vmatpush1.bf16.msra.mxu0 %v1749
  %2035 = vmatprep.subr.bf16.mxu0 0
  %2036 = vmatpush1.bf16.msra.mxu0 %v1748
  %2037 = vmatprep.subr.bf16.mxu0 0
  %2038 = vmatpush1.bf16.msra.mxu0 %v1747
  %2039 = vmatprep.subr.bf16.mxu0 0
  %2040 = vmatpush2.bf16.msra.mxu0 %v1762
  %2041 = vmatprep.subr.bf16.mxu0 0
  %2042 = vmatpush2.bf16.msra.mxu0 %v1761
  %2043 = vmatprep.subr.bf16.mxu0 0
  %2044 = vmatpush2.bf16.msra.mxu0 %v1760
  %2045 = vmatprep.subr.bf16.mxu0 0
  %2046 = vmatpush2.bf16.msra.mxu0 %v1759
  %2047 = vmatprep.subr.bf16.mxu0 0
  %2048 = vmatpush2.bf16.msra.mxu0 %v1758
  %2049 = vmatprep.subr.bf16.mxu0 0
  %2050 = vmatpush2.bf16.msra.mxu0 %v1757
  %2051 = vmatprep.subr.bf16.mxu0 0
  %2052 = vmatpush2.bf16.msra.mxu0 %v1756
  %2053 = vmatprep.subr.bf16.mxu0 0
  %2054 = vmatpush2.bf16.msra.mxu0 %v1755
  %2055 = vmatprep.mubr.bf16.mxu0 %v1281
  %2056 = vmatmul.mubr.bf16.gmra.mxu0 %v1280
  %v2057 = vpop.f32.mrf.mxu0
  %v2058 = vadd.f32 %v2018, %v2057
  %v2059 = vpop.f32.mrf.mxu0
  %v2060 = vpop.f32.mrf.mxu0
  %v2061 = vpop.f32.mrf.mxu0
  %2062 = vdwg.mxu0
  %2063 = vmatprep.subr.bf16.mxu0 0
  %2064 = vmatpush1.bf16.msra.mxu0 %v1770
  %2065 = vmatprep.subr.bf16.mxu0 0
  %2066 = vmatpush1.bf16.msra.mxu0 %v1769
  %2067 = vmatprep.subr.bf16.mxu0 0
  %2068 = vmatpush1.bf16.msra.mxu0 %v1768
  %2069 = vmatprep.subr.bf16.mxu0 0
  %2070 = vmatpush1.bf16.msra.mxu0 %v1767
  %2071 = vmatprep.subr.bf16.mxu0 0
  %2072 = vmatpush1.bf16.msra.mxu0 %v1766
  %2073 = vmatprep.subr.bf16.mxu0 0
  %2074 = vmatpush1.bf16.msra.mxu0 %v1765
  %2075 = vmatprep.subr.bf16.mxu0 0
  %2076 = vmatpush1.bf16.msra.mxu0 %v1764
  %2077 = vmatprep.subr.bf16.mxu0 0
  %2078 = vmatpush1.bf16.msra.mxu0 %v1763
  %2079 = vmatprep.subr.bf16.mxu0 0
  %2080 = vmatpush2.bf16.msra.mxu0 %v1778
  %2081 = vmatprep.subr.bf16.mxu0 0
  %2082 = vmatpush2.bf16.msra.mxu0 %v1777
  %2083 = vmatprep.subr.bf16.mxu0 0
  %2084 = vmatpush2.bf16.msra.mxu0 %v1776
  %2085 = vmatprep.subr.bf16.mxu0 0
  %2086 = vmatpush2.bf16.msra.mxu0 %v1775
  %2087 = vmatprep.subr.bf16.mxu0 0
  %2088 = vmatpush2.bf16.msra.mxu0 %v1774
  %2089 = vmatprep.subr.bf16.mxu0 0
  %2090 = vmatpush2.bf16.msra.mxu0 %v1773
  %2091 = vmatprep.subr.bf16.mxu0 0
  %2092 = vmatpush2.bf16.msra.mxu0 %v1772
  %2093 = vmatprep.subr.bf16.mxu0 0
  %2094 = vmatpush2.bf16.msra.mxu0 %v1771
  %2095 = vmatprep.mubr.bf16.mxu0 %v1283
  %2096 = vmatmul.mubr.bf16.gmra.mxu0 %v1282
  %v2097 = vpop.f32.mrf.mxu0
  %v2098 = vadd.f32 %v2058, %v2097
  %v2099 = vpop.f32.mrf.mxu0
  %v2100 = vpop.f32.mrf.mxu0
  %v2101 = vpop.f32.mrf.mxu0
  %2102 = vdwg.mxu0
  %2103 = vmatprep.subr.bf16.mxu0 0
  %2104 = vmatpush1.bf16.msra.mxu0 %v1786
  %2105 = vmatprep.subr.bf16.mxu0 0
  %2106 = vmatpush1.bf16.msra.mxu0 %v1785
  %2107 = vmatprep.subr.bf16.mxu0 0
  %2108 = vmatpush1.bf16.msra.mxu0 %v1784
  %2109 = vmatprep.subr.bf16.mxu0 0
  %2110 = vmatpush1.bf16.msra.mxu0 %v1783
  %2111 = vmatprep.subr.bf16.mxu0 0
  %2112 = vmatpush1.bf16.msra.mxu0 %v1782
  %2113 = vmatprep.subr.bf16.mxu0 0
  %2114 = vmatpush1.bf16.msra.mxu0 %v1781
  %2115 = vmatprep.subr.bf16.mxu0 0
  %2116 = vmatpush1.bf16.msra.mxu0 %v1780
  %2117 = vmatprep.subr.bf16.mxu0 0
  %2118 = vmatpush1.bf16.msra.mxu0 %v1779
  %2119 = vmatprep.subr.bf16.mxu0 0
  %2120 = vmatpush2.bf16.msra.mxu0 %v1794
  %2121 = vmatprep.subr.bf16.mxu0 0
  %2122 = vmatpush2.bf16.msra.mxu0 %v1793
  %2123 = vmatprep.subr.bf16.mxu0 0
  %2124 = vmatpush2.bf16.msra.mxu0 %v1792
  %2125 = vmatprep.subr.bf16.mxu0 0
  %2126 = vmatpush2.bf16.msra.mxu0 %v1791
  %2127 = vmatprep.subr.bf16.mxu0 0
  %2128 = vmatpush2.bf16.msra.mxu0 %v1790
  %2129 = vmatprep.subr.bf16.mxu0 0
  %2130 = vmatpush2.bf16.msra.mxu0 %v1789
  %2131 = vmatprep.subr.bf16.mxu0 0
  %2132 = vmatpush2.bf16.msra.mxu0 %v1788
  %2133 = vmatprep.subr.bf16.mxu0 0
  %2134 = vmatpush2.bf16.msra.mxu0 %v1787
  %2135 = vmatprep.mubr.bf16.mxu0 %v1285
  %2136 = vmatmul.mubr.bf16.gmra.mxu0 %v1284
  %v2137 = vpop.f32.mrf.mxu0
  %v2138 = vadd.f32 %v2098, %v2137
  %v2139 = vpop.f32.mrf.mxu0
  %v2140 = vpop.f32.mrf.mxu0
  %v2141 = vpop.f32.mrf.mxu0
  %2142 = vdwg.mxu0
  %2143 = vmatprep.subr.bf16.mxu0 0
  %2144 = vmatpush1.bf16.msra.mxu0 0
  %2145 = vmatprep.subr.bf16.mxu0 0
  %2146 = vmatpush1.bf16.msra.mxu0 0
  %2147 = vmatprep.subr.bf16.mxu0 0
  %2148 = vmatpush1.bf16.msra.mxu0 0
  %2149 = vmatprep.subr.bf16.mxu0 0
  %2150 = vmatpush1.bf16.msra.mxu0 0
  %2151 = vmatprep.subr.bf16.mxu0 0
  %2152 = vmatpush1.bf16.msra.mxu0 %v1798
  %2153 = vmatprep.subr.bf16.mxu0 0
  %2154 = vmatpush1.bf16.msra.mxu0 %v1797
  %2155 = vmatprep.subr.bf16.mxu0 0
  %2156 = vmatpush1.bf16.msra.mxu0 %v1796
  %2157 = vmatprep.subr.bf16.mxu0 0
  %2158 = vmatpush1.bf16.msra.mxu0 %v1795
  %2159 = vmatprep.subr.bf16.mxu0 0
  %2160 = vmatpush2.bf16.msra.mxu0 0
  %2161 = vmatprep.subr.bf16.mxu0 0
  %2162 = vmatpush2.bf16.msra.mxu0 0
  %2163 = vmatprep.subr.bf16.mxu0 0
  %2164 = vmatpush2.bf16.msra.mxu0 0
  %2165 = vmatprep.subr.bf16.mxu0 0
  %2166 = vmatpush2.bf16.msra.mxu0 0
  %2167 = vmatprep.subr.bf16.mxu0 0
  %2168 = vmatpush2.bf16.msra.mxu0 0
  %2169 = vmatprep.subr.bf16.mxu0 0
  %2170 = vmatpush2.bf16.msra.mxu0 0
  %2171 = vmatprep.subr.bf16.mxu0 0
  %2172 = vmatpush2.bf16.msra.mxu0 0
  %2173 = vmatprep.subr.bf16.mxu0 0
  %2174 = vmatpush2.bf16.msra.mxu0 0
  %2175 = vmatprep.mubr.bf16.mxu0 0
  %2176 = vmatmul.mubr.bf16.gmra.mxu0 %v1901
  %v2177 = vpop.f32.mrf.mxu0
  %v2178 = vadd.f32 %v2138, %v2177
  %v2179 = vpop.f32.mrf.mxu0
  %v2180 = vpop.f32.mrf.mxu0
  %v2181 = vpop.f32.mrf.mxu0
  %2182 = vdwg.mxu0
  %v2183 = vmax.f32 %v2178, 0.0
  %2185 = vrot.lane.b32.xlu0 %v2183, 32
  %v2186 = vpop.permute.xlu0 %2185
  %vm2188 = vcmask 523520
  %2189 = vst.msk [vmem:[%s15] sm:$0xff] %vm2188, %v2186
  %v2190 = vld [vmem:[%s6] sm:$0xff]
  %v2191 = vld [vmem:[%s6 + $0x8] sm:$0xff]
  %v2192 = vld [vmem:[%s6 + $0x10] sm:$0xff]
  %v2193 = vld [vmem:[%s6 + $0x18] sm:$0xff]
  %v2194 = vld [vmem:[%s6 + $0x20] sm:$0xff]
  %v2195 = vld [vmem:[%s6 + $0x28] sm:$0xff]
  %v2196 = vld [vmem:[%s6 + $0x30] sm:$0xff]
  %v2197 = vld [vmem:[%s6 + $0x38] sm:$0xff]
  %v2198 = vld [vmem:[%s6 + $0x40] sm:$0xff]
  %v2199 = vld [vmem:[%s6 + $0x48] sm:$0xff]
  %v2200 = vld [vmem:[%s6 + $0x50] sm:$0xff]
  %v2201 = vld [vmem:[%s6 + $0x58] sm:$0xff]
  %v2202 = vld [vmem:[%s6 + $0x60] sm:$0xff]
  %v2203 = vld [vmem:[%s6 + $0x68] sm:$0xff]
  %v2204 = vld [vmem:[%s6 + $0x70] sm:$0xff]
  %v2205 = vld [vmem:[%s6 + $0x78] sm:$0xff]
  %v2206 = vld [vmem:[%s6 + $0x80] sm:$0xff]
  %v2207 = vld [vmem:[%s6 + $0x88] sm:$0xff]
  %v2208 = vld [vmem:[%s6 + $0x90] sm:$0xff]
  %v2209 = vld [vmem:[%s6 + $0x98] sm:$0xff]
  %v2210 = vld [vmem:[%s6 + $0xa0] sm:$0xff]
  %v2211 = vld [vmem:[%s6 + $0xa8] sm:$0xff]
  %v2212 = vld [vmem:[%s6 + $0xb0] sm:$0xff]
  %v2213 = vld [vmem:[%s6 + $0xb8] sm:$0xff]
  %v2214 = vld [vmem:[%s6 + $0xc0] sm:$0xff]
  %v2215 = vld [vmem:[%s6 + $0xc8] sm:$0xff]
  %v2216 = vld [vmem:[%s6 + $0xd0] sm:$0xff]
  %v2217 = vld [vmem:[%s6 + $0xd8] sm:$0xff]
  %v2218 = vld [vmem:[%s6 + $0xe0] sm:$0xff]
  %v2219 = vld [vmem:[%s6 + $0xe8] sm:$0xff]
  %v2220 = vld [vmem:[%s6 + $0xf0] sm:$0xff]
  %v2221 = vld [vmem:[%s6 + $0xf8] sm:$0xf]
  %v2222 = vld [vmem:[%s7] sm:$0xf]
  %v2223 = vld [vmem:[%s7 + $0x4] sm:$0xf]
  %v2224 = vld [vmem:[%s7 + $0x8] sm:$0xf]
  %v2225 = vld [vmem:[%s7 + $0xc] sm:$0xf]
  %v2226 = vld [vmem:[%s7 + $0x10] sm:$0xf]
  %v2227 = vld [vmem:[%s7 + $0x14] sm:$0xf]
  %v2228 = vld [vmem:[%s7 + $0x18] sm:$0xf]
  %v2229 = vld [vmem:[%s7 + $0x1c] sm:$0xf]
  %v2230 = vld [vmem:[%s7 + $0x20] sm:$0xf]
  %v2231 = vld [vmem:[%s7 + $0x24] sm:$0xf]
  %v2232 = vld [vmem:[%s7 + $0x28] sm:$0xf]
  %v2233 = vld [vmem:[%s7 + $0x2c] sm:$0xf]
  %v2234 = vld [vmem:[%s7 + $0x30] sm:$0xf]
  %v2235 = vld [vmem:[%s7 + $0x34] sm:$0xf]
  %v2236 = vld [vmem:[%s7 + $0x38] sm:$0xf]
  %v2237 = vld [vmem:[%s7 + $0x3c] sm:$0xf]
  %v2238 = vld [vmem:[%s7 + $0x40] sm:$0xf]
  %v2239 = vld [vmem:[%s7 + $0x44] sm:$0xf]
  %v2240 = vld [vmem:[%s7 + $0x48] sm:$0xf]
  %v2241 = vld [vmem:[%s7 + $0x4c] sm:$0xf]
  %v2242 = vld [vmem:[%s7 + $0x50] sm:$0xf]
  %v2243 = vld [vmem:[%s7 + $0x54] sm:$0xf]
  %v2244 = vld [vmem:[%s7 + $0x58] sm:$0xf]
  %v2245 = vld [vmem:[%s7 + $0x5c] sm:$0xf]
  %v2246 = vld [vmem:[%s7 + $0x60] sm:$0xf]
  %v2247 = vld [vmem:[%s7 + $0x64] sm:$0xf]
  %v2248 = vld [vmem:[%s7 + $0x68] sm:$0xf]
  %v2249 = vld [vmem:[%s7 + $0x6c] sm:$0xf]
  %v2250 = vld [vmem:[%s7 + $0x70] sm:$0xf]
  %v2251 = vld [vmem:[%s7 + $0x74] sm:$0xf]
  %v2252 = vld [vmem:[%s7 + $0x78] sm:$0xf]
  %v2253 = vld [vmem:[%s7 + $0x7c] sm:$0xf]
  %v2254 = vld [vmem:[%s7 + $0x80] sm:$0xf]
  %v2255 = vld [vmem:[%s7 + $0x84] sm:$0xf]
  %v2256 = vld [vmem:[%s7 + $0x88] sm:$0xf]
  %v2257 = vld [vmem:[%s7 + $0x8c] sm:$0xf]
  %v2258 = vld [vmem:[%s7 + $0x90] sm:$0xf]
  %v2259 = vld [vmem:[%s7 + $0x94] sm:$0xf]
  %v2260 = vld [vmem:[%s7 + $0x98] sm:$0xf]
  %v2261 = vld [vmem:[%s7 + $0x9c] sm:$0xf]
  %v2262 = vld [vmem:[%s7 + $0xa0] sm:$0xf]
  %v2263 = vld [vmem:[%s7 + $0xa4] sm:$0xf]
  %v2264 = vld [vmem:[%s7 + $0xa8] sm:$0xf]
  %v2265 = vld [vmem:[%s7 + $0xac] sm:$0xf]
  %v2266 = vld [vmem:[%s7 + $0xb0] sm:$0xf]
  %v2267 = vld [vmem:[%s7 + $0xb4] sm:$0xf]
  %v2268 = vld [vmem:[%s7 + $0xb8] sm:$0xf]
  %v2269 = vld [vmem:[%s7 + $0xbc] sm:$0xf]
  %v2270 = vld [vmem:[%s7 + $0xc0] sm:$0xf]
  %v2271 = vld [vmem:[%s7 + $0xc4] sm:$0xf]
  %v2272 = vld [vmem:[%s7 + $0xc8] sm:$0xf]
  %v2273 = vld [vmem:[%s7 + $0xcc] sm:$0xf]
  %v2274 = vld [vmem:[%s7 + $0xd0] sm:$0xf]
  %v2275 = vld [vmem:[%s7 + $0xd4] sm:$0xf]
  %v2276 = vld [vmem:[%s7 + $0xd8] sm:$0xf]
  %v2277 = vld [vmem:[%s7 + $0xdc] sm:$0xf]
  %v2278 = vld [vmem:[%s7 + $0xe0] sm:$0xf]
  %v2279 = vld [vmem:[%s7 + $0xe4] sm:$0xf]
  %v2280 = vld [vmem:[%s7 + $0xe8] sm:$0xf]
  %v2281 = vld [vmem:[%s7 + $0xec] sm:$0xf]
  %v2282 = vld [vmem:[%s7 + $0xf0] sm:$0xf]
  %v2283 = vld [vmem:[%s7 + $0xf4] sm:$0xf]
  %v2284 = vld [vmem:[%s7 + $0xf8] sm:$0xf]
  %v2285 = vld [vmem:[%s7 + $0xfc] sm:$0xf]
  %v2286 = vld [vmem:[%s7 + $0x100] sm:$0xf]
  %v2287 = vld [vmem:[%s7 + $0x104] sm:$0xf]
  %v2288 = vld [vmem:[%s7 + $0x108] sm:$0xf]
  %v2289 = vld [vmem:[%s7 + $0x10c] sm:$0xf]
  %v2290 = vld [vmem:[%s7 + $0x110] sm:$0xf]
  %v2291 = vld [vmem:[%s7 + $0x114] sm:$0xf]
  %v2292 = vld [vmem:[%s7 + $0x118] sm:$0xf]
  %v2293 = vld [vmem:[%s7 + $0x11c] sm:$0xf]
  %v2294 = vld [vmem:[%s7 + $0x120] sm:$0xf]
  %v2295 = vld [vmem:[%s7 + $0x124] sm:$0xf]
  %v2296 = vld [vmem:[%s7 + $0x128] sm:$0xf]
  %v2297 = vld [vmem:[%s7 + $0x12c] sm:$0xf]
  %v2298 = vld [vmem:[%s7 + $0x130] sm:$0xf]
  %v2299 = vld [vmem:[%s7 + $0x134] sm:$0xf]
  %v2300 = vld [vmem:[%s7 + $0x138] sm:$0xf]
  %v2301 = vld [vmem:[%s7 + $0x13c] sm:$0xf]
  %v2302 = vld [vmem:[%s7 + $0x140] sm:$0xf]
  %v2303 = vld [vmem:[%s7 + $0x144] sm:$0xf]
  %v2304 = vld [vmem:[%s7 + $0x148] sm:$0xf]
  %v2305 = vld [vmem:[%s7 + $0x14c] sm:$0xf]
  %v2306 = vld [vmem:[%s7 + $0x150] sm:$0xf]
  %v2307 = vld [vmem:[%s7 + $0x154] sm:$0xf]
  %v2308 = vld [vmem:[%s7 + $0x158] sm:$0xf]
  %v2309 = vld [vmem:[%s7 + $0x15c] sm:$0xf]
  %v2310 = vld [vmem:[%s7 + $0x160] sm:$0xf]
  %v2311 = vld [vmem:[%s7 + $0x164] sm:$0xf]
  %v2312 = vld [vmem:[%s7 + $0x168] sm:$0xf]
  %v2313 = vld [vmem:[%s7 + $0x16c] sm:$0xf]
  %v2314 = vld [vmem:[%s7 + $0x170] sm:$0xf]
  %v2315 = vld [vmem:[%s7 + $0x174] sm:$0xf]
  %v2316 = vld [vmem:[%s7 + $0x178] sm:$0xf]
  %v2317 = vld [vmem:[%s7 + $0x17c] sm:$0xf]
  %v2318 = vld [vmem:[%s7 + $0x180] sm:$0xf]
  %v2319 = vld [vmem:[%s7 + $0x184] sm:$0xf]
  %v2320 = vld [vmem:[%s7 + $0x188] sm:$0xf]
  %v2321 = vld [vmem:[%s7 + $0x18c] sm:$0xf]
  %v2322 = vld [vmem:[%s7 + $0x190] sm:$0xf]
  %v2323 = vld [vmem:[%s7 + $0x194] sm:$0xf]
  %v2324 = vld [vmem:[%s7 + $0x198] sm:$0xf]
  %v2325 = vld [vmem:[%s7 + $0x19c] sm:$0xf]
  %v2326 = vld [vmem:[%s7 + $0x1a0] sm:$0xf]
  %v2327 = vld [vmem:[%s7 + $0x1a4] sm:$0xf]
  %v2328 = vld [vmem:[%s7 + $0x1a8] sm:$0xf]
  %v2329 = vld [vmem:[%s7 + $0x1ac] sm:$0xf]
  %v2330 = vld [vmem:[%s7 + $0x1b0] sm:$0xf]
  %v2331 = vld [vmem:[%s7 + $0x1b4] sm:$0xf]
  %v2332 = vld [vmem:[%s7 + $0x1b8] sm:$0xf]
  %v2333 = vld [vmem:[%s7 + $0x1bc] sm:$0xf]
  %v2334 = vld [vmem:[%s7 + $0x1c0] sm:$0xf]
  %v2335 = vld [vmem:[%s7 + $0x1c4] sm:$0xf]
  %v2336 = vld [vmem:[%s7 + $0x1c8] sm:$0xf]
  %v2337 = vld [vmem:[%s7 + $0x1cc] sm:$0xf]
  %v2338 = vld [vmem:[%s7 + $0x1d0] sm:$0xf]
  %v2339 = vld [vmem:[%s7 + $0x1d4] sm:$0xf]
  %v2340 = vld [vmem:[%s7 + $0x1d8] sm:$0xf]
  %v2341 = vld [vmem:[%s7 + $0x1dc] sm:$0xf]
  %v2342 = vld [vmem:[%s7 + $0x1e0] sm:$0xf]
  %v2343 = vld [vmem:[%s7 + $0x1e4] sm:$0xf]
  %v2344 = vld [vmem:[%s7 + $0x1e8] sm:$0xf]
  %v2345 = vld [vmem:[%s7 + $0x1ec] sm:$0xf]
  %v2346 = vld [vmem:[%s7 + $0x1f0] sm:$0xf]
  %v2347 = vld [vmem:[%s7 + $0x1f4] sm:$0xf]
  %v2348 = vld [vmem:[%s7 + $0x1f8] sm:$0xf]
  %v2349 = vld [vmem:[%s7 + $0x1fc] sm:$0xf]
  %v2350 = vld [vmem:[%s7 + $0x200] sm:$0xf]
  %v2351 = vld [vmem:[%s7 + $0x204] sm:$0xf]
  %v2352 = vld [vmem:[%s7 + $0x208] sm:$0xf]
  %v2353 = vld [vmem:[%s7 + $0x20c] sm:$0xf]
  %v2354 = vld [vmem:[%s7 + $0x210] sm:$0xf]
  %v2355 = vld [vmem:[%s7 + $0x214] sm:$0xf]
  %v2356 = vld [vmem:[%s7 + $0x218] sm:$0xf]
  %v2357 = vld [vmem:[%s7 + $0x21c] sm:$0xf]
  %v2358 = vld [vmem:[%s7 + $0x220] sm:$0xf]
  %v2359 = vld [vmem:[%s7 + $0x224] sm:$0xf]
  %v2360 = vld [vmem:[%s7 + $0x228] sm:$0xf]
  %v2361 = vld [vmem:[%s7 + $0x22c] sm:$0xf]
  %v2362 = vld [vmem:[%s7 + $0x230] sm:$0xf]
  %v2363 = vld [vmem:[%s7 + $0x234] sm:$0xf]
  %v2364 = vld [vmem:[%s7 + $0x238] sm:$0xf]
  %v2365 = vld [vmem:[%s7 + $0x23c] sm:$0xf]
  %v2366 = vld [vmem:[%s7 + $0x240] sm:$0xf]
  %v2367 = vld [vmem:[%s7 + $0x244] sm:$0xf]
  %v2368 = vld [vmem:[%s7 + $0x248] sm:$0xf]
  %v2369 = vld [vmem:[%s7 + $0x24c] sm:$0xf]
  %v2370 = vld [vmem:[%s7 + $0x250] sm:$0xf]
  %v2371 = vld [vmem:[%s7 + $0x254] sm:$0xf]
  %v2372 = vld [vmem:[%s7 + $0x258] sm:$0xf]
  %v2373 = vld [vmem:[%s7 + $0x25c] sm:$0xf]
  %v2374 = vld [vmem:[%s7 + $0x260] sm:$0xf]
  %v2375 = vld [vmem:[%s7 + $0x264] sm:$0xf]
  %v2376 = vld [vmem:[%s7 + $0x268] sm:$0xf]
  %v2377 = vld [vmem:[%s7 + $0x26c] sm:$0xf]
  %v2378 = vld [vmem:[%s7 + $0x270] sm:$0xf]
  %v2379 = vld [vmem:[%s7 + $0x274] sm:$0xf]
  %v2380 = vld [vmem:[%s7 + $0x278] sm:$0xf]
  %v2381 = vld [vmem:[%s7 + $0x27c] sm:$0xf]
  %v2382 = vld [vmem:[%s7 + $0x280] sm:$0xf]
  %v2383 = vld [vmem:[%s7 + $0x284] sm:$0xf]
  %v2384 = vld [vmem:[%s7 + $0x288] sm:$0xf]
  %v2385 = vld [vmem:[%s7 + $0x28c] sm:$0xf]
  %v2386 = vld [vmem:[%s7 + $0x290] sm:$0xf]
  %v2387 = vld [vmem:[%s7 + $0x294] sm:$0xf]
  %v2388 = vld [vmem:[%s7 + $0x298] sm:$0xf]
  %v2389 = vld [vmem:[%s7 + $0x29c] sm:$0xf]
  %v2390 = vld [vmem:[%s7 + $0x2a0] sm:$0xf]
  %v2391 = vld [vmem:[%s7 + $0x2a4] sm:$0xf]
  %v2392 = vld [vmem:[%s7 + $0x2a8] sm:$0xf]
  %v2393 = vld [vmem:[%s7 + $0x2ac] sm:$0xf]
  %v2394 = vld [vmem:[%s7 + $0x2b0] sm:$0xf]
  %v2395 = vld [vmem:[%s7 + $0x2b4] sm:$0xf]
  %v2396 = vld [vmem:[%s7 + $0x2b8] sm:$0xf]
  %v2397 = vld [vmem:[%s7 + $0x2bc] sm:$0xf]
  %v2398 = vld [vmem:[%s7 + $0x2c0] sm:$0xf]
  %v2399 = vld [vmem:[%s7 + $0x2c4] sm:$0xf]
  %v2400 = vld [vmem:[%s7 + $0x2c8] sm:$0xf]
  %v2401 = vld [vmem:[%s7 + $0x2cc] sm:$0xf]
  %v2402 = vld [vmem:[%s7 + $0x2d0] sm:$0xf]
  %v2403 = vld [vmem:[%s7 + $0x2d4] sm:$0xf]
  %v2404 = vld [vmem:[%s7 + $0x2d8] sm:$0xf]
  %v2405 = vld [vmem:[%s7 + $0x2dc] sm:$0xf]
  %v2406 = vld [vmem:[%s7 + $0x2e0] sm:$0xf]
  %v2407 = vld [vmem:[%s7 + $0x2e4] sm:$0xf]
  %v2408 = vld [vmem:[%s7 + $0x2e8] sm:$0xf]
  %v2409 = vld [vmem:[%s7 + $0x2ec] sm:$0xf]
  %v2410 = vld [vmem:[%s7 + $0x2f0] sm:$0xf]
  %v2411 = vld [vmem:[%s7 + $0x2f4] sm:$0xf]
  %v2412 = vld [vmem:[%s7 + $0x2f8] sm:$0xf]
  %v2413 = vld [vmem:[%s7 + $0x2fc] sm:$0xf]
  %v2414 = vld [vmem:[%s7 + $0x300] sm:$0xf]
  %v2415 = vld [vmem:[%s7 + $0x304] sm:$0xf]
  %v2416 = vld [vmem:[%s7 + $0x308] sm:$0xf]
  %v2417 = vld [vmem:[%s7 + $0x30c] sm:$0xf]
  %v2418 = vld [vmem:[%s7 + $0x310] sm:$0xf]
  %v2419 = vld [vmem:[%s7 + $0x314] sm:$0xf]
  %v2420 = vld [vmem:[%s7 + $0x318] sm:$0xf]
  %v2421 = vld [vmem:[%s7 + $0x31c] sm:$0xf]
  %v2422 = vld [vmem:[%s7 + $0x320] sm:$0xf]
  %v2423 = vld [vmem:[%s7 + $0x324] sm:$0xf]
  %v2424 = vld [vmem:[%s7 + $0x328] sm:$0xf]
  %v2425 = vld [vmem:[%s7 + $0x32c] sm:$0xf]
  %v2426 = vld [vmem:[%s7 + $0x330] sm:$0xf]
  %v2427 = vld [vmem:[%s7 + $0x334] sm:$0xf]
  %v2428 = vld [vmem:[%s7 + $0x338] sm:$0xf]
  %v2429 = vld [vmem:[%s7 + $0x33c] sm:$0xf]
  %v2430 = vld [vmem:[%s7 + $0x340] sm:$0xf]
  %v2431 = vld [vmem:[%s7 + $0x344] sm:$0xf]
  %v2432 = vld [vmem:[%s7 + $0x348] sm:$0xf]
  %v2433 = vld [vmem:[%s7 + $0x34c] sm:$0xf]
  %v2434 = vld [vmem:[%s7 + $0x350] sm:$0xf]
  %v2435 = vld [vmem:[%s7 + $0x354] sm:$0xf]
  %v2436 = vld [vmem:[%s7 + $0x358] sm:$0xf]
  %v2437 = vld [vmem:[%s7 + $0x35c] sm:$0xf]
  %v2438 = vld [vmem:[%s7 + $0x360] sm:$0xf]
  %v2439 = vld [vmem:[%s7 + $0x364] sm:$0xf]
  %v2440 = vld [vmem:[%s7 + $0x368] sm:$0xf]
  %v2441 = vld [vmem:[%s7 + $0x36c] sm:$0xf]
  %v2442 = vld [vmem:[%s7 + $0x370] sm:$0xf]
  %v2443 = vld [vmem:[%s7 + $0x374] sm:$0xf]
  %v2444 = vld [vmem:[%s7 + $0x378] sm:$0xf]
  %v2445 = vld [vmem:[%s7 + $0x37c] sm:$0xf]
  %v2446 = vld [vmem:[%s7 + $0x380] sm:$0xf]
  %v2447 = vld [vmem:[%s7 + $0x384] sm:$0xf]
  %v2448 = vld [vmem:[%s7 + $0x388] sm:$0xf]
  %v2449 = vld [vmem:[%s7 + $0x38c] sm:$0xf]
  %v2450 = vld [vmem:[%s7 + $0x390] sm:$0xf]
  %v2451 = vld [vmem:[%s7 + $0x394] sm:$0xf]
  %v2452 = vld [vmem:[%s7 + $0x398] sm:$0xf]
  %v2453 = vld [vmem:[%s7 + $0x39c] sm:$0xf]
  %v2454 = vld [vmem:[%s7 + $0x3a0] sm:$0xf]
  %v2455 = vld [vmem:[%s7 + $0x3a4] sm:$0xf]
  %v2456 = vld [vmem:[%s7 + $0x3a8] sm:$0xf]
  %v2457 = vld [vmem:[%s7 + $0x3ac] sm:$0xf]
  %v2458 = vld [vmem:[%s7 + $0x3b0] sm:$0xf]
  %v2459 = vld [vmem:[%s7 + $0x3b4] sm:$0xf]
  %v2460 = vld [vmem:[%s7 + $0x3b8] sm:$0xf]
  %v2461 = vld [vmem:[%s7 + $0x3bc] sm:$0xf]
  %v2462 = vld [vmem:[%s7 + $0x3c0] sm:$0xf]
  %v2463 = vld [vmem:[%s7 + $0x3c4] sm:$0xf]
  %v2464 = vld [vmem:[%s7 + $0x3c8] sm:$0xf]
  %v2465 = vld [vmem:[%s7 + $0x3cc] sm:$0xf]
  %v2466 = vld [vmem:[%s7 + $0x3d0] sm:$0xf]
  %v2467 = vld [vmem:[%s7 + $0x3d4] sm:$0xf]
  %v2468 = vld [vmem:[%s7 + $0x3d8] sm:$0xf]
  %v2469 = vld [vmem:[%s7 + $0x3dc] sm:$0xf]
  %v2470 = vld [vmem:[%s7 + $0x3e0] sm:$0xf]
  %v2471 = vld [vmem:[%s7 + $0x3e4] sm:$0xf]
  %v2472 = vld [vmem:[%s7 + $0x3e8] sm:$0xf]
  %v2473 = vld [vmem:[%s7 + $0x3ec] sm:$0xf]
  %v2474 = vld [vmem:[%s7 + $0x3f0] sm:$0xf]
  %v2475 = vld [vmem:[%s7 + $0x3f4] sm:$0xf]
  %v2476 = vld [vmem:[%s7 + $0x3f8] sm:$0xf]
  %v2477 = vld [vmem:[%s7 + $0x3fc] sm:$0xf]
  %v2478 = vld [vmem:[%s7 + $0x400] sm:$0xf]
  %v2479 = vld [vmem:[%s7 + $0x404] sm:$0xf]
  %v2480 = vld [vmem:[%s7 + $0x408] sm:$0xf]
  %v2481 = vld [vmem:[%s7 + $0x40c] sm:$0xf]
  %v2482 = vld [vmem:[%s7 + $0x410] sm:$0xf]
  %v2483 = vld [vmem:[%s7 + $0x414] sm:$0xf]
  %v2484 = vld [vmem:[%s7 + $0x418] sm:$0xf]
  %v2485 = vld [vmem:[%s7 + $0x41c] sm:$0xf]
  %v2486 = vld [vmem:[%s7 + $0x420] sm:$0xf]
  %v2487 = vld [vmem:[%s7 + $0x424] sm:$0xf]
  %v2488 = vld [vmem:[%s7 + $0x428] sm:$0xf]
  %v2489 = vld [vmem:[%s7 + $0x42c] sm:$0xf]
  %v2490 = vld [vmem:[%s7 + $0x430] sm:$0xf]
  %v2491 = vld [vmem:[%s7 + $0x434] sm:$0xf]
  %v2492 = vld [vmem:[%s7 + $0x438] sm:$0xf]
  %v2493 = vld [vmem:[%s7 + $0x43c] sm:$0xf]
  %v2494 = vld [vmem:[%s7 + $0x440] sm:$0xf]
  %v2495 = vld [vmem:[%s7 + $0x444] sm:$0xf]
  %v2496 = vld [vmem:[%s7 + $0x448] sm:$0xf]
  %v2497 = vld [vmem:[%s7 + $0x44c] sm:$0xf]
  %v2498 = vld [vmem:[%s7 + $0x450] sm:$0xf]
  %v2499 = vld [vmem:[%s7 + $0x454] sm:$0xf]
  %v2500 = vld [vmem:[%s7 + $0x458] sm:$0xf]
  %v2501 = vld [vmem:[%s7 + $0x45c] sm:$0xf]
  %v2502 = vld [vmem:[%s7 + $0x460] sm:$0xf]
  %v2503 = vld [vmem:[%s7 + $0x464] sm:$0xf]
  %v2504 = vld [vmem:[%s7 + $0x468] sm:$0xf]
  %v2505 = vld [vmem:[%s7 + $0x46c] sm:$0xf]
  %v2506 = vld [vmem:[%s7 + $0x470] sm:$0xf]
  %v2507 = vld [vmem:[%s7 + $0x474] sm:$0xf]
  %v2508 = vld [vmem:[%s7 + $0x478] sm:$0xf]
  %v2509 = vld [vmem:[%s7 + $0x47c] sm:$0xf]
  %v2510 = vld [vmem:[%s7 + $0x480] sm:$0xf]
  %v2511 = vld [vmem:[%s7 + $0x484] sm:$0xf]
  %v2512 = vld [vmem:[%s7 + $0x488] sm:$0xf]
  %v2513 = vld [vmem:[%s7 + $0x48c] sm:$0xf]
  %v2514 = vld [vmem:[%s7 + $0x490] sm:$0xf]
  %v2515 = vld [vmem:[%s7 + $0x494] sm:$0xf]
  %v2516 = vld [vmem:[%s7 + $0x498] sm:$0xf]
  %v2517 = vld [vmem:[%s7 + $0x49c] sm:$0xf]
  %v2518 = vld [vmem:[%s7 + $0x4a0] sm:$0xf]
  %v2519 = vld [vmem:[%s7 + $0x4a4] sm:$0xf]
  %v2520 = vld [vmem:[%s7 + $0x4a8] sm:$0xf]
  %v2521 = vld [vmem:[%s7 + $0x4ac] sm:$0xf]
  %v2522 = vld [vmem:[%s7 + $0x4b0] sm:$0xf]
  %v2523 = vld [vmem:[%s7 + $0x4b4] sm:$0xf]
  %v2524 = vld [vmem:[%s7 + $0x4b8] sm:$0xf]
  %v2525 = vld [vmem:[%s7 + $0x4bc] sm:$0xf]
  %v2526 = vld [vmem:[%s7 + $0x4c0] sm:$0xf]
  %v2527 = vld [vmem:[%s7 + $0x4c4] sm:$0xf]
  %v2528 = vld [vmem:[%s7 + $0x4c8] sm:$0xf]
  %v2529 = vld [vmem:[%s7 + $0x4cc] sm:$0xf]
  %v2530 = vld [vmem:[%s7 + $0x4d0] sm:$0xf]
  %v2531 = vld [vmem:[%s7 + $0x4d4] sm:$0xf]
  %v2532 = vld [vmem:[%s7 + $0x4d8] sm:$0xf]
  %v2533 = vld [vmem:[%s7 + $0x4dc] sm:$0xf]
  %v2534 = vld [vmem:[%s7 + $0x4e0] sm:$0xf]
  %v2535 = vld [vmem:[%s7 + $0x4e4] sm:$0xf]
  %v2536 = vld [vmem:[%s7 + $0x4e8] sm:$0xf]
  %v2537 = vld [vmem:[%s7 + $0x4ec] sm:$0xf]
  %v2538 = vld [vmem:[%s7 + $0x4f0] sm:$0xf]
  %v2539 = vld [vmem:[%s7 + $0x4f4] sm:$0xf]
  %v2540 = vld [vmem:[%s7 + $0x4f8] sm:$0xf]
  %v2541 = vld [vmem:[%s7 + $0x4fc] sm:$0xf]
  %v2542 = vld [vmem:[%s7 + $0x500] sm:$0xf]
  %v2543 = vld [vmem:[%s7 + $0x504] sm:$0xf]
  %v2544 = vld [vmem:[%s7 + $0x508] sm:$0xf]
  %v2545 = vld [vmem:[%s7 + $0x50c] sm:$0xf]
  %v2546 = vld [vmem:[%s7 + $0x510] sm:$0xf]
  %v2547 = vld [vmem:[%s7 + $0x514] sm:$0xf]
  %v2548 = vld [vmem:[%s7 + $0x518] sm:$0xf]
  %v2549 = vld [vmem:[%s7 + $0x51c] sm:$0xf]
  %v2550 = vld [vmem:[%s7 + $0x520] sm:$0xf]
  %v2551 = vld [vmem:[%s7 + $0x524] sm:$0xf]
  %v2552 = vld [vmem:[%s7 + $0x528] sm:$0xf]
  %v2553 = vld [vmem:[%s7 + $0x52c] sm:$0xf]
  %v2554 = vld [vmem:[%s7 + $0x530] sm:$0xf]
  %v2555 = vld [vmem:[%s7 + $0x534] sm:$0xf]
  %v2556 = vld [vmem:[%s7 + $0x538] sm:$0xf]
  %v2557 = vld [vmem:[%s7 + $0x53c] sm:$0xf]
  %v2558 = vld [vmem:[%s7 + $0x540] sm:$0xf]
  %v2559 = vld [vmem:[%s7 + $0x544] sm:$0xf]
  %v2560 = vld [vmem:[%s7 + $0x548] sm:$0xf]
  %v2561 = vld [vmem:[%s7 + $0x54c] sm:$0xf]
  %v2562 = vld [vmem:[%s7 + $0x550] sm:$0xf]
  %v2563 = vld [vmem:[%s7 + $0x554] sm:$0xf]
  %v2564 = vld [vmem:[%s7 + $0x558] sm:$0xf]
  %v2565 = vld [vmem:[%s7 + $0x55c] sm:$0xf]
  %v2566 = vld [vmem:[%s7 + $0x560] sm:$0xf]
  %v2567 = vld [vmem:[%s7 + $0x564] sm:$0xf]
  %v2568 = vld [vmem:[%s7 + $0x568] sm:$0xf]
  %v2569 = vld [vmem:[%s7 + $0x56c] sm:$0xf]
  %v2570 = vld [vmem:[%s7 + $0x570] sm:$0xf]
  %v2571 = vld [vmem:[%s7 + $0x574] sm:$0xf]
  %v2572 = vld [vmem:[%s7 + $0x578] sm:$0xf]
  %v2573 = vld [vmem:[%s7 + $0x57c] sm:$0xf]
  %v2574 = vld [vmem:[%s7 + $0x580] sm:$0xf]
  %v2575 = vld [vmem:[%s7 + $0x584] sm:$0xf]
  %v2576 = vld [vmem:[%s7 + $0x588] sm:$0xf]
  %v2577 = vld [vmem:[%s7 + $0x58c] sm:$0xf]
  %v2578 = vld [vmem:[%s7 + $0x590] sm:$0xf]
  %v2579 = vld [vmem:[%s7 + $0x594] sm:$0xf]
  %v2580 = vld [vmem:[%s7 + $0x598] sm:$0xf]
  %v2581 = vld [vmem:[%s7 + $0x59c] sm:$0xf]
  %v2582 = vld [vmem:[%s7 + $0x5a0] sm:$0xf]
  %v2583 = vld [vmem:[%s7 + $0x5a4] sm:$0xf]
  %v2584 = vld [vmem:[%s7 + $0x5a8] sm:$0xf]
  %v2585 = vld [vmem:[%s7 + $0x5ac] sm:$0xf]
  %v2586 = vld [vmem:[%s7 + $0x5b0] sm:$0xf]
  %v2587 = vld [vmem:[%s7 + $0x5b4] sm:$0xf]
  %v2588 = vld [vmem:[%s7 + $0x5b8] sm:$0xf]
  %v2589 = vld [vmem:[%s7 + $0x5bc] sm:$0xf]
  %v2590 = vld [vmem:[%s7 + $0x5c0] sm:$0xf]
  %v2591 = vld [vmem:[%s7 + $0x5c4] sm:$0xf]
  %v2592 = vld [vmem:[%s7 + $0x5c8] sm:$0xf]
  %v2593 = vld [vmem:[%s7 + $0x5cc] sm:$0xf]
  %v2594 = vld [vmem:[%s7 + $0x5d0] sm:$0xf]
  %v2595 = vld [vmem:[%s7 + $0x5d4] sm:$0xf]
  %v2596 = vld [vmem:[%s7 + $0x5d8] sm:$0xf]
  %v2597 = vld [vmem:[%s7 + $0x5dc] sm:$0xf]
  %v2598 = vld [vmem:[%s7 + $0x5e0] sm:$0xf]
  %v2599 = vld [vmem:[%s7 + $0x5e4] sm:$0xf]
  %v2600 = vld [vmem:[%s7 + $0x5e8] sm:$0xf]
  %v2601 = vld [vmem:[%s7 + $0x5ec] sm:$0xf]
  %v2602 = vld [vmem:[%s7 + $0x5f0] sm:$0xf]
  %v2603 = vld [vmem:[%s7 + $0x5f4] sm:$0xf]
  %v2604 = vld [vmem:[%s7 + $0x5f8] sm:$0xf]
  %v2605 = vld [vmem:[%s7 + $0x5fc] sm:$0xf]
  %v2606 = vld [vmem:[%s7 + $0x600] sm:$0xf]
  %v2607 = vld [vmem:[%s7 + $0x604] sm:$0xf]
  %v2608 = vld [vmem:[%s7 + $0x608] sm:$0xf]
  %v2609 = vld [vmem:[%s7 + $0x60c] sm:$0xf]
  %v2610 = vld [vmem:[%s7 + $0x610] sm:$0xf]
  %v2611 = vld [vmem:[%s7 + $0x614] sm:$0xf]
  %v2612 = vld [vmem:[%s7 + $0x618] sm:$0xf]
  %v2613 = vld [vmem:[%s7 + $0x61c] sm:$0xf]
  %v2614 = vld [vmem:[%s7 + $0x620] sm:$0xf]
  %v2615 = vld [vmem:[%s7 + $0x624] sm:$0xf]
  %v2616 = vld [vmem:[%s7 + $0x628] sm:$0xf]
  %v2617 = vld [vmem:[%s7 + $0x62c] sm:$0xf]
  %v2618 = vld [vmem:[%s7 + $0x630] sm:$0xf]
  %v2619 = vld [vmem:[%s7 + $0x634] sm:$0xf]
  %v2620 = vld [vmem:[%s7 + $0x638] sm:$0xf]
  %v2621 = vld [vmem:[%s7 + $0x63c] sm:$0xf]
  %v2622 = vld [vmem:[%s7 + $0x640] sm:$0xf]
  %v2623 = vld [vmem:[%s7 + $0x644] sm:$0xf]
  %v2624 = vld [vmem:[%s7 + $0x648] sm:$0xf]
  %v2625 = vld [vmem:[%s7 + $0x64c] sm:$0xf]
  %v2626 = vld [vmem:[%s7 + $0x650] sm:$0xf]
  %v2627 = vld [vmem:[%s7 + $0x654] sm:$0xf]
  %v2628 = vld [vmem:[%s7 + $0x658] sm:$0xf]
  %v2629 = vld [vmem:[%s7 + $0x65c] sm:$0xf]
  %v2630 = vld [vmem:[%s7 + $0x660] sm:$0xf]
  %v2631 = vld [vmem:[%s7 + $0x664] sm:$0xf]
  %v2632 = vld [vmem:[%s7 + $0x668] sm:$0xf]
  %v2633 = vld [vmem:[%s7 + $0x66c] sm:$0xf]
  %v2634 = vld [vmem:[%s7 + $0x670] sm:$0xf]
  %v2635 = vld [vmem:[%s7 + $0x674] sm:$0xf]
  %v2636 = vld [vmem:[%s7 + $0x678] sm:$0xf]
  %v2637 = vld [vmem:[%s7 + $0x67c] sm:$0xf]
  %v2638 = vld [vmem:[%s7 + $0x680] sm:$0xf]
  %v2639 = vld [vmem:[%s7 + $0x684] sm:$0xf]
  %v2640 = vld [vmem:[%s7 + $0x688] sm:$0xf]
  %v2641 = vld [vmem:[%s7 + $0x68c] sm:$0xf]
  %v2642 = vld [vmem:[%s7 + $0x690] sm:$0xf]
  %v2643 = vld [vmem:[%s7 + $0x694] sm:$0xf]
  %v2644 = vld [vmem:[%s7 + $0x698] sm:$0xf]
  %v2645 = vld [vmem:[%s7 + $0x69c] sm:$0xf]
  %v2646 = vld [vmem:[%s7 + $0x6a0] sm:$0xf]
  %v2647 = vld [vmem:[%s7 + $0x6a4] sm:$0xf]
  %v2648 = vld [vmem:[%s7 + $0x6a8] sm:$0xf]
  %v2649 = vld [vmem:[%s7 + $0x6ac] sm:$0xf]
  %v2650 = vld [vmem:[%s7 + $0x6b0] sm:$0xf]
  %v2651 = vld [vmem:[%s7 + $0x6b4] sm:$0xf]
  %v2652 = vld [vmem:[%s7 + $0x6b8] sm:$0xf]
  %v2653 = vld [vmem:[%s7 + $0x6bc] sm:$0xf]
  %v2654 = vld [vmem:[%s7 + $0x6c0] sm:$0xf]
  %v2655 = vld [vmem:[%s7 + $0x6c4] sm:$0xf]
  %v2656 = vld [vmem:[%s7 + $0x6c8] sm:$0xf]
  %v2657 = vld [vmem:[%s7 + $0x6cc] sm:$0xf]
  %v2658 = vld [vmem:[%s7 + $0x6d0] sm:$0xf]
  %v2659 = vld [vmem:[%s7 + $0x6d4] sm:$0xf]
  %v2660 = vld [vmem:[%s7 + $0x6d8] sm:$0xf]
  %v2661 = vld [vmem:[%s7 + $0x6dc] sm:$0xf]
  %v2662 = vld [vmem:[%s7 + $0x6e0] sm:$0xf]
  %v2663 = vld [vmem:[%s7 + $0x6e4] sm:$0xf]
  %v2664 = vld [vmem:[%s7 + $0x6e8] sm:$0xf]
  %v2665 = vld [vmem:[%s7 + $0x6ec] sm:$0xf]
  %v2666 = vld [vmem:[%s7 + $0x6f0] sm:$0xf]
  %v2667 = vld [vmem:[%s7 + $0x6f4] sm:$0xf]
  %v2668 = vld [vmem:[%s7 + $0x6f8] sm:$0xf]
  %v2669 = vld [vmem:[%s7 + $0x6fc] sm:$0xf]
  %v2670 = vld [vmem:[%s7 + $0x700] sm:$0xf]
  %v2671 = vld [vmem:[%s7 + $0x704] sm:$0xf]
  %v2672 = vld [vmem:[%s7 + $0x708] sm:$0xf]
  %v2673 = vld [vmem:[%s7 + $0x70c] sm:$0xf]
  %v2674 = vld [vmem:[%s7 + $0x710] sm:$0xf]
  %v2675 = vld [vmem:[%s7 + $0x714] sm:$0xf]
  %v2676 = vld [vmem:[%s7 + $0x718] sm:$0xf]
  %v2677 = vld [vmem:[%s7 + $0x71c] sm:$0xf]
  %v2678 = vld [vmem:[%s7 + $0x720] sm:$0xf]
  %v2679 = vld [vmem:[%s7 + $0x724] sm:$0xf]
  %v2680 = vld [vmem:[%s7 + $0x728] sm:$0xf]
  %v2681 = vld [vmem:[%s7 + $0x72c] sm:$0xf]
  %v2682 = vld [vmem:[%s7 + $0x730] sm:$0xf]
  %v2683 = vld [vmem:[%s7 + $0x734] sm:$0xf]
  %v2684 = vld [vmem:[%s7 + $0x738] sm:$0xf]
  %v2685 = vld [vmem:[%s7 + $0x73c] sm:$0xf]
  %v2686 = vld [vmem:[%s7 + $0x740] sm:$0xf]
  %v2687 = vld [vmem:[%s7 + $0x744] sm:$0xf]
  %v2688 = vld [vmem:[%s7 + $0x748] sm:$0xf]
  %v2689 = vld [vmem:[%s7 + $0x74c] sm:$0xf]
  %v2690 = vld [vmem:[%s7 + $0x750] sm:$0xf]
  %v2691 = vld [vmem:[%s7 + $0x754] sm:$0xf]
  %v2692 = vld [vmem:[%s7 + $0x758] sm:$0xf]
  %v2693 = vld [vmem:[%s7 + $0x75c] sm:$0xf]
  %v2694 = vld [vmem:[%s7 + $0x760] sm:$0xf]
  %v2695 = vld [vmem:[%s7 + $0x764] sm:$0xf]
  %v2696 = vld [vmem:[%s7 + $0x768] sm:$0xf]
  %v2697 = vld [vmem:[%s7 + $0x76c] sm:$0xf]
  %v2698 = vld [vmem:[%s7 + $0x770] sm:$0xf]
  %v2699 = vld [vmem:[%s7 + $0x774] sm:$0xf]
  %v2700 = vld [vmem:[%s7 + $0x778] sm:$0xf]
  %v2701 = vld [vmem:[%s7 + $0x77c] sm:$0xf]
  %v2702 = vld [vmem:[%s7 + $0x780] sm:$0xf]
  %v2703 = vld [vmem:[%s7 + $0x784] sm:$0xf]
  %v2704 = vld [vmem:[%s7 + $0x788] sm:$0xf]
  %v2705 = vld [vmem:[%s7 + $0x78c] sm:$0xf]
  %v2706 = vld [vmem:[%s7 + $0x790] sm:$0xf]
  %v2707 = vld [vmem:[%s7 + $0x794] sm:$0xf]
  %v2708 = vld [vmem:[%s7 + $0x798] sm:$0xf]
  %v2709 = vld [vmem:[%s7 + $0x79c] sm:$0xf]
  %v2710 = vld [vmem:[%s7 + $0x7a0] sm:$0xf]
  %v2711 = vld [vmem:[%s7 + $0x7a4] sm:$0xf]
  %v2712 = vld [vmem:[%s7 + $0x7a8] sm:$0xf]
  %v2713 = vld [vmem:[%s7 + $0x7ac] sm:$0xf]
  %v2714 = vld [vmem:[%s7 + $0x7b0] sm:$0xf]
  %v2715 = vld [vmem:[%s7 + $0x7b4] sm:$0xf]
  %v2716 = vld [vmem:[%s7 + $0x7b8] sm:$0xf]
  %v2717 = vld [vmem:[%s7 + $0x7bc] sm:$0xf]
  %v2718 = vld [vmem:[%s7 + $0x7c0] sm:$0xf]
  %v2719 = vld [vmem:[%s7 + $0x7c4] sm:$0xf]
  %v2720 = vld [vmem:[%s7 + $0x7c8] sm:$0xf]
  %v2721 = vld [vmem:[%s7 + $0x7cc] sm:$0xf]
  %v2722 = vld [vmem:[%s7 + $0x7d0] sm:$0xf]
  %v2723 = vld [vmem:[%s7 + $0x7d4] sm:$0xf]
  %v2724 = vld [vmem:[%s7 + $0x7d8] sm:$0xf]
  %v2725 = vld [vmem:[%s7 + $0x7dc] sm:$0xf]
  %v2726 = vld [vmem:[%s7 + $0x7e0] sm:$0xf]
  %v2727 = vld [vmem:[%s7 + $0x7e4] sm:$0xf]
  %v2728 = vld [vmem:[%s7 + $0x7e8] sm:$0xf]
  %v2729 = vld [vmem:[%s7 + $0x7ec] sm:$0xf]
  %v2730 = vld [vmem:[%s7 + $0x7f0] sm:$0xf]
  %v2731 = vld [vmem:[%s7 + $0x7f4] sm:$0xf]
  %v2732 = vld [vmem:[%s7 + $0x7f8] sm:$0xf]
  %v2733 = vld [vmem:[%s7 + $0x7fc] sm:$0xf]
  %v2734 = vld [vmem:[%s7 + $0x800] sm:$0xf]
  %v2735 = vld [vmem:[%s7 + $0x804] sm:$0xf]
  %v2736 = vld [vmem:[%s7 + $0x808] sm:$0xf]
  %v2737 = vld [vmem:[%s7 + $0x80c] sm:$0xf]
  %v2738 = vld [vmem:[%s7 + $0x810] sm:$0xf]
  %v2739 = vld [vmem:[%s7 + $0x814] sm:$0xf]
  %v2740 = vld [vmem:[%s7 + $0x818] sm:$0xf]
  %v2741 = vld [vmem:[%s7 + $0x81c] sm:$0xf]
  %v2742 = vld [vmem:[%s7 + $0x820] sm:$0xf]
  %v2743 = vld [vmem:[%s7 + $0x824] sm:$0xf]
  %v2744 = vld [vmem:[%s7 + $0x828] sm:$0xf]
  %v2745 = vld [vmem:[%s7 + $0x82c] sm:$0xf]
  %v2746 = vld [vmem:[%s7 + $0x830] sm:$0xf]
  %v2747 = vld [vmem:[%s7 + $0x834] sm:$0xf]
  %v2748 = vld [vmem:[%s7 + $0x838] sm:$0xf]
  %v2749 = vld [vmem:[%s7 + $0x83c] sm:$0xf]
  %v2750 = vld [vmem:[%s7 + $0x840] sm:$0xf]
  %v2751 = vld [vmem:[%s7 + $0x844] sm:$0xf]
  %v2752 = vld [vmem:[%s7 + $0x848] sm:$0xf]
  %v2753 = vld [vmem:[%s7 + $0x84c] sm:$0xf]
  %v2754 = vld [vmem:[%s7 + $0x850] sm:$0xf]
  %v2755 = vld [vmem:[%s7 + $0x854] sm:$0xf]
  %v2756 = vld [vmem:[%s7 + $0x858] sm:$0xf]
  %v2757 = vld [vmem:[%s7 + $0x85c] sm:$0xf]
  %v2758 = vld [vmem:[%s7 + $0x860] sm:$0xf]
  %v2759 = vld [vmem:[%s7 + $0x864] sm:$0xf]
  %v2760 = vld [vmem:[%s7 + $0x868] sm:$0xf]
  %v2761 = vld [vmem:[%s7 + $0x86c] sm:$0xf]
  %v2762 = vld [vmem:[%s7 + $0x870] sm:$0xf]
  %v2763 = vld [vmem:[%s7 + $0x874] sm:$0xf]
  %v2764 = vld [vmem:[%s7 + $0x878] sm:$0xf]
  %v2765 = vld [vmem:[%s7 + $0x87c] sm:$0xf]
  %v2766 = vld [vmem:[%s7 + $0x880] sm:$0xf]
  %v2767 = vld [vmem:[%s7 + $0x884] sm:$0xf]
  %v2768 = vld [vmem:[%s7 + $0x888] sm:$0xf]
  %v2769 = vld [vmem:[%s7 + $0x88c] sm:$0xf]
  %v2770 = vld [vmem:[%s7 + $0x890] sm:$0xf]
  %v2771 = vld [vmem:[%s7 + $0x894] sm:$0xf]
  %v2772 = vld [vmem:[%s7 + $0x898] sm:$0xf]
  %v2773 = vld [vmem:[%s7 + $0x89c] sm:$0xf]
  %v2774 = vld [vmem:[%s7 + $0x8a0] sm:$0xf]
  %v2775 = vld [vmem:[%s7 + $0x8a4] sm:$0xf]
  %v2776 = vld [vmem:[%s7 + $0x8a8] sm:$0xf]
  %v2777 = vld [vmem:[%s7 + $0x8ac] sm:$0xf]
  %v2778 = vld [vmem:[%s7 + $0x8b0] sm:$0xf]
  %v2779 = vld [vmem:[%s7 + $0x8b4] sm:$0xf]
  %v2780 = vld [vmem:[%s7 + $0x8b8] sm:$0xf]
  %v2781 = vld [vmem:[%s7 + $0x8bc] sm:$0xf]
  %v2782 = vld [vmem:[%s7 + $0x8c0] sm:$0xf]
  %v2783 = vld [vmem:[%s7 + $0x8c4] sm:$0xf]
  %v2784 = vld [vmem:[%s7 + $0x8c8] sm:$0xf]
  %v2785 = vld [vmem:[%s7 + $0x8cc] sm:$0xf]
  %v2786 = vld [vmem:[%s7 + $0x8d0] sm:$0xf]
  %v2787 = vld [vmem:[%s7 + $0x8d4] sm:$0xf]
  %v2788 = vld [vmem:[%s7 + $0x8d8] sm:$0xf]
  %v2789 = vld [vmem:[%s7 + $0x8dc] sm:$0xf]
  %v2790 = vld [vmem:[%s7 + $0x8e0] sm:$0xf]
  %v2791 = vld [vmem:[%s7 + $0x8e4] sm:$0xf]
  %v2792 = vld [vmem:[%s7 + $0x8e8] sm:$0xf]
  %v2793 = vld [vmem:[%s7 + $0x8ec] sm:$0xf]
  %v2794 = vld [vmem:[%s7 + $0x8f0] sm:$0xf]
  %v2795 = vld [vmem:[%s7 + $0x8f4] sm:$0xf]
  %v2796 = vld [vmem:[%s7 + $0x8f8] sm:$0xf]
  %v2797 = vld [vmem:[%s7 + $0x8fc] sm:$0xf]
  %v2798 = vld [vmem:[%s7 + $0x900] sm:$0xf]
  %v2799 = vld [vmem:[%s7 + $0x904] sm:$0xf]
  %v2800 = vld [vmem:[%s7 + $0x908] sm:$0xf]
  %v2801 = vld [vmem:[%s7 + $0x90c] sm:$0xf]
  %v2802 = vld [vmem:[%s7 + $0x910] sm:$0xf]
  %v2803 = vld [vmem:[%s7 + $0x914] sm:$0xf]
  %v2804 = vld [vmem:[%s7 + $0x918] sm:$0xf]
  %v2805 = vld [vmem:[%s7 + $0x91c] sm:$0xf]
  %v2806 = vld [vmem:[%s7 + $0x920] sm:$0xf]
  %v2807 = vld [vmem:[%s7 + $0x924] sm:$0xf]
  %v2808 = vld [vmem:[%s7 + $0x928] sm:$0xf]
  %v2809 = vld [vmem:[%s7 + $0x92c] sm:$0xf]
  %v2810 = vld [vmem:[%s7 + $0x930] sm:$0xf]
  %v2811 = vld [vmem:[%s7 + $0x934] sm:$0xf]
  %v2812 = vld [vmem:[%s7 + $0x938] sm:$0xf]
  %v2813 = vld [vmem:[%s7 + $0x93c] sm:$0xf]
  %v2814 = vld [vmem:[%s7 + $0x940] sm:$0xf]
  %v2815 = vld [vmem:[%s7 + $0x944] sm:$0xf]
  %v2816 = vld [vmem:[%s7 + $0x948] sm:$0xf]
  %v2817 = vld [vmem:[%s7 + $0x94c] sm:$0xf]
  %v2818 = vld [vmem:[%s7 + $0x950] sm:$0xf]
  %v2819 = vld [vmem:[%s7 + $0x954] sm:$0xf]
  %v2820 = vld [vmem:[%s7 + $0x958] sm:$0xf]
  %v2821 = vld [vmem:[%s7 + $0x95c] sm:$0xf]
  %v2822 = vld [vmem:[%s7 + $0x960] sm:$0xf]
  %v2823 = vld [vmem:[%s7 + $0x964] sm:$0xf]
  %v2824 = vld [vmem:[%s7 + $0x968] sm:$0xf]
  %v2825 = vld [vmem:[%s7 + $0x96c] sm:$0xf]
  %v2826 = vld [vmem:[%s7 + $0x970] sm:$0xf]
  %v2827 = vld [vmem:[%s7 + $0x974] sm:$0xf]
  %v2828 = vld [vmem:[%s7 + $0x978] sm:$0xf]
  %v2829 = vld [vmem:[%s7 + $0x97c] sm:$0xf]
  %v2830 = vld [vmem:[%s7 + $0x980] sm:$0xf]
  %v2831 = vld [vmem:[%s7 + $0x984] sm:$0xf]
  %v2832 = vld [vmem:[%s7 + $0x988] sm:$0xf]
  %v2833 = vld [vmem:[%s7 + $0x98c] sm:$0xf]
  %v2834 = vld [vmem:[%s7 + $0x990] sm:$0xf]
  %v2835 = vld [vmem:[%s7 + $0x994] sm:$0xf]
  %v2836 = vld [vmem:[%s7 + $0x998] sm:$0xf]
  %v2837 = vld [vmem:[%s7 + $0x99c] sm:$0xf]
  %v2838 = vld [vmem:[%s7 + $0x9a0] sm:$0xf]
  %v2839 = vld [vmem:[%s7 + $0x9a4] sm:$0xf]
  %v2840 = vld [vmem:[%s7 + $0x9a8] sm:$0xf]
  %v2841 = vld [vmem:[%s7 + $0x9ac] sm:$0xf]
  %v2842 = vld [vmem:[%s7 + $0x9b0] sm:$0xf]
  %v2843 = vld [vmem:[%s7 + $0x9b4] sm:$0xf]
  %v2844 = vld [vmem:[%s7 + $0x9b8] sm:$0xf]
  %v2845 = vld [vmem:[%s7 + $0x9bc] sm:$0xf]
  %v2846 = vld [vmem:[%s7 + $0x9c0] sm:$0xf]
  %v2847 = vld [vmem:[%s7 + $0x9c4] sm:$0xf]
  %v2848 = vld [vmem:[%s7 + $0x9c8] sm:$0xf]
  %v2849 = vld [vmem:[%s7 + $0x9cc] sm:$0xf]
  %v2850 = vld [vmem:[%s7 + $0x9d0] sm:$0xf]
  %v2851 = vld [vmem:[%s7 + $0x9d4] sm:$0xf]
  %v2852 = vld [vmem:[%s7 + $0x9d8] sm:$0xf]
  %v2853 = vld [vmem:[%s7 + $0x9dc] sm:$0xf]
  %v2854 = vld [vmem:[%s7 + $0x9e0] sm:$0xf]
  %v2855 = vld [vmem:[%s7 + $0x9e4] sm:$0xf]
  %v2856 = vld [vmem:[%s7 + $0x9e8] sm:$0xf]
  %v2857 = vld [vmem:[%s7 + $0x9ec] sm:$0xf]
  %v2858 = vld [vmem:[%s7 + $0x9f0] sm:$0xf]
  %v2859 = vld [vmem:[%s7 + $0x9f4] sm:$0xf]
  %v2860 = vld [vmem:[%s7 + $0x9f8] sm:$0xf]
  %v2861 = vld [vmem:[%s7 + $0x9fc] sm:$0xf]
  %v2862 = vld [vmem:[%s7 + $0xa00] sm:$0xf]
  %v2863 = vld [vmem:[%s7 + $0xa04] sm:$0xf]
  %v2864 = vld [vmem:[%s7 + $0xa08] sm:$0xf]
  %v2865 = vld [vmem:[%s7 + $0xa0c] sm:$0xf]
  %v2866 = vld [vmem:[%s7 + $0xa10] sm:$0xf]
  %v2867 = vld [vmem:[%s7 + $0xa14] sm:$0xf]
  %v2868 = vld [vmem:[%s7 + $0xa18] sm:$0xf]
  %v2869 = vld [vmem:[%s7 + $0xa1c] sm:$0xf]
  %v2870 = vld [vmem:[%s7 + $0xa20] sm:$0xf]
  %v2871 = vld [vmem:[%s7 + $0xa24] sm:$0xf]
  %v2872 = vld [vmem:[%s7 + $0xa28] sm:$0xf]
  %v2873 = vld [vmem:[%s7 + $0xa2c] sm:$0xf]
  %v2874 = vld [vmem:[%s7 + $0xa30] sm:$0xf]
  %v2875 = vld [vmem:[%s7 + $0xa34] sm:$0xf]
  %v2876 = vld [vmem:[%s7 + $0xa38] sm:$0xf]
  %v2877 = vld [vmem:[%s7 + $0xa3c] sm:$0xf]
  %v2878 = vld [vmem:[%s7 + $0xa40] sm:$0xf]
  %v2879 = vld [vmem:[%s7 + $0xa44] sm:$0xf]
  %v2880 = vld [vmem:[%s7 + $0xa48] sm:$0xf]
  %v2881 = vld [vmem:[%s7 + $0xa4c] sm:$0xf]
  %v2882 = vld [vmem:[%s7 + $0xa50] sm:$0xf]
  %v2883 = vld [vmem:[%s7 + $0xa54] sm:$0xf]
  %v2884 = vld [vmem:[%s7 + $0xa58] sm:$0xf]
  %v2885 = vld [vmem:[%s7 + $0xa5c] sm:$0xf]
  %v2886 = vld [vmem:[%s7 + $0xa60] sm:$0xf]
  %v2887 = vld [vmem:[%s7 + $0xa64] sm:$0xf]
  %v2888 = vld [vmem:[%s7 + $0xa68] sm:$0xf]
  %v2889 = vld [vmem:[%s7 + $0xa6c] sm:$0xf]
  %v2890 = vld [vmem:[%s7 + $0xa70] sm:$0xf]
  %v2891 = vld [vmem:[%s7 + $0xa74] sm:$0xf]
  %v2892 = vld [vmem:[%s7 + $0xa78] sm:$0xf]
  %v2893 = vld [vmem:[%s7 + $0xa7c] sm:$0xf]
  %v2894 = vld [vmem:[%s7 + $0xa80] sm:$0xf]
  %v2895 = vld [vmem:[%s7 + $0xa84] sm:$0xf]
  %v2896 = vld [vmem:[%s7 + $0xa88] sm:$0xf]
  %v2897 = vld [vmem:[%s7 + $0xa8c] sm:$0xf]
  %v2898 = vld [vmem:[%s7 + $0xa90] sm:$0xf]
  %v2899 = vld [vmem:[%s7 + $0xa94] sm:$0xf]
  %v2900 = vld [vmem:[%s7 + $0xa98] sm:$0xf]
  %v2901 = vld [vmem:[%s7 + $0xa9c] sm:$0xf]
  %v2902 = vld [vmem:[%s7 + $0xaa0] sm:$0xf]
  %v2903 = vld [vmem:[%s7 + $0xaa4] sm:$0xf]
  %v2904 = vld [vmem:[%s7 + $0xaa8] sm:$0xf]
  %v2905 = vld [vmem:[%s7 + $0xaac] sm:$0xf]
  %v2906 = vld [vmem:[%s7 + $0xab0] sm:$0xf]
  %v2907 = vld [vmem:[%s7 + $0xab4] sm:$0xf]
  %v2908 = vld [vmem:[%s7 + $0xab8] sm:$0xf]
  %v2909 = vld [vmem:[%s7 + $0xabc] sm:$0xf]
  %v2910 = vld [vmem:[%s7 + $0xac0] sm:$0xf]
  %v2911 = vld [vmem:[%s7 + $0xac4] sm:$0xf]
  %v2912 = vld [vmem:[%s7 + $0xac8] sm:$0xf]
  %v2913 = vld [vmem:[%s7 + $0xacc] sm:$0xf]
  %v2914 = vld [vmem:[%s7 + $0xad0] sm:$0xf]
  %v2915 = vld [vmem:[%s7 + $0xad4] sm:$0xf]
  %v2916 = vld [vmem:[%s7 + $0xad8] sm:$0xf]
  %v2917 = vld [vmem:[%s7 + $0xadc] sm:$0xf]
  %v2918 = vld [vmem:[%s7 + $0xae0] sm:$0xf]
  %v2919 = vld [vmem:[%s7 + $0xae4] sm:$0xf]
  %v2920 = vld [vmem:[%s7 + $0xae8] sm:$0xf]
  %v2921 = vld [vmem:[%s7 + $0xaec] sm:$0xf]
  %v2922 = vld [vmem:[%s7 + $0xaf0] sm:$0xf]
  %v2923 = vld [vmem:[%s7 + $0xaf4] sm:$0xf]
  %v2924 = vld [vmem:[%s7 + $0xaf8] sm:$0xf]
  %v2925 = vld [vmem:[%s7 + $0xafc] sm:$0xf]
  %v2926 = vld [vmem:[%s7 + $0xb00] sm:$0xf]
  %v2927 = vld [vmem:[%s7 + $0xb04] sm:$0xf]
  %v2928 = vld [vmem:[%s7 + $0xb08] sm:$0xf]
  %v2929 = vld [vmem:[%s7 + $0xb0c] sm:$0xf]
  %v2930 = vld [vmem:[%s7 + $0xb10] sm:$0xf]
  %v2931 = vld [vmem:[%s7 + $0xb14] sm:$0xf]
  %v2932 = vld [vmem:[%s7 + $0xb18] sm:$0xf]
  %v2933 = vld [vmem:[%s7 + $0xb1c] sm:$0xf]
  %v2934 = vld [vmem:[%s7 + $0xb20] sm:$0xf]
  %v2935 = vld [vmem:[%s7 + $0xb24] sm:$0xf]
  %v2936 = vld [vmem:[%s7 + $0xb28] sm:$0xf]
  %v2937 = vld [vmem:[%s7 + $0xb2c] sm:$0xf]
  %v2938 = vld [vmem:[%s7 + $0xb30] sm:$0xf]
  %v2939 = vld [vmem:[%s7 + $0xb34] sm:$0xf]
  %v2940 = vld [vmem:[%s7 + $0xb38] sm:$0xf]
  %v2941 = vld [vmem:[%s7 + $0xb3c] sm:$0xf]
  %v2942 = vld [vmem:[%s7 + $0xb40] sm:$0xf]
  %v2943 = vld [vmem:[%s7 + $0xb44] sm:$0xf]
  %v2944 = vld [vmem:[%s7 + $0xb48] sm:$0xf]
  %v2945 = vld [vmem:[%s7 + $0xb4c] sm:$0xf]
  %v2946 = vld [vmem:[%s7 + $0xb50] sm:$0xf]
  %v2947 = vld [vmem:[%s7 + $0xb54] sm:$0xf]
  %v2948 = vld [vmem:[%s7 + $0xb58] sm:$0xf]
  %v2949 = vld [vmem:[%s7 + $0xb5c] sm:$0xf]
  %v2950 = vld [vmem:[%s7 + $0xb60] sm:$0xf]
  %v2951 = vld [vmem:[%s7 + $0xb64] sm:$0xf]
  %v2952 = vld [vmem:[%s7 + $0xb68] sm:$0xf]
  %v2953 = vld [vmem:[%s7 + $0xb6c] sm:$0xf]
  %v2954 = vld [vmem:[%s7 + $0xb70] sm:$0xf]
  %v2955 = vld [vmem:[%s7 + $0xb74] sm:$0xf]
  %v2956 = vld [vmem:[%s7 + $0xb78] sm:$0xf]
  %v2957 = vld [vmem:[%s7 + $0xb7c] sm:$0xf]
  %v2958 = vld [vmem:[%s7 + $0xb80] sm:$0xf]
  %v2959 = vld [vmem:[%s7 + $0xb84] sm:$0xf]
  %v2960 = vld [vmem:[%s7 + $0xb88] sm:$0xf]
  %v2961 = vld [vmem:[%s7 + $0xb8c] sm:$0xf]
  %v2962 = vld [vmem:[%s7 + $0xb90] sm:$0xf]
  %v2963 = vld [vmem:[%s7 + $0xb94] sm:$0xf]
  %v2964 = vld [vmem:[%s7 + $0xb98] sm:$0xf]
  %v2965 = vld [vmem:[%s7 + $0xb9c] sm:$0xf]
  %v2966 = vld [vmem:[%s7 + $0xba0] sm:$0xf]
  %v2967 = vld [vmem:[%s7 + $0xba4] sm:$0xf]
  %v2968 = vld [vmem:[%s7 + $0xba8] sm:$0xf]
  %v2969 = vld [vmem:[%s7 + $0xbac] sm:$0xf]
  %v2970 = vld [vmem:[%s7 + $0xbb0] sm:$0xf]
  %v2971 = vld [vmem:[%s7 + $0xbb4] sm:$0xf]
  %v2972 = vld [vmem:[%s7 + $0xbb8] sm:$0xf]
  %v2973 = vld [vmem:[%s7 + $0xbbc] sm:$0xf]
  %v2974 = vld [vmem:[%s7 + $0xbc0] sm:$0xf]
  %v2975 = vld [vmem:[%s7 + $0xbc4] sm:$0xf]
  %v2976 = vld [vmem:[%s7 + $0xbc8] sm:$0xf]
  %v2977 = vld [vmem:[%s7 + $0xbcc] sm:$0xf]
  %v2978 = vld [vmem:[%s7 + $0xbd0] sm:$0xf]
  %v2979 = vld [vmem:[%s7 + $0xbd4] sm:$0xf]
  %v2980 = vld [vmem:[%s7 + $0xbd8] sm:$0xf]
  %v2981 = vld [vmem:[%s7 + $0xbdc] sm:$0xf]
  %v2982 = vld [vmem:[%s7 + $0xbe0] sm:$0xf]
  %v2983 = vld [vmem:[%s7 + $0xbe4] sm:$0xf]
  %v2984 = vld [vmem:[%s7 + $0xbe8] sm:$0xf]
  %v2985 = vld [vmem:[%s7 + $0xbec] sm:$0xf]
  %v2986 = vld [vmem:[%s7 + $0xbf0] sm:$0xf]
  %v2987 = vld [vmem:[%s7 + $0xbf4] sm:$0xf]
  %v2988 = vld [vmem:[%s7 + $0xbf8] sm:$0xf]
  %v2989 = vld [vmem:[%s7 + $0xbfc] sm:$0xf]
  %v2990 = vld [vmem:[%s7 + $0xc00] sm:$0xf]
  %v2991 = vld [vmem:[%s7 + $0xc04] sm:$0xf]
  %v2992 = vld [vmem:[%s7 + $0xc08] sm:$0xf]
  %v2993 = vld [vmem:[%s7 + $0xc0c] sm:$0xf]
  %v2994 = vld [vmem:[%s7 + $0xc10] sm:$0xf]
  %v2995 = vld [vmem:[%s7 + $0xc14] sm:$0xf]
  %v2996 = vld [vmem:[%s7 + $0xc18] sm:$0xf]
  %v2997 = vld [vmem:[%s7 + $0xc1c] sm:$0xf]
  %v2998 = vld [vmem:[%s7 + $0xc20] sm:$0xf]
  %v2999 = vld [vmem:[%s7 + $0xc24] sm:$0xf]
  %v3000 = vld [vmem:[%s7 + $0xc28] sm:$0xf]
  %v3001 = vld [vmem:[%s7 + $0xc2c] sm:$0xf]
  %v3002 = vld [vmem:[%s7 + $0xc30] sm:$0xf]
  %v3003 = vld [vmem:[%s7 + $0xc34] sm:$0xf]
  %v3004 = vld [vmem:[%s7 + $0xc38] sm:$0xf]
  %v3005 = vld [vmem:[%s7 + $0xc3c] sm:$0xf]
  %v3006 = vld [vmem:[%s7 + $0xc40] sm:$0xf]
  %v3007 = vld [vmem:[%s7 + $0xc44] sm:$0xf]
  %v3008 = vld [vmem:[%s7 + $0xc48] sm:$0xf]
  %v3009 = vld [vmem:[%s7 + $0xc4c] sm:$0xf]
  %v3010 = vld [vmem:[%s7 + $0xc50] sm:$0xf]
  %v3011 = vld [vmem:[%s7 + $0xc54] sm:$0xf]
  %v3012 = vld [vmem:[%s7 + $0xc58] sm:$0xf]
  %v3013 = vld [vmem:[%s7 + $0xc5c] sm:$0xf]
  %v3014 = vld [vmem:[%s7 + $0xc60] sm:$0xf]
  %v3015 = vld [vmem:[%s7 + $0xc64] sm:$0xf]
  %v3016 = vld [vmem:[%s7 + $0xc68] sm:$0xf]
  %v3017 = vld [vmem:[%s7 + $0xc6c] sm:$0xf]
  %v3018 = vld [vmem:[%s7 + $0xc70] sm:$0xf]
  %v3019 = vld [vmem:[%s7 + $0xc74] sm:$0xf]
  %v3020 = vld [vmem:[%s7 + $0xc78] sm:$0xf]
  %v3021 = vld [vmem:[%s7 + $0xc7c] sm:$0xf]
  %v3022 = vld [vmem:[%s7 + $0xc80] sm:$0xf]
  %v3023 = vld [vmem:[%s7 + $0xc84] sm:$0xf]
  %v3024 = vld [vmem:[%s7 + $0xc88] sm:$0xf]
  %v3025 = vld [vmem:[%s7 + $0xc8c] sm:$0xf]
  %v3026 = vld [vmem:[%s7 + $0xc90] sm:$0xf]
  %v3027 = vld [vmem:[%s7 + $0xc94] sm:$0xf]
  %v3028 = vld [vmem:[%s7 + $0xc98] sm:$0xf]
  %v3029 = vld [vmem:[%s7 + $0xc9c] sm:$0xf]
  %v3030 = vld [vmem:[%s7 + $0xca0] sm:$0xf]
  %v3031 = vld [vmem:[%s7 + $0xca4] sm:$0xf]
  %v3032 = vld [vmem:[%s7 + $0xca8] sm:$0xf]
  %v3033 = vld [vmem:[%s7 + $0xcac] sm:$0xf]
  %v3034 = vld [vmem:[%s7 + $0xcb0] sm:$0xf]
  %v3035 = vld [vmem:[%s7 + $0xcb4] sm:$0xf]
  %v3036 = vld [vmem:[%s7 + $0xcb8] sm:$0xf]
  %v3037 = vld [vmem:[%s7 + $0xcbc] sm:$0xf]
  %v3038 = vld [vmem:[%s7 + $0xcc0] sm:$0xf]
  %v3039 = vld [vmem:[%s7 + $0xcc4] sm:$0xf]
  %v3040 = vld [vmem:[%s7 + $0xcc8] sm:$0xf]
  %v3041 = vld [vmem:[%s7 + $0xccc] sm:$0xf]
  %v3042 = vld [vmem:[%s7 + $0xcd0] sm:$0xf]
  %v3043 = vld [vmem:[%s7 + $0xcd4] sm:$0xf]
  %v3044 = vld [vmem:[%s7 + $0xcd8] sm:$0xf]
  %v3045 = vld [vmem:[%s7 + $0xcdc] sm:$0xf]
  %v3046 = vld [vmem:[%s7 + $0xce0] sm:$0xf]
  %v3047 = vld [vmem:[%s7 + $0xce4] sm:$0xf]
  %v3048 = vld [vmem:[%s7 + $0xce8] sm:$0xf]
  %v3049 = vld [vmem:[%s7 + $0xcec] sm:$0xf]
  %v3050 = vld [vmem:[%s7 + $0xcf0] sm:$0xf]
  %v3051 = vld [vmem:[%s7 + $0xcf4] sm:$0xf]
  %v3052 = vld [vmem:[%s7 + $0xcf8] sm:$0xf]
  %v3053 = vld [vmem:[%s7 + $0xcfc] sm:$0xf]
  %v3054 = vld [vmem:[%s7 + $0xd00] sm:$0xf]
  %v3055 = vld [vmem:[%s7 + $0xd04] sm:$0xf]
  %v3056 = vld [vmem:[%s7 + $0xd08] sm:$0xf]
  %v3057 = vld [vmem:[%s7 + $0xd0c] sm:$0xf]
  %v3058 = vld [vmem:[%s7 + $0xd10] sm:$0xf]
  %v3059 = vld [vmem:[%s7 + $0xd14] sm:$0xf]
  %v3060 = vld [vmem:[%s7 + $0xd18] sm:$0xf]
  %v3061 = vld [vmem:[%s7 + $0xd1c] sm:$0xf]
  %v3062 = vld [vmem:[%s7 + $0xd20] sm:$0xf]
  %v3063 = vld [vmem:[%s7 + $0xd24] sm:$0xf]
  %v3064 = vld [vmem:[%s7 + $0xd28] sm:$0xf]
  %v3065 = vld [vmem:[%s7 + $0xd2c] sm:$0xf]
  %v3066 = vld [vmem:[%s7 + $0xd30] sm:$0xf]
  %v3067 = vld [vmem:[%s7 + $0xd34] sm:$0xf]
  %v3068 = vld [vmem:[%s7 + $0xd38] sm:$0xf]
  %v3069 = vld [vmem:[%s7 + $0xd3c] sm:$0xf]
  %v3070 = vld [vmem:[%s7 + $0xd40] sm:$0xf]
  %v3071 = vld [vmem:[%s7 + $0xd44] sm:$0xf]
  %v3072 = vld [vmem:[%s7 + $0xd48] sm:$0xf]
  %v3073 = vld [vmem:[%s7 + $0xd4c] sm:$0xf]
  %v3074 = vld [vmem:[%s7 + $0xd50] sm:$0xf]
  %v3075 = vld [vmem:[%s7 + $0xd54] sm:$0xf]
  %v3076 = vld [vmem:[%s7 + $0xd58] sm:$0xf]
  %v3077 = vld [vmem:[%s7 + $0xd5c] sm:$0xf]
  %v3078 = vld [vmem:[%s7 + $0xd60] sm:$0xf]
  %v3079 = vld [vmem:[%s7 + $0xd64] sm:$0xf]
  %v3080 = vld [vmem:[%s7 + $0xd68] sm:$0xf]
  %v3081 = vld [vmem:[%s7 + $0xd6c] sm:$0xf]
  %v3082 = vld [vmem:[%s7 + $0xd70] sm:$0xf]
  %v3083 = vld [vmem:[%s7 + $0xd74] sm:$0xf]
  %v3084 = vld [vmem:[%s7 + $0xd78] sm:$0xf]
  %v3085 = vld [vmem:[%s7 + $0xd7c] sm:$0xf]
  %v3086 = vld [vmem:[%s7 + $0xd80] sm:$0xf]
  %v3087 = vld [vmem:[%s7 + $0xd84] sm:$0xf]
  %v3088 = vld [vmem:[%s7 + $0xd88] sm:$0xf]
  %v3089 = vld [vmem:[%s7 + $0xd8c] sm:$0xf]
  %v3090 = vld [vmem:[%s7 + $0xd90] sm:$0xf]
  %v3091 = vld [vmem:[%s7 + $0xd94] sm:$0xf]
  %v3092 = vld [vmem:[%s7 + $0xd98] sm:$0xf]
  %v3093 = vld [vmem:[%s7 + $0xd9c] sm:$0xf]
  %v3094 = vld [vmem:[%s7 + $0xda0] sm:$0xf]
  %v3095 = vld [vmem:[%s7 + $0xda4] sm:$0xf]
  %v3096 = vld [vmem:[%s7 + $0xda8] sm:$0xf]
  %v3097 = vld [vmem:[%s7 + $0xdac] sm:$0xf]
  %v3098 = vld [vmem:[%s7 + $0xdb0] sm:$0xf]
  %v3099 = vld [vmem:[%s7 + $0xdb4] sm:$0xf]
  %v3100 = vld [vmem:[%s7 + $0xdb8] sm:$0xf]
  %v3101 = vld [vmem:[%s7 + $0xdbc] sm:$0xf]
  %v3102 = vld [vmem:[%s7 + $0xdc0] sm:$0xf]
  %v3103 = vld [vmem:[%s7 + $0xdc4] sm:$0xf]
  %v3104 = vld [vmem:[%s7 + $0xdc8] sm:$0xf]
  %v3105 = vld [vmem:[%s7 + $0xdcc] sm:$0xf]
  %v3106 = vld [vmem:[%s7 + $0xdd0] sm:$0xf]
  %v3107 = vld [vmem:[%s7 + $0xdd4] sm:$0xf]
  %v3108 = vld [vmem:[%s7 + $0xdd8] sm:$0xf]
  %v3109 = vld [vmem:[%s7 + $0xddc] sm:$0xf]
  %v3110 = vld [vmem:[%s7 + $0xde0] sm:$0xf]
  %v3111 = vld [vmem:[%s7 + $0xde4] sm:$0xf]
  %v3112 = vld [vmem:[%s7 + $0xde8] sm:$0xf]
  %v3113 = vld [vmem:[%s7 + $0xdec] sm:$0xf]
  %v3114 = vld [vmem:[%s7 + $0xdf0] sm:$0xf]
  %v3115 = vld [vmem:[%s7 + $0xdf4] sm:$0xf]
  %v3116 = vld [vmem:[%s7 + $0xdf8] sm:$0xf]
  %v3117 = vld [vmem:[%s7 + $0xdfc] sm:$0xf]
  %v3118 = vld [vmem:[%s7 + $0xe00] sm:$0xf]
  %v3119 = vld [vmem:[%s7 + $0xe04] sm:$0xf]
  %v3120 = vld [vmem:[%s7 + $0xe08] sm:$0xf]
  %v3121 = vld [vmem:[%s7 + $0xe0c] sm:$0xf]
  %v3122 = vld [vmem:[%s7 + $0xe10] sm:$0xf]
  %v3123 = vld [vmem:[%s7 + $0xe14] sm:$0xf]
  %v3124 = vld [vmem:[%s7 + $0xe18] sm:$0xf]
  %v3125 = vld [vmem:[%s7 + $0xe1c] sm:$0xf]
  %v3126 = vld [vmem:[%s7 + $0xe20] sm:$0xf]
  %v3127 = vld [vmem:[%s7 + $0xe24] sm:$0xf]
  %v3128 = vld [vmem:[%s7 + $0xe28] sm:$0xf]
  %v3129 = vld [vmem:[%s7 + $0xe2c] sm:$0xf]
  %v3130 = vld [vmem:[%s7 + $0xe30] sm:$0xf]
  %v3131 = vld [vmem:[%s7 + $0xe34] sm:$0xf]
  %v3132 = vld [vmem:[%s7 + $0xe38] sm:$0xf]
  %v3133 = vld [vmem:[%s7 + $0xe3c] sm:$0xf]
  %v3134 = vld [vmem:[%s7 + $0xe40] sm:$0xf]
  %v3135 = vld [vmem:[%s7 + $0xe44] sm:$0xf]
  %v3136 = vld [vmem:[%s7 + $0xe48] sm:$0xf]
  %v3137 = vld [vmem:[%s7 + $0xe4c] sm:$0xf]
  %v3138 = vld [vmem:[%s7 + $0xe50] sm:$0xf]
  %v3139 = vld [vmem:[%s7 + $0xe54] sm:$0xf]
  %v3140 = vld [vmem:[%s7 + $0xe58] sm:$0xf]
  %v3141 = vld [vmem:[%s7 + $0xe5c] sm:$0xf]
  %v3142 = vld [vmem:[%s7 + $0xe60] sm:$0xf]
  %v3143 = vld [vmem:[%s7 + $0xe64] sm:$0xf]
  %v3144 = vld [vmem:[%s7 + $0xe68] sm:$0xf]
  %v3145 = vld [vmem:[%s7 + $0xe6c] sm:$0xf]
  %v3146 = vld [vmem:[%s7 + $0xe70] sm:$0xf]
  %v3147 = vld [vmem:[%s7 + $0xe74] sm:$0xf]
  %v3148 = vld [vmem:[%s7 + $0xe78] sm:$0xf]
  %v3149 = vld [vmem:[%s7 + $0xe7c] sm:$0xf]
  %v3150 = vld [vmem:[%s7 + $0xe80] sm:$0xf]
  %v3151 = vld [vmem:[%s7 + $0xe84] sm:$0xf]
  %v3152 = vld [vmem:[%s7 + $0xe88] sm:$0xf]
  %v3153 = vld [vmem:[%s7 + $0xe8c] sm:$0xf]
  %v3154 = vld [vmem:[%s7 + $0xe90] sm:$0xf]
  %v3155 = vld [vmem:[%s7 + $0xe94] sm:$0xf]
  %v3156 = vld [vmem:[%s7 + $0xe98] sm:$0xf]
  %v3157 = vld [vmem:[%s7 + $0xe9c] sm:$0xf]
  %v3158 = vld [vmem:[%s7 + $0xea0] sm:$0xf]
  %v3159 = vld [vmem:[%s7 + $0xea4] sm:$0xf]
  %v3160 = vld [vmem:[%s7 + $0xea8] sm:$0xf]
  %v3161 = vld [vmem:[%s7 + $0xeac] sm:$0xf]
  %v3162 = vld [vmem:[%s7 + $0xeb0] sm:$0xf]
  %v3163 = vld [vmem:[%s7 + $0xeb4] sm:$0xf]
  %v3164 = vld [vmem:[%s7 + $0xeb8] sm:$0xf]
  %v3165 = vld [vmem:[%s7 + $0xebc] sm:$0xf]
  %v3166 = vld [vmem:[%s7 + $0xec0] sm:$0xf]
  %v3167 = vld [vmem:[%s7 + $0xec4] sm:$0xf]
  %v3168 = vld [vmem:[%s7 + $0xec8] sm:$0xf]
  %v3169 = vld [vmem:[%s7 + $0xecc] sm:$0xf]
  %v3170 = vld [vmem:[%s7 + $0xed0] sm:$0xf]
  %v3171 = vld [vmem:[%s7 + $0xed4] sm:$0xf]
  %v3172 = vld [vmem:[%s7 + $0xed8] sm:$0xf]
  %v3173 = vld [vmem:[%s7 + $0xedc] sm:$0xf]
  %v3174 = vld [vmem:[%s7 + $0xee0] sm:$0xf]
  %v3175 = vld [vmem:[%s7 + $0xee4] sm:$0xf]
  %v3176 = vld [vmem:[%s7 + $0xee8] sm:$0xf]
  %v3177 = vld [vmem:[%s7 + $0xeec] sm:$0xf]
  %v3178 = vld [vmem:[%s7 + $0xef0] sm:$0xf]
  %v3179 = vld [vmem:[%s7 + $0xef4] sm:$0xf]
  %v3180 = vld [vmem:[%s7 + $0xef8] sm:$0xf]
  %v3181 = vld [vmem:[%s7 + $0xefc] sm:$0xf]
  %v3182 = vld [vmem:[%s7 + $0xf00] sm:$0xf]
  %v3183 = vld [vmem:[%s7 + $0xf04] sm:$0xf]
  %v3184 = vld [vmem:[%s7 + $0xf08] sm:$0xf]
  %v3185 = vld [vmem:[%s7 + $0xf0c] sm:$0xf]
  %v3186 = vld [vmem:[%s7 + $0xf10] sm:$0xf]
  %v3187 = vld [vmem:[%s7 + $0xf14] sm:$0xf]
  %v3188 = vld [vmem:[%s7 + $0xf18] sm:$0xf]
  %v3189 = vld [vmem:[%s7 + $0xf1c] sm:$0xf]
  %v3190 = vld [vmem:[%s7 + $0xf20] sm:$0xf]
  %v3191 = vld [vmem:[%s7 + $0xf24] sm:$0xf]
  %v3192 = vld [vmem:[%s7 + $0xf28] sm:$0xf]
  %v3193 = vld [vmem:[%s7 + $0xf2c] sm:$0xf]
  %v3194 = vld [vmem:[%s7 + $0xf30] sm:$0xf]
  %v3195 = vld [vmem:[%s7 + $0xf34] sm:$0xf]
  %v3196 = vld [vmem:[%s7 + $0xf38] sm:$0xf]
  %v3197 = vld [vmem:[%s7 + $0xf3c] sm:$0xf]
  %v3198 = vld [vmem:[%s7 + $0xf40] sm:$0xf]
  %v3199 = vld [vmem:[%s7 + $0xf44] sm:$0xf]
  %v3200 = vld [vmem:[%s7 + $0xf48] sm:$0xf]
  %v3201 = vld [vmem:[%s7 + $0xf4c] sm:$0xf]
  %v3202 = vld [vmem:[%s7 + $0xf50] sm:$0xf]
  %v3203 = vld [vmem:[%s7 + $0xf54] sm:$0xf]
  %v3204 = vld [vmem:[%s7 + $0xf58] sm:$0xf]
  %v3205 = vld [vmem:[%s7 + $0xf5c] sm:$0xf]
  %v3206 = vld [vmem:[%s7 + $0xf60] sm:$0xf]
  %v3207 = vld [vmem:[%s7 + $0xf64] sm:$0xf]
  %v3208 = vld [vmem:[%s7 + $0xf68] sm:$0xf]
  %v3209 = vld [vmem:[%s7 + $0xf6c] sm:$0xf]
  %v3210 = vld [vmem:[%s7 + $0xf70] sm:$0xf]
  %v3211 = vld [vmem:[%s7 + $0xf74] sm:$0xf]
  %v3212 = vld [vmem:[%s7 + $0xf78] sm:$0xf]
  %v3213 = vld [vmem:[%s7 + $0xf7c] sm:$0xf]
  %v3214 = vld [vmem:[%s7 + $0xf80] sm:$0xf]
  %v3215 = vld [vmem:[%s7 + $0xf84] sm:$0xf]
  %v3216 = vld [vmem:[%s7 + $0xf88] sm:$0xf]
  %v3217 = vld [vmem:[%s7 + $0xf8c] sm:$0xf]
  %v3218 = vld [vmem:[%s7 + $0xf90] sm:$0xf]
  %v3219 = vld [vmem:[%s7 + $0xf94] sm:$0xf]
  %v3220 = vld [vmem:[%s7 + $0xf98] sm:$0xf]
  %v3221 = vld [vmem:[%s7 + $0xf9c] sm:$0xf]
  %v3222 = vld [vmem:[%s8] sm:$0x1]
  %v3224 = vlaneseq
  %v3225 = vshrl.u32 %v3224, 7
  %v3226 = vsub.s32 0, %v3225
  %v3227 = vrot.slane %v3222, %v3226
  %v3261 = vunpack.c.l.b16 %v2190
  %v3262 = vunpack.c.h.b16 %v2190
  %v3263 = vunpack.c.l.b16 %v2191
  %v3264 = vunpack.c.h.b16 %v2191
  %v3265 = vunpack.c.l.b16 %v2192
  %v3266 = vunpack.c.h.b16 %v2192
  %v3267 = vunpack.c.l.b16 %v2193
  %v3268 = vunpack.c.h.b16 %v2193
  %v3269 = vunpack.c.l.b16 %v2194
  %v3270 = vunpack.c.h.b16 %v2194
  %v3271 = vunpack.c.l.b16 %v2195
  %v3272 = vunpack.c.h.b16 %v2195
  %v3273 = vunpack.c.l.b16 %v2196
  %v3274 = vunpack.c.h.b16 %v2196
  %v3275 = vunpack.c.l.b16 %v2197
  %v3276 = vunpack.c.h.b16 %v2197
  %v3277 = vunpack.c.l.b16 %v2198
  %v3278 = vunpack.c.h.b16 %v2198
  %v3279 = vunpack.c.l.b16 %v2199
  %v3280 = vunpack.c.h.b16 %v2199
  %v3281 = vunpack.c.l.b16 %v2200
  %v3282 = vunpack.c.h.b16 %v2200
  %v3283 = vunpack.c.l.b16 %v2201
  %v3284 = vunpack.c.h.b16 %v2201
  %v3285 = vunpack.c.l.b16 %v2202
  %v3286 = vunpack.c.h.b16 %v2202
  %v3287 = vunpack.c.l.b16 %v2203
  %v3288 = vunpack.c.h.b16 %v2203
  %v3289 = vunpack.c.l.b16 %v2204
  %v3290 = vunpack.c.h.b16 %v2204
  %v3291 = vunpack.c.l.b16 %v2205
  %v3292 = vunpack.c.h.b16 %v2205
  %v3293 = vunpack.c.l.b16 %v2206
  %v3294 = vunpack.c.h.b16 %v2206
  %v3295 = vunpack.c.l.b16 %v2207
  %v3296 = vunpack.c.h.b16 %v2207
  %v3297 = vunpack.c.l.b16 %v2208
  %v3298 = vunpack.c.h.b16 %v2208
  %v3299 = vunpack.c.l.b16 %v2209
  %v3300 = vunpack.c.h.b16 %v2209
  %v3301 = vunpack.c.l.b16 %v2210
  %v3302 = vunpack.c.h.b16 %v2210
  %v3303 = vunpack.c.l.b16 %v2211
  %v3304 = vunpack.c.h.b16 %v2211
  %v3305 = vunpack.c.l.b16 %v2212
  %v3306 = vunpack.c.h.b16 %v2212
  %v3307 = vunpack.c.l.b16 %v2213
  %v3308 = vunpack.c.h.b16 %v2213
  %v3309 = vunpack.c.l.b16 %v2214
  %v3310 = vunpack.c.h.b16 %v2214
  %v3311 = vunpack.c.l.b16 %v2215
  %v3312 = vunpack.c.h.b16 %v2215
  %v3313 = vunpack.c.l.b16 %v2216
  %v3314 = vunpack.c.h.b16 %v2216
  %v3315 = vunpack.c.l.b16 %v2217
  %v3316 = vunpack.c.h.b16 %v2217
  %v3317 = vunpack.c.l.b16 %v2218
  %v3318 = vunpack.c.h.b16 %v2218
  %v3319 = vunpack.c.l.b16 %v2219
  %v3320 = vunpack.c.h.b16 %v2219
  %v3321 = vunpack.c.l.b16 %v2220
  %v3322 = vunpack.c.h.b16 %v2220
  %v3323 = vunpack.c.l.b16 %v2221
  %v3324 = vpack.c.b16 %v3261, %v3261
  %v3325 = vpack.c.b16 %v3262, %v3262
  %v3326 = vpack.c.b16 %v3263, %v3263
  %v3327 = vpack.c.b16 %v3264, %v3264
  %v3328 = vpack.c.b16 %v3265, %v3265
  %v3329 = vpack.c.b16 %v3266, %v3266
  %v3330 = vpack.c.b16 %v3267, %v3267
  %v3331 = vpack.c.b16 %v3268, %v3268
  %v3332 = vpack.c.b16 %v3269, %v3269
  %v3333 = vpack.c.b16 %v3270, %v3270
  %v3334 = vpack.c.b16 %v3271, %v3271
  %v3335 = vpack.c.b16 %v3272, %v3272
  %v3336 = vpack.c.b16 %v3273, %v3273
  %v3337 = vpack.c.b16 %v3274, %v3274
  %v3338 = vpack.c.b16 %v3275, %v3275
  %v3339 = vpack.c.b16 %v3276, %v3276
  %v3340 = vpack.c.b16 %v3277, %v3277
  %v3341 = vpack.c.b16 %v3278, %v3278
  %v3342 = vpack.c.b16 %v3279, %v3279
  %v3343 = vpack.c.b16 %v3280, %v3280
  %v3344 = vpack.c.b16 %v3281, %v3281
  %v3345 = vpack.c.b16 %v3282, %v3282
  %v3346 = vpack.c.b16 %v3283, %v3283
  %v3347 = vpack.c.b16 %v3284, %v3284
  %v3348 = vpack.c.b16 %v3285, %v3285
  %v3349 = vpack.c.b16 %v3286, %v3286
  %v3350 = vpack.c.b16 %v3287, %v3287
  %v3351 = vpack.c.b16 %v3288, %v3288
  %v3352 = vpack.c.b16 %v3289, %v3289
  %v3353 = vpack.c.b16 %v3290, %v3290
  %v3354 = vpack.c.b16 %v3291, %v3291
  %v3355 = vpack.c.b16 %v3292, %v3292
  %v3356 = vpack.c.b16 %v3293, %v3293
  %v3357 = vpack.c.b16 %v3294, %v3294
  %v3358 = vpack.c.b16 %v3295, %v3295
  %v3359 = vpack.c.b16 %v3296, %v3296
  %v3360 = vpack.c.b16 %v3297, %v3297
  %v3361 = vpack.c.b16 %v3298, %v3298
  %v3362 = vpack.c.b16 %v3299, %v3299
  %v3363 = vpack.c.b16 %v3300, %v3300
  %v3364 = vpack.c.b16 %v3301, %v3301
  %v3365 = vpack.c.b16 %v3302, %v3302
  %v3366 = vpack.c.b16 %v3303, %v3303
  %v3367 = vpack.c.b16 %v3304, %v3304
  %v3368 = vpack.c.b16 %v3305, %v3305
  %v3369 = vpack.c.b16 %v3306, %v3306
  %v3370 = vpack.c.b16 %v3307, %v3307
  %v3371 = vpack.c.b16 %v3308, %v3308
  %v3372 = vpack.c.b16 %v3309, %v3309
  %v3373 = vpack.c.b16 %v3310, %v3310
  %v3374 = vpack.c.b16 %v3311, %v3311
  %v3375 = vpack.c.b16 %v3312, %v3312
  %v3376 = vpack.c.b16 %v3313, %v3313
  %v3377 = vpack.c.b16 %v3314, %v3314
  %v3378 = vpack.c.b16 %v3315, %v3315
  %v3379 = vpack.c.b16 %v3316, %v3316
  %v3380 = vpack.c.b16 %v3317, %v3317
  %v3381 = vpack.c.b16 %v3318, %v3318
  %v3382 = vpack.c.b16 %v3319, %v3319
  %v3383 = vpack.c.b16 %v3320, %v3320
  %v3384 = vpack.c.b16 %v3321, %v3321
  %v3385 = vpack.c.b16 %v3322, %v3322
  %v3386 = vpack.c.b16 %v3323, %v3323
  %v4449 = vunpack.c.l.b16 %v2222
  %v4450 = vunpack.c.l.b16 %v2223
  %v4451 = vunpack.c.l.b16 %v2224
  %v4452 = vunpack.c.l.b16 %v2225
  %v4453 = vunpack.c.l.b16 %v2226
  %v4454 = vunpack.c.l.b16 %v2227
  %v4455 = vunpack.c.l.b16 %v2228
  %v4456 = vunpack.c.l.b16 %v2229
  %v4457 = vunpack.c.l.b16 %v2230
  %v4458 = vunpack.c.l.b16 %v2231
  %v4459 = vunpack.c.l.b16 %v2232
  %v4460 = vunpack.c.l.b16 %v2233
  %v4461 = vunpack.c.l.b16 %v2234
  %v4462 = vunpack.c.l.b16 %v2235
  %v4463 = vunpack.c.l.b16 %v2236
  %v4464 = vunpack.c.l.b16 %v2237
  %v4465 = vunpack.c.l.b16 %v2238
  %v4466 = vunpack.c.l.b16 %v2239
  %v4467 = vunpack.c.l.b16 %v2240
  %v4468 = vunpack.c.l.b16 %v2241
  %v4469 = vunpack.c.l.b16 %v2242
  %v4470 = vunpack.c.l.b16 %v2243
  %v4471 = vunpack.c.l.b16 %v2244
  %v4472 = vunpack.c.l.b16 %v2245
  %v4473 = vunpack.c.l.b16 %v2246
  %v4474 = vunpack.c.l.b16 %v2247
  %v4475 = vunpack.c.l.b16 %v2248
  %v4476 = vunpack.c.l.b16 %v2249
  %v4477 = vunpack.c.l.b16 %v2250
  %v4478 = vunpack.c.l.b16 %v2251
  %v4479 = vunpack.c.l.b16 %v2252
  %v4480 = vunpack.c.l.b16 %v2253
  %v4481 = vunpack.c.l.b16 %v2254
  %v4482 = vunpack.c.l.b16 %v2255
  %v4483 = vunpack.c.l.b16 %v2256
  %v4484 = vunpack.c.l.b16 %v2257
  %v4485 = vunpack.c.l.b16 %v2258
  %v4486 = vunpack.c.l.b16 %v2259
  %v4487 = vunpack.c.l.b16 %v2260
  %v4488 = vunpack.c.l.b16 %v2261
  %v4489 = vunpack.c.l.b16 %v2262
  %v4490 = vunpack.c.l.b16 %v2263
  %v4491 = vunpack.c.l.b16 %v2264
  %v4492 = vunpack.c.l.b16 %v2265
  %v4493 = vunpack.c.l.b16 %v2266
  %v4494 = vunpack.c.l.b16 %v2267
  %v4495 = vunpack.c.l.b16 %v2268
  %v4496 = vunpack.c.l.b16 %v2269
  %v4497 = vunpack.c.l.b16 %v2270
  %v4498 = vunpack.c.l.b16 %v2271
  %v4499 = vunpack.c.l.b16 %v2272
  %v4500 = vunpack.c.l.b16 %v2273
  %v4501 = vunpack.c.l.b16 %v2274
  %v4502 = vunpack.c.l.b16 %v2275
  %v4503 = vunpack.c.l.b16 %v2276
  %v4504 = vunpack.c.l.b16 %v2277
  %v4505 = vunpack.c.l.b16 %v2278
  %v4506 = vunpack.c.l.b16 %v2279
  %v4507 = vunpack.c.l.b16 %v2280
  %v4508 = vunpack.c.l.b16 %v2281
  %v4509 = vunpack.c.l.b16 %v2282
  %v4510 = vunpack.c.l.b16 %v2283
  %v4511 = vunpack.c.l.b16 %v2284
  %v4512 = vunpack.c.l.b16 %v2285
  %v4513 = vunpack.c.l.b16 %v2286
  %v4514 = vunpack.c.l.b16 %v2287
  %v4515 = vunpack.c.l.b16 %v2288
  %v4516 = vunpack.c.l.b16 %v2289
  %v4517 = vunpack.c.l.b16 %v2290
  %v4518 = vunpack.c.l.b16 %v2291
  %v4519 = vunpack.c.l.b16 %v2292
  %v4520 = vunpack.c.l.b16 %v2293
  %v4521 = vunpack.c.l.b16 %v2294
  %v4522 = vunpack.c.l.b16 %v2295
  %v4523 = vunpack.c.l.b16 %v2296
  %v4524 = vunpack.c.l.b16 %v2297
  %v4525 = vunpack.c.l.b16 %v2298
  %v4526 = vunpack.c.l.b16 %v2299
  %v4527 = vunpack.c.l.b16 %v2300
  %v4528 = vunpack.c.l.b16 %v2301
  %v4529 = vunpack.c.l.b16 %v2302
  %v4530 = vunpack.c.l.b16 %v2303
  %v4531 = vunpack.c.l.b16 %v2304
  %v4532 = vunpack.c.l.b16 %v2305
  %v4533 = vunpack.c.l.b16 %v2306
  %v4534 = vunpack.c.l.b16 %v2307
  %v4535 = vunpack.c.l.b16 %v2308
  %v4536 = vunpack.c.l.b16 %v2309
  %v4537 = vunpack.c.l.b16 %v2310
  %v4538 = vunpack.c.l.b16 %v2311
  %v4539 = vunpack.c.l.b16 %v2312
  %v4540 = vunpack.c.l.b16 %v2313
  %v4541 = vunpack.c.l.b16 %v2314
  %v4542 = vunpack.c.l.b16 %v2315
  %v4543 = vunpack.c.l.b16 %v2316
  %v4544 = vunpack.c.l.b16 %v2317
  %v4545 = vunpack.c.l.b16 %v2318
  %v4546 = vunpack.c.l.b16 %v2319
  %v4547 = vunpack.c.l.b16 %v2320
  %v4548 = vunpack.c.l.b16 %v2321
  %v4549 = vunpack.c.l.b16 %v2322
  %v4550 = vunpack.c.l.b16 %v2323
  %v4551 = vunpack.c.l.b16 %v2324
  %v4552 = vunpack.c.l.b16 %v2325
  %v4553 = vunpack.c.l.b16 %v2326
  %v4554 = vunpack.c.l.b16 %v2327
  %v4555 = vunpack.c.l.b16 %v2328
  %v4556 = vunpack.c.l.b16 %v2329
  %v4557 = vunpack.c.l.b16 %v2330
  %v4558 = vunpack.c.l.b16 %v2331
  %v4559 = vunpack.c.l.b16 %v2332
  %v4560 = vunpack.c.l.b16 %v2333
  %v4561 = vunpack.c.l.b16 %v2334
  %v4562 = vunpack.c.l.b16 %v2335
  %v4563 = vunpack.c.l.b16 %v2336
  %v4564 = vunpack.c.l.b16 %v2337
  %v4565 = vunpack.c.l.b16 %v2338
  %v4566 = vunpack.c.l.b16 %v2339
  %v4567 = vunpack.c.l.b16 %v2340
  %v4568 = vunpack.c.l.b16 %v2341
  %v4569 = vunpack.c.l.b16 %v2342
  %v4570 = vunpack.c.l.b16 %v2343
  %v4571 = vunpack.c.l.b16 %v2344
  %v4572 = vunpack.c.l.b16 %v2345
  %v4573 = vunpack.c.l.b16 %v2346
  %v4574 = vunpack.c.l.b16 %v2347
  %v4575 = vunpack.c.l.b16 %v2348
  %v4576 = vunpack.c.l.b16 %v2349
  %v4577 = vunpack.c.l.b16 %v2350
  %v4578 = vunpack.c.l.b16 %v2351
  %v4579 = vunpack.c.l.b16 %v2352
  %v4580 = vunpack.c.l.b16 %v2353
  %v4581 = vunpack.c.l.b16 %v2354
  %v4582 = vunpack.c.l.b16 %v2355
  %v4583 = vunpack.c.l.b16 %v2356
  %v4584 = vunpack.c.l.b16 %v2357
  %v4585 = vunpack.c.l.b16 %v2358
  %v4586 = vunpack.c.l.b16 %v2359
  %v4587 = vunpack.c.l.b16 %v2360
  %v4588 = vunpack.c.l.b16 %v2361
  %v4589 = vunpack.c.l.b16 %v2362
  %v4590 = vunpack.c.l.b16 %v2363
  %v4591 = vunpack.c.l.b16 %v2364
  %v4592 = vunpack.c.l.b16 %v2365
  %v4593 = vunpack.c.l.b16 %v2366
  %v4594 = vunpack.c.l.b16 %v2367
  %v4595 = vunpack.c.l.b16 %v2368
  %v4596 = vunpack.c.l.b16 %v2369
  %v4597 = vunpack.c.l.b16 %v2370
  %v4598 = vunpack.c.l.b16 %v2371
  %v4599 = vunpack.c.l.b16 %v2372
  %v4600 = vunpack.c.l.b16 %v2373
  %v4601 = vunpack.c.l.b16 %v2374
  %v4602 = vunpack.c.l.b16 %v2375
  %v4603 = vunpack.c.l.b16 %v2376
  %v4604 = vunpack.c.l.b16 %v2377
  %v4605 = vunpack.c.l.b16 %v2378
  %v4606 = vunpack.c.l.b16 %v2379
  %v4607 = vunpack.c.l.b16 %v2380
  %v4608 = vunpack.c.l.b16 %v2381
  %v4609 = vunpack.c.l.b16 %v2382
  %v4610 = vunpack.c.l.b16 %v2383
  %v4611 = vunpack.c.l.b16 %v2384
  %v4612 = vunpack.c.l.b16 %v2385
  %v4613 = vunpack.c.l.b16 %v2386
  %v4614 = vunpack.c.l.b16 %v2387
  %v4615 = vunpack.c.l.b16 %v2388
  %v4616 = vunpack.c.l.b16 %v2389
  %v4617 = vunpack.c.l.b16 %v2390
  %v4618 = vunpack.c.l.b16 %v2391
  %v4619 = vunpack.c.l.b16 %v2392
  %v4620 = vunpack.c.l.b16 %v2393
  %v4621 = vunpack.c.l.b16 %v2394
  %v4622 = vunpack.c.l.b16 %v2395
  %v4623 = vunpack.c.l.b16 %v2396
  %v4624 = vunpack.c.l.b16 %v2397
  %v4625 = vunpack.c.l.b16 %v2398
  %v4626 = vunpack.c.l.b16 %v2399
  %v4627 = vunpack.c.l.b16 %v2400
  %v4628 = vunpack.c.l.b16 %v2401
  %v4629 = vunpack.c.l.b16 %v2402
  %v4630 = vunpack.c.l.b16 %v2403
  %v4631 = vunpack.c.l.b16 %v2404
  %v4632 = vunpack.c.l.b16 %v2405
  %v4633 = vunpack.c.l.b16 %v2406
  %v4634 = vunpack.c.l.b16 %v2407
  %v4635 = vunpack.c.l.b16 %v2408
  %v4636 = vunpack.c.l.b16 %v2409
  %v4637 = vunpack.c.l.b16 %v2410
  %v4638 = vunpack.c.l.b16 %v2411
  %v4639 = vunpack.c.l.b16 %v2412
  %v4640 = vunpack.c.l.b16 %v2413
  %v4641 = vunpack.c.l.b16 %v2414
  %v4642 = vunpack.c.l.b16 %v2415
  %v4643 = vunpack.c.l.b16 %v2416
  %v4644 = vunpack.c.l.b16 %v2417
  %v4645 = vunpack.c.l.b16 %v2418
  %v4646 = vunpack.c.l.b16 %v2419
  %v4647 = vunpack.c.l.b16 %v2420
  %v4648 = vunpack.c.l.b16 %v2421
  %v4649 = vunpack.c.l.b16 %v2422
  %v4650 = vunpack.c.l.b16 %v2423
  %v4651 = vunpack.c.l.b16 %v2424
  %v4652 = vunpack.c.l.b16 %v2425
  %v4653 = vunpack.c.l.b16 %v2426
  %v4654 = vunpack.c.l.b16 %v2427
  %v4655 = vunpack.c.l.b16 %v2428
  %v4656 = vunpack.c.l.b16 %v2429
  %v4657 = vunpack.c.l.b16 %v2430
  %v4658 = vunpack.c.l.b16 %v2431
  %v4659 = vunpack.c.l.b16 %v2432
  %v4660 = vunpack.c.l.b16 %v2433
  %v4661 = vunpack.c.l.b16 %v2434
  %v4662 = vunpack.c.l.b16 %v2435
  %v4663 = vunpack.c.l.b16 %v2436
  %v4664 = vunpack.c.l.b16 %v2437
  %v4665 = vunpack.c.l.b16 %v2438
  %v4666 = vunpack.c.l.b16 %v2439
  %v4667 = vunpack.c.l.b16 %v2440
  %v4668 = vunpack.c.l.b16 %v2441
  %v4669 = vunpack.c.l.b16 %v2442
  %v4670 = vunpack.c.l.b16 %v2443
  %v4671 = vunpack.c.l.b16 %v2444
  %v4672 = vunpack.c.l.b16 %v2445
  %v4673 = vunpack.c.l.b16 %v2446
  %v4674 = vunpack.c.l.b16 %v2447
  %v4675 = vunpack.c.l.b16 %v2448
  %v4676 = vunpack.c.l.b16 %v2449
  %v4677 = vunpack.c.l.b16 %v2450
  %v4678 = vunpack.c.l.b16 %v2451
  %v4679 = vunpack.c.l.b16 %v2452
  %v4680 = vunpack.c.l.b16 %v2453
  %v4681 = vunpack.c.l.b16 %v2454
  %v4682 = vunpack.c.l.b16 %v2455
  %v4683 = vunpack.c.l.b16 %v2456
  %v4684 = vunpack.c.l.b16 %v2457
  %v4685 = vunpack.c.l.b16 %v2458
  %v4686 = vunpack.c.l.b16 %v2459
  %v4687 = vunpack.c.l.b16 %v2460
  %v4688 = vunpack.c.l.b16 %v2461
  %v4689 = vunpack.c.l.b16 %v2462
  %v4690 = vunpack.c.l.b16 %v2463
  %v4691 = vunpack.c.l.b16 %v2464
  %v4692 = vunpack.c.l.b16 %v2465
  %v4693 = vunpack.c.l.b16 %v2466
  %v4694 = vunpack.c.l.b16 %v2467
  %v4695 = vunpack.c.l.b16 %v2468
  %v4696 = vunpack.c.l.b16 %v2469
  %v4697 = vunpack.c.l.b16 %v2470
  %v4698 = vunpack.c.l.b16 %v2471
  %v4699 = vunpack.c.l.b16 %v2472
  %v4700 = vunpack.c.l.b16 %v2473
  %v4701 = vunpack.c.l.b16 %v2474
  %v4702 = vunpack.c.l.b16 %v2475
  %v4703 = vunpack.c.l.b16 %v2476
  %v4704 = vunpack.c.l.b16 %v2477
  %v4705 = vunpack.c.l.b16 %v2478
  %v4706 = vunpack.c.l.b16 %v2479
  %v4707 = vunpack.c.l.b16 %v2480
  %v4708 = vunpack.c.l.b16 %v2481
  %v4709 = vunpack.c.l.b16 %v2482
  %v4710 = vunpack.c.l.b16 %v2483
  %v4711 = vunpack.c.l.b16 %v2484
  %v4712 = vunpack.c.l.b16 %v2485
  %v4713 = vunpack.c.l.b16 %v2486
  %v4714 = vunpack.c.l.b16 %v2487
  %v4715 = vunpack.c.l.b16 %v2488
  %v4716 = vunpack.c.l.b16 %v2489
  %v4717 = vunpack.c.l.b16 %v2490
  %v4718 = vunpack.c.l.b16 %v2491
  %v4719 = vunpack.c.l.b16 %v2492
  %v4720 = vunpack.c.l.b16 %v2493
  %v4721 = vunpack.c.l.b16 %v2494
  %v4722 = vunpack.c.l.b16 %v2495
  %v4723 = vunpack.c.l.b16 %v2496
  %v4724 = vunpack.c.l.b16 %v2497
  %v4725 = vunpack.c.l.b16 %v2498
  %v4726 = vunpack.c.l.b16 %v2499
  %v4727 = vunpack.c.l.b16 %v2500
  %v4728 = vunpack.c.l.b16 %v2501
  %v4729 = vunpack.c.l.b16 %v2502
  %v4730 = vunpack.c.l.b16 %v2503
  %v4731 = vunpack.c.l.b16 %v2504
  %v4732 = vunpack.c.l.b16 %v2505
  %v4733 = vunpack.c.l.b16 %v2506
  %v4734 = vunpack.c.l.b16 %v2507
  %v4735 = vunpack.c.l.b16 %v2508
  %v4736 = vunpack.c.l.b16 %v2509
  %v4737 = vunpack.c.l.b16 %v2510
  %v4738 = vunpack.c.l.b16 %v2511
  %v4739 = vunpack.c.l.b16 %v2512
  %v4740 = vunpack.c.l.b16 %v2513
  %v4741 = vunpack.c.l.b16 %v2514
  %v4742 = vunpack.c.l.b16 %v2515
  %v4743 = vunpack.c.l.b16 %v2516
  %v4744 = vunpack.c.l.b16 %v2517
  %v4745 = vunpack.c.l.b16 %v2518
  %v4746 = vunpack.c.l.b16 %v2519
  %v4747 = vunpack.c.l.b16 %v2520
  %v4748 = vunpack.c.l.b16 %v2521
  %v4749 = vunpack.c.l.b16 %v2522
  %v4750 = vunpack.c.l.b16 %v2523
  %v4751 = vunpack.c.l.b16 %v2524
  %v4752 = vunpack.c.l.b16 %v2525
  %v4753 = vunpack.c.l.b16 %v2526
  %v4754 = vunpack.c.l.b16 %v2527
  %v4755 = vunpack.c.l.b16 %v2528
  %v4756 = vunpack.c.l.b16 %v2529
  %v4757 = vunpack.c.l.b16 %v2530
  %v4758 = vunpack.c.l.b16 %v2531
  %v4759 = vunpack.c.l.b16 %v2532
  %v4760 = vunpack.c.l.b16 %v2533
  %v4761 = vunpack.c.l.b16 %v2534
  %v4762 = vunpack.c.l.b16 %v2535
  %v4763 = vunpack.c.l.b16 %v2536
  %v4764 = vunpack.c.l.b16 %v2537
  %v4765 = vunpack.c.l.b16 %v2538
  %v4766 = vunpack.c.l.b16 %v2539
  %v4767 = vunpack.c.l.b16 %v2540
  %v4768 = vunpack.c.l.b16 %v2541
  %v4769 = vunpack.c.l.b16 %v2542
  %v4770 = vunpack.c.l.b16 %v2543
  %v4771 = vunpack.c.l.b16 %v2544
  %v4772 = vunpack.c.l.b16 %v2545
  %v4773 = vunpack.c.l.b16 %v2546
  %v4774 = vunpack.c.l.b16 %v2547
  %v4775 = vunpack.c.l.b16 %v2548
  %v4776 = vunpack.c.l.b16 %v2549
  %v4777 = vunpack.c.l.b16 %v2550
  %v4778 = vunpack.c.l.b16 %v2551
  %v4779 = vunpack.c.l.b16 %v2552
  %v4780 = vunpack.c.l.b16 %v2553
  %v4781 = vunpack.c.l.b16 %v2554
  %v4782 = vunpack.c.l.b16 %v2555
  %v4783 = vunpack.c.l.b16 %v2556
  %v4784 = vunpack.c.l.b16 %v2557
  %v4785 = vunpack.c.l.b16 %v2558
  %v4786 = vunpack.c.l.b16 %v2559
  %v4787 = vunpack.c.l.b16 %v2560
  %v4788 = vunpack.c.l.b16 %v2561
  %v4789 = vunpack.c.l.b16 %v2562
  %v4790 = vunpack.c.l.b16 %v2563
  %v4791 = vunpack.c.l.b16 %v2564
  %v4792 = vunpack.c.l.b16 %v2565
  %v4793 = vunpack.c.l.b16 %v2566
  %v4794 = vunpack.c.l.b16 %v2567
  %v4795 = vunpack.c.l.b16 %v2568
  %v4796 = vunpack.c.l.b16 %v2569
  %v4797 = vunpack.c.l.b16 %v2570
  %v4798 = vunpack.c.l.b16 %v2571
  %v4799 = vunpack.c.l.b16 %v2572
  %v4800 = vunpack.c.l.b16 %v2573
  %v4801 = vunpack.c.l.b16 %v2574
  %v4802 = vunpack.c.l.b16 %v2575
  %v4803 = vunpack.c.l.b16 %v2576
  %v4804 = vunpack.c.l.b16 %v2577
  %v4805 = vunpack.c.l.b16 %v2578
  %v4806 = vunpack.c.l.b16 %v2579
  %v4807 = vunpack.c.l.b16 %v2580
  %v4808 = vunpack.c.l.b16 %v2581
  %v4809 = vunpack.c.l.b16 %v2582
  %v4810 = vunpack.c.l.b16 %v2583
  %v4811 = vunpack.c.l.b16 %v2584
  %v4812 = vunpack.c.l.b16 %v2585
  %v4813 = vunpack.c.l.b16 %v2586
  %v4814 = vunpack.c.l.b16 %v2587
  %v4815 = vunpack.c.l.b16 %v2588
  %v4816 = vunpack.c.l.b16 %v2589
  %v4817 = vunpack.c.l.b16 %v2590
  %v4818 = vunpack.c.l.b16 %v2591
  %v4819 = vunpack.c.l.b16 %v2592
  %v4820 = vunpack.c.l.b16 %v2593
  %v4821 = vunpack.c.l.b16 %v2594
  %v4822 = vunpack.c.l.b16 %v2595
  %v4823 = vunpack.c.l.b16 %v2596
  %v4824 = vunpack.c.l.b16 %v2597
  %v4825 = vunpack.c.l.b16 %v2598
  %v4826 = vunpack.c.l.b16 %v2599
  %v4827 = vunpack.c.l.b16 %v2600
  %v4828 = vunpack.c.l.b16 %v2601
  %v4829 = vunpack.c.l.b16 %v2602
  %v4830 = vunpack.c.l.b16 %v2603
  %v4831 = vunpack.c.l.b16 %v2604
  %v4832 = vunpack.c.l.b16 %v2605
  %v4833 = vunpack.c.l.b16 %v2606
  %v4834 = vunpack.c.l.b16 %v2607
  %v4835 = vunpack.c.l.b16 %v2608
  %v4836 = vunpack.c.l.b16 %v2609
  %v4837 = vunpack.c.l.b16 %v2610
  %v4838 = vunpack.c.l.b16 %v2611
  %v4839 = vunpack.c.l.b16 %v2612
  %v4840 = vunpack.c.l.b16 %v2613
  %v4841 = vunpack.c.l.b16 %v2614
  %v4842 = vunpack.c.l.b16 %v2615
  %v4843 = vunpack.c.l.b16 %v2616
  %v4844 = vunpack.c.l.b16 %v2617
  %v4845 = vunpack.c.l.b16 %v2618
  %v4846 = vunpack.c.l.b16 %v2619
  %v4847 = vunpack.c.l.b16 %v2620
  %v4848 = vunpack.c.l.b16 %v2621
  %v4849 = vunpack.c.l.b16 %v2622
  %v4850 = vunpack.c.l.b16 %v2623
  %v4851 = vunpack.c.l.b16 %v2624
  %v4852 = vunpack.c.l.b16 %v2625
  %v4853 = vunpack.c.l.b16 %v2626
  %v4854 = vunpack.c.l.b16 %v2627
  %v4855 = vunpack.c.l.b16 %v2628
  %v4856 = vunpack.c.l.b16 %v2629
  %v4857 = vunpack.c.l.b16 %v2630
  %v4858 = vunpack.c.l.b16 %v2631
  %v4859 = vunpack.c.l.b16 %v2632
  %v4860 = vunpack.c.l.b16 %v2633
  %v4861 = vunpack.c.l.b16 %v2634
  %v4862 = vunpack.c.l.b16 %v2635
  %v4863 = vunpack.c.l.b16 %v2636
  %v4864 = vunpack.c.l.b16 %v2637
  %v4865 = vunpack.c.l.b16 %v2638
  %v4866 = vunpack.c.l.b16 %v2639
  %v4867 = vunpack.c.l.b16 %v2640
  %v4868 = vunpack.c.l.b16 %v2641
  %v4869 = vunpack.c.l.b16 %v2642
  %v4870 = vunpack.c.l.b16 %v2643
  %v4871 = vunpack.c.l.b16 %v2644
  %v4872 = vunpack.c.l.b16 %v2645
  %v4873 = vunpack.c.l.b16 %v2646
  %v4874 = vunpack.c.l.b16 %v2647
  %v4875 = vunpack.c.l.b16 %v2648
  %v4876 = vunpack.c.l.b16 %v2649
  %v4877 = vunpack.c.l.b16 %v2650
  %v4878 = vunpack.c.l.b16 %v2651
  %v4879 = vunpack.c.l.b16 %v2652
  %v4880 = vunpack.c.l.b16 %v2653
  %v4881 = vunpack.c.l.b16 %v2654
  %v4882 = vunpack.c.l.b16 %v2655
  %v4883 = vunpack.c.l.b16 %v2656
  %v4884 = vunpack.c.l.b16 %v2657
  %v4885 = vunpack.c.l.b16 %v2658
  %v4886 = vunpack.c.l.b16 %v2659
  %v4887 = vunpack.c.l.b16 %v2660
  %v4888 = vunpack.c.l.b16 %v2661
  %v4889 = vunpack.c.l.b16 %v2662
  %v4890 = vunpack.c.l.b16 %v2663
  %v4891 = vunpack.c.l.b16 %v2664
  %v4892 = vunpack.c.l.b16 %v2665
  %v4893 = vunpack.c.l.b16 %v2666
  %v4894 = vunpack.c.l.b16 %v2667
  %v4895 = vunpack.c.l.b16 %v2668
  %v4896 = vunpack.c.l.b16 %v2669
  %v4897 = vunpack.c.l.b16 %v2670
  %v4898 = vunpack.c.l.b16 %v2671
  %v4899 = vunpack.c.l.b16 %v2672
  %v4900 = vunpack.c.l.b16 %v2673
  %v4901 = vunpack.c.l.b16 %v2674
  %v4902 = vunpack.c.l.b16 %v2675
  %v4903 = vunpack.c.l.b16 %v2676
  %v4904 = vunpack.c.l.b16 %v2677
  %v4905 = vunpack.c.l.b16 %v2678
  %v4906 = vunpack.c.l.b16 %v2679
  %v4907 = vunpack.c.l.b16 %v2680
  %v4908 = vunpack.c.l.b16 %v2681
  %v4909 = vunpack.c.l.b16 %v2682
  %v4910 = vunpack.c.l.b16 %v2683
  %v4911 = vunpack.c.l.b16 %v2684
  %v4912 = vunpack.c.l.b16 %v2685
  %v4913 = vunpack.c.l.b16 %v2686
  %v4914 = vunpack.c.l.b16 %v2687
  %v4915 = vunpack.c.l.b16 %v2688
  %v4916 = vunpack.c.l.b16 %v2689
  %v4917 = vunpack.c.l.b16 %v2690
  %v4918 = vunpack.c.l.b16 %v2691
  %v4919 = vunpack.c.l.b16 %v2692
  %v4920 = vunpack.c.l.b16 %v2693
  %v4921 = vunpack.c.l.b16 %v2694
  %v4922 = vunpack.c.l.b16 %v2695
  %v4923 = vunpack.c.l.b16 %v2696
  %v4924 = vunpack.c.l.b16 %v2697
  %v4925 = vunpack.c.l.b16 %v2698
  %v4926 = vunpack.c.l.b16 %v2699
  %v4927 = vunpack.c.l.b16 %v2700
  %v4928 = vunpack.c.l.b16 %v2701
  %v4929 = vunpack.c.l.b16 %v2702
  %v4930 = vunpack.c.l.b16 %v2703
  %v4931 = vunpack.c.l.b16 %v2704
  %v4932 = vunpack.c.l.b16 %v2705
  %v4933 = vunpack.c.l.b16 %v2706
  %v4934 = vunpack.c.l.b16 %v2707
  %v4935 = vunpack.c.l.b16 %v2708
  %v4936 = vunpack.c.l.b16 %v2709
  %v4937 = vunpack.c.l.b16 %v2710
  %v4938 = vunpack.c.l.b16 %v2711
  %v4939 = vunpack.c.l.b16 %v2712
  %v4940 = vunpack.c.l.b16 %v2713
  %v4941 = vunpack.c.l.b16 %v2714
  %v4942 = vunpack.c.l.b16 %v2715
  %v4943 = vunpack.c.l.b16 %v2716
  %v4944 = vunpack.c.l.b16 %v2717
  %v4945 = vunpack.c.l.b16 %v2718
  %v4946 = vunpack.c.l.b16 %v2719
  %v4947 = vunpack.c.l.b16 %v2720
  %v4948 = vunpack.c.l.b16 %v2721
  %v4949 = vunpack.c.l.b16 %v2722
  %v4950 = vunpack.c.l.b16 %v2723
  %v4951 = vunpack.c.l.b16 %v2724
  %v4952 = vunpack.c.l.b16 %v2725
  %v4953 = vunpack.c.l.b16 %v2726
  %v4954 = vunpack.c.l.b16 %v2727
  %v4955 = vunpack.c.l.b16 %v2728
  %v4956 = vunpack.c.l.b16 %v2729
  %v4957 = vunpack.c.l.b16 %v2730
  %v4958 = vunpack.c.l.b16 %v2731
  %v4959 = vunpack.c.l.b16 %v2732
  %v4960 = vunpack.c.l.b16 %v2733
  %v4961 = vunpack.c.l.b16 %v2734
  %v4962 = vunpack.c.l.b16 %v2735
  %v4963 = vunpack.c.l.b16 %v2736
  %v4964 = vunpack.c.l.b16 %v2737
  %v4965 = vunpack.c.l.b16 %v2738
  %v4966 = vunpack.c.l.b16 %v2739
  %v4967 = vunpack.c.l.b16 %v2740
  %v4968 = vunpack.c.l.b16 %v2741
  %v4969 = vunpack.c.l.b16 %v2742
  %v4970 = vunpack.c.l.b16 %v2743
  %v4971 = vunpack.c.l.b16 %v2744
  %v4972 = vunpack.c.l.b16 %v2745
  %v4973 = vunpack.c.l.b16 %v2746
  %v4974 = vunpack.c.l.b16 %v2747
  %v4975 = vunpack.c.l.b16 %v2748
  %v4976 = vunpack.c.l.b16 %v2749
  %v4977 = vunpack.c.l.b16 %v2750
  %v4978 = vunpack.c.l.b16 %v2751
  %v4979 = vunpack.c.l.b16 %v2752
  %v4980 = vunpack.c.l.b16 %v2753
  %v4981 = vunpack.c.l.b16 %v2754
  %v4982 = vunpack.c.l.b16 %v2755
  %v4983 = vunpack.c.l.b16 %v2756
  %v4984 = vunpack.c.l.b16 %v2757
  %v4985 = vunpack.c.l.b16 %v2758
  %v4986 = vunpack.c.l.b16 %v2759
  %v4987 = vunpack.c.l.b16 %v2760
  %v4988 = vunpack.c.l.b16 %v2761
  %v4989 = vunpack.c.l.b16 %v2762
  %v4990 = vunpack.c.l.b16 %v2763
  %v4991 = vunpack.c.l.b16 %v2764
  %v4992 = vunpack.c.l.b16 %v2765
  %v4993 = vunpack.c.l.b16 %v2766
  %v4994 = vunpack.c.l.b16 %v2767
  %v4995 = vunpack.c.l.b16 %v2768
  %v4996 = vunpack.c.l.b16 %v2769
  %v4997 = vunpack.c.l.b16 %v2770
  %v4998 = vunpack.c.l.b16 %v2771
  %v4999 = vunpack.c.l.b16 %v2772
  %v5000 = vunpack.c.l.b16 %v2773
  %v5001 = vunpack.c.l.b16 %v2774
  %v5002 = vunpack.c.l.b16 %v2775
  %v5003 = vunpack.c.l.b16 %v2776
  %v5004 = vunpack.c.l.b16 %v2777
  %v5005 = vunpack.c.l.b16 %v2778
  %v5006 = vunpack.c.l.b16 %v2779
  %v5007 = vunpack.c.l.b16 %v2780
  %v5008 = vunpack.c.l.b16 %v2781
  %v5009 = vunpack.c.l.b16 %v2782
  %v5010 = vunpack.c.l.b16 %v2783
  %v5011 = vunpack.c.l.b16 %v2784
  %v5012 = vunpack.c.l.b16 %v2785
  %v5013 = vunpack.c.l.b16 %v2786
  %v5014 = vunpack.c.l.b16 %v2787
  %v5015 = vunpack.c.l.b16 %v2788
  %v5016 = vunpack.c.l.b16 %v2789
  %v5017 = vunpack.c.l.b16 %v2790
  %v5018 = vunpack.c.l.b16 %v2791
  %v5019 = vunpack.c.l.b16 %v2792
  %v5020 = vunpack.c.l.b16 %v2793
  %v5021 = vunpack.c.l.b16 %v2794
  %v5022 = vunpack.c.l.b16 %v2795
  %v5023 = vunpack.c.l.b16 %v2796
  %v5024 = vunpack.c.l.b16 %v2797
  %v5025 = vunpack.c.l.b16 %v2798
  %v5026 = vunpack.c.l.b16 %v2799
  %v5027 = vunpack.c.l.b16 %v2800
  %v5028 = vunpack.c.l.b16 %v2801
  %v5029 = vunpack.c.l.b16 %v2802
  %v5030 = vunpack.c.l.b16 %v2803
  %v5031 = vunpack.c.l.b16 %v2804
  %v5032 = vunpack.c.l.b16 %v2805
  %v5033 = vunpack.c.l.b16 %v2806
  %v5034 = vunpack.c.l.b16 %v2807
  %v5035 = vunpack.c.l.b16 %v2808
  %v5036 = vunpack.c.l.b16 %v2809
  %v5037 = vunpack.c.l.b16 %v2810
  %v5038 = vunpack.c.l.b16 %v2811
  %v5039 = vunpack.c.l.b16 %v2812
  %v5040 = vunpack.c.l.b16 %v2813
  %v5041 = vunpack.c.l.b16 %v2814
  %v5042 = vunpack.c.l.b16 %v2815
  %v5043 = vunpack.c.l.b16 %v2816
  %v5044 = vunpack.c.l.b16 %v2817
  %v5045 = vunpack.c.l.b16 %v2818
  %v5046 = vunpack.c.l.b16 %v2819
  %v5047 = vunpack.c.l.b16 %v2820
  %v5048 = vunpack.c.l.b16 %v2821
  %v5049 = vunpack.c.l.b16 %v2822
  %v5050 = vunpack.c.l.b16 %v2823
  %v5051 = vunpack.c.l.b16 %v2824
  %v5052 = vunpack.c.l.b16 %v2825
  %v5053 = vunpack.c.l.b16 %v2826
  %v5054 = vunpack.c.l.b16 %v2827
  %v5055 = vunpack.c.l.b16 %v2828
  %v5056 = vunpack.c.l.b16 %v2829
  %v5057 = vunpack.c.l.b16 %v2830
  %v5058 = vunpack.c.l.b16 %v2831
  %v5059 = vunpack.c.l.b16 %v2832
  %v5060 = vunpack.c.l.b16 %v2833
  %v5061 = vunpack.c.l.b16 %v2834
  %v5062 = vunpack.c.l.b16 %v2835
  %v5063 = vunpack.c.l.b16 %v2836
  %v5064 = vunpack.c.l.b16 %v2837
  %v5065 = vunpack.c.l.b16 %v2838
  %v5066 = vunpack.c.l.b16 %v2839
  %v5067 = vunpack.c.l.b16 %v2840
  %v5068 = vunpack.c.l.b16 %v2841
  %v5069 = vunpack.c.l.b16 %v2842
  %v5070 = vunpack.c.l.b16 %v2843
  %v5071 = vunpack.c.l.b16 %v2844
  %v5072 = vunpack.c.l.b16 %v2845
  %v5073 = vunpack.c.l.b16 %v2846
  %v5074 = vunpack.c.l.b16 %v2847
  %v5075 = vunpack.c.l.b16 %v2848
  %v5076 = vunpack.c.l.b16 %v2849
  %v5077 = vunpack.c.l.b16 %v2850
  %v5078 = vunpack.c.l.b16 %v2851
  %v5079 = vunpack.c.l.b16 %v2852
  %v5080 = vunpack.c.l.b16 %v2853
  %v5081 = vunpack.c.l.b16 %v2854
  %v5082 = vunpack.c.l.b16 %v2855
  %v5083 = vunpack.c.l.b16 %v2856
  %v5084 = vunpack.c.l.b16 %v2857
  %v5085 = vunpack.c.l.b16 %v2858
  %v5086 = vunpack.c.l.b16 %v2859
  %v5087 = vunpack.c.l.b16 %v2860
  %v5088 = vunpack.c.l.b16 %v2861
  %v5089 = vunpack.c.l.b16 %v2862
  %v5090 = vunpack.c.l.b16 %v2863
  %v5091 = vunpack.c.l.b16 %v2864
  %v5092 = vunpack.c.l.b16 %v2865
  %v5093 = vunpack.c.l.b16 %v2866
  %v5094 = vunpack.c.l.b16 %v2867
  %v5095 = vunpack.c.l.b16 %v2868
  %v5096 = vunpack.c.l.b16 %v2869
  %v5097 = vunpack.c.l.b16 %v2870
  %v5098 = vunpack.c.l.b16 %v2871
  %v5099 = vunpack.c.l.b16 %v2872
  %v5100 = vunpack.c.l.b16 %v2873
  %v5101 = vunpack.c.l.b16 %v2874
  %v5102 = vunpack.c.l.b16 %v2875
  %v5103 = vunpack.c.l.b16 %v2876
  %v5104 = vunpack.c.l.b16 %v2877
  %v5105 = vunpack.c.l.b16 %v2878
  %v5106 = vunpack.c.l.b16 %v2879
  %v5107 = vunpack.c.l.b16 %v2880
  %v5108 = vunpack.c.l.b16 %v2881
  %v5109 = vunpack.c.l.b16 %v2882
  %v5110 = vunpack.c.l.b16 %v2883
  %v5111 = vunpack.c.l.b16 %v2884
  %v5112 = vunpack.c.l.b16 %v2885
  %v5113 = vunpack.c.l.b16 %v2886
  %v5114 = vunpack.c.l.b16 %v2887
  %v5115 = vunpack.c.l.b16 %v2888
  %v5116 = vunpack.c.l.b16 %v2889
  %v5117 = vunpack.c.l.b16 %v2890
  %v5118 = vunpack.c.l.b16 %v2891
  %v5119 = vunpack.c.l.b16 %v2892
  %v5120 = vunpack.c.l.b16 %v2893
  %v5121 = vunpack.c.l.b16 %v2894
  %v5122 = vunpack.c.l.b16 %v2895
  %v5123 = vunpack.c.l.b16 %v2896
  %v5124 = vunpack.c.l.b16 %v2897
  %v5125 = vunpack.c.l.b16 %v2898
  %v5126 = vunpack.c.l.b16 %v2899
  %v5127 = vunpack.c.l.b16 %v2900
  %v5128 = vunpack.c.l.b16 %v2901
  %v5129 = vunpack.c.l.b16 %v2902
  %v5130 = vunpack.c.l.b16 %v2903
  %v5131 = vunpack.c.l.b16 %v2904
  %v5132 = vunpack.c.l.b16 %v2905
  %v5133 = vunpack.c.l.b16 %v2906
  %v5134 = vunpack.c.l.b16 %v2907
  %v5135 = vunpack.c.l.b16 %v2908
  %v5136 = vunpack.c.l.b16 %v2909
  %v5137 = vunpack.c.l.b16 %v2910
  %v5138 = vunpack.c.l.b16 %v2911
  %v5139 = vunpack.c.l.b16 %v2912
  %v5140 = vunpack.c.l.b16 %v2913
  %v5141 = vunpack.c.l.b16 %v2914
  %v5142 = vunpack.c.l.b16 %v2915
  %v5143 = vunpack.c.l.b16 %v2916
  %v5144 = vunpack.c.l.b16 %v2917
  %v5145 = vunpack.c.l.b16 %v2918
  %v5146 = vunpack.c.l.b16 %v2919
  %v5147 = vunpack.c.l.b16 %v2920
  %v5148 = vunpack.c.l.b16 %v2921
  %v5149 = vunpack.c.l.b16 %v2922
  %v5150 = vunpack.c.l.b16 %v2923
  %v5151 = vunpack.c.l.b16 %v2924
  %v5152 = vunpack.c.l.b16 %v2925
  %v5153 = vunpack.c.l.b16 %v2926
  %v5154 = vunpack.c.l.b16 %v2927
  %v5155 = vunpack.c.l.b16 %v2928
  %v5156 = vunpack.c.l.b16 %v2929
  %v5157 = vunpack.c.l.b16 %v2930
  %v5158 = vunpack.c.l.b16 %v2931
  %v5159 = vunpack.c.l.b16 %v2932
  %v5160 = vunpack.c.l.b16 %v2933
  %v5161 = vunpack.c.l.b16 %v2934
  %v5162 = vunpack.c.l.b16 %v2935
  %v5163 = vunpack.c.l.b16 %v2936
  %v5164 = vunpack.c.l.b16 %v2937
  %v5165 = vunpack.c.l.b16 %v2938
  %v5166 = vunpack.c.l.b16 %v2939
  %v5167 = vunpack.c.l.b16 %v2940
  %v5168 = vunpack.c.l.b16 %v2941
  %v5169 = vunpack.c.l.b16 %v2942
  %v5170 = vunpack.c.l.b16 %v2943
  %v5171 = vunpack.c.l.b16 %v2944
  %v5172 = vunpack.c.l.b16 %v2945
  %v5173 = vunpack.c.l.b16 %v2946
  %v5174 = vunpack.c.l.b16 %v2947
  %v5175 = vunpack.c.l.b16 %v2948
  %v5176 = vunpack.c.l.b16 %v2949
  %v5177 = vunpack.c.l.b16 %v2950
  %v5178 = vunpack.c.l.b16 %v2951
  %v5179 = vunpack.c.l.b16 %v2952
  %v5180 = vunpack.c.l.b16 %v2953
  %v5181 = vunpack.c.l.b16 %v2954
  %v5182 = vunpack.c.l.b16 %v2955
  %v5183 = vunpack.c.l.b16 %v2956
  %v5184 = vunpack.c.l.b16 %v2957
  %v5185 = vunpack.c.l.b16 %v2958
  %v5186 = vunpack.c.l.b16 %v2959
  %v5187 = vunpack.c.l.b16 %v2960
  %v5188 = vunpack.c.l.b16 %v2961
  %v5189 = vunpack.c.l.b16 %v2962
  %v5190 = vunpack.c.l.b16 %v2963
  %v5191 = vunpack.c.l.b16 %v2964
  %v5192 = vunpack.c.l.b16 %v2965
  %v5193 = vunpack.c.l.b16 %v2966
  %v5194 = vunpack.c.l.b16 %v2967
  %v5195 = vunpack.c.l.b16 %v2968
  %v5196 = vunpack.c.l.b16 %v2969
  %v5197 = vunpack.c.l.b16 %v2970
  %v5198 = vunpack.c.l.b16 %v2971
  %v5199 = vunpack.c.l.b16 %v2972
  %v5200 = vunpack.c.l.b16 %v2973
  %v5201 = vunpack.c.l.b16 %v2974
  %v5202 = vunpack.c.l.b16 %v2975
  %v5203 = vunpack.c.l.b16 %v2976
  %v5204 = vunpack.c.l.b16 %v2977
  %v5205 = vunpack.c.l.b16 %v2978
  %v5206 = vunpack.c.l.b16 %v2979
  %v5207 = vunpack.c.l.b16 %v2980
  %v5208 = vunpack.c.l.b16 %v2981
  %v5209 = vunpack.c.l.b16 %v2982
  %v5210 = vunpack.c.l.b16 %v2983
  %v5211 = vunpack.c.l.b16 %v2984
  %v5212 = vunpack.c.l.b16 %v2985
  %v5213 = vunpack.c.l.b16 %v2986
  %v5214 = vunpack.c.l.b16 %v2987
  %v5215 = vunpack.c.l.b16 %v2988
  %v5216 = vunpack.c.l.b16 %v2989
  %v5217 = vunpack.c.l.b16 %v2990
  %v5218 = vunpack.c.l.b16 %v2991
  %v5219 = vunpack.c.l.b16 %v2992
  %v5220 = vunpack.c.l.b16 %v2993
  %v5221 = vunpack.c.l.b16 %v2994
  %v5222 = vunpack.c.l.b16 %v2995
  %v5223 = vunpack.c.l.b16 %v2996
  %v5224 = vunpack.c.l.b16 %v2997
  %v5225 = vunpack.c.l.b16 %v2998
  %v5226 = vunpack.c.l.b16 %v2999
  %v5227 = vunpack.c.l.b16 %v3000
  %v5228 = vunpack.c.l.b16 %v3001
  %v5229 = vunpack.c.l.b16 %v3002
  %v5230 = vunpack.c.l.b16 %v3003
  %v5231 = vunpack.c.l.b16 %v3004
  %v5232 = vunpack.c.l.b16 %v3005
  %v5233 = vunpack.c.l.b16 %v3006
  %v5234 = vunpack.c.l.b16 %v3007
  %v5235 = vunpack.c.l.b16 %v3008
  %v5236 = vunpack.c.l.b16 %v3009
  %v5237 = vunpack.c.l.b16 %v3010
  %v5238 = vunpack.c.l.b16 %v3011
  %v5239 = vunpack.c.l.b16 %v3012
  %v5240 = vunpack.c.l.b16 %v3013
  %v5241 = vunpack.c.l.b16 %v3014
  %v5242 = vunpack.c.l.b16 %v3015
  %v5243 = vunpack.c.l.b16 %v3016
  %v5244 = vunpack.c.l.b16 %v3017
  %v5245 = vunpack.c.l.b16 %v3018
  %v5246 = vunpack.c.l.b16 %v3019
  %v5247 = vunpack.c.l.b16 %v3020
  %v5248 = vunpack.c.l.b16 %v3021
  %v5249 = vunpack.c.l.b16 %v3022
  %v5250 = vunpack.c.l.b16 %v3023
  %v5251 = vunpack.c.l.b16 %v3024
  %v5252 = vunpack.c.l.b16 %v3025
  %v5253 = vunpack.c.l.b16 %v3026
  %v5254 = vunpack.c.l.b16 %v3027
  %v5255 = vunpack.c.l.b16 %v3028
  %v5256 = vunpack.c.l.b16 %v3029
  %v5257 = vunpack.c.l.b16 %v3030
  %v5258 = vunpack.c.l.b16 %v3031
  %v5259 = vunpack.c.l.b16 %v3032
  %v5260 = vunpack.c.l.b16 %v3033
  %v5261 = vunpack.c.l.b16 %v3034
  %v5262 = vunpack.c.l.b16 %v3035
  %v5263 = vunpack.c.l.b16 %v3036
  %v5264 = vunpack.c.l.b16 %v3037
  %v5265 = vunpack.c.l.b16 %v3038
  %v5266 = vunpack.c.l.b16 %v3039
  %v5267 = vunpack.c.l.b16 %v3040
  %v5268 = vunpack.c.l.b16 %v3041
  %v5269 = vunpack.c.l.b16 %v3042
  %v5270 = vunpack.c.l.b16 %v3043
  %v5271 = vunpack.c.l.b16 %v3044
  %v5272 = vunpack.c.l.b16 %v3045
  %v5273 = vunpack.c.l.b16 %v3046
  %v5274 = vunpack.c.l.b16 %v3047
  %v5275 = vunpack.c.l.b16 %v3048
  %v5276 = vunpack.c.l.b16 %v3049
  %v5277 = vunpack.c.l.b16 %v3050
  %v5278 = vunpack.c.l.b16 %v3051
  %v5279 = vunpack.c.l.b16 %v3052
  %v5280 = vunpack.c.l.b16 %v3053
  %v5281 = vunpack.c.l.b16 %v3054
  %v5282 = vunpack.c.l.b16 %v3055
  %v5283 = vunpack.c.l.b16 %v3056
  %v5284 = vunpack.c.l.b16 %v3057
  %v5285 = vunpack.c.l.b16 %v3058
  %v5286 = vunpack.c.l.b16 %v3059
  %v5287 = vunpack.c.l.b16 %v3060
  %v5288 = vunpack.c.l.b16 %v3061
  %v5289 = vunpack.c.l.b16 %v3062
  %v5290 = vunpack.c.l.b16 %v3063
  %v5291 = vunpack.c.l.b16 %v3064
  %v5292 = vunpack.c.l.b16 %v3065
  %v5293 = vunpack.c.l.b16 %v3066
  %v5294 = vunpack.c.l.b16 %v3067
  %v5295 = vunpack.c.l.b16 %v3068
  %v5296 = vunpack.c.l.b16 %v3069
  %v5297 = vunpack.c.l.b16 %v3070
  %v5298 = vunpack.c.l.b16 %v3071
  %v5299 = vunpack.c.l.b16 %v3072
  %v5300 = vunpack.c.l.b16 %v3073
  %v5301 = vunpack.c.l.b16 %v3074
  %v5302 = vunpack.c.l.b16 %v3075
  %v5303 = vunpack.c.l.b16 %v3076
  %v5304 = vunpack.c.l.b16 %v3077
  %v5305 = vunpack.c.l.b16 %v3078
  %v5306 = vunpack.c.l.b16 %v3079
  %v5307 = vunpack.c.l.b16 %v3080
  %v5308 = vunpack.c.l.b16 %v3081
  %v5309 = vunpack.c.l.b16 %v3082
  %v5310 = vunpack.c.l.b16 %v3083
  %v5311 = vunpack.c.l.b16 %v3084
  %v5312 = vunpack.c.l.b16 %v3085
  %v5313 = vunpack.c.l.b16 %v3086
  %v5314 = vunpack.c.l.b16 %v3087
  %v5315 = vunpack.c.l.b16 %v3088
  %v5316 = vunpack.c.l.b16 %v3089
  %v5317 = vunpack.c.l.b16 %v3090
  %v5318 = vunpack.c.l.b16 %v3091
  %v5319 = vunpack.c.l.b16 %v3092
  %v5320 = vunpack.c.l.b16 %v3093
  %v5321 = vunpack.c.l.b16 %v3094
  %v5322 = vunpack.c.l.b16 %v3095
  %v5323 = vunpack.c.l.b16 %v3096
  %v5324 = vunpack.c.l.b16 %v3097
  %v5325 = vunpack.c.l.b16 %v3098
  %v5326 = vunpack.c.l.b16 %v3099
  %v5327 = vunpack.c.l.b16 %v3100
  %v5328 = vunpack.c.l.b16 %v3101
  %v5329 = vunpack.c.l.b16 %v3102
  %v5330 = vunpack.c.l.b16 %v3103
  %v5331 = vunpack.c.l.b16 %v3104
  %v5332 = vunpack.c.l.b16 %v3105
  %v5333 = vunpack.c.l.b16 %v3106
  %v5334 = vunpack.c.l.b16 %v3107
  %v5335 = vunpack.c.l.b16 %v3108
  %v5336 = vunpack.c.l.b16 %v3109
  %v5337 = vunpack.c.l.b16 %v3110
  %v5338 = vunpack.c.l.b16 %v3111
  %v5339 = vunpack.c.l.b16 %v3112
  %v5340 = vunpack.c.l.b16 %v3113
  %v5341 = vunpack.c.l.b16 %v3114
  %v5342 = vunpack.c.l.b16 %v3115
  %v5343 = vunpack.c.l.b16 %v3116
  %v5344 = vunpack.c.l.b16 %v3117
  %v5345 = vunpack.c.l.b16 %v3118
  %v5346 = vunpack.c.l.b16 %v3119
  %v5347 = vunpack.c.l.b16 %v3120
  %v5348 = vunpack.c.l.b16 %v3121
  %v5349 = vunpack.c.l.b16 %v3122
  %v5350 = vunpack.c.l.b16 %v3123
  %v5351 = vunpack.c.l.b16 %v3124
  %v5352 = vunpack.c.l.b16 %v3125
  %v5353 = vunpack.c.l.b16 %v3126
  %v5354 = vunpack.c.l.b16 %v3127
  %v5355 = vunpack.c.l.b16 %v3128
  %v5356 = vunpack.c.l.b16 %v3129
  %v5357 = vunpack.c.l.b16 %v3130
  %v5358 = vunpack.c.l.b16 %v3131
  %v5359 = vunpack.c.l.b16 %v3132
  %v5360 = vunpack.c.l.b16 %v3133
  %v5361 = vunpack.c.l.b16 %v3134
  %v5362 = vunpack.c.l.b16 %v3135
  %v5363 = vunpack.c.l.b16 %v3136
  %v5364 = vunpack.c.l.b16 %v3137
  %v5365 = vunpack.c.l.b16 %v3138
  %v5366 = vunpack.c.l.b16 %v3139
  %v5367 = vunpack.c.l.b16 %v3140
  %v5368 = vunpack.c.l.b16 %v3141
  %v5369 = vunpack.c.l.b16 %v3142
  %v5370 = vunpack.c.l.b16 %v3143
  %v5371 = vunpack.c.l.b16 %v3144
  %v5372 = vunpack.c.l.b16 %v3145
  %v5373 = vunpack.c.l.b16 %v3146
  %v5374 = vunpack.c.l.b16 %v3147
  %v5375 = vunpack.c.l.b16 %v3148
  %v5376 = vunpack.c.l.b16 %v3149
  %v5377 = vunpack.c.l.b16 %v3150
  %v5378 = vunpack.c.l.b16 %v3151
  %v5379 = vunpack.c.l.b16 %v3152
  %v5380 = vunpack.c.l.b16 %v3153
  %v5381 = vunpack.c.l.b16 %v3154
  %v5382 = vunpack.c.l.b16 %v3155
  %v5383 = vunpack.c.l.b16 %v3156
  %v5384 = vunpack.c.l.b16 %v3157
  %v5385 = vunpack.c.l.b16 %v3158
  %v5386 = vunpack.c.l.b16 %v3159
  %v5387 = vunpack.c.l.b16 %v3160
  %v5388 = vunpack.c.l.b16 %v3161
  %v5389 = vunpack.c.l.b16 %v3162
  %v5390 = vunpack.c.l.b16 %v3163
  %v5391 = vunpack.c.l.b16 %v3164
  %v5392 = vunpack.c.l.b16 %v3165
  %v5393 = vunpack.c.l.b16 %v3166
  %v5394 = vunpack.c.l.b16 %v3167
  %v5395 = vunpack.c.l.b16 %v3168
  %v5396 = vunpack.c.l.b16 %v3169
  %v5397 = vunpack.c.l.b16 %v3170
  %v5398 = vunpack.c.l.b16 %v3171
  %v5399 = vunpack.c.l.b16 %v3172
  %v5400 = vunpack.c.l.b16 %v3173
  %v5401 = vunpack.c.l.b16 %v3174
  %v5402 = vunpack.c.l.b16 %v3175
  %v5403 = vunpack.c.l.b16 %v3176
  %v5404 = vunpack.c.l.b16 %v3177
  %v5405 = vunpack.c.l.b16 %v3178
  %v5406 = vunpack.c.l.b16 %v3179
  %v5407 = vunpack.c.l.b16 %v3180
  %v5408 = vunpack.c.l.b16 %v3181
  %v5409 = vunpack.c.l.b16 %v3182
  %v5410 = vunpack.c.l.b16 %v3183
  %v5411 = vunpack.c.l.b16 %v3184
  %v5412 = vunpack.c.l.b16 %v3185
  %v5413 = vunpack.c.l.b16 %v3186
  %v5414 = vunpack.c.l.b16 %v3187
  %v5415 = vunpack.c.l.b16 %v3188
  %v5416 = vunpack.c.l.b16 %v3189
  %v5417 = vunpack.c.l.b16 %v3190
  %v5418 = vunpack.c.l.b16 %v3191
  %v5419 = vunpack.c.l.b16 %v3192
  %v5420 = vunpack.c.l.b16 %v3193
  %v5421 = vunpack.c.l.b16 %v3194
  %v5422 = vunpack.c.l.b16 %v3195
  %v5423 = vunpack.c.l.b16 %v3196
  %v5424 = vunpack.c.l.b16 %v3197
  %v5425 = vunpack.c.l.b16 %v3198
  %v5426 = vunpack.c.l.b16 %v3199
  %v5427 = vunpack.c.l.b16 %v3200
  %v5428 = vunpack.c.l.b16 %v3201
  %v5429 = vunpack.c.l.b16 %v3202
  %v5430 = vunpack.c.l.b16 %v3203
  %v5431 = vunpack.c.l.b16 %v3204
  %v5432 = vunpack.c.l.b16 %v3205
  %v5433 = vunpack.c.l.b16 %v3206
  %v5434 = vunpack.c.l.b16 %v3207
  %v5435 = vunpack.c.l.b16 %v3208
  %v5436 = vunpack.c.l.b16 %v3209
  %v5437 = vunpack.c.l.b16 %v3210
  %v5438 = vunpack.c.l.b16 %v3211
  %v5439 = vunpack.c.l.b16 %v3212
  %v5440 = vunpack.c.l.b16 %v3213
  %v5441 = vunpack.c.l.b16 %v3214
  %v5442 = vunpack.c.l.b16 %v3215
  %v5443 = vunpack.c.l.b16 %v3216
  %v5444 = vunpack.c.l.b16 %v3217
  %v5445 = vunpack.c.l.b16 %v3218
  %v5446 = vunpack.c.l.b16 %v3219
  %v5447 = vunpack.c.l.b16 %v3220
  %v5448 = vunpack.c.l.b16 %v3221
  %v5449 = vpack.c.b16 %v4450, %v4449
  %v5450 = vpack.c.b16 %v4452, %v4451
  %v5451 = vpack.c.b16 %v4454, %v4453
  %v5452 = vpack.c.b16 %v4456, %v4455
  %v5453 = vpack.c.b16 %v4458, %v4457
  %v5454 = vpack.c.b16 %v4460, %v4459
  %v5455 = vpack.c.b16 %v4462, %v4461
  %v5456 = vpack.c.b16 %v4464, %v4463
  %v5457 = vpack.c.b16 %v4466, %v4465
  %v5458 = vpack.c.b16 %v4468, %v4467
  %v5459 = vpack.c.b16 %v4470, %v4469
  %v5460 = vpack.c.b16 %v4472, %v4471
  %v5461 = vpack.c.b16 %v4474, %v4473
  %v5462 = vpack.c.b16 %v4476, %v4475
  %v5463 = vpack.c.b16 %v4478, %v4477
  %v5464 = vpack.c.b16 %v4480, %v4479
  %v5465 = vpack.c.b16 %v4482, %v4481
  %v5466 = vpack.c.b16 %v4484, %v4483
  %v5467 = vpack.c.b16 %v4486, %v4485
  %v5468 = vpack.c.b16 %v4488, %v4487
  %v5469 = vpack.c.b16 %v4490, %v4489
  %v5470 = vpack.c.b16 %v4492, %v4491
  %v5471 = vpack.c.b16 %v4494, %v4493
  %v5472 = vpack.c.b16 %v4496, %v4495
  %v5473 = vpack.c.b16 %v4498, %v4497
  %v5474 = vpack.c.b16 %v4500, %v4499
  %v5475 = vpack.c.b16 %v4502, %v4501
  %v5476 = vpack.c.b16 %v4504, %v4503
  %v5477 = vpack.c.b16 %v4506, %v4505
  %v5478 = vpack.c.b16 %v4508, %v4507
  %v5479 = vpack.c.b16 %v4510, %v4509
  %v5480 = vpack.c.b16 %v4512, %v4511
  %v5481 = vpack.c.b16 %v4514, %v4513
  %v5482 = vpack.c.b16 %v4516, %v4515
  %v5483 = vpack.c.b16 %v4518, %v4517
  %v5484 = vpack.c.b16 %v4520, %v4519
  %v5485 = vpack.c.b16 %v4522, %v4521
  %v5486 = vpack.c.b16 %v4524, %v4523
  %v5487 = vpack.c.b16 %v4526, %v4525
  %v5488 = vpack.c.b16 %v4528, %v4527
  %v5489 = vpack.c.b16 %v4530, %v4529
  %v5490 = vpack.c.b16 %v4532, %v4531
  %v5491 = vpack.c.b16 %v4534, %v4533
  %v5492 = vpack.c.b16 %v4536, %v4535
  %v5493 = vpack.c.b16 %v4538, %v4537
  %v5494 = vpack.c.b16 %v4540, %v4539
  %v5495 = vpack.c.b16 %v4542, %v4541
  %v5496 = vpack.c.b16 %v4544, %v4543
  %v5497 = vpack.c.b16 %v4546, %v4545
  %v5498 = vpack.c.b16 %v4548, %v4547
  %v5499 = vpack.c.b16 %v4550, %v4549
  %v5500 = vpack.c.b16 %v4552, %v4551
  %v5501 = vpack.c.b16 %v4554, %v4553
  %v5502 = vpack.c.b16 %v4556, %v4555
  %v5503 = vpack.c.b16 %v4558, %v4557
  %v5504 = vpack.c.b16 %v4560, %v4559
  %v5505 = vpack.c.b16 %v4562, %v4561
  %v5506 = vpack.c.b16 %v4564, %v4563
  %v5507 = vpack.c.b16 %v4566, %v4565
  %v5508 = vpack.c.b16 %v4568, %v4567
  %v5509 = vpack.c.b16 %v4570, %v4569
  %v5510 = vpack.c.b16 %v4572, %v4571
  %v5511 = vpack.c.b16 %v4574, %v4573
  %v5512 = vpack.c.b16 %v4576, %v4575
  %v5513 = vpack.c.b16 %v4578, %v4577
  %v5514 = vpack.c.b16 %v4580, %v4579
  %v5515 = vpack.c.b16 %v4582, %v4581
  %v5516 = vpack.c.b16 %v4584, %v4583
  %v5517 = vpack.c.b16 %v4586, %v4585
  %v5518 = vpack.c.b16 %v4588, %v4587
  %v5519 = vpack.c.b16 %v4590, %v4589
  %v5520 = vpack.c.b16 %v4592, %v4591
  %v5521 = vpack.c.b16 %v4594, %v4593
  %v5522 = vpack.c.b16 %v4596, %v4595
  %v5523 = vpack.c.b16 %v4598, %v4597
  %v5524 = vpack.c.b16 %v4600, %v4599
  %v5525 = vpack.c.b16 %v4602, %v4601
  %v5526 = vpack.c.b16 %v4604, %v4603
  %v5527 = vpack.c.b16 %v4606, %v4605
  %v5528 = vpack.c.b16 %v4608, %v4607
  %v5529 = vpack.c.b16 %v4610, %v4609
  %v5530 = vpack.c.b16 %v4612, %v4611
  %v5531 = vpack.c.b16 %v4614, %v4613
  %v5532 = vpack.c.b16 %v4616, %v4615
  %v5533 = vpack.c.b16 %v4618, %v4617
  %v5534 = vpack.c.b16 %v4620, %v4619
  %v5535 = vpack.c.b16 %v4622, %v4621
  %v5536 = vpack.c.b16 %v4624, %v4623
  %v5537 = vpack.c.b16 %v4626, %v4625
  %v5538 = vpack.c.b16 %v4628, %v4627
  %v5539 = vpack.c.b16 %v4630, %v4629
  %v5540 = vpack.c.b16 %v4632, %v4631
  %v5541 = vpack.c.b16 %v4634, %v4633
  %v5542 = vpack.c.b16 %v4636, %v4635
  %v5543 = vpack.c.b16 %v4638, %v4637
  %v5544 = vpack.c.b16 %v4640, %v4639
  %v5545 = vpack.c.b16 %v4642, %v4641
  %v5546 = vpack.c.b16 %v4644, %v4643
  %v5547 = vpack.c.b16 %v4646, %v4645
  %v5548 = vpack.c.b16 %v4648, %v4647
  %v5549 = vpack.c.b16 %v4650, %v4649
  %v5550 = vpack.c.b16 %v4652, %v4651
  %v5551 = vpack.c.b16 %v4654, %v4653
  %v5552 = vpack.c.b16 %v4656, %v4655
  %v5553 = vpack.c.b16 %v4658, %v4657
  %v5554 = vpack.c.b16 %v4660, %v4659
  %v5555 = vpack.c.b16 %v4662, %v4661
  %v5556 = vpack.c.b16 %v4664, %v4663
  %v5557 = vpack.c.b16 %v4666, %v4665
  %v5558 = vpack.c.b16 %v4668, %v4667
  %v5559 = vpack.c.b16 %v4670, %v4669
  %v5560 = vpack.c.b16 %v4672, %v4671
  %v5561 = vpack.c.b16 %v4674, %v4673
  %v5562 = vpack.c.b16 %v4676, %v4675
  %v5563 = vpack.c.b16 %v4678, %v4677
  %v5564 = vpack.c.b16 %v4680, %v4679
  %v5565 = vpack.c.b16 %v4682, %v4681
  %v5566 = vpack.c.b16 %v4684, %v4683
  %v5567 = vpack.c.b16 %v4686, %v4685
  %v5568 = vpack.c.b16 %v4688, %v4687
  %v5569 = vpack.c.b16 %v4690, %v4689
  %v5570 = vpack.c.b16 %v4692, %v4691
  %v5571 = vpack.c.b16 %v4694, %v4693
  %v5572 = vpack.c.b16 %v4696, %v4695
  %v5573 = vpack.c.b16 %v4698, %v4697
  %v5574 = vpack.c.b16 %v4700, %v4699
  %v5575 = vpack.c.b16 %v4702, %v4701
  %v5576 = vpack.c.b16 %v4704, %v4703
  %v5577 = vpack.c.b16 %v4706, %v4705
  %v5578 = vpack.c.b16 %v4708, %v4707
  %v5579 = vpack.c.b16 %v4710, %v4709
  %v5580 = vpack.c.b16 %v4712, %v4711
  %v5581 = vpack.c.b16 %v4714, %v4713
  %v5582 = vpack.c.b16 %v4716, %v4715
  %v5583 = vpack.c.b16 %v4718, %v4717
  %v5584 = vpack.c.b16 %v4720, %v4719
  %v5585 = vpack.c.b16 %v4722, %v4721
  %v5586 = vpack.c.b16 %v4724, %v4723
  %v5587 = vpack.c.b16 %v4726, %v4725
  %v5588 = vpack.c.b16 %v4728, %v4727
  %v5589 = vpack.c.b16 %v4730, %v4729
  %v5590 = vpack.c.b16 %v4732, %v4731
  %v5591 = vpack.c.b16 %v4734, %v4733
  %v5592 = vpack.c.b16 %v4736, %v4735
  %v5593 = vpack.c.b16 %v4738, %v4737
  %v5594 = vpack.c.b16 %v4740, %v4739
  %v5595 = vpack.c.b16 %v4742, %v4741
  %v5596 = vpack.c.b16 %v4744, %v4743
  %v5597 = vpack.c.b16 %v4746, %v4745
  %v5598 = vpack.c.b16 %v4748, %v4747
  %v5599 = vpack.c.b16 %v4750, %v4749
  %v5600 = vpack.c.b16 %v4752, %v4751
  %v5601 = vpack.c.b16 %v4754, %v4753
  %v5602 = vpack.c.b16 %v4756, %v4755
  %v5603 = vpack.c.b16 %v4758, %v4757
  %v5604 = vpack.c.b16 %v4760, %v4759
  %v5605 = vpack.c.b16 %v4762, %v4761
  %v5606 = vpack.c.b16 %v4764, %v4763
  %v5607 = vpack.c.b16 %v4766, %v4765
  %v5608 = vpack.c.b16 %v4768, %v4767
  %v5609 = vpack.c.b16 %v4770, %v4769
  %v5610 = vpack.c.b16 %v4772, %v4771
  %v5611 = vpack.c.b16 %v4774, %v4773
  %v5612 = vpack.c.b16 %v4776, %v4775
  %v5613 = vpack.c.b16 %v4778, %v4777
  %v5614 = vpack.c.b16 %v4780, %v4779
  %v5615 = vpack.c.b16 %v4782, %v4781
  %v5616 = vpack.c.b16 %v4784, %v4783
  %v5617 = vpack.c.b16 %v4786, %v4785
  %v5618 = vpack.c.b16 %v4788, %v4787
  %v5619 = vpack.c.b16 %v4790, %v4789
  %v5620 = vpack.c.b16 %v4792, %v4791
  %v5621 = vpack.c.b16 %v4794, %v4793
  %v5622 = vpack.c.b16 %v4796, %v4795
  %v5623 = vpack.c.b16 %v4798, %v4797
  %v5624 = vpack.c.b16 %v4800, %v4799
  %v5625 = vpack.c.b16 %v4802, %v4801
  %v5626 = vpack.c.b16 %v4804, %v4803
  %v5627 = vpack.c.b16 %v4806, %v4805
  %v5628 = vpack.c.b16 %v4808, %v4807
  %v5629 = vpack.c.b16 %v4810, %v4809
  %v5630 = vpack.c.b16 %v4812, %v4811
  %v5631 = vpack.c.b16 %v4814, %v4813
  %v5632 = vpack.c.b16 %v4816, %v4815
  %v5633 = vpack.c.b16 %v4818, %v4817
  %v5634 = vpack.c.b16 %v4820, %v4819
  %v5635 = vpack.c.b16 %v4822, %v4821
  %v5636 = vpack.c.b16 %v4824, %v4823
  %v5637 = vpack.c.b16 %v4826, %v4825
  %v5638 = vpack.c.b16 %v4828, %v4827
  %v5639 = vpack.c.b16 %v4830, %v4829
  %v5640 = vpack.c.b16 %v4832, %v4831
  %v5641 = vpack.c.b16 %v4834, %v4833
  %v5642 = vpack.c.b16 %v4836, %v4835
  %v5643 = vpack.c.b16 %v4838, %v4837
  %v5644 = vpack.c.b16 %v4840, %v4839
  %v5645 = vpack.c.b16 %v4842, %v4841
  %v5646 = vpack.c.b16 %v4844, %v4843
  %v5647 = vpack.c.b16 %v4846, %v4845
  %v5648 = vpack.c.b16 %v4848, %v4847
  %v5649 = vpack.c.b16 %v4850, %v4849
  %v5650 = vpack.c.b16 %v4852, %v4851
  %v5651 = vpack.c.b16 %v4854, %v4853
  %v5652 = vpack.c.b16 %v4856, %v4855
  %v5653 = vpack.c.b16 %v4858, %v4857
  %v5654 = vpack.c.b16 %v4860, %v4859
  %v5655 = vpack.c.b16 %v4862, %v4861
  %v5656 = vpack.c.b16 %v4864, %v4863
  %v5657 = vpack.c.b16 %v4866, %v4865
  %v5658 = vpack.c.b16 %v4868, %v4867
  %v5659 = vpack.c.b16 %v4870, %v4869
  %v5660 = vpack.c.b16 %v4872, %v4871
  %v5661 = vpack.c.b16 %v4874, %v4873
  %v5662 = vpack.c.b16 %v4876, %v4875
  %v5663 = vpack.c.b16 %v4878, %v4877
  %v5664 = vpack.c.b16 %v4880, %v4879
  %v5665 = vpack.c.b16 %v4882, %v4881
  %v5666 = vpack.c.b16 %v4884, %v4883
  %v5667 = vpack.c.b16 %v4886, %v4885
  %v5668 = vpack.c.b16 %v4888, %v4887
  %v5669 = vpack.c.b16 %v4890, %v4889
  %v5670 = vpack.c.b16 %v4892, %v4891
  %v5671 = vpack.c.b16 %v4894, %v4893
  %v5672 = vpack.c.b16 %v4896, %v4895
  %v5673 = vpack.c.b16 %v4898, %v4897
  %v5674 = vpack.c.b16 %v4900, %v4899
  %v5675 = vpack.c.b16 %v4902, %v4901
  %v5676 = vpack.c.b16 %v4904, %v4903
  %v5677 = vpack.c.b16 %v4906, %v4905
  %v5678 = vpack.c.b16 %v4908, %v4907
  %v5679 = vpack.c.b16 %v4910, %v4909
  %v5680 = vpack.c.b16 %v4912, %v4911
  %v5681 = vpack.c.b16 %v4914, %v4913
  %v5682 = vpack.c.b16 %v4916, %v4915
  %v5683 = vpack.c.b16 %v4918, %v4917
  %v5684 = vpack.c.b16 %v4920, %v4919
  %v5685 = vpack.c.b16 %v4922, %v4921
  %v5686 = vpack.c.b16 %v4924, %v4923
  %v5687 = vpack.c.b16 %v4926, %v4925
  %v5688 = vpack.c.b16 %v4928, %v4927
  %v5689 = vpack.c.b16 %v4930, %v4929
  %v5690 = vpack.c.b16 %v4932, %v4931
  %v5691 = vpack.c.b16 %v4934, %v4933
  %v5692 = vpack.c.b16 %v4936, %v4935
  %v5693 = vpack.c.b16 %v4938, %v4937
  %v5694 = vpack.c.b16 %v4940, %v4939
  %v5695 = vpack.c.b16 %v4942, %v4941
  %v5696 = vpack.c.b16 %v4944, %v4943
  %v5697 = vpack.c.b16 %v4946, %v4945
  %v5698 = vpack.c.b16 %v4948, %v4947
  %v5699 = vpack.c.b16 %v4950, %v4949
  %v5700 = vpack.c.b16 %v4952, %v4951
  %v5701 = vpack.c.b16 %v4954, %v4953
  %v5702 = vpack.c.b16 %v4956, %v4955
  %v5703 = vpack.c.b16 %v4958, %v4957
  %v5704 = vpack.c.b16 %v4960, %v4959
  %v5705 = vpack.c.b16 %v4962, %v4961
  %v5706 = vpack.c.b16 %v4964, %v4963
  %v5707 = vpack.c.b16 %v4966, %v4965
  %v5708 = vpack.c.b16 %v4968, %v4967
  %v5709 = vpack.c.b16 %v4970, %v4969
  %v5710 = vpack.c.b16 %v4972, %v4971
  %v5711 = vpack.c.b16 %v4974, %v4973
  %v5712 = vpack.c.b16 %v4976, %v4975
  %v5713 = vpack.c.b16 %v4978, %v4977
  %v5714 = vpack.c.b16 %v4980, %v4979
  %v5715 = vpack.c.b16 %v4982, %v4981
  %v5716 = vpack.c.b16 %v4984, %v4983
  %v5717 = vpack.c.b16 %v4986, %v4985
  %v5718 = vpack.c.b16 %v4988, %v4987
  %v5719 = vpack.c.b16 %v4990, %v4989
  %v5720 = vpack.c.b16 %v4992, %v4991
  %v5721 = vpack.c.b16 %v4994, %v4993
  %v5722 = vpack.c.b16 %v4996, %v4995
  %v5723 = vpack.c.b16 %v4998, %v4997
  %v5724 = vpack.c.b16 %v5000, %v4999
  %v5725 = vpack.c.b16 %v5002, %v5001
  %v5726 = vpack.c.b16 %v5004, %v5003
  %v5727 = vpack.c.b16 %v5006, %v5005
  %v5728 = vpack.c.b16 %v5008, %v5007
  %v5729 = vpack.c.b16 %v5010, %v5009
  %v5730 = vpack.c.b16 %v5012, %v5011
  %v5731 = vpack.c.b16 %v5014, %v5013
  %v5732 = vpack.c.b16 %v5016, %v5015
  %v5733 = vpack.c.b16 %v5018, %v5017
  %v5734 = vpack.c.b16 %v5020, %v5019
  %v5735 = vpack.c.b16 %v5022, %v5021
  %v5736 = vpack.c.b16 %v5024, %v5023
  %v5737 = vpack.c.b16 %v5026, %v5025
  %v5738 = vpack.c.b16 %v5028, %v5027
  %v5739 = vpack.c.b16 %v5030, %v5029
  %v5740 = vpack.c.b16 %v5032, %v5031
  %v5741 = vpack.c.b16 %v5034, %v5033
  %v5742 = vpack.c.b16 %v5036, %v5035
  %v5743 = vpack.c.b16 %v5038, %v5037
  %v5744 = vpack.c.b16 %v5040, %v5039
  %v5745 = vpack.c.b16 %v5042, %v5041
  %v5746 = vpack.c.b16 %v5044, %v5043
  %v5747 = vpack.c.b16 %v5046, %v5045
  %v5748 = vpack.c.b16 %v5048, %v5047
  %v5749 = vpack.c.b16 %v5050, %v5049
  %v5750 = vpack.c.b16 %v5052, %v5051
  %v5751 = vpack.c.b16 %v5054, %v5053
  %v5752 = vpack.c.b16 %v5056, %v5055
  %v5753 = vpack.c.b16 %v5058, %v5057
  %v5754 = vpack.c.b16 %v5060, %v5059
  %v5755 = vpack.c.b16 %v5062, %v5061
  %v5756 = vpack.c.b16 %v5064, %v5063
  %v5757 = vpack.c.b16 %v5066, %v5065
  %v5758 = vpack.c.b16 %v5068, %v5067
  %v5759 = vpack.c.b16 %v5070, %v5069
  %v5760 = vpack.c.b16 %v5072, %v5071
  %v5761 = vpack.c.b16 %v5074, %v5073
  %v5762 = vpack.c.b16 %v5076, %v5075
  %v5763 = vpack.c.b16 %v5078, %v5077
  %v5764 = vpack.c.b16 %v5080, %v5079
  %v5765 = vpack.c.b16 %v5082, %v5081
  %v5766 = vpack.c.b16 %v5084, %v5083
  %v5767 = vpack.c.b16 %v5086, %v5085
  %v5768 = vpack.c.b16 %v5088, %v5087
  %v5769 = vpack.c.b16 %v5090, %v5089
  %v5770 = vpack.c.b16 %v5092, %v5091
  %v5771 = vpack.c.b16 %v5094, %v5093
  %v5772 = vpack.c.b16 %v5096, %v5095
  %v5773 = vpack.c.b16 %v5098, %v5097
  %v5774 = vpack.c.b16 %v5100, %v5099
  %v5775 = vpack.c.b16 %v5102, %v5101
  %v5776 = vpack.c.b16 %v5104, %v5103
  %v5777 = vpack.c.b16 %v5106, %v5105
  %v5778 = vpack.c.b16 %v5108, %v5107
  %v5779 = vpack.c.b16 %v5110, %v5109
  %v5780 = vpack.c.b16 %v5112, %v5111
  %v5781 = vpack.c.b16 %v5114, %v5113
  %v5782 = vpack.c.b16 %v5116, %v5115
  %v5783 = vpack.c.b16 %v5118, %v5117
  %v5784 = vpack.c.b16 %v5120, %v5119
  %v5785 = vpack.c.b16 %v5122, %v5121
  %v5786 = vpack.c.b16 %v5124, %v5123
  %v5787 = vpack.c.b16 %v5126, %v5125
  %v5788 = vpack.c.b16 %v5128, %v5127
  %v5789 = vpack.c.b16 %v5130, %v5129
  %v5790 = vpack.c.b16 %v5132, %v5131
  %v5791 = vpack.c.b16 %v5134, %v5133
  %v5792 = vpack.c.b16 %v5136, %v5135
  %v5793 = vpack.c.b16 %v5138, %v5137
  %v5794 = vpack.c.b16 %v5140, %v5139
  %v5795 = vpack.c.b16 %v5142, %v5141
  %v5796 = vpack.c.b16 %v5144, %v5143
  %v5797 = vpack.c.b16 %v5146, %v5145
  %v5798 = vpack.c.b16 %v5148, %v5147
  %v5799 = vpack.c.b16 %v5150, %v5149
  %v5800 = vpack.c.b16 %v5152, %v5151
  %v5801 = vpack.c.b16 %v5154, %v5153
  %v5802 = vpack.c.b16 %v5156, %v5155
  %v5803 = vpack.c.b16 %v5158, %v5157
  %v5804 = vpack.c.b16 %v5160, %v5159
  %v5805 = vpack.c.b16 %v5162, %v5161
  %v5806 = vpack.c.b16 %v5164, %v5163
  %v5807 = vpack.c.b16 %v5166, %v5165
  %v5808 = vpack.c.b16 %v5168, %v5167
  %v5809 = vpack.c.b16 %v5170, %v5169
  %v5810 = vpack.c.b16 %v5172, %v5171
  %v5811 = vpack.c.b16 %v5174, %v5173
  %v5812 = vpack.c.b16 %v5176, %v5175
  %v5813 = vpack.c.b16 %v5178, %v5177
  %v5814 = vpack.c.b16 %v5180, %v5179
  %v5815 = vpack.c.b16 %v5182, %v5181
  %v5816 = vpack.c.b16 %v5184, %v5183
  %v5817 = vpack.c.b16 %v5186, %v5185
  %v5818 = vpack.c.b16 %v5188, %v5187
  %v5819 = vpack.c.b16 %v5190, %v5189
  %v5820 = vpack.c.b16 %v5192, %v5191
  %v5821 = vpack.c.b16 %v5194, %v5193
  %v5822 = vpack.c.b16 %v5196, %v5195
  %v5823 = vpack.c.b16 %v5198, %v5197
  %v5824 = vpack.c.b16 %v5200, %v5199
  %v5825 = vpack.c.b16 %v5202, %v5201
  %v5826 = vpack.c.b16 %v5204, %v5203
  %v5827 = vpack.c.b16 %v5206, %v5205
  %v5828 = vpack.c.b16 %v5208, %v5207
  %v5829 = vpack.c.b16 %v5210, %v5209
  %v5830 = vpack.c.b16 %v5212, %v5211
  %v5831 = vpack.c.b16 %v5214, %v5213
  %v5832 = vpack.c.b16 %v5216, %v5215
  %v5833 = vpack.c.b16 %v5218, %v5217
  %v5834 = vpack.c.b16 %v5220, %v5219
  %v5835 = vpack.c.b16 %v5222, %v5221
  %v5836 = vpack.c.b16 %v5224, %v5223
  %v5837 = vpack.c.b16 %v5226, %v5225
  %v5838 = vpack.c.b16 %v5228, %v5227
  %v5839 = vpack.c.b16 %v5230, %v5229
  %v5840 = vpack.c.b16 %v5232, %v5231
  %v5841 = vpack.c.b16 %v5234, %v5233
  %v5842 = vpack.c.b16 %v5236, %v5235
  %v5843 = vpack.c.b16 %v5238, %v5237
  %v5844 = vpack.c.b16 %v5240, %v5239
  %v5845 = vpack.c.b16 %v5242, %v5241
  %v5846 = vpack.c.b16 %v5244, %v5243
  %v5847 = vpack.c.b16 %v5246, %v5245
  %v5848 = vpack.c.b16 %v5248, %v5247
  %v5849 = vpack.c.b16 %v5250, %v5249
  %v5850 = vpack.c.b16 %v5252, %v5251
  %v5851 = vpack.c.b16 %v5254, %v5253
  %v5852 = vpack.c.b16 %v5256, %v5255
  %v5853 = vpack.c.b16 %v5258, %v5257
  %v5854 = vpack.c.b16 %v5260, %v5259
  %v5855 = vpack.c.b16 %v5262, %v5261
  %v5856 = vpack.c.b16 %v5264, %v5263
  %v5857 = vpack.c.b16 %v5266, %v5265
  %v5858 = vpack.c.b16 %v5268, %v5267
  %v5859 = vpack.c.b16 %v5270, %v5269
  %v5860 = vpack.c.b16 %v5272, %v5271
  %v5861 = vpack.c.b16 %v5274, %v5273
  %v5862 = vpack.c.b16 %v5276, %v5275
  %v5863 = vpack.c.b16 %v5278, %v5277
  %v5864 = vpack.c.b16 %v5280, %v5279
  %v5865 = vpack.c.b16 %v5282, %v5281
  %v5866 = vpack.c.b16 %v5284, %v5283
  %v5867 = vpack.c.b16 %v5286, %v5285
  %v5868 = vpack.c.b16 %v5288, %v5287
  %v5869 = vpack.c.b16 %v5290, %v5289
  %v5870 = vpack.c.b16 %v5292, %v5291
  %v5871 = vpack.c.b16 %v5294, %v5293
  %v5872 = vpack.c.b16 %v5296, %v5295
  %v5873 = vpack.c.b16 %v5298, %v5297
  %v5874 = vpack.c.b16 %v5300, %v5299
  %v5875 = vpack.c.b16 %v5302, %v5301
  %v5876 = vpack.c.b16 %v5304, %v5303
  %v5877 = vpack.c.b16 %v5306, %v5305
  %v5878 = vpack.c.b16 %v5308, %v5307
  %v5879 = vpack.c.b16 %v5310, %v5309
  %v5880 = vpack.c.b16 %v5312, %v5311
  %v5881 = vpack.c.b16 %v5314, %v5313
  %v5882 = vpack.c.b16 %v5316, %v5315
  %v5883 = vpack.c.b16 %v5318, %v5317
  %v5884 = vpack.c.b16 %v5320, %v5319
  %v5885 = vpack.c.b16 %v5322, %v5321
  %v5886 = vpack.c.b16 %v5324, %v5323
  %v5887 = vpack.c.b16 %v5326, %v5325
  %v5888 = vpack.c.b16 %v5328, %v5327
  %v5889 = vpack.c.b16 %v5330, %v5329
  %v5890 = vpack.c.b16 %v5332, %v5331
  %v5891 = vpack.c.b16 %v5334, %v5333
  %v5892 = vpack.c.b16 %v5336, %v5335
  %v5893 = vpack.c.b16 %v5338, %v5337
  %v5894 = vpack.c.b16 %v5340, %v5339
  %v5895 = vpack.c.b16 %v5342, %v5341
  %v5896 = vpack.c.b16 %v5344, %v5343
  %v5897 = vpack.c.b16 %v5346, %v5345
  %v5898 = vpack.c.b16 %v5348, %v5347
  %v5899 = vpack.c.b16 %v5350, %v5349
  %v5900 = vpack.c.b16 %v5352, %v5351
  %v5901 = vpack.c.b16 %v5354, %v5353
  %v5902 = vpack.c.b16 %v5356, %v5355
  %v5903 = vpack.c.b16 %v5358, %v5357
  %v5904 = vpack.c.b16 %v5360, %v5359
  %v5905 = vpack.c.b16 %v5362, %v5361
  %v5906 = vpack.c.b16 %v5364, %v5363
  %v5907 = vpack.c.b16 %v5366, %v5365
  %v5908 = vpack.c.b16 %v5368, %v5367
  %v5909 = vpack.c.b16 %v5370, %v5369
  %v5910 = vpack.c.b16 %v5372, %v5371
  %v5911 = vpack.c.b16 %v5374, %v5373
  %v5912 = vpack.c.b16 %v5376, %v5375
  %v5913 = vpack.c.b16 %v5378, %v5377
  %v5914 = vpack.c.b16 %v5380, %v5379
  %v5915 = vpack.c.b16 %v5382, %v5381
  %v5916 = vpack.c.b16 %v5384, %v5383
  %v5917 = vpack.c.b16 %v5386, %v5385
  %v5918 = vpack.c.b16 %v5388, %v5387
  %v5919 = vpack.c.b16 %v5390, %v5389
  %v5920 = vpack.c.b16 %v5392, %v5391
  %v5921 = vpack.c.b16 %v5394, %v5393
  %v5922 = vpack.c.b16 %v5396, %v5395
  %v5923 = vpack.c.b16 %v5398, %v5397
  %v5924 = vpack.c.b16 %v5400, %v5399
  %v5925 = vpack.c.b16 %v5402, %v5401
  %v5926 = vpack.c.b16 %v5404, %v5403
  %v5927 = vpack.c.b16 %v5406, %v5405
  %v5928 = vpack.c.b16 %v5408, %v5407
  %v5929 = vpack.c.b16 %v5410, %v5409
  %v5930 = vpack.c.b16 %v5412, %v5411
  %v5931 = vpack.c.b16 %v5414, %v5413
  %v5932 = vpack.c.b16 %v5416, %v5415
  %v5933 = vpack.c.b16 %v5418, %v5417
  %v5934 = vpack.c.b16 %v5420, %v5419
  %v5935 = vpack.c.b16 %v5422, %v5421
  %v5936 = vpack.c.b16 %v5424, %v5423
  %v5937 = vpack.c.b16 %v5426, %v5425
  %v5938 = vpack.c.b16 %v5428, %v5427
  %v5939 = vpack.c.b16 %v5430, %v5429
  %v5940 = vpack.c.b16 %v5432, %v5431
  %v5941 = vpack.c.b16 %v5434, %v5433
  %v5942 = vpack.c.b16 %v5436, %v5435
  %v5943 = vpack.c.b16 %v5438, %v5437
  %v5944 = vpack.c.b16 %v5440, %v5439
  %v5945 = vpack.c.b16 %v5442, %v5441
  %v5946 = vpack.c.b16 %v5444, %v5443
  %v5947 = vpack.c.b16 %v5446, %v5445
  %v5948 = vpack.c.b16 %v5448, %v5447
  %v6450 = vsel %vm1899, %v3386, 0
  %6452 = vmatprep.subr.bf16.mxu0 0
  %6453 = vmatpush1.bf16.msra.mxu0 %v5456
  %6454 = vmatprep.subr.bf16.mxu0 0
  %6455 = vmatpush1.bf16.msra.mxu0 %v5455
  %6456 = vmatprep.subr.bf16.mxu0 0
  %6457 = vmatpush1.bf16.msra.mxu0 %v5454
  %6458 = vmatprep.subr.bf16.mxu0 0
  %6459 = vmatpush1.bf16.msra.mxu0 %v5453
  %6460 = vmatprep.subr.bf16.mxu0 0
  %6461 = vmatpush1.bf16.msra.mxu0 %v5452
  %6462 = vmatprep.subr.bf16.mxu0 0
  %6463 = vmatpush1.bf16.msra.mxu0 %v5451
  %6464 = vmatprep.subr.bf16.mxu0 0
  %6465 = vmatpush1.bf16.msra.mxu0 %v5450
  %6466 = vmatprep.subr.bf16.mxu0 0
  %6467 = vmatpush1.bf16.msra.mxu0 %v5449
  %6468 = vmatprep.subr.bf16.mxu0 0
  %6469 = vmatpush2.bf16.msra.mxu0 %v5464
  %6470 = vmatprep.subr.bf16.mxu0 0
  %6471 = vmatpush2.bf16.msra.mxu0 %v5463
  %6472 = vmatprep.subr.bf16.mxu0 0
  %6473 = vmatpush2.bf16.msra.mxu0 %v5462
  %6474 = vmatprep.subr.bf16.mxu0 0
  %6475 = vmatpush2.bf16.msra.mxu0 %v5461
  %6476 = vmatprep.subr.bf16.mxu0 0
  %6477 = vmatpush2.bf16.msra.mxu0 %v5460
  %6478 = vmatprep.subr.bf16.mxu0 0
  %6479 = vmatpush2.bf16.msra.mxu0 %v5459
  %6480 = vmatprep.subr.bf16.mxu0 0
  %6481 = vmatpush2.bf16.msra.mxu0 %v5458
  %6482 = vmatprep.subr.bf16.mxu0 0
  %6483 = vmatpush2.bf16.msra.mxu0 %v5457
  %6484 = vmatprep.mubr.bf16.mxu0 %v3325
  %6485 = vmatmul.mubr.bf16.gmra.mxu0 %v3324
  %v6486 = vpop.f32.mrf.mxu0
  %v6487 = vadd.f32 %v3227, %v6486
  %v6488 = vpop.f32.mrf.mxu0
  %v6489 = vpop.f32.mrf.mxu0
  %v6490 = vpop.f32.mrf.mxu0
  %6491 = vdwg.mxu0
  %6492 = vmatprep.subr.bf16.mxu0 0
  %6493 = vmatpush1.bf16.msra.mxu0 %v5472
  %6494 = vmatprep.subr.bf16.mxu0 0
  %6495 = vmatpush1.bf16.msra.mxu0 %v5471
  %6496 = vmatprep.subr.bf16.mxu0 0
  %6497 = vmatpush1.bf16.msra.mxu0 %v5470
  %6498 = vmatprep.subr.bf16.mxu0 0
  %6499 = vmatpush1.bf16.msra.mxu0 %v5469
  %6500 = vmatprep.subr.bf16.mxu0 0
  %6501 = vmatpush1.bf16.msra.mxu0 %v5468
  %6502 = vmatprep.subr.bf16.mxu0 0
  %6503 = vmatpush1.bf16.msra.mxu0 %v5467
  %6504 = vmatprep.subr.bf16.mxu0 0
  %6505 = vmatpush1.bf16.msra.mxu0 %v5466
  %6506 = vmatprep.subr.bf16.mxu0 0
  %6507 = vmatpush1.bf16.msra.mxu0 %v5465
  %6508 = vmatprep.subr.bf16.mxu0 0
  %6509 = vmatpush2.bf16.msra.mxu0 %v5480
  %6510 = vmatprep.subr.bf16.mxu0 0
  %6511 = vmatpush2.bf16.msra.mxu0 %v5479
  %6512 = vmatprep.subr.bf16.mxu0 0
  %6513 = vmatpush2.bf16.msra.mxu0 %v5478
  %6514 = vmatprep.subr.bf16.mxu0 0
  %6515 = vmatpush2.bf16.msra.mxu0 %v5477
  %6516 = vmatprep.subr.bf16.mxu0 0
  %6517 = vmatpush2.bf16.msra.mxu0 %v5476
  %6518 = vmatprep.subr.bf16.mxu0 0
  %6519 = vmatpush2.bf16.msra.mxu0 %v5475
  %6520 = vmatprep.subr.bf16.mxu0 0
  %6521 = vmatpush2.bf16.msra.mxu0 %v5474
  %6522 = vmatprep.subr.bf16.mxu0 0
  %6523 = vmatpush2.bf16.msra.mxu0 %v5473
  %6524 = vmatprep.mubr.bf16.mxu0 %v3327
  %6525 = vmatmul.mubr.bf16.gmra.mxu0 %v3326
  %v6526 = vpop.f32.mrf.mxu0
  %v6527 = vadd.f32 %v6487, %v6526
  %v6528 = vpop.f32.mrf.mxu0
  %v6529 = vpop.f32.mrf.mxu0
  %v6530 = vpop.f32.mrf.mxu0
  %6531 = vdwg.mxu0
  %6532 = vmatprep.subr.bf16.mxu0 0
  %6533 = vmatpush1.bf16.msra.mxu0 %v5488
  %6534 = vmatprep.subr.bf16.mxu0 0
  %6535 = vmatpush1.bf16.msra.mxu0 %v5487
  %6536 = vmatprep.subr.bf16.mxu0 0
  %6537 = vmatpush1.bf16.msra.mxu0 %v5486
  %6538 = vmatprep.subr.bf16.mxu0 0
  %6539 = vmatpush1.bf16.msra.mxu0 %v5485
  %6540 = vmatprep.subr.bf16.mxu0 0
  %6541 = vmatpush1.bf16.msra.mxu0 %v5484
  %6542 = vmatprep.subr.bf16.mxu0 0
  %6543 = vmatpush1.bf16.msra.mxu0 %v5483
  %6544 = vmatprep.subr.bf16.mxu0 0
  %6545 = vmatpush1.bf16.msra.mxu0 %v5482
  %6546 = vmatprep.subr.bf16.mxu0 0
  %6547 = vmatpush1.bf16.msra.mxu0 %v5481
  %6548 = vmatprep.subr.bf16.mxu0 0
  %6549 = vmatpush2.bf16.msra.mxu0 %v5496
  %6550 = vmatprep.subr.bf16.mxu0 0
  %6551 = vmatpush2.bf16.msra.mxu0 %v5495
  %6552 = vmatprep.subr.bf16.mxu0 0
  %6553 = vmatpush2.bf16.msra.mxu0 %v5494
  %6554 = vmatprep.subr.bf16.mxu0 0
  %6555 = vmatpush2.bf16.msra.mxu0 %v5493
  %6556 = vmatprep.subr.bf16.mxu0 0
  %6557 = vmatpush2.bf16.msra.mxu0 %v5492
  %6558 = vmatprep.subr.bf16.mxu0 0
  %6559 = vmatpush2.bf16.msra.mxu0 %v5491
  %6560 = vmatprep.subr.bf16.mxu0 0
  %6561 = vmatpush2.bf16.msra.mxu0 %v5490
  %6562 = vmatprep.subr.bf16.mxu0 0
  %6563 = vmatpush2.bf16.msra.mxu0 %v5489
  %6564 = vmatprep.mubr.bf16.mxu0 %v3329
  %6565 = vmatmul.mubr.bf16.gmra.mxu0 %v3328
  %v6566 = vpop.f32.mrf.mxu0
  %v6567 = vadd.f32 %v6527, %v6566
  %v6568 = vpop.f32.mrf.mxu0
  %v6569 = vpop.f32.mrf.mxu0
  %v6570 = vpop.f32.mrf.mxu0
  %6571 = vdwg.mxu0
  %6572 = vmatprep.subr.bf16.mxu0 0
  %6573 = vmatpush1.bf16.msra.mxu0 %v5504
  %6574 = vmatprep.subr.bf16.mxu0 0
  %6575 = vmatpush1.bf16.msra.mxu0 %v5503
  %6576 = vmatprep.subr.bf16.mxu0 0
  %6577 = vmatpush1.bf16.msra.mxu0 %v5502
  %6578 = vmatprep.subr.bf16.mxu0 0
  %6579 = vmatpush1.bf16.msra.mxu0 %v5501
  %6580 = vmatprep.subr.bf16.mxu0 0
  %6581 = vmatpush1.bf16.msra.mxu0 %v5500
  %6582 = vmatprep.subr.bf16.mxu0 0
  %6583 = vmatpush1.bf16.msra.mxu0 %v5499
  %6584 = vmatprep.subr.bf16.mxu0 0
  %6585 = vmatpush1.bf16.msra.mxu0 %v5498
  %6586 = vmatprep.subr.bf16.mxu0 0
  %6587 = vmatpush1.bf16.msra.mxu0 %v5497
  %6588 = vmatprep.subr.bf16.mxu0 0
  %6589 = vmatpush2.bf16.msra.mxu0 %v5512
  %6590 = vmatprep.subr.bf16.mxu0 0
  %6591 = vmatpush2.bf16.msra.mxu0 %v5511
  %6592 = vmatprep.subr.bf16.mxu0 0
  %6593 = vmatpush2.bf16.msra.mxu0 %v5510
  %6594 = vmatprep.subr.bf16.mxu0 0
  %6595 = vmatpush2.bf16.msra.mxu0 %v5509
  %6596 = vmatprep.subr.bf16.mxu0 0
  %6597 = vmatpush2.bf16.msra.mxu0 %v5508
  %6598 = vmatprep.subr.bf16.mxu0 0
  %6599 = vmatpush2.bf16.msra.mxu0 %v5507
  %6600 = vmatprep.subr.bf16.mxu0 0
  %6601 = vmatpush2.bf16.msra.mxu0 %v5506
  %6602 = vmatprep.subr.bf16.mxu0 0
  %6603 = vmatpush2.bf16.msra.mxu0 %v5505
  %6604 = vmatprep.mubr.bf16.mxu0 %v3331
  %6605 = vmatmul.mubr.bf16.gmra.mxu0 %v3330
  %v6606 = vpop.f32.mrf.mxu0
  %v6607 = vadd.f32 %v6567, %v6606
  %v6608 = vpop.f32.mrf.mxu0
  %v6609 = vpop.f32.mrf.mxu0
  %v6610 = vpop.f32.mrf.mxu0
  %6611 = vdwg.mxu0
  %6612 = vmatprep.subr.bf16.mxu0 0
  %6613 = vmatpush1.bf16.msra.mxu0 %v5520
  %6614 = vmatprep.subr.bf16.mxu0 0
  %6615 = vmatpush1.bf16.msra.mxu0 %v5519
  %6616 = vmatprep.subr.bf16.mxu0 0
  %6617 = vmatpush1.bf16.msra.mxu0 %v5518
  %6618 = vmatprep.subr.bf16.mxu0 0
  %6619 = vmatpush1.bf16.msra.mxu0 %v5517
  %6620 = vmatprep.subr.bf16.mxu0 0
  %6621 = vmatpush1.bf16.msra.mxu0 %v5516
  %6622 = vmatprep.subr.bf16.mxu0 0
  %6623 = vmatpush1.bf16.msra.mxu0 %v5515
  %6624 = vmatprep.subr.bf16.mxu0 0
  %6625 = vmatpush1.bf16.msra.mxu0 %v5514
  %6626 = vmatprep.subr.bf16.mxu0 0
  %6627 = vmatpush1.bf16.msra.mxu0 %v5513
  %6628 = vmatprep.subr.bf16.mxu0 0
  %6629 = vmatpush2.bf16.msra.mxu0 %v5528
  %6630 = vmatprep.subr.bf16.mxu0 0
  %6631 = vmatpush2.bf16.msra.mxu0 %v5527
  %6632 = vmatprep.subr.bf16.mxu0 0
  %6633 = vmatpush2.bf16.msra.mxu0 %v5526
  %6634 = vmatprep.subr.bf16.mxu0 0
  %6635 = vmatpush2.bf16.msra.mxu0 %v5525
  %6636 = vmatprep.subr.bf16.mxu0 0
  %6637 = vmatpush2.bf16.msra.mxu0 %v5524
  %6638 = vmatprep.subr.bf16.mxu0 0
  %6639 = vmatpush2.bf16.msra.mxu0 %v5523
  %6640 = vmatprep.subr.bf16.mxu0 0
  %6641 = vmatpush2.bf16.msra.mxu0 %v5522
  %6642 = vmatprep.subr.bf16.mxu0 0
  %6643 = vmatpush2.bf16.msra.mxu0 %v5521
  %6644 = vmatprep.mubr.bf16.mxu0 %v3333
  %6645 = vmatmul.mubr.bf16.gmra.mxu0 %v3332
  %v6646 = vpop.f32.mrf.mxu0
  %v6647 = vadd.f32 %v6607, %v6646
  %v6648 = vpop.f32.mrf.mxu0
  %v6649 = vpop.f32.mrf.mxu0
  %v6650 = vpop.f32.mrf.mxu0
  %6651 = vdwg.mxu0
  %6652 = vmatprep.subr.bf16.mxu0 0
  %6653 = vmatpush1.bf16.msra.mxu0 %v5536
  %6654 = vmatprep.subr.bf16.mxu0 0
  %6655 = vmatpush1.bf16.msra.mxu0 %v5535
  %6656 = vmatprep.subr.bf16.mxu0 0
  %6657 = vmatpush1.bf16.msra.mxu0 %v5534
  %6658 = vmatprep.subr.bf16.mxu0 0
  %6659 = vmatpush1.bf16.msra.mxu0 %v5533
  %6660 = vmatprep.subr.bf16.mxu0 0
  %6661 = vmatpush1.bf16.msra.mxu0 %v5532
  %6662 = vmatprep.subr.bf16.mxu0 0
  %6663 = vmatpush1.bf16.msra.mxu0 %v5531
  %6664 = vmatprep.subr.bf16.mxu0 0
  %6665 = vmatpush1.bf16.msra.mxu0 %v5530
  %6666 = vmatprep.subr.bf16.mxu0 0
  %6667 = vmatpush1.bf16.msra.mxu0 %v5529
  %6668 = vmatprep.subr.bf16.mxu0 0
  %6669 = vmatpush2.bf16.msra.mxu0 %v5544
  %6670 = vmatprep.subr.bf16.mxu0 0
  %6671 = vmatpush2.bf16.msra.mxu0 %v5543
  %6672 = vmatprep.subr.bf16.mxu0 0
  %6673 = vmatpush2.bf16.msra.mxu0 %v5542
  %6674 = vmatprep.subr.bf16.mxu0 0
  %6675 = vmatpush2.bf16.msra.mxu0 %v5541
  %6676 = vmatprep.subr.bf16.mxu0 0
  %6677 = vmatpush2.bf16.msra.mxu0 %v5540
  %6678 = vmatprep.subr.bf16.mxu0 0
  %6679 = vmatpush2.bf16.msra.mxu0 %v5539
  %6680 = vmatprep.subr.bf16.mxu0 0
  %6681 = vmatpush2.bf16.msra.mxu0 %v5538
  %6682 = vmatprep.subr.bf16.mxu0 0
  %6683 = vmatpush2.bf16.msra.mxu0 %v5537
  %6684 = vmatprep.mubr.bf16.mxu0 %v3335
  %6685 = vmatmul.mubr.bf16.gmra.mxu0 %v3334
  %v6686 = vpop.f32.mrf.mxu0
  %v6687 = vadd.f32 %v6647, %v6686
  %v6688 = vpop.f32.mrf.mxu0
  %v6689 = vpop.f32.mrf.mxu0
  %v6690 = vpop.f32.mrf.mxu0
  %6691 = vdwg.mxu0
  %6692 = vmatprep.subr.bf16.mxu0 0
  %6693 = vmatpush1.bf16.msra.mxu0 %v5552
  %6694 = vmatprep.subr.bf16.mxu0 0
  %6695 = vmatpush1.bf16.msra.mxu0 %v5551
  %6696 = vmatprep.subr.bf16.mxu0 0
  %6697 = vmatpush1.bf16.msra.mxu0 %v5550
  %6698 = vmatprep.subr.bf16.mxu0 0
  %6699 = vmatpush1.bf16.msra.mxu0 %v5549
  %6700 = vmatprep.subr.bf16.mxu0 0
  %6701 = vmatpush1.bf16.msra.mxu0 %v5548
  %6702 = vmatprep.subr.bf16.mxu0 0
  %6703 = vmatpush1.bf16.msra.mxu0 %v5547
  %6704 = vmatprep.subr.bf16.mxu0 0
  %6705 = vmatpush1.bf16.msra.mxu0 %v5546
  %6706 = vmatprep.subr.bf16.mxu0 0
  %6707 = vmatpush1.bf16.msra.mxu0 %v5545
  %6708 = vmatprep.subr.bf16.mxu0 0
  %6709 = vmatpush2.bf16.msra.mxu0 %v5560
  %6710 = vmatprep.subr.bf16.mxu0 0
  %6711 = vmatpush2.bf16.msra.mxu0 %v5559
  %6712 = vmatprep.subr.bf16.mxu0 0
  %6713 = vmatpush2.bf16.msra.mxu0 %v5558
  %6714 = vmatprep.subr.bf16.mxu0 0
  %6715 = vmatpush2.bf16.msra.mxu0 %v5557
  %6716 = vmatprep.subr.bf16.mxu0 0
  %6717 = vmatpush2.bf16.msra.mxu0 %v5556
  %6718 = vmatprep.subr.bf16.mxu0 0
  %6719 = vmatpush2.bf16.msra.mxu0 %v5555
  %6720 = vmatprep.subr.bf16.mxu0 0
  %6721 = vmatpush2.bf16.msra.mxu0 %v5554
  %6722 = vmatprep.subr.bf16.mxu0 0
  %6723 = vmatpush2.bf16.msra.mxu0 %v5553
  %6724 = vmatprep.mubr.bf16.mxu0 %v3337
  %6725 = vmatmul.mubr.bf16.gmra.mxu0 %v3336
  %v6726 = vpop.f32.mrf.mxu0
  %v6727 = vadd.f32 %v6687, %v6726
  %v6728 = vpop.f32.mrf.mxu0
  %v6729 = vpop.f32.mrf.mxu0
  %v6730 = vpop.f32.mrf.mxu0
  %6731 = vdwg.mxu0
  %6732 = vmatprep.subr.bf16.mxu0 0
  %6733 = vmatpush1.bf16.msra.mxu0 %v5568
  %6734 = vmatprep.subr.bf16.mxu0 0
  %6735 = vmatpush1.bf16.msra.mxu0 %v5567
  %6736 = vmatprep.subr.bf16.mxu0 0
  %6737 = vmatpush1.bf16.msra.mxu0 %v5566
  %6738 = vmatprep.subr.bf16.mxu0 0
  %6739 = vmatpush1.bf16.msra.mxu0 %v5565
  %6740 = vmatprep.subr.bf16.mxu0 0
  %6741 = vmatpush1.bf16.msra.mxu0 %v5564
  %6742 = vmatprep.subr.bf16.mxu0 0
  %6743 = vmatpush1.bf16.msra.mxu0 %v5563
  %6744 = vmatprep.subr.bf16.mxu0 0
  %6745 = vmatpush1.bf16.msra.mxu0 %v5562
  %6746 = vmatprep.subr.bf16.mxu0 0
  %6747 = vmatpush1.bf16.msra.mxu0 %v5561
  %6748 = vmatprep.subr.bf16.mxu0 0
  %6749 = vmatpush2.bf16.msra.mxu0 %v5576
  %6750 = vmatprep.subr.bf16.mxu0 0
  %6751 = vmatpush2.bf16.msra.mxu0 %v5575
  %6752 = vmatprep.subr.bf16.mxu0 0
  %6753 = vmatpush2.bf16.msra.mxu0 %v5574
  %6754 = vmatprep.subr.bf16.mxu0 0
  %6755 = vmatpush2.bf16.msra.mxu0 %v5573
  %6756 = vmatprep.subr.bf16.mxu0 0
  %6757 = vmatpush2.bf16.msra.mxu0 %v5572
  %6758 = vmatprep.subr.bf16.mxu0 0
  %6759 = vmatpush2.bf16.msra.mxu0 %v5571
  %6760 = vmatprep.subr.bf16.mxu0 0
  %6761 = vmatpush2.bf16.msra.mxu0 %v5570
  %6762 = vmatprep.subr.bf16.mxu0 0
  %6763 = vmatpush2.bf16.msra.mxu0 %v5569
  %6764 = vmatprep.mubr.bf16.mxu0 %v3339
  %6765 = vmatmul.mubr.bf16.gmra.mxu0 %v3338
  %v6766 = vpop.f32.mrf.mxu0
  %v6767 = vadd.f32 %v6727, %v6766
  %v6768 = vpop.f32.mrf.mxu0
  %v6769 = vpop.f32.mrf.mxu0
  %v6770 = vpop.f32.mrf.mxu0
  %6771 = vdwg.mxu0
  %6772 = vmatprep.subr.bf16.mxu0 0
  %6773 = vmatpush1.bf16.msra.mxu0 %v5584
  %6774 = vmatprep.subr.bf16.mxu0 0
  %6775 = vmatpush1.bf16.msra.mxu0 %v5583
  %6776 = vmatprep.subr.bf16.mxu0 0
  %6777 = vmatpush1.bf16.msra.mxu0 %v5582
  %6778 = vmatprep.subr.bf16.mxu0 0
  %6779 = vmatpush1.bf16.msra.mxu0 %v5581
  %6780 = vmatprep.subr.bf16.mxu0 0
  %6781 = vmatpush1.bf16.msra.mxu0 %v5580
  %6782 = vmatprep.subr.bf16.mxu0 0
  %6783 = vmatpush1.bf16.msra.mxu0 %v5579
  %6784 = vmatprep.subr.bf16.mxu0 0
  %6785 = vmatpush1.bf16.msra.mxu0 %v5578
  %6786 = vmatprep.subr.bf16.mxu0 0
  %6787 = vmatpush1.bf16.msra.mxu0 %v5577
  %6788 = vmatprep.subr.bf16.mxu0 0
  %6789 = vmatpush2.bf16.msra.mxu0 %v5592
  %6790 = vmatprep.subr.bf16.mxu0 0
  %6791 = vmatpush2.bf16.msra.mxu0 %v5591
  %6792 = vmatprep.subr.bf16.mxu0 0
  %6793 = vmatpush2.bf16.msra.mxu0 %v5590
  %6794 = vmatprep.subr.bf16.mxu0 0
  %6795 = vmatpush2.bf16.msra.mxu0 %v5589
  %6796 = vmatprep.subr.bf16.mxu0 0
  %6797 = vmatpush2.bf16.msra.mxu0 %v5588
  %6798 = vmatprep.subr.bf16.mxu0 0
  %6799 = vmatpush2.bf16.msra.mxu0 %v5587
  %6800 = vmatprep.subr.bf16.mxu0 0
  %6801 = vmatpush2.bf16.msra.mxu0 %v5586
  %6802 = vmatprep.subr.bf16.mxu0 0
  %6803 = vmatpush2.bf16.msra.mxu0 %v5585
  %6804 = vmatprep.mubr.bf16.mxu0 %v3341
  %6805 = vmatmul.mubr.bf16.gmra.mxu0 %v3340
  %v6806 = vpop.f32.mrf.mxu0
  %v6807 = vadd.f32 %v6767, %v6806
  %v6808 = vpop.f32.mrf.mxu0
  %v6809 = vpop.f32.mrf.mxu0
  %v6810 = vpop.f32.mrf.mxu0
  %6811 = vdwg.mxu0
  %6812 = vmatprep.subr.bf16.mxu0 0
  %6813 = vmatpush1.bf16.msra.mxu0 %v5600
  %6814 = vmatprep.subr.bf16.mxu0 0
  %6815 = vmatpush1.bf16.msra.mxu0 %v5599
  %6816 = vmatprep.subr.bf16.mxu0 0
  %6817 = vmatpush1.bf16.msra.mxu0 %v5598
  %6818 = vmatprep.subr.bf16.mxu0 0
  %6819 = vmatpush1.bf16.msra.mxu0 %v5597
  %6820 = vmatprep.subr.bf16.mxu0 0
  %6821 = vmatpush1.bf16.msra.mxu0 %v5596
  %6822 = vmatprep.subr.bf16.mxu0 0
  %6823 = vmatpush1.bf16.msra.mxu0 %v5595
  %6824 = vmatprep.subr.bf16.mxu0 0
  %6825 = vmatpush1.bf16.msra.mxu0 %v5594
  %6826 = vmatprep.subr.bf16.mxu0 0
  %6827 = vmatpush1.bf16.msra.mxu0 %v5593
  %6828 = vmatprep.subr.bf16.mxu0 0
  %6829 = vmatpush2.bf16.msra.mxu0 %v5608
  %6830 = vmatprep.subr.bf16.mxu0 0
  %6831 = vmatpush2.bf16.msra.mxu0 %v5607
  %6832 = vmatprep.subr.bf16.mxu0 0
  %6833 = vmatpush2.bf16.msra.mxu0 %v5606
  %6834 = vmatprep.subr.bf16.mxu0 0
  %6835 = vmatpush2.bf16.msra.mxu0 %v5605
  %6836 = vmatprep.subr.bf16.mxu0 0
  %6837 = vmatpush2.bf16.msra.mxu0 %v5604
  %6838 = vmatprep.subr.bf16.mxu0 0
  %6839 = vmatpush2.bf16.msra.mxu0 %v5603
  %6840 = vmatprep.subr.bf16.mxu0 0
  %6841 = vmatpush2.bf16.msra.mxu0 %v5602
  %6842 = vmatprep.subr.bf16.mxu0 0
  %6843 = vmatpush2.bf16.msra.mxu0 %v5601
  %6844 = vmatprep.mubr.bf16.mxu0 %v3343
  %6845 = vmatmul.mubr.bf16.gmra.mxu0 %v3342
  %v6846 = vpop.f32.mrf.mxu0
  %v6847 = vadd.f32 %v6807, %v6846
  %v6848 = vpop.f32.mrf.mxu0
  %v6849 = vpop.f32.mrf.mxu0
  %v6850 = vpop.f32.mrf.mxu0
  %6851 = vdwg.mxu0
  %6852 = vmatprep.subr.bf16.mxu0 0
  %6853 = vmatpush1.bf16.msra.mxu0 %v5616
  %6854 = vmatprep.subr.bf16.mxu0 0
  %6855 = vmatpush1.bf16.msra.mxu0 %v5615
  %6856 = vmatprep.subr.bf16.mxu0 0
  %6857 = vmatpush1.bf16.msra.mxu0 %v5614
  %6858 = vmatprep.subr.bf16.mxu0 0
  %6859 = vmatpush1.bf16.msra.mxu0 %v5613
  %6860 = vmatprep.subr.bf16.mxu0 0
  %6861 = vmatpush1.bf16.msra.mxu0 %v5612
  %6862 = vmatprep.subr.bf16.mxu0 0
  %6863 = vmatpush1.bf16.msra.mxu0 %v5611
  %6864 = vmatprep.subr.bf16.mxu0 0
  %6865 = vmatpush1.bf16.msra.mxu0 %v5610
  %6866 = vmatprep.subr.bf16.mxu0 0
  %6867 = vmatpush1.bf16.msra.mxu0 %v5609
  %6868 = vmatprep.subr.bf16.mxu0 0
  %6869 = vmatpush2.bf16.msra.mxu0 %v5624
  %6870 = vmatprep.subr.bf16.mxu0 0
  %6871 = vmatpush2.bf16.msra.mxu0 %v5623
  %6872 = vmatprep.subr.bf16.mxu0 0
  %6873 = vmatpush2.bf16.msra.mxu0 %v5622
  %6874 = vmatprep.subr.bf16.mxu0 0
  %6875 = vmatpush2.bf16.msra.mxu0 %v5621
  %6876 = vmatprep.subr.bf16.mxu0 0
  %6877 = vmatpush2.bf16.msra.mxu0 %v5620
  %6878 = vmatprep.subr.bf16.mxu0 0
  %6879 = vmatpush2.bf16.msra.mxu0 %v5619
  %6880 = vmatprep.subr.bf16.mxu0 0
  %6881 = vmatpush2.bf16.msra.mxu0 %v5618
  %6882 = vmatprep.subr.bf16.mxu0 0
  %6883 = vmatpush2.bf16.msra.mxu0 %v5617
  %6884 = vmatprep.mubr.bf16.mxu0 %v3345
  %6885 = vmatmul.mubr.bf16.gmra.mxu0 %v3344
  %v6886 = vpop.f32.mrf.mxu0
  %v6887 = vadd.f32 %v6847, %v6886
  %v6888 = vpop.f32.mrf.mxu0
  %v6889 = vpop.f32.mrf.mxu0
  %v6890 = vpop.f32.mrf.mxu0
  %6891 = vdwg.mxu0
  %6892 = vmatprep.subr.bf16.mxu0 0
  %6893 = vmatpush1.bf16.msra.mxu0 %v5632
  %6894 = vmatprep.subr.bf16.mxu0 0
  %6895 = vmatpush1.bf16.msra.mxu0 %v5631
  %6896 = vmatprep.subr.bf16.mxu0 0
  %6897 = vmatpush1.bf16.msra.mxu0 %v5630
  %6898 = vmatprep.subr.bf16.mxu0 0
  %6899 = vmatpush1.bf16.msra.mxu0 %v5629
  %6900 = vmatprep.subr.bf16.mxu0 0
  %6901 = vmatpush1.bf16.msra.mxu0 %v5628
  %6902 = vmatprep.subr.bf16.mxu0 0
  %6903 = vmatpush1.bf16.msra.mxu0 %v5627
  %6904 = vmatprep.subr.bf16.mxu0 0
  %6905 = vmatpush1.bf16.msra.mxu0 %v5626
  %6906 = vmatprep.subr.bf16.mxu0 0
  %6907 = vmatpush1.bf16.msra.mxu0 %v5625
  %6908 = vmatprep.subr.bf16.mxu0 0
  %6909 = vmatpush2.bf16.msra.mxu0 %v5640
  %6910 = vmatprep.subr.bf16.mxu0 0
  %6911 = vmatpush2.bf16.msra.mxu0 %v5639
  %6912 = vmatprep.subr.bf16.mxu0 0
  %6913 = vmatpush2.bf16.msra.mxu0 %v5638
  %6914 = vmatprep.subr.bf16.mxu0 0
  %6915 = vmatpush2.bf16.msra.mxu0 %v5637
  %6916 = vmatprep.subr.bf16.mxu0 0
  %6917 = vmatpush2.bf16.msra.mxu0 %v5636
  %6918 = vmatprep.subr.bf16.mxu0 0
  %6919 = vmatpush2.bf16.msra.mxu0 %v5635
  %6920 = vmatprep.subr.bf16.mxu0 0
  %6921 = vmatpush2.bf16.msra.mxu0 %v5634
  %6922 = vmatprep.subr.bf16.mxu0 0
  %6923 = vmatpush2.bf16.msra.mxu0 %v5633
  %6924 = vmatprep.mubr.bf16.mxu0 %v3347
  %6925 = vmatmul.mubr.bf16.gmra.mxu0 %v3346
  %v6926 = vpop.f32.mrf.mxu0
  %v6927 = vadd.f32 %v6887, %v6926
  %v6928 = vpop.f32.mrf.mxu0
  %v6929 = vpop.f32.mrf.mxu0
  %v6930 = vpop.f32.mrf.mxu0
  %6931 = vdwg.mxu0
  %6932 = vmatprep.subr.bf16.mxu0 0
  %6933 = vmatpush1.bf16.msra.mxu0 %v5648
  %6934 = vmatprep.subr.bf16.mxu0 0
  %6935 = vmatpush1.bf16.msra.mxu0 %v5647
  %6936 = vmatprep.subr.bf16.mxu0 0
  %6937 = vmatpush1.bf16.msra.mxu0 %v5646
  %6938 = vmatprep.subr.bf16.mxu0 0
  %6939 = vmatpush1.bf16.msra.mxu0 %v5645
  %6940 = vmatprep.subr.bf16.mxu0 0
  %6941 = vmatpush1.bf16.msra.mxu0 %v5644
  %6942 = vmatprep.subr.bf16.mxu0 0
  %6943 = vmatpush1.bf16.msra.mxu0 %v5643
  %6944 = vmatprep.subr.bf16.mxu0 0
  %6945 = vmatpush1.bf16.msra.mxu0 %v5642
  %6946 = vmatprep.subr.bf16.mxu0 0
  %6947 = vmatpush1.bf16.msra.mxu0 %v5641
  %6948 = vmatprep.subr.bf16.mxu0 0
  %6949 = vmatpush2.bf16.msra.mxu0 %v5656
  %6950 = vmatprep.subr.bf16.mxu0 0
  %6951 = vmatpush2.bf16.msra.mxu0 %v5655
  %6952 = vmatprep.subr.bf16.mxu0 0
  %6953 = vmatpush2.bf16.msra.mxu0 %v5654
  %6954 = vmatprep.subr.bf16.mxu0 0
  %6955 = vmatpush2.bf16.msra.mxu0 %v5653
  %6956 = vmatprep.subr.bf16.mxu0 0
  %6957 = vmatpush2.bf16.msra.mxu0 %v5652
  %6958 = vmatprep.subr.bf16.mxu0 0
  %6959 = vmatpush2.bf16.msra.mxu0 %v5651
  %6960 = vmatprep.subr.bf16.mxu0 0
  %6961 = vmatpush2.bf16.msra.mxu0 %v5650
  %6962 = vmatprep.subr.bf16.mxu0 0
  %6963 = vmatpush2.bf16.msra.mxu0 %v5649
  %6964 = vmatprep.mubr.bf16.mxu0 %v3349
  %6965 = vmatmul.mubr.bf16.gmra.mxu0 %v3348
  %v6966 = vpop.f32.mrf.mxu0
  %v6967 = vadd.f32 %v6927, %v6966
  %v6968 = vpop.f32.mrf.mxu0
  %v6969 = vpop.f32.mrf.mxu0
  %v6970 = vpop.f32.mrf.mxu0
  %6971 = vdwg.mxu0
  %6972 = vmatprep.subr.bf16.mxu0 0
  %6973 = vmatpush1.bf16.msra.mxu0 %v5664
  %6974 = vmatprep.subr.bf16.mxu0 0
  %6975 = vmatpush1.bf16.msra.mxu0 %v5663
  %6976 = vmatprep.subr.bf16.mxu0 0
  %6977 = vmatpush1.bf16.msra.mxu0 %v5662
  %6978 = vmatprep.subr.bf16.mxu0 0
  %6979 = vmatpush1.bf16.msra.mxu0 %v5661
  %6980 = vmatprep.subr.bf16.mxu0 0
  %6981 = vmatpush1.bf16.msra.mxu0 %v5660
  %6982 = vmatprep.subr.bf16.mxu0 0
  %6983 = vmatpush1.bf16.msra.mxu0 %v5659
  %6984 = vmatprep.subr.bf16.mxu0 0
  %6985 = vmatpush1.bf16.msra.mxu0 %v5658
  %6986 = vmatprep.subr.bf16.mxu0 0
  %6987 = vmatpush1.bf16.msra.mxu0 %v5657
  %6988 = vmatprep.subr.bf16.mxu0 0
  %6989 = vmatpush2.bf16.msra.mxu0 %v5672
  %6990 = vmatprep.subr.bf16.mxu0 0
  %6991 = vmatpush2.bf16.msra.mxu0 %v5671
  %6992 = vmatprep.subr.bf16.mxu0 0
  %6993 = vmatpush2.bf16.msra.mxu0 %v5670
  %6994 = vmatprep.subr.bf16.mxu0 0
  %6995 = vmatpush2.bf16.msra.mxu0 %v5669
  %6996 = vmatprep.subr.bf16.mxu0 0
  %6997 = vmatpush2.bf16.msra.mxu0 %v5668
  %6998 = vmatprep.subr.bf16.mxu0 0
  %6999 = vmatpush2.bf16.msra.mxu0 %v5667
  %7000 = vmatprep.subr.bf16.mxu0 0
  %7001 = vmatpush2.bf16.msra.mxu0 %v5666
  %7002 = vmatprep.subr.bf16.mxu0 0
  %7003 = vmatpush2.bf16.msra.mxu0 %v5665
  %7004 = vmatprep.mubr.bf16.mxu0 %v3351
  %7005 = vmatmul.mubr.bf16.gmra.mxu0 %v3350
  %v7006 = vpop.f32.mrf.mxu0
  %v7007 = vadd.f32 %v6967, %v7006
  %v7008 = vpop.f32.mrf.mxu0
  %v7009 = vpop.f32.mrf.mxu0
  %v7010 = vpop.f32.mrf.mxu0
  %7011 = vdwg.mxu0
  %7012 = vmatprep.subr.bf16.mxu0 0
  %7013 = vmatpush1.bf16.msra.mxu0 %v5680
  %7014 = vmatprep.subr.bf16.mxu0 0
  %7015 = vmatpush1.bf16.msra.mxu0 %v5679
  %7016 = vmatprep.subr.bf16.mxu0 0
  %7017 = vmatpush1.bf16.msra.mxu0 %v5678
  %7018 = vmatprep.subr.bf16.mxu0 0
  %7019 = vmatpush1.bf16.msra.mxu0 %v5677
  %7020 = vmatprep.subr.bf16.mxu0 0
  %7021 = vmatpush1.bf16.msra.mxu0 %v5676
  %7022 = vmatprep.subr.bf16.mxu0 0
  %7023 = vmatpush1.bf16.msra.mxu0 %v5675
  %7024 = vmatprep.subr.bf16.mxu0 0
  %7025 = vmatpush1.bf16.msra.mxu0 %v5674
  %7026 = vmatprep.subr.bf16.mxu0 0
  %7027 = vmatpush1.bf16.msra.mxu0 %v5673
  %7028 = vmatprep.subr.bf16.mxu0 0
  %7029 = vmatpush2.bf16.msra.mxu0 %v5688
  %7030 = vmatprep.subr.bf16.mxu0 0
  %7031 = vmatpush2.bf16.msra.mxu0 %v5687
  %7032 = vmatprep.subr.bf16.mxu0 0
  %7033 = vmatpush2.bf16.msra.mxu0 %v5686
  %7034 = vmatprep.subr.bf16.mxu0 0
  %7035 = vmatpush2.bf16.msra.mxu0 %v5685
  %7036 = vmatprep.subr.bf16.mxu0 0
  %7037 = vmatpush2.bf16.msra.mxu0 %v5684
  %7038 = vmatprep.subr.bf16.mxu0 0
  %7039 = vmatpush2.bf16.msra.mxu0 %v5683
  %7040 = vmatprep.subr.bf16.mxu0 0
  %7041 = vmatpush2.bf16.msra.mxu0 %v5682
  %7042 = vmatprep.subr.bf16.mxu0 0
  %7043 = vmatpush2.bf16.msra.mxu0 %v5681
  %7044 = vmatprep.mubr.bf16.mxu0 %v3353
  %7045 = vmatmul.mubr.bf16.gmra.mxu0 %v3352
  %v7046 = vpop.f32.mrf.mxu0
  %v7047 = vadd.f32 %v7007, %v7046
  %v7048 = vpop.f32.mrf.mxu0
  %v7049 = vpop.f32.mrf.mxu0
  %v7050 = vpop.f32.mrf.mxu0
  %7051 = vdwg.mxu0
  %7052 = vmatprep.subr.bf16.mxu0 0
  %7053 = vmatpush1.bf16.msra.mxu0 %v5696
  %7054 = vmatprep.subr.bf16.mxu0 0
  %7055 = vmatpush1.bf16.msra.mxu0 %v5695
  %7056 = vmatprep.subr.bf16.mxu0 0
  %7057 = vmatpush1.bf16.msra.mxu0 %v5694
  %7058 = vmatprep.subr.bf16.mxu0 0
  %7059 = vmatpush1.bf16.msra.mxu0 %v5693
  %7060 = vmatprep.subr.bf16.mxu0 0
  %7061 = vmatpush1.bf16.msra.mxu0 %v5692
  %7062 = vmatprep.subr.bf16.mxu0 0
  %7063 = vmatpush1.bf16.msra.mxu0 %v5691
  %7064 = vmatprep.subr.bf16.mxu0 0
  %7065 = vmatpush1.bf16.msra.mxu0 %v5690
  %7066 = vmatprep.subr.bf16.mxu0 0
  %7067 = vmatpush1.bf16.msra.mxu0 %v5689
  %7068 = vmatprep.subr.bf16.mxu0 0
  %7069 = vmatpush2.bf16.msra.mxu0 %v5704
  %7070 = vmatprep.subr.bf16.mxu0 0
  %7071 = vmatpush2.bf16.msra.mxu0 %v5703
  %7072 = vmatprep.subr.bf16.mxu0 0
  %7073 = vmatpush2.bf16.msra.mxu0 %v5702
  %7074 = vmatprep.subr.bf16.mxu0 0
  %7075 = vmatpush2.bf16.msra.mxu0 %v5701
  %7076 = vmatprep.subr.bf16.mxu0 0
  %7077 = vmatpush2.bf16.msra.mxu0 %v5700
  %7078 = vmatprep.subr.bf16.mxu0 0
  %7079 = vmatpush2.bf16.msra.mxu0 %v5699
  %7080 = vmatprep.subr.bf16.mxu0 0
  %7081 = vmatpush2.bf16.msra.mxu0 %v5698
  %7082 = vmatprep.subr.bf16.mxu0 0
  %7083 = vmatpush2.bf16.msra.mxu0 %v5697
  %7084 = vmatprep.mubr.bf16.mxu0 %v3355
  %7085 = vmatmul.mubr.bf16.gmra.mxu0 %v3354
  %v7086 = vpop.f32.mrf.mxu0
  %v7087 = vadd.f32 %v7047, %v7086
  %v7088 = vpop.f32.mrf.mxu0
  %v7089 = vpop.f32.mrf.mxu0
  %v7090 = vpop.f32.mrf.mxu0
  %7091 = vdwg.mxu0
  %7092 = vmatprep.subr.bf16.mxu0 0
  %7093 = vmatpush1.bf16.msra.mxu0 %v5712
  %7094 = vmatprep.subr.bf16.mxu0 0
  %7095 = vmatpush1.bf16.msra.mxu0 %v5711
  %7096 = vmatprep.subr.bf16.mxu0 0
  %7097 = vmatpush1.bf16.msra.mxu0 %v5710
  %7098 = vmatprep.subr.bf16.mxu0 0
  %7099 = vmatpush1.bf16.msra.mxu0 %v5709
  %7100 = vmatprep.subr.bf16.mxu0 0
  %7101 = vmatpush1.bf16.msra.mxu0 %v5708
  %7102 = vmatprep.subr.bf16.mxu0 0
  %7103 = vmatpush1.bf16.msra.mxu0 %v5707
  %7104 = vmatprep.subr.bf16.mxu0 0
  %7105 = vmatpush1.bf16.msra.mxu0 %v5706
  %7106 = vmatprep.subr.bf16.mxu0 0
  %7107 = vmatpush1.bf16.msra.mxu0 %v5705
  %7108 = vmatprep.subr.bf16.mxu0 0
  %7109 = vmatpush2.bf16.msra.mxu0 %v5720
  %7110 = vmatprep.subr.bf16.mxu0 0
  %7111 = vmatpush2.bf16.msra.mxu0 %v5719
  %7112 = vmatprep.subr.bf16.mxu0 0
  %7113 = vmatpush2.bf16.msra.mxu0 %v5718
  %7114 = vmatprep.subr.bf16.mxu0 0
  %7115 = vmatpush2.bf16.msra.mxu0 %v5717
  %7116 = vmatprep.subr.bf16.mxu0 0
  %7117 = vmatpush2.bf16.msra.mxu0 %v5716
  %7118 = vmatprep.subr.bf16.mxu0 0
  %7119 = vmatpush2.bf16.msra.mxu0 %v5715
  %7120 = vmatprep.subr.bf16.mxu0 0
  %7121 = vmatpush2.bf16.msra.mxu0 %v5714
  %7122 = vmatprep.subr.bf16.mxu0 0
  %7123 = vmatpush2.bf16.msra.mxu0 %v5713
  %7124 = vmatprep.mubr.bf16.mxu0 %v3357
  %7125 = vmatmul.mubr.bf16.gmra.mxu0 %v3356
  %v7126 = vpop.f32.mrf.mxu0
  %v7127 = vadd.f32 %v7087, %v7126
  %v7128 = vpop.f32.mrf.mxu0
  %v7129 = vpop.f32.mrf.mxu0
  %v7130 = vpop.f32.mrf.mxu0
  %7131 = vdwg.mxu0
  %7132 = vmatprep.subr.bf16.mxu0 0
  %7133 = vmatpush1.bf16.msra.mxu0 %v5728
  %7134 = vmatprep.subr.bf16.mxu0 0
  %7135 = vmatpush1.bf16.msra.mxu0 %v5727
  %7136 = vmatprep.subr.bf16.mxu0 0
  %7137 = vmatpush1.bf16.msra.mxu0 %v5726
  %7138 = vmatprep.subr.bf16.mxu0 0
  %7139 = vmatpush1.bf16.msra.mxu0 %v5725
  %7140 = vmatprep.subr.bf16.mxu0 0
  %7141 = vmatpush1.bf16.msra.mxu0 %v5724
  %7142 = vmatprep.subr.bf16.mxu0 0
  %7143 = vmatpush1.bf16.msra.mxu0 %v5723
  %7144 = vmatprep.subr.bf16.mxu0 0
  %7145 = vmatpush1.bf16.msra.mxu0 %v5722
  %7146 = vmatprep.subr.bf16.mxu0 0
  %7147 = vmatpush1.bf16.msra.mxu0 %v5721
  %7148 = vmatprep.subr.bf16.mxu0 0
  %7149 = vmatpush2.bf16.msra.mxu0 %v5736
  %7150 = vmatprep.subr.bf16.mxu0 0
  %7151 = vmatpush2.bf16.msra.mxu0 %v5735
  %7152 = vmatprep.subr.bf16.mxu0 0
  %7153 = vmatpush2.bf16.msra.mxu0 %v5734
  %7154 = vmatprep.subr.bf16.mxu0 0
  %7155 = vmatpush2.bf16.msra.mxu0 %v5733
  %7156 = vmatprep.subr.bf16.mxu0 0
  %7157 = vmatpush2.bf16.msra.mxu0 %v5732
  %7158 = vmatprep.subr.bf16.mxu0 0
  %7159 = vmatpush2.bf16.msra.mxu0 %v5731
  %7160 = vmatprep.subr.bf16.mxu0 0
  %7161 = vmatpush2.bf16.msra.mxu0 %v5730
  %7162 = vmatprep.subr.bf16.mxu0 0
  %7163 = vmatpush2.bf16.msra.mxu0 %v5729
  %7164 = vmatprep.mubr.bf16.mxu0 %v3359
  %7165 = vmatmul.mubr.bf16.gmra.mxu0 %v3358
  %v7166 = vpop.f32.mrf.mxu0
  %v7167 = vadd.f32 %v7127, %v7166
  %v7168 = vpop.f32.mrf.mxu0
  %v7169 = vpop.f32.mrf.mxu0
  %v7170 = vpop.f32.mrf.mxu0
  %7171 = vdwg.mxu0
  %7172 = vmatprep.subr.bf16.mxu0 0
  %7173 = vmatpush1.bf16.msra.mxu0 %v5744
  %7174 = vmatprep.subr.bf16.mxu0 0
  %7175 = vmatpush1.bf16.msra.mxu0 %v5743
  %7176 = vmatprep.subr.bf16.mxu0 0
  %7177 = vmatpush1.bf16.msra.mxu0 %v5742
  %7178 = vmatprep.subr.bf16.mxu0 0
  %7179 = vmatpush1.bf16.msra.mxu0 %v5741
  %7180 = vmatprep.subr.bf16.mxu0 0
  %7181 = vmatpush1.bf16.msra.mxu0 %v5740
  %7182 = vmatprep.subr.bf16.mxu0 0
  %7183 = vmatpush1.bf16.msra.mxu0 %v5739
  %7184 = vmatprep.subr.bf16.mxu0 0
  %7185 = vmatpush1.bf16.msra.mxu0 %v5738
  %7186 = vmatprep.subr.bf16.mxu0 0
  %7187 = vmatpush1.bf16.msra.mxu0 %v5737
  %7188 = vmatprep.subr.bf16.mxu0 0
  %7189 = vmatpush2.bf16.msra.mxu0 %v5752
  %7190 = vmatprep.subr.bf16.mxu0 0
  %7191 = vmatpush2.bf16.msra.mxu0 %v5751
  %7192 = vmatprep.subr.bf16.mxu0 0
  %7193 = vmatpush2.bf16.msra.mxu0 %v5750
  %7194 = vmatprep.subr.bf16.mxu0 0
  %7195 = vmatpush2.bf16.msra.mxu0 %v5749
  %7196 = vmatprep.subr.bf16.mxu0 0
  %7197 = vmatpush2.bf16.msra.mxu0 %v5748
  %7198 = vmatprep.subr.bf16.mxu0 0
  %7199 = vmatpush2.bf16.msra.mxu0 %v5747
  %7200 = vmatprep.subr.bf16.mxu0 0
  %7201 = vmatpush2.bf16.msra.mxu0 %v5746
  %7202 = vmatprep.subr.bf16.mxu0 0
  %7203 = vmatpush2.bf16.msra.mxu0 %v5745
  %7204 = vmatprep.mubr.bf16.mxu0 %v3361
  %7205 = vmatmul.mubr.bf16.gmra.mxu0 %v3360
  %v7206 = vpop.f32.mrf.mxu0
  %v7207 = vadd.f32 %v7167, %v7206
  %v7208 = vpop.f32.mrf.mxu0
  %v7209 = vpop.f32.mrf.mxu0
  %v7210 = vpop.f32.mrf.mxu0
  %7211 = vdwg.mxu0
  %7212 = vmatprep.subr.bf16.mxu0 0
  %7213 = vmatpush1.bf16.msra.mxu0 %v5760
  %7214 = vmatprep.subr.bf16.mxu0 0
  %7215 = vmatpush1.bf16.msra.mxu0 %v5759
  %7216 = vmatprep.subr.bf16.mxu0 0
  %7217 = vmatpush1.bf16.msra.mxu0 %v5758
  %7218 = vmatprep.subr.bf16.mxu0 0
  %7219 = vmatpush1.bf16.msra.mxu0 %v5757
  %7220 = vmatprep.subr.bf16.mxu0 0
  %7221 = vmatpush1.bf16.msra.mxu0 %v5756
  %7222 = vmatprep.subr.bf16.mxu0 0
  %7223 = vmatpush1.bf16.msra.mxu0 %v5755
  %7224 = vmatprep.subr.bf16.mxu0 0
  %7225 = vmatpush1.bf16.msra.mxu0 %v5754
  %7226 = vmatprep.subr.bf16.mxu0 0
  %7227 = vmatpush1.bf16.msra.mxu0 %v5753
  %7228 = vmatprep.subr.bf16.mxu0 0
  %7229 = vmatpush2.bf16.msra.mxu0 %v5768
  %7230 = vmatprep.subr.bf16.mxu0 0
  %7231 = vmatpush2.bf16.msra.mxu0 %v5767
  %7232 = vmatprep.subr.bf16.mxu0 0
  %7233 = vmatpush2.bf16.msra.mxu0 %v5766
  %7234 = vmatprep.subr.bf16.mxu0 0
  %7235 = vmatpush2.bf16.msra.mxu0 %v5765
  %7236 = vmatprep.subr.bf16.mxu0 0
  %7237 = vmatpush2.bf16.msra.mxu0 %v5764
  %7238 = vmatprep.subr.bf16.mxu0 0
  %7239 = vmatpush2.bf16.msra.mxu0 %v5763
  %7240 = vmatprep.subr.bf16.mxu0 0
  %7241 = vmatpush2.bf16.msra.mxu0 %v5762
  %7242 = vmatprep.subr.bf16.mxu0 0
  %7243 = vmatpush2.bf16.msra.mxu0 %v5761
  %7244 = vmatprep.mubr.bf16.mxu0 %v3363
  %7245 = vmatmul.mubr.bf16.gmra.mxu0 %v3362
  %v7246 = vpop.f32.mrf.mxu0
  %v7247 = vadd.f32 %v7207, %v7246
  %v7248 = vpop.f32.mrf.mxu0
  %v7249 = vpop.f32.mrf.mxu0
  %v7250 = vpop.f32.mrf.mxu0
  %7251 = vdwg.mxu0
  %7252 = vmatprep.subr.bf16.mxu0 0
  %7253 = vmatpush1.bf16.msra.mxu0 %v5776
  %7254 = vmatprep.subr.bf16.mxu0 0
  %7255 = vmatpush1.bf16.msra.mxu0 %v5775
  %7256 = vmatprep.subr.bf16.mxu0 0
  %7257 = vmatpush1.bf16.msra.mxu0 %v5774
  %7258 = vmatprep.subr.bf16.mxu0 0
  %7259 = vmatpush1.bf16.msra.mxu0 %v5773
  %7260 = vmatprep.subr.bf16.mxu0 0
  %7261 = vmatpush1.bf16.msra.mxu0 %v5772
  %7262 = vmatprep.subr.bf16.mxu0 0
  %7263 = vmatpush1.bf16.msra.mxu0 %v5771
  %7264 = vmatprep.subr.bf16.mxu0 0
  %7265 = vmatpush1.bf16.msra.mxu0 %v5770
  %7266 = vmatprep.subr.bf16.mxu0 0
  %7267 = vmatpush1.bf16.msra.mxu0 %v5769
  %7268 = vmatprep.subr.bf16.mxu0 0
  %7269 = vmatpush2.bf16.msra.mxu0 %v5784
  %7270 = vmatprep.subr.bf16.mxu0 0
  %7271 = vmatpush2.bf16.msra.mxu0 %v5783
  %7272 = vmatprep.subr.bf16.mxu0 0
  %7273 = vmatpush2.bf16.msra.mxu0 %v5782
  %7274 = vmatprep.subr.bf16.mxu0 0
  %7275 = vmatpush2.bf16.msra.mxu0 %v5781
  %7276 = vmatprep.subr.bf16.mxu0 0
  %7277 = vmatpush2.bf16.msra.mxu0 %v5780
  %7278 = vmatprep.subr.bf16.mxu0 0
  %7279 = vmatpush2.bf16.msra.mxu0 %v5779
  %7280 = vmatprep.subr.bf16.mxu0 0
  %7281 = vmatpush2.bf16.msra.mxu0 %v5778
  %7282 = vmatprep.subr.bf16.mxu0 0
  %7283 = vmatpush2.bf16.msra.mxu0 %v5777
  %7284 = vmatprep.mubr.bf16.mxu0 %v3365
  %7285 = vmatmul.mubr.bf16.gmra.mxu0 %v3364
  %v7286 = vpop.f32.mrf.mxu0
  %v7287 = vadd.f32 %v7247, %v7286
  %v7288 = vpop.f32.mrf.mxu0
  %v7289 = vpop.f32.mrf.mxu0
  %v7290 = vpop.f32.mrf.mxu0
  %7291 = vdwg.mxu0
  %7292 = vmatprep.subr.bf16.mxu0 0
  %7293 = vmatpush1.bf16.msra.mxu0 %v5792
  %7294 = vmatprep.subr.bf16.mxu0 0
  %7295 = vmatpush1.bf16.msra.mxu0 %v5791
  %7296 = vmatprep.subr.bf16.mxu0 0
  %7297 = vmatpush1.bf16.msra.mxu0 %v5790
  %7298 = vmatprep.subr.bf16.mxu0 0
  %7299 = vmatpush1.bf16.msra.mxu0 %v5789
  %7300 = vmatprep.subr.bf16.mxu0 0
  %7301 = vmatpush1.bf16.msra.mxu0 %v5788
  %7302 = vmatprep.subr.bf16.mxu0 0
  %7303 = vmatpush1.bf16.msra.mxu0 %v5787
  %7304 = vmatprep.subr.bf16.mxu0 0
  %7305 = vmatpush1.bf16.msra.mxu0 %v5786
  %7306 = vmatprep.subr.bf16.mxu0 0
  %7307 = vmatpush1.bf16.msra.mxu0 %v5785
  %7308 = vmatprep.subr.bf16.mxu0 0
  %7309 = vmatpush2.bf16.msra.mxu0 %v5800
  %7310 = vmatprep.subr.bf16.mxu0 0
  %7311 = vmatpush2.bf16.msra.mxu0 %v5799
  %7312 = vmatprep.subr.bf16.mxu0 0
  %7313 = vmatpush2.bf16.msra.mxu0 %v5798
  %7314 = vmatprep.subr.bf16.mxu0 0
  %7315 = vmatpush2.bf16.msra.mxu0 %v5797
  %7316 = vmatprep.subr.bf16.mxu0 0
  %7317 = vmatpush2.bf16.msra.mxu0 %v5796
  %7318 = vmatprep.subr.bf16.mxu0 0
  %7319 = vmatpush2.bf16.msra.mxu0 %v5795
  %7320 = vmatprep.subr.bf16.mxu0 0
  %7321 = vmatpush2.bf16.msra.mxu0 %v5794
  %7322 = vmatprep.subr.bf16.mxu0 0
  %7323 = vmatpush2.bf16.msra.mxu0 %v5793
  %7324 = vmatprep.mubr.bf16.mxu0 %v3367
  %7325 = vmatmul.mubr.bf16.gmra.mxu0 %v3366
  %v7326 = vpop.f32.mrf.mxu0
  %v7327 = vadd.f32 %v7287, %v7326
  %v7328 = vpop.f32.mrf.mxu0
  %v7329 = vpop.f32.mrf.mxu0
  %v7330 = vpop.f32.mrf.mxu0
  %7331 = vdwg.mxu0
  %7332 = vmatprep.subr.bf16.mxu0 0
  %7333 = vmatpush1.bf16.msra.mxu0 %v5808
  %7334 = vmatprep.subr.bf16.mxu0 0
  %7335 = vmatpush1.bf16.msra.mxu0 %v5807
  %7336 = vmatprep.subr.bf16.mxu0 0
  %7337 = vmatpush1.bf16.msra.mxu0 %v5806
  %7338 = vmatprep.subr.bf16.mxu0 0
  %7339 = vmatpush1.bf16.msra.mxu0 %v5805
  %7340 = vmatprep.subr.bf16.mxu0 0
  %7341 = vmatpush1.bf16.msra.mxu0 %v5804
  %7342 = vmatprep.subr.bf16.mxu0 0
  %7343 = vmatpush1.bf16.msra.mxu0 %v5803
  %7344 = vmatprep.subr.bf16.mxu0 0
  %7345 = vmatpush1.bf16.msra.mxu0 %v5802
  %7346 = vmatprep.subr.bf16.mxu0 0
  %7347 = vmatpush1.bf16.msra.mxu0 %v5801
  %7348 = vmatprep.subr.bf16.mxu0 0
  %7349 = vmatpush2.bf16.msra.mxu0 %v5816
  %7350 = vmatprep.subr.bf16.mxu0 0
  %7351 = vmatpush2.bf16.msra.mxu0 %v5815
  %7352 = vmatprep.subr.bf16.mxu0 0
  %7353 = vmatpush2.bf16.msra.mxu0 %v5814
  %7354 = vmatprep.subr.bf16.mxu0 0
  %7355 = vmatpush2.bf16.msra.mxu0 %v5813
  %7356 = vmatprep.subr.bf16.mxu0 0
  %7357 = vmatpush2.bf16.msra.mxu0 %v5812
  %7358 = vmatprep.subr.bf16.mxu0 0
  %7359 = vmatpush2.bf16.msra.mxu0 %v5811
  %7360 = vmatprep.subr.bf16.mxu0 0
  %7361 = vmatpush2.bf16.msra.mxu0 %v5810
  %7362 = vmatprep.subr.bf16.mxu0 0
  %7363 = vmatpush2.bf16.msra.mxu0 %v5809
  %7364 = vmatprep.mubr.bf16.mxu0 %v3369
  %7365 = vmatmul.mubr.bf16.gmra.mxu0 %v3368
  %v7366 = vpop.f32.mrf.mxu0
  %v7367 = vadd.f32 %v7327, %v7366
  %v7368 = vpop.f32.mrf.mxu0
  %v7369 = vpop.f32.mrf.mxu0
  %v7370 = vpop.f32.mrf.mxu0
  %7371 = vdwg.mxu0
  %7372 = vmatprep.subr.bf16.mxu0 0
  %7373 = vmatpush1.bf16.msra.mxu0 %v5824
  %7374 = vmatprep.subr.bf16.mxu0 0
  %7375 = vmatpush1.bf16.msra.mxu0 %v5823
  %7376 = vmatprep.subr.bf16.mxu0 0
  %7377 = vmatpush1.bf16.msra.mxu0 %v5822
  %7378 = vmatprep.subr.bf16.mxu0 0
  %7379 = vmatpush1.bf16.msra.mxu0 %v5821
  %7380 = vmatprep.subr.bf16.mxu0 0
  %7381 = vmatpush1.bf16.msra.mxu0 %v5820
  %7382 = vmatprep.subr.bf16.mxu0 0
  %7383 = vmatpush1.bf16.msra.mxu0 %v5819
  %7384 = vmatprep.subr.bf16.mxu0 0
  %7385 = vmatpush1.bf16.msra.mxu0 %v5818
  %7386 = vmatprep.subr.bf16.mxu0 0
  %7387 = vmatpush1.bf16.msra.mxu0 %v5817
  %7388 = vmatprep.subr.bf16.mxu0 0
  %7389 = vmatpush2.bf16.msra.mxu0 %v5832
  %7390 = vmatprep.subr.bf16.mxu0 0
  %7391 = vmatpush2.bf16.msra.mxu0 %v5831
  %7392 = vmatprep.subr.bf16.mxu0 0
  %7393 = vmatpush2.bf16.msra.mxu0 %v5830
  %7394 = vmatprep.subr.bf16.mxu0 0
  %7395 = vmatpush2.bf16.msra.mxu0 %v5829
  %7396 = vmatprep.subr.bf16.mxu0 0
  %7397 = vmatpush2.bf16.msra.mxu0 %v5828
  %7398 = vmatprep.subr.bf16.mxu0 0
  %7399 = vmatpush2.bf16.msra.mxu0 %v5827
  %7400 = vmatprep.subr.bf16.mxu0 0
  %7401 = vmatpush2.bf16.msra.mxu0 %v5826
  %7402 = vmatprep.subr.bf16.mxu0 0
  %7403 = vmatpush2.bf16.msra.mxu0 %v5825
  %7404 = vmatprep.mubr.bf16.mxu0 %v3371
  %7405 = vmatmul.mubr.bf16.gmra.mxu0 %v3370
  %v7406 = vpop.f32.mrf.mxu0
  %v7407 = vadd.f32 %v7367, %v7406
  %v7408 = vpop.f32.mrf.mxu0
  %v7409 = vpop.f32.mrf.mxu0
  %v7410 = vpop.f32.mrf.mxu0
  %7411 = vdwg.mxu0
  %7412 = vmatprep.subr.bf16.mxu0 0
  %7413 = vmatpush1.bf16.msra.mxu0 %v5840
  %7414 = vmatprep.subr.bf16.mxu0 0
  %7415 = vmatpush1.bf16.msra.mxu0 %v5839
  %7416 = vmatprep.subr.bf16.mxu0 0
  %7417 = vmatpush1.bf16.msra.mxu0 %v5838
  %7418 = vmatprep.subr.bf16.mxu0 0
  %7419 = vmatpush1.bf16.msra.mxu0 %v5837
  %7420 = vmatprep.subr.bf16.mxu0 0
  %7421 = vmatpush1.bf16.msra.mxu0 %v5836
  %7422 = vmatprep.subr.bf16.mxu0 0
  %7423 = vmatpush1.bf16.msra.mxu0 %v5835
  %7424 = vmatprep.subr.bf16.mxu0 0
  %7425 = vmatpush1.bf16.msra.mxu0 %v5834
  %7426 = vmatprep.subr.bf16.mxu0 0
  %7427 = vmatpush1.bf16.msra.mxu0 %v5833
  %7428 = vmatprep.subr.bf16.mxu0 0
  %7429 = vmatpush2.bf16.msra.mxu0 %v5848
  %7430 = vmatprep.subr.bf16.mxu0 0
  %7431 = vmatpush2.bf16.msra.mxu0 %v5847
  %7432 = vmatprep.subr.bf16.mxu0 0
  %7433 = vmatpush2.bf16.msra.mxu0 %v5846
  %7434 = vmatprep.subr.bf16.mxu0 0
  %7435 = vmatpush2.bf16.msra.mxu0 %v5845
  %7436 = vmatprep.subr.bf16.mxu0 0
  %7437 = vmatpush2.bf16.msra.mxu0 %v5844
  %7438 = vmatprep.subr.bf16.mxu0 0
  %7439 = vmatpush2.bf16.msra.mxu0 %v5843
  %7440 = vmatprep.subr.bf16.mxu0 0
  %7441 = vmatpush2.bf16.msra.mxu0 %v5842
  %7442 = vmatprep.subr.bf16.mxu0 0
  %7443 = vmatpush2.bf16.msra.mxu0 %v5841
  %7444 = vmatprep.mubr.bf16.mxu0 %v3373
  %7445 = vmatmul.mubr.bf16.gmra.mxu0 %v3372
  %v7446 = vpop.f32.mrf.mxu0
  %v7447 = vadd.f32 %v7407, %v7446
  %v7448 = vpop.f32.mrf.mxu0
  %v7449 = vpop.f32.mrf.mxu0
  %v7450 = vpop.f32.mrf.mxu0
  %7451 = vdwg.mxu0
  %7452 = vmatprep.subr.bf16.mxu0 0
  %7453 = vmatpush1.bf16.msra.mxu0 %v5856
  %7454 = vmatprep.subr.bf16.mxu0 0
  %7455 = vmatpush1.bf16.msra.mxu0 %v5855
  %7456 = vmatprep.subr.bf16.mxu0 0
  %7457 = vmatpush1.bf16.msra.mxu0 %v5854
  %7458 = vmatprep.subr.bf16.mxu0 0
  %7459 = vmatpush1.bf16.msra.mxu0 %v5853
  %7460 = vmatprep.subr.bf16.mxu0 0
  %7461 = vmatpush1.bf16.msra.mxu0 %v5852
  %7462 = vmatprep.subr.bf16.mxu0 0
  %7463 = vmatpush1.bf16.msra.mxu0 %v5851
  %7464 = vmatprep.subr.bf16.mxu0 0
  %7465 = vmatpush1.bf16.msra.mxu0 %v5850
  %7466 = vmatprep.subr.bf16.mxu0 0
  %7467 = vmatpush1.bf16.msra.mxu0 %v5849
  %7468 = vmatprep.subr.bf16.mxu0 0
  %7469 = vmatpush2.bf16.msra.mxu0 %v5864
  %7470 = vmatprep.subr.bf16.mxu0 0
  %7471 = vmatpush2.bf16.msra.mxu0 %v5863
  %7472 = vmatprep.subr.bf16.mxu0 0
  %7473 = vmatpush2.bf16.msra.mxu0 %v5862
  %7474 = vmatprep.subr.bf16.mxu0 0
  %7475 = vmatpush2.bf16.msra.mxu0 %v5861
  %7476 = vmatprep.subr.bf16.mxu0 0
  %7477 = vmatpush2.bf16.msra.mxu0 %v5860
  %7478 = vmatprep.subr.bf16.mxu0 0
  %7479 = vmatpush2.bf16.msra.mxu0 %v5859
  %7480 = vmatprep.subr.bf16.mxu0 0
  %7481 = vmatpush2.bf16.msra.mxu0 %v5858
  %7482 = vmatprep.subr.bf16.mxu0 0
  %7483 = vmatpush2.bf16.msra.mxu0 %v5857
  %7484 = vmatprep.mubr.bf16.mxu0 %v3375
  %7485 = vmatmul.mubr.bf16.gmra.mxu0 %v3374
  %v7486 = vpop.f32.mrf.mxu0
  %v7487 = vadd.f32 %v7447, %v7486
  %v7488 = vpop.f32.mrf.mxu0
  %v7489 = vpop.f32.mrf.mxu0
  %v7490 = vpop.f32.mrf.mxu0
  %7491 = vdwg.mxu0
  %7492 = vmatprep.subr.bf16.mxu0 0
  %7493 = vmatpush1.bf16.msra.mxu0 %v5872
  %7494 = vmatprep.subr.bf16.mxu0 0
  %7495 = vmatpush1.bf16.msra.mxu0 %v5871
  %7496 = vmatprep.subr.bf16.mxu0 0
  %7497 = vmatpush1.bf16.msra.mxu0 %v5870
  %7498 = vmatprep.subr.bf16.mxu0 0
  %7499 = vmatpush1.bf16.msra.mxu0 %v5869
  %7500 = vmatprep.subr.bf16.mxu0 0
  %7501 = vmatpush1.bf16.msra.mxu0 %v5868
  %7502 = vmatprep.subr.bf16.mxu0 0
  %7503 = vmatpush1.bf16.msra.mxu0 %v5867
  %7504 = vmatprep.subr.bf16.mxu0 0
  %7505 = vmatpush1.bf16.msra.mxu0 %v5866
  %7506 = vmatprep.subr.bf16.mxu0 0
  %7507 = vmatpush1.bf16.msra.mxu0 %v5865
  %7508 = vmatprep.subr.bf16.mxu0 0
  %7509 = vmatpush2.bf16.msra.mxu0 %v5880
  %7510 = vmatprep.subr.bf16.mxu0 0
  %7511 = vmatpush2.bf16.msra.mxu0 %v5879
  %7512 = vmatprep.subr.bf16.mxu0 0
  %7513 = vmatpush2.bf16.msra.mxu0 %v5878
  %7514 = vmatprep.subr.bf16.mxu0 0
  %7515 = vmatpush2.bf16.msra.mxu0 %v5877
  %7516 = vmatprep.subr.bf16.mxu0 0
  %7517 = vmatpush2.bf16.msra.mxu0 %v5876
  %7518 = vmatprep.subr.bf16.mxu0 0
  %7519 = vmatpush2.bf16.msra.mxu0 %v5875
  %7520 = vmatprep.subr.bf16.mxu0 0
  %7521 = vmatpush2.bf16.msra.mxu0 %v5874
  %7522 = vmatprep.subr.bf16.mxu0 0
  %7523 = vmatpush2.bf16.msra.mxu0 %v5873
  %7524 = vmatprep.mubr.bf16.mxu0 %v3377
  %7525 = vmatmul.mubr.bf16.gmra.mxu0 %v3376
  %v7526 = vpop.f32.mrf.mxu0
  %v7527 = vadd.f32 %v7487, %v7526
  %v7528 = vpop.f32.mrf.mxu0
  %v7529 = vpop.f32.mrf.mxu0
  %v7530 = vpop.f32.mrf.mxu0
  %7531 = vdwg.mxu0
  %7532 = vmatprep.subr.bf16.mxu0 0
  %7533 = vmatpush1.bf16.msra.mxu0 %v5888
  %7534 = vmatprep.subr.bf16.mxu0 0
  %7535 = vmatpush1.bf16.msra.mxu0 %v5887
  %7536 = vmatprep.subr.bf16.mxu0 0
  %7537 = vmatpush1.bf16.msra.mxu0 %v5886
  %7538 = vmatprep.subr.bf16.mxu0 0
  %7539 = vmatpush1.bf16.msra.mxu0 %v5885
  %7540 = vmatprep.subr.bf16.mxu0 0
  %7541 = vmatpush1.bf16.msra.mxu0 %v5884
  %7542 = vmatprep.subr.bf16.mxu0 0
  %7543 = vmatpush1.bf16.msra.mxu0 %v5883
  %7544 = vmatprep.subr.bf16.mxu0 0
  %7545 = vmatpush1.bf16.msra.mxu0 %v5882
  %7546 = vmatprep.subr.bf16.mxu0 0
  %7547 = vmatpush1.bf16.msra.mxu0 %v5881
  %7548 = vmatprep.subr.bf16.mxu0 0
  %7549 = vmatpush2.bf16.msra.mxu0 %v5896
  %7550 = vmatprep.subr.bf16.mxu0 0
  %7551 = vmatpush2.bf16.msra.mxu0 %v5895
  %7552 = vmatprep.subr.bf16.mxu0 0
  %7553 = vmatpush2.bf16.msra.mxu0 %v5894
  %7554 = vmatprep.subr.bf16.mxu0 0
  %7555 = vmatpush2.bf16.msra.mxu0 %v5893
  %7556 = vmatprep.subr.bf16.mxu0 0
  %7557 = vmatpush2.bf16.msra.mxu0 %v5892
  %7558 = vmatprep.subr.bf16.mxu0 0
  %7559 = vmatpush2.bf16.msra.mxu0 %v5891
  %7560 = vmatprep.subr.bf16.mxu0 0
  %7561 = vmatpush2.bf16.msra.mxu0 %v5890
  %7562 = vmatprep.subr.bf16.mxu0 0
  %7563 = vmatpush2.bf16.msra.mxu0 %v5889
  %7564 = vmatprep.mubr.bf16.mxu0 %v3379
  %7565 = vmatmul.mubr.bf16.gmra.mxu0 %v3378
  %v7566 = vpop.f32.mrf.mxu0
  %v7567 = vadd.f32 %v7527, %v7566
  %v7568 = vpop.f32.mrf.mxu0
  %v7569 = vpop.f32.mrf.mxu0
  %v7570 = vpop.f32.mrf.mxu0
  %7571 = vdwg.mxu0
  %7572 = vmatprep.subr.bf16.mxu0 0
  %7573 = vmatpush1.bf16.msra.mxu0 %v5904
  %7574 = vmatprep.subr.bf16.mxu0 0
  %7575 = vmatpush1.bf16.msra.mxu0 %v5903
  %7576 = vmatprep.subr.bf16.mxu0 0
  %7577 = vmatpush1.bf16.msra.mxu0 %v5902
  %7578 = vmatprep.subr.bf16.mxu0 0
  %7579 = vmatpush1.bf16.msra.mxu0 %v5901
  %7580 = vmatprep.subr.bf16.mxu0 0
  %7581 = vmatpush1.bf16.msra.mxu0 %v5900
  %7582 = vmatprep.subr.bf16.mxu0 0
  %7583 = vmatpush1.bf16.msra.mxu0 %v5899
  %7584 = vmatprep.subr.bf16.mxu0 0
  %7585 = vmatpush1.bf16.msra.mxu0 %v5898
  %7586 = vmatprep.subr.bf16.mxu0 0
  %7587 = vmatpush1.bf16.msra.mxu0 %v5897
  %7588 = vmatprep.subr.bf16.mxu0 0
  %7589 = vmatpush2.bf16.msra.mxu0 %v5912
  %7590 = vmatprep.subr.bf16.mxu0 0
  %7591 = vmatpush2.bf16.msra.mxu0 %v5911
  %7592 = vmatprep.subr.bf16.mxu0 0
  %7593 = vmatpush2.bf16.msra.mxu0 %v5910
  %7594 = vmatprep.subr.bf16.mxu0 0
  %7595 = vmatpush2.bf16.msra.mxu0 %v5909
  %7596 = vmatprep.subr.bf16.mxu0 0
  %7597 = vmatpush2.bf16.msra.mxu0 %v5908
  %7598 = vmatprep.subr.bf16.mxu0 0
  %7599 = vmatpush2.bf16.msra.mxu0 %v5907
  %7600 = vmatprep.subr.bf16.mxu0 0
  %7601 = vmatpush2.bf16.msra.mxu0 %v5906
  %7602 = vmatprep.subr.bf16.mxu0 0
  %7603 = vmatpush2.bf16.msra.mxu0 %v5905
  %7604 = vmatprep.mubr.bf16.mxu0 %v3381
  %7605 = vmatmul.mubr.bf16.gmra.mxu0 %v3380
  %v7606 = vpop.f32.mrf.mxu0
  %v7607 = vadd.f32 %v7567, %v7606
  %v7608 = vpop.f32.mrf.mxu0
  %v7609 = vpop.f32.mrf.mxu0
  %v7610 = vpop.f32.mrf.mxu0
  %7611 = vdwg.mxu0
  %7612 = vmatprep.subr.bf16.mxu0 0
  %7613 = vmatpush1.bf16.msra.mxu0 %v5920
  %7614 = vmatprep.subr.bf16.mxu0 0
  %7615 = vmatpush1.bf16.msra.mxu0 %v5919
  %7616 = vmatprep.subr.bf16.mxu0 0
  %7617 = vmatpush1.bf16.msra.mxu0 %v5918
  %7618 = vmatprep.subr.bf16.mxu0 0
  %7619 = vmatpush1.bf16.msra.mxu0 %v5917
  %7620 = vmatprep.subr.bf16.mxu0 0
  %7621 = vmatpush1.bf16.msra.mxu0 %v5916
  %7622 = vmatprep.subr.bf16.mxu0 0
  %7623 = vmatpush1.bf16.msra.mxu0 %v5915
  %7624 = vmatprep.subr.bf16.mxu0 0
  %7625 = vmatpush1.bf16.msra.mxu0 %v5914
  %7626 = vmatprep.subr.bf16.mxu0 0
  %7627 = vmatpush1.bf16.msra.mxu0 %v5913
  %7628 = vmatprep.subr.bf16.mxu0 0
  %7629 = vmatpush2.bf16.msra.mxu0 %v5928
  %7630 = vmatprep.subr.bf16.mxu0 0
  %7631 = vmatpush2.bf16.msra.mxu0 %v5927
  %7632 = vmatprep.subr.bf16.mxu0 0
  %7633 = vmatpush2.bf16.msra.mxu0 %v5926
  %7634 = vmatprep.subr.bf16.mxu0 0
  %7635 = vmatpush2.bf16.msra.mxu0 %v5925
  %7636 = vmatprep.subr.bf16.mxu0 0
  %7637 = vmatpush2.bf16.msra.mxu0 %v5924
  %7638 = vmatprep.subr.bf16.mxu0 0
  %7639 = vmatpush2.bf16.msra.mxu0 %v5923
  %7640 = vmatprep.subr.bf16.mxu0 0
  %7641 = vmatpush2.bf16.msra.mxu0 %v5922
  %7642 = vmatprep.subr.bf16.mxu0 0
  %7643 = vmatpush2.bf16.msra.mxu0 %v5921
  %7644 = vmatprep.mubr.bf16.mxu0 %v3383
  %7645 = vmatmul.mubr.bf16.gmra.mxu0 %v3382
  %v7646 = vpop.f32.mrf.mxu0
  %v7647 = vadd.f32 %v7607, %v7646
  %v7648 = vpop.f32.mrf.mxu0
  %v7649 = vpop.f32.mrf.mxu0
  %v7650 = vpop.f32.mrf.mxu0
  %7651 = vdwg.mxu0
  %7652 = vmatprep.subr.bf16.mxu0 0
  %7653 = vmatpush1.bf16.msra.mxu0 %v5936
  %7654 = vmatprep.subr.bf16.mxu0 0
  %7655 = vmatpush1.bf16.msra.mxu0 %v5935
  %7656 = vmatprep.subr.bf16.mxu0 0
  %7657 = vmatpush1.bf16.msra.mxu0 %v5934
  %7658 = vmatprep.subr.bf16.mxu0 0
  %7659 = vmatpush1.bf16.msra.mxu0 %v5933
  %7660 = vmatprep.subr.bf16.mxu0 0
  %7661 = vmatpush1.bf16.msra.mxu0 %v5932
  %7662 = vmatprep.subr.bf16.mxu0 0
  %7663 = vmatpush1.bf16.msra.mxu0 %v5931
  %7664 = vmatprep.subr.bf16.mxu0 0
  %7665 = vmatpush1.bf16.msra.mxu0 %v5930
  %7666 = vmatprep.subr.bf16.mxu0 0
  %7667 = vmatpush1.bf16.msra.mxu0 %v5929
  %7668 = vmatprep.subr.bf16.mxu0 0
  %7669 = vmatpush2.bf16.msra.mxu0 %v5944
  %7670 = vmatprep.subr.bf16.mxu0 0
  %7671 = vmatpush2.bf16.msra.mxu0 %v5943
  %7672 = vmatprep.subr.bf16.mxu0 0
  %7673 = vmatpush2.bf16.msra.mxu0 %v5942
  %7674 = vmatprep.subr.bf16.mxu0 0
  %7675 = vmatpush2.bf16.msra.mxu0 %v5941
  %7676 = vmatprep.subr.bf16.mxu0 0
  %7677 = vmatpush2.bf16.msra.mxu0 %v5940
  %7678 = vmatprep.subr.bf16.mxu0 0
  %7679 = vmatpush2.bf16.msra.mxu0 %v5939
  %7680 = vmatprep.subr.bf16.mxu0 0
  %7681 = vmatpush2.bf16.msra.mxu0 %v5938
  %7682 = vmatprep.subr.bf16.mxu0 0
  %7683 = vmatpush2.bf16.msra.mxu0 %v5937
  %7684 = vmatprep.mubr.bf16.mxu0 %v3385
  %7685 = vmatmul.mubr.bf16.gmra.mxu0 %v3384
  %v7686 = vpop.f32.mrf.mxu0
  %v7687 = vadd.f32 %v7647, %v7686
  %v7688 = vpop.f32.mrf.mxu0
  %v7689 = vpop.f32.mrf.mxu0
  %v7690 = vpop.f32.mrf.mxu0
  %7691 = vdwg.mxu0
  %7692 = vmatprep.subr.bf16.mxu0 0
  %7693 = vmatpush1.bf16.msra.mxu0 0
  %7694 = vmatprep.subr.bf16.mxu0 0
  %7695 = vmatpush1.bf16.msra.mxu0 0
  %7696 = vmatprep.subr.bf16.mxu0 0
  %7697 = vmatpush1.bf16.msra.mxu0 0
  %7698 = vmatprep.subr.bf16.mxu0 0
  %7699 = vmatpush1.bf16.msra.mxu0 0
  %7700 = vmatprep.subr.bf16.mxu0 0
  %7701 = vmatpush1.bf16.msra.mxu0 %v5948
  %7702 = vmatprep.subr.bf16.mxu0 0
  %7703 = vmatpush1.bf16.msra.mxu0 %v5947
  %7704 = vmatprep.subr.bf16.mxu0 0
  %7705 = vmatpush1.bf16.msra.mxu0 %v5946
  %7706 = vmatprep.subr.bf16.mxu0 0
  %7707 = vmatpush1.bf16.msra.mxu0 %v5945
  %7708 = vmatprep.subr.bf16.mxu0 0
  %7709 = vmatpush2.bf16.msra.mxu0 0
  %7710 = vmatprep.subr.bf16.mxu0 0
  %7711 = vmatpush2.bf16.msra.mxu0 0
  %7712 = vmatprep.subr.bf16.mxu0 0
  %7713 = vmatpush2.bf16.msra.mxu0 0
  %7714 = vmatprep.subr.bf16.mxu0 0
  %7715 = vmatpush2.bf16.msra.mxu0 0
  %7716 = vmatprep.subr.bf16.mxu0 0
  %7717 = vmatpush2.bf16.msra.mxu0 0
  %7718 = vmatprep.subr.bf16.mxu0 0
  %7719 = vmatpush2.bf16.msra.mxu0 0
  %7720 = vmatprep.subr.bf16.mxu0 0
  %7721 = vmatpush2.bf16.msra.mxu0 0
  %7722 = vmatprep.subr.bf16.mxu0 0
  %7723 = vmatpush2.bf16.msra.mxu0 0
  %7724 = vmatprep.mubr.bf16.mxu0 0
  %7725 = vmatmul.mubr.bf16.gmra.mxu0 %v6450
  %v7726 = vpop.f32.mrf.mxu0
  %v7727 = vadd.f32 %v7687, %v7726
  %v7728 = vpop.f32.mrf.mxu0
  %v7729 = vpop.f32.mrf.mxu0
  %v7730 = vpop.f32.mrf.mxu0
  %7731 = vdwg.mxu0
  %v7732 = vmax.f32 %v7727, 0.0
  %7734 = vrot.lane.b32.xlu0 %v7732, 64
  %v7735 = vpop.permute.xlu0 %7734
  %vm7737 = vcmask 785920
  %7738 = vst.msk [vmem:[%s15] sm:$0xff] %vm7737, %v7735
  %v7739 = vld [vmem:[%s9] sm:$0xf]
  %v7740 = vld [vmem:[%s10] sm:$0xf]
  %v7741 = vld [vmem:[%s10 + $0x4] sm:$0xf]
  %v7742 = vld [vmem:[%s10 + $0x8] sm:$0x7]
  %v7743 = vld [vmem:[%s11] sm:$0x1]
  %v7745 = vlaneseq
  %v7746 = vshrl.u32 %v7745, 7
  %v7747 = vsub.s32 0, %v7746
  %v7748 = vrot.slane %v7743, %v7747
  %v7753 = vunpack.c.l.b16 %v7740
  %v7754 = vunpack.c.l.b16 %v7741
  %v7755 = vunpack.c.l.b16 %v7742
  %v7756 = vpack.c.b16 %v7754, %v7753
  %v7757 = vpack.c.b16 %v7755, %v7755
  %vm7759 = vcmask 179200
  %v7761 = vsel %vm7759, %v7739, 0
  %vm7763 = vcmask 1042432
  %v7765 = vsel %vm7763, %v7757, 0
  %7767 = vmatprep.subr.bf16.mxu0 0
  %7768 = vmatpush1.bf16.msra.mxu0 0
  %7769 = vmatprep.subr.bf16.mxu0 0
  %7770 = vmatpush1.bf16.msra.mxu0 0
  %7771 = vmatprep.subr.bf16.mxu0 0
  %7772 = vmatpush1.bf16.msra.mxu0 0
  %7773 = vmatprep.subr.bf16.mxu0 0
  %7774 = vmatpush1.bf16.msra.mxu0 0
  %7775 = vmatprep.subr.bf16.mxu0 0
  %7776 = vmatpush1.bf16.msra.mxu0 0
  %7777 = vmatprep.subr.bf16.mxu0 0
  %7778 = vmatpush1.bf16.msra.mxu0 0
  %7779 = vmatprep.subr.bf16.mxu0 0
  %7780 = vmatpush1.bf16.msra.mxu0 %v7765
  %7781 = vmatprep.subr.bf16.mxu0 0
  %7782 = vmatpush1.bf16.msra.mxu0 %v7756
  %7783 = vmatprep.subr.bf16.mxu0 0
  %7784 = vmatpush2.bf16.msra.mxu0 0
  %7785 = vmatprep.subr.bf16.mxu0 0
  %7786 = vmatpush2.bf16.msra.mxu0 0
  %7787 = vmatprep.subr.bf16.mxu0 0
  %7788 = vmatpush2.bf16.msra.mxu0 0
  %7789 = vmatprep.subr.bf16.mxu0 0
  %7790 = vmatpush2.bf16.msra.mxu0 0
  %7791 = vmatprep.subr.bf16.mxu0 0
  %7792 = vmatpush2.bf16.msra.mxu0 0
  %7793 = vmatprep.subr.bf16.mxu0 0
  %7794 = vmatpush2.bf16.msra.mxu0 0
  %7795 = vmatprep.subr.bf16.mxu0 0
  %7796 = vmatpush2.bf16.msra.mxu0 0
  %7797 = vmatprep.subr.bf16.mxu0 0
  %7798 = vmatpush2.bf16.msra.mxu0 0
  %7799 = vmatprep.mubr.bf16.mxu0 0
  %7800 = vmatmul.mubr.bf16.gmra.mxu0 %v7761
  %v7801 = vpop.f32.mrf.mxu0
  %v7802 = vadd.f32 %v7748, %v7801
  %v7803 = vpop.f32.mrf.mxu0
  %v7804 = vpop.f32.mrf.mxu0
  %v7805 = vpop.f32.mrf.mxu0
  %7806 = vdwg.mxu0
  %v7807 = vmax.f32 %v7802, 0.0
  %7809 = vrot.lane.b32.xlu0 %v7807, 96
  %v7810 = vpop.permute.xlu0 %7809
  %vm7812 = vcmask 1048320
  %7813 = vst.msk [vmem:[%s15] sm:$0xff] %vm7812, %v7810
  %v7814 = vld [vmem:[%s12] sm:$0xff]
  %v7815 = vld [vmem:[%s12 + $0x8] sm:$0xf]
  %v7816 = vld [vmem:[%s13] sm:$0xf]
  %v7817 = vld [vmem:[%s13 + $0x4] sm:$0xf]
  %v7818 = vld [vmem:[%s13 + $0x8] sm:$0xf]
  %v7819 = vld [vmem:[%s13 + $0xc] sm:$0xf]
  %v7820 = vld [vmem:[%s13 + $0x10] sm:$0xf]
  %v7821 = vld [vmem:[%s13 + $0x14] sm:$0xf]
  %v7822 = vld [vmem:[%s13 + $0x18] sm:$0xf]
  %v7823 = vld [vmem:[%s13 + $0x1c] sm:$0xf]
  %v7824 = vld [vmem:[%s13 + $0x20] sm:$0xf]
  %v7825 = vld [vmem:[%s13 + $0x24] sm:$0xf]
  %v7826 = vld [vmem:[%s13 + $0x28] sm:$0xf]
  %v7827 = vld [vmem:[%s13 + $0x2c] sm:$0xf]
  %v7828 = vld [vmem:[%s13 + $0x30] sm:$0xf]
  %v7829 = vld [vmem:[%s13 + $0x34] sm:$0xf]
  %v7830 = vld [vmem:[%s13 + $0x38] sm:$0xf]
  %v7831 = vld [vmem:[%s13 + $0x3c] sm:$0xf]
  %v7832 = vld [vmem:[%s13 + $0x40] sm:$0xf]
  %v7833 = vld [vmem:[%s13 + $0x44] sm:$0xf]
  %v7834 = vld [vmem:[%s13 + $0x48] sm:$0xf]
  %v7835 = vld [vmem:[%s13 + $0x4c] sm:$0xf]
  %v7836 = vld [vmem:[%s13 + $0x50] sm:$0xf]
  %v7837 = vld [vmem:[%s13 + $0x54] sm:$0xf]
  %v7838 = vld [vmem:[%s13 + $0x58] sm:$0xf]
  %v7839 = vld [vmem:[%s13 + $0x5c] sm:$0xf]
  %v7840 = vld [vmem:[%s13 + $0x60] sm:$0xf]
  %v7841 = vld [vmem:[%s13 + $0x64] sm:$0xf]
  %v7842 = vld [vmem:[%s13 + $0x68] sm:$0xf]
  %v7843 = vld [vmem:[%s13 + $0x6c] sm:$0xf]
  %v7844 = vld [vmem:[%s13 + $0x70] sm:$0xf]
  %v7845 = vld [vmem:[%s13 + $0x74] sm:$0xf]
  %v7846 = vld [vmem:[%s13 + $0x78] sm:$0xf]
  %v7847 = vld [vmem:[%s13 + $0x7c] sm:$0xf]
  %v7848 = vld [vmem:[%s13 + $0x80] sm:$0xf]
  %v7849 = vld [vmem:[%s13 + $0x84] sm:$0xf]
  %v7850 = vld [vmem:[%s13 + $0x88] sm:$0x1]
  %v7851 = vld [vmem:[%s14] sm:$0x1]
  %v7853 = vlaneseq
  %v7854 = vshrl.u32 %v7853, 7
  %v7855 = vsub.s32 0, %v7854
  %v7856 = vrot.slane %v7851, %v7855
  %v7860 = vunpack.c.l.b16 %v7814
  %v7861 = vunpack.c.h.b16 %v7814
  %v7862 = vunpack.c.l.b16 %v7815
  %v7863 = vpack.c.b16 %v7860, %v7860
  %v7864 = vpack.c.b16 %v7861, %v7861
  %v7865 = vpack.c.b16 %v7862, %v7862
  %v7903 = vunpack.c.l.b16 %v7816
  %v7904 = vunpack.c.l.b16 %v7817
  %v7905 = vunpack.c.l.b16 %v7818
  %v7906 = vunpack.c.l.b16 %v7819
  %v7907 = vunpack.c.l.b16 %v7820
  %v7908 = vunpack.c.l.b16 %v7821
  %v7909 = vunpack.c.l.b16 %v7822
  %v7910 = vunpack.c.l.b16 %v7823
  %v7911 = vunpack.c.l.b16 %v7824
  %v7912 = vunpack.c.l.b16 %v7825
  %v7913 = vunpack.c.l.b16 %v7826
  %v7914 = vunpack.c.l.b16 %v7827
  %v7915 = vunpack.c.l.b16 %v7828
  %v7916 = vunpack.c.l.b16 %v7829
  %v7917 = vunpack.c.l.b16 %v7830
  %v7918 = vunpack.c.l.b16 %v7831
  %v7919 = vunpack.c.l.b16 %v7832
  %v7920 = vunpack.c.l.b16 %v7833
  %v7921 = vunpack.c.l.b16 %v7834
  %v7922 = vunpack.c.l.b16 %v7835
  %v7923 = vunpack.c.l.b16 %v7836
  %v7924 = vunpack.c.l.b16 %v7837
  %v7925 = vunpack.c.l.b16 %v7838
  %v7926 = vunpack.c.l.b16 %v7839
  %v7927 = vunpack.c.l.b16 %v7840
  %v7928 = vunpack.c.l.b16 %v7841
  %v7929 = vunpack.c.l.b16 %v7842
  %v7930 = vunpack.c.l.b16 %v7843
  %v7931 = vunpack.c.l.b16 %v7844
  %v7932 = vunpack.c.l.b16 %v7845
  %v7933 = vunpack.c.l.b16 %v7846
  %v7934 = vunpack.c.l.b16 %v7847
  %v7935 = vunpack.c.l.b16 %v7848
  %v7936 = vunpack.c.l.b16 %v7849
  %v7937 = vunpack.c.l.b16 %v7850
  %v7938 = vpack.c.b16 %v7904, %v7903
  %v7939 = vpack.c.b16 %v7906, %v7905
  %v7940 = vpack.c.b16 %v7908, %v7907
  %v7941 = vpack.c.b16 %v7910, %v7909
  %v7942 = vpack.c.b16 %v7912, %v7911
  %v7943 = vpack.c.b16 %v7914, %v7913
  %v7944 = vpack.c.b16 %v7916, %v7915
  %v7945 = vpack.c.b16 %v7918, %v7917
  %v7946 = vpack.c.b16 %v7920, %v7919
  %v7947 = vpack.c.b16 %v7922, %v7921
  %v7948 = vpack.c.b16 %v7924, %v7923
  %v7949 = vpack.c.b16 %v7926, %v7925
  %v7950 = vpack.c.b16 %v7928, %v7927
  %v7951 = vpack.c.b16 %v7930, %v7929
  %v7952 = vpack.c.b16 %v7932, %v7931
  %v7953 = vpack.c.b16 %v7934, %v7933
  %v7954 = vpack.c.b16 %v7936, %v7935
  %v7955 = vpack.c.b16 %v7937, %v7937
  %vm7973 = vcmask 138240
  %v7975 = vsel %vm7973, %v7865, 0
  %vm7977 = vcmask 1040384
  %v7978 = vsel 0, 4294967295, 65535
  %v7979 = vsel %vm7977, %v7978, 0
  %v7981 = vand.u32 %v7955, %v7979
  %7983 = vmatprep.subr.bf16.mxu0 0
  %7984 = vmatpush1.bf16.msra.mxu0 %v7945
  %7985 = vmatprep.subr.bf16.mxu0 0
  %7986 = vmatpush1.bf16.msra.mxu0 %v7944
  %7987 = vmatprep.subr.bf16.mxu0 0
  %7988 = vmatpush1.bf16.msra.mxu0 %v7943
  %7989 = vmatprep.subr.bf16.mxu0 0
  %7990 = vmatpush1.bf16.msra.mxu0 %v7942
  %7991 = vmatprep.subr.bf16.mxu0 0
  %7992 = vmatpush1.bf16.msra.mxu0 %v7941
  %7993 = vmatprep.subr.bf16.mxu0 0
  %7994 = vmatpush1.bf16.msra.mxu0 %v7940
  %7995 = vmatprep.subr.bf16.mxu0 0
  %7996 = vmatpush1.bf16.msra.mxu0 %v7939
  %7997 = vmatprep.subr.bf16.mxu0 0
  %7998 = vmatpush1.bf16.msra.mxu0 %v7938
  %7999 = vmatprep.subr.bf16.mxu0 0
  %8000 = vmatpush2.bf16.msra.mxu0 %v7953
  %8001 = vmatprep.subr.bf16.mxu0 0
  %8002 = vmatpush2.bf16.msra.mxu0 %v7952
  %8003 = vmatprep.subr.bf16.mxu0 0
  %8004 = vmatpush2.bf16.msra.mxu0 %v7951
  %8005 = vmatprep.subr.bf16.mxu0 0
  %8006 = vmatpush2.bf16.msra.mxu0 %v7950
  %8007 = vmatprep.subr.bf16.mxu0 0
  %8008 = vmatpush2.bf16.msra.mxu0 %v7949
  %8009 = vmatprep.subr.bf16.mxu0 0
  %8010 = vmatpush2.bf16.msra.mxu0 %v7948
  %8011 = vmatprep.subr.bf16.mxu0 0
  %8012 = vmatpush2.bf16.msra.mxu0 %v7947
  %8013 = vmatprep.subr.bf16.mxu0 0
  %8014 = vmatpush2.bf16.msra.mxu0 %v7946
  %8015 = vmatprep.mubr.bf16.mxu0 %v7864
  %8016 = vmatmul.mubr.bf16.gmra.mxu0 %v7863
  %v8017 = vpop.f32.mrf.mxu0
  %v8018 = vadd.f32 %v7856, %v8017
  %v8019 = vpop.f32.mrf.mxu0
  %v8020 = vpop.f32.mrf.mxu0
  %v8021 = vpop.f32.mrf.mxu0
  %8022 = vdwg.mxu0
  %8023 = vmatprep.subr.bf16.mxu0 0
  %8024 = vmatpush1.bf16.msra.mxu0 0
  %8025 = vmatprep.subr.bf16.mxu0 0
  %8026 = vmatpush1.bf16.msra.mxu0 0
  %8027 = vmatprep.subr.bf16.mxu0 0
  %8028 = vmatpush1.bf16.msra.mxu0 0
  %8029 = vmatprep.subr.bf16.mxu0 0
  %8030 = vmatpush1.bf16.msra.mxu0 0
  %8031 = vmatprep.subr.bf16.mxu0 0
  %8032 = vmatpush1.bf16.msra.mxu0 0
  %8033 = vmatprep.subr.bf16.mxu0 0
  %8034 = vmatpush1.bf16.msra.mxu0 0
  %8035 = vmatprep.subr.bf16.mxu0 0
  %8036 = vmatpush1.bf16.msra.mxu0 %v7981
  %8037 = vmatprep.subr.bf16.mxu0 0
  %8038 = vmatpush1.bf16.msra.mxu0 %v7954
  %8039 = vmatprep.subr.bf16.mxu0 0
  %8040 = vmatpush2.bf16.msra.mxu0 0
  %8041 = vmatprep.subr.bf16.mxu0 0
  %8042 = vmatpush2.bf16.msra.mxu0 0
  %8043 = vmatprep.subr.bf16.mxu0 0
  %8044 = vmatpush2.bf16.msra.mxu0 0
  %8045 = vmatprep.subr.bf16.mxu0 0
  %8046 = vmatpush2.bf16.msra.mxu0 0
  %8047 = vmatprep.subr.bf16.mxu0 0
  %8048 = vmatpush2.bf16.msra.mxu0 0
  %8049 = vmatprep.subr.bf16.mxu0 0
  %8050 = vmatpush2.bf16.msra.mxu0 0
  %8051 = vmatprep.subr.bf16.mxu0 0
  %8052 = vmatpush2.bf16.msra.mxu0 0
  %8053 = vmatprep.subr.bf16.mxu0 0
  %8054 = vmatpush2.bf16.msra.mxu0 0
  %8055 = vmatprep.mubr.bf16.mxu0 0
  %8056 = vmatmul.mubr.bf16.gmra.mxu0 %v7975
  %v8057 = vpop.f32.mrf.mxu0
  %v8058 = vadd.f32 %v8018, %v8057
  %v8059 = vpop.f32.mrf.mxu0
  %v8060 = vpop.f32.mrf.mxu0
  %v8061 = vpop.f32.mrf.mxu0
  %8062 = vdwg.mxu0
  %v8063 = vmax.f32 %v8058, 0.0
  %8064 = vst.msk [vmem:[%s15 + $0x8] sm:$0xff] %vm1038, %v8063
  // Predicated region
  $region62: #{embedding_forward.4} parent=0 // pred_check
    _
  $region63: #{embedding_forward.4} parent=0 // pred_check_branch
    %8066 = sbr.rel (0) target = $region65
  $region64: #{embedding_forward.4} parent=0 // pred_region
    _
  $region65: #{embedding_forward.4} parent=0 // pred_fallthru
    _
  // Predicated region
  $region66: #{embedding_forward.4} parent=0 // pred_check
    _
  $region67: #{embedding_forward.4} parent=0 // pred_check_branch
    %8068 = sbr.rel (0) target = $region69
  $region68: #{embedding_forward.4} parent=0 // pred_region
    _
  $region69: #{embedding_forward.4} parent=0 // pred_fallthru
    _

</llo_original>
